<compile_context>
chip_gen: v7x
topology: tpu7x:2x2x1
jax: 0.10.0
libtpu: 0.0.40
codegen_flags: <defaults>
</compile_context>

<pallas_src>
import random

import jax
import jax.numpy as jnp
from jax.experimental import pallas as pl
from jax.experimental.pallas import tpu as pltpu

# ----------------------------- model hyper-params (small) -----------------------------
EN_VOCAB = 10
CN_VOCAB = 12
EMB_DIM = 16
HID_DIM = 32            # encoder per-direction hidden size
N_LAYERS = 2
DEC_HID = 2 * HID_DIM   # decoder hidden size (concat of fwd/bwd encoder hidden)
VOCAB_PAD = 128         # lane-dense padded vocab width for the decoder head output

_VMEM = pl.BlockSpec(memory_space=pltpu.MemorySpace.VMEM)
_SMEM = pl.BlockSpec(memory_space=pltpu.MemorySpace.SMEM)


# --------------------------------- in-kernel helpers -----------------------------------
def _dotw(a, w):
    """MXU matmul: activation cast to the weight dtype (bf16), f32 accumulation."""
    return jnp.dot(a.astype(w.dtype), w, preferred_element_type=jnp.float32)


def _gru_cell(h, gi, gh, H):
    """One GRU update from fused gate slabs (PyTorch gate order [r, z, n]).
       gi = x @ W_ih3 + [b_ir+b_hr, b_iz+b_hz, b_in]   (B, 3H)
       gh = h @ W_hh3 + [0,         0,         b_hn]   (B, 3H)
       r  = sig(gi_r + gh_r); z = sig(gi_z + gh_z); n = tanh(gi_n + r*gh_n)
       h' = (1-z)*n + z*h"""
    r = jax.nn.sigmoid(gi[:, :H] + gh[:, :H])
    z = jax.nn.sigmoid(gi[:, H:2 * H] + gh[:, H:2 * H])
    n = jnp.tanh(gi[:, 2 * H:] + r * gh[:, 2 * H:])
    return (1.0 - z) * n + z * h


# ----------------------------------- Pallas kernel -------------------------------------
def seq2seq_kernel(x_ref, tgt_oh_ref, tf_ref, *rest):
    """Full encoder (bidirectional, N_LAYERS) + full teacher-forced/greedy decode loop.
    x_ref:      (T, B, EMB) f32 embedded source.
    tgt_oh_ref: (T, B, V)   f32 one-hot teacher tokens.
    tf_ref:     (T,) int32 SMEM teacher-forcing flags (index 0 unused).
    rest: per encoder layer [wih6 (Din,6H) bf16, whh6 (2H,6H) bf16, bi6 (1,6H), bhn6 (1,6H)],
          decoder embedding (V, EMB) f32,
          per decoder layer [wih3 (Din,3Hd) bf16, whh3 (Hd,3Hd) bf16, bi3 (1,3Hd), bhn3 (1,3Hd)],
          head [w1,b1,w2,b2,w3(pad 128),b3(pad -1e9)],
          out_ref (T, B, VOCAB_PAD) f32, scratches yf (T,B,H), yb (T,B,H), x_scr (B,EMB)."""
    idx = 0
    enc_w = rest[idx: idx + 4 * N_LAYERS]; idx += 4 * N_LAYERS
    demb_ref = rest[idx]; idx += 1
    dec_w = rest[idx: idx + 4 * N_LAYERS]; idx += 4 * N_LAYERS
    hw1_ref, hb1_ref, hw2_ref, hb2_ref, hw3_ref, hb3_ref = rest[idx: idx + 6]; idx += 6
    out_ref = rest[idx]; idx += 1
    yf_scr, yb_scr, x_scr = rest[idx:]

    T, B, _ = x_ref.shape
    H = HID_DIM

    # --------------------------------- encoder ---------------------------------
    x = x_ref[...]                                       # (T, B, Din) f32
    h_enc = []                                           # per-layer final cat(h_fwd, h_bwd)
    for l in range(N_LAYERS):
        wih = enc_w[4 * l + 0][...]                      # (Din, 6H)  [fwd r|z|n, bwd r|z|n]
        whh = enc_w[4 * l + 1][...]                      # (2H, 6H)   blockdiag(Whh_f, Whh_b)
        bi = enc_w[4 * l + 2][...]                       # (1, 6H)
        bhn = enc_w[4 * l + 3][...]                      # (1, 6H)    only n slots non-zero
        keep_out = l + 1 < N_LAYERS                      # last layer's enc_out is unused

        Din = x.shape[-1]
        # Input projection for ALL timesteps, both directions, all gates: one matmul.
        gi = (_dotw(x.reshape(T * B, Din), wih) + bi).reshape(T, B, 6 * H)
        bhn_b = jnp.broadcast_to(bhn, (B, 6 * H))        # hoisted out of the t-loop

        h_cat = jnp.zeros((B, 2 * H), jnp.float32)       # [h_fwd | h_bwd]
        for s in range(T):
            gh = _dotw(h_cat, whh) + bhn_b               # ONE recurrent matmul / step / layer
            h_f = _gru_cell(h_cat[:, :H], gi[s, :, :3 * H], gh[:, :3 * H], H)
            h_b = _gru_cell(h_cat[:, H:], gi[T - 1 - s, :, 3 * H:], gh[:, 3 * H:], H)
            h_cat = jnp.concatenate([h_f, h_b], axis=-1)
            if keep_out:
                yf_scr[s] = h_f                          # fwd hidden for timestep s
                yb_scr[T - 1 - s] = h_b                  # bwd hidden for timestep T-1-s
        h_enc.append(h_cat)                              # decoder h0 for this layer
        if keep_out:
            x = jnp.concatenate([yf_scr[...], yb_scr[...]], axis=-1)   # (T, B, 2H)

    # --------------------------------- decoder ---------------------------------
    V = tgt_oh_ref.shape[-1]
    E = demb_ref.shape[-1]
    Hd = DEC_HID
    emb = demb_ref[...]                                  # (V, E) f32 — exact lookup
    # Teacher-forced embeddings for all steps in one batched matmul (off critical path).
    emb_all = jnp.dot(tgt_oh_ref[...].reshape(T * B, V), emb,
                      preferred_element_type=jnp.float32).reshape(T, B, E)

    dlayers = []
    for l in range(N_LAYERS):
        dlayers.append((dec_w[4 * l + 0][...],
                        dec_w[4 * l + 1][...],
                        jnp.broadcast_to(dec_w[4 * l + 2][...], (B, 3 * Hd)),
                        jnp.broadcast_to(dec_w[4 * l + 3][...], (B, 3 * Hd))))
    w1 = hw1_ref[...]; b1 = jnp.broadcast_to(hb1_ref[...], (B, hb1_ref.shape[-1]))
    w2 = hw2_ref[...]; b2 = jnp.broadcast_to(hb2_ref[...], (B, hb2_ref.shape[-1]))
    w3 = hw3_ref[...]; b3 = jnp.broadcast_to(hb3_ref[...], (B, VOCAB_PAD))

    h = list(h_enc)                                      # decoder initial hidden per layer
    out_ref[0] = jnp.zeros((B, VOCAB_PAD), jnp.float32)  # outputs[:, 0] stays zero
    x_scr[...] = emb_all[0]                              # first input = target[:, 0]

    for t in range(1, T):
        xt = x_scr[...]
        for l in range(N_LAYERS):
            wih, whh, bi_b, bhn_b = dlayers[l]
            gi = _dotw(xt, wih) + bi_b                   # ONE input-gate matmul / layer
            gh = _dotw(h[l], whh) + bhn_b                # ONE recurrent matmul / layer
            h[l] = _gru_cell(h[l], gi, gh, Hd)
            xt = h[l]
        # fused embedding2vocab1 -> 2 -> 3 head (no activations), lane-padded output
        z1 = _dotw(xt, w1) + b1
        z2 = _dotw(z1, w2) + b2
        logits = _dotw(z2, w3) + b3                      # (B, VOCAB_PAD), pad lanes = -1e9
        out_ref[t] = logits

        if t < T - 1:
            x_scr[...] = emb_all[t]                      # teacher-forced input (default)

            @pl.when(tf_ref[t] == 0)                     # greedy path only when not forced
            def _():
                m = jnp.max(logits, axis=-1, keepdims=True)
                lane = jax.lax.broadcasted_iota(jnp.int32, logits.shape, 1)
                top1 = jnp.min(jnp.where(logits >= m, lane, VOCAB_PAD),
                               axis=-1, keepdims=True)
                pred_oh = (top1 == jax.lax.broadcasted_iota(jnp.int32, (B, V), 1)
                           ).astype(jnp.float32)
                x_scr[...] = jnp.dot(pred_oh, emb, preferred_element_type=jnp.float32)


# ----------------------------------- parameter init ------------------------------------
def _uniform(key, shape, scale=0.1):
    return jax.random.uniform(key, shape, jnp.float32, -scale, scale)


def init_params(key):
    """PyTorch-layout parameters (same shapes as nn.GRU / nn.Linear)."""
    keys = iter(jax.random.split(key, 64))
    enc = {"embedding": _uniform(next(keys), (EN_VOCAB, EMB_DIM)), "layers": []}
    for l in range(N_LAYERS):
        in_dim = EMB_DIM if l == 0 else 2 * HID_DIM
        dirs = []
        for _d in range(2):  # forward, backward
            dirs.append(dict(
                w_ih=_uniform(next(keys), (3 * HID_DIM, in_dim)),
                w_hh=_uniform(next(keys), (3 * HID_DIM, HID_DIM)),
                b_ih=_uniform(next(keys), (3 * HID_DIM,)),
                b_hh=_uniform(next(keys), (3 * HID_DIM,)),
            ))
        enc["layers"].append(dirs)

    dec = {"embedding": _uniform(next(keys), (CN_VOCAB, EMB_DIM)), "layers": []}
    for l in range(N_LAYERS):
        in_dim = EMB_DIM if l == 0 else DEC_HID
        dec["layers"].append(dict(
            w_ih=_uniform(next(keys), (3 * DEC_HID, in_dim)),
            w_hh=_uniform(next(keys), (3 * DEC_HID, DEC_HID)),
            b_ih=_uniform(next(keys), (3 * DEC_HID,)),
            b_hh=_uniform(next(keys), (3 * DEC_HID,)),
        ))
    dec["head"] = dict(
        w1=_uniform(next(keys), (2 * DEC_HID, DEC_HID)), b1=_uniform(next(keys), (2 * DEC_HID,)),
        w2=_uniform(next(keys), (4 * DEC_HID, 2 * DEC_HID)), b2=_uniform(next(keys), (4 * DEC_HID,)),
        w3=_uniform(next(keys), (CN_VOCAB, 4 * DEC_HID)), b3=_uniform(next(keys), (CN_VOCAB,)),
    )
    return enc, dec


def _fused_biases(p, H):
    """PyTorch GRU biases -> (bi3, bhn3) with bi3=[b_ir+b_hr, b_iz+b_hz, b_in], bhn3=[0,0,b_hn]."""
    b_ih = p["b_ih"].reshape(3, H)
    b_hh = p["b_hh"].reshape(3, H)
    bi = jnp.concatenate([b_ih[0] + b_hh[0], b_ih[1] + b_hh[1], b_ih[2]])
    bhn = jnp.concatenate([jnp.zeros(2 * H, jnp.float32), b_hh[2]])
    return bi, bhn


def _prep_enc_layer(dir_params, wdtype):
    """Fuse both directions + all 3 gates of one encoder layer into single slabs:
       wih6 (Din, 6H), whh6 = blockdiag(Whh_f^T, Whh_b^T) (2H, 6H), bi6 (1,6H), bhn6 (1,6H)."""
    pf, pb = dir_params
    H = HID_DIM
    wih = jnp.concatenate([pf["w_ih"].T, pb["w_ih"].T], axis=1).astype(wdtype)   # (Din, 6H)
    whh = jnp.zeros((2 * H, 6 * H), jnp.float32)
    whh = whh.at[:H, :3 * H].set(pf["w_hh"].T).at[H:, 3 * H:].set(pb["w_hh"].T)
    whh = whh.astype(wdtype)
    bif, bhnf = _fused_biases(pf, H)
    bib, bhnb = _fused_biases(pb, H)
    bi = jnp.concatenate([bif, bib]).reshape(1, 6 * H)
    bhn = jnp.concatenate([bhnf, bhnb]).reshape(1, 6 * H)
    return (wih, whh, bi, bhn)


def _prep_dec_layer(p, wdtype):
    """Fuse all 3 gates of one decoder layer: wih3 (Din, 3Hd), whh3 (Hd, 3Hd)."""
    Hd = DEC_HID
    wih = p["w_ih"].T.astype(wdtype)
    whh = p["w_hh"].T.astype(wdtype)
    bi, bhn = _fused_biases(p, Hd)
    return (wih, whh, bi.reshape(1, 3 * Hd), bhn.reshape(1, 3 * Hd))


def prep_params(enc_raw, dec_raw, wdtype=jnp.bfloat16):
    """One-time packing: transposes, gate/direction fusion, bias fusion, vocab-head lane
    padding, bf16 weight cast — nothing gets re-transposed in the jitted hot path."""
    enc = {
        "embedding": enc_raw["embedding"],                              # f32, exact gather
        "layers": [_prep_enc_layer(layer, wdtype) for layer in enc_raw["layers"]],
    }
    head = dec_raw["head"]
    w3t = head["w3"].T                                                  # (4*DEC_HID, V)
    w3p = jnp.zeros((w3t.shape[0], VOCAB_PAD), jnp.float32).at[:, :CN_VOCAB].set(w3t)
    b3p = jnp.full((1, VOCAB_PAD), -1e9, jnp.float32).at[0, :CN_VOCAB].set(head["b3"])
    dec = {
        "embedding": dec_raw["embedding"],                              # keep f32 (exact lookup)
        "layers": [_prep_dec_layer(l, wdtype) for l in dec_raw["layers"]],
        "head": dict(
            w1=head["w1"].T.astype(wdtype), b1=head["b1"].reshape(1, -1),
            w2=head["w2"].T.astype(wdtype), b2=head["b2"].reshape(1, -1),
            w3=w3p.astype(wdtype), b3=b3p,
        ),
    }
    return enc, dec


# ------------------------------------- model glue ---------------------------------------
@jax.jit
def seq2seq_forward(params, src, tgt, tf_mask):
    """Mirrors Seq2Seq.forward (teacher-forcing flags precomputed so it is jittable).
    Returns (outputs (B, T, CN_VOCAB), preds (B, T-1))."""
    enc, dec = params
    B, T = tgt.shape

    x = jnp.transpose(jnp.take(enc["embedding"], src, axis=0), (1, 0, 2))     # (T, B, EMB)
    tgt_oh = jax.nn.one_hot(jnp.transpose(tgt), CN_VOCAB, dtype=jnp.float32)  # (T, B, V)
    tf = tf_mask.astype(jnp.int32)                                            # (T,) SMEM

    inputs = [x, tgt_oh, tf]
    for lw in enc["layers"]:
        inputs += list(lw)
    inputs.append(dec["embedding"])
    for lw in dec["layers"]:
        inputs += list(lw)
    head = dec["head"]
    inputs += [head["w1"], head["b1"], head["w2"], head["b2"], head["w3"], head["b3"]]

    out_pad = pl.pallas_call(
        seq2seq_kernel,
        out_shape=jax.ShapeDtypeStruct((T, B, VOCAB_PAD), jnp.float32),
        in_specs=[_VMEM, _VMEM, _SMEM] + [_VMEM] * (len(inputs) - 3),
        out_specs=_VMEM,
        scratch_shapes=[
            pltpu.VMEM((T, B, HID_DIM), jnp.float32),   # fwd per-timestep hiddens (layer i/o)
            pltpu.VMEM((T, B, HID_DIM), jnp.float32),   # bwd per-timestep hiddens (layer i/o)
            pltpu.VMEM((B, EMB_DIM), jnp.float32),      # next decoder-input embedding
        ],
    )(*inputs)

    outputs = jnp.transpose(out_pad, (1, 0, 2))[:, :, :CN_VOCAB]       # (B, T, V)
    preds = jnp.argmax(outputs[:, 1:, :], axis=-1).astype(jnp.int32)   # (B, T-1)
    return outputs, preds


# -------------------------------------- run it -----------------------------------------
if __name__ == "__main__":
    random.seed(0)  # teacher-forcing coin flips deterministic (one flip per decode step)
    key = jax.random.PRNGKey(0)
    k_params, k_src, k_tgt = jax.random.split(key, 3)

    B, T = 8, 8   # B >= 8 fills vreg sublanes / MXU rows far better than B = 2
    enc_raw, dec_raw = init_params(k_params)
    params = prep_params(enc_raw, dec_raw)

    src = jax.random.randint(k_src, (B, T), 0, EN_VOCAB, dtype=jnp.int32)
    tgt = jax.random.randint(k_tgt, (B, T), 0, CN_VOCAB, dtype=jnp.int32)

    teacher_forcing_ratio = 1.0
    # Same semantics / call order as `random.random() <= ratio` in the PyTorch loop, drawn
    # up-front so the whole forward can be jitted (flag index 0 is unused).
    tf_mask = jnp.array(
        [1] + [1 if random.random() <= teacher_forcing_ratio else 0 for _ in range(1, T)],
        dtype=jnp.int32)

    outputs, preds = seq2seq_forward(params, src, tgt, tf_mask)
    jax.block_until_ready((outputs, preds))

    assert outputs.shape == (B, T, CN_VOCAB)
    assert preds.shape == (B, T - 1)
    assert bool(jnp.all(outputs[:, 0] == 0.0))
    print("KERNEL_OK")
</pallas_src>

<mosaic_0001>
module attributes {stable_mosaic.version = 11 : i64} {
  func.func @seq2seq_kernel(%arg0: memref<8x8x16xf32, #tpu.memory_space<vmem>>, %arg1: memref<8x8x12xf32, #tpu.memory_space<vmem>>, %arg2: memref<8xi32, #tpu.memory_space<smem>>, %arg3: memref<16x192xbf16, #tpu.memory_space<vmem>>, %arg4: memref<64x192xbf16, #tpu.memory_space<vmem>>, %arg5: memref<1x192xf32, #tpu.memory_space<vmem>>, %arg6: memref<1x192xf32, #tpu.memory_space<vmem>>, %arg7: memref<64x192xbf16, #tpu.memory_space<vmem>>, %arg8: memref<64x192xbf16, #tpu.memory_space<vmem>>, %arg9: memref<1x192xf32, #tpu.memory_space<vmem>>, %arg10: memref<1x192xf32, #tpu.memory_space<vmem>>, %arg11: memref<12x16xf32, #tpu.memory_space<vmem>>, %arg12: memref<16x192xbf16, #tpu.memory_space<vmem>>, %arg13: memref<64x192xbf16, #tpu.memory_space<vmem>>, %arg14: memref<1x192xf32, #tpu.memory_space<vmem>>, %arg15: memref<1x192xf32, #tpu.memory_space<vmem>>, %arg16: memref<64x192xbf16, #tpu.memory_space<vmem>>, %arg17: memref<64x192xbf16, #tpu.memory_space<vmem>>, %arg18: memref<1x192xf32, #tpu.memory_space<vmem>>, %arg19: memref<1x192xf32, #tpu.memory_space<vmem>>, %arg20: memref<64x128xbf16, #tpu.memory_space<vmem>>, %arg21: memref<1x128xf32, #tpu.memory_space<vmem>>, %arg22: memref<128x256xbf16, #tpu.memory_space<vmem>>, %arg23: memref<1x256xf32, #tpu.memory_space<vmem>>, %arg24: memref<256x128xbf16, #tpu.memory_space<vmem>>, %arg25: memref<1x128xf32, #tpu.memory_space<vmem>>, %arg26: memref<8x8x128xf32, #tpu.memory_space<vmem>>, %arg27: memref<8x8x32xf32, #tpu.memory_space<vmem>>, %arg28: memref<8x8x32xf32, #tpu.memory_space<vmem>>, %arg29: memref<8x16xf32, #tpu.memory_space<vmem>>) attributes {dimension_semantics = [], scalar_prefetch = 0 : i64, scratch_operands = 3 : i64, tpu.core_type = #tpu.core_type<tc>} {
    %c0 = arith.constant 0 : index
    %c0_0 = arith.constant 0 : index
    %c0_1 = arith.constant 0 : index
    %0 = vector.load %arg0[%c0, %c0_0, %c0_1] : memref<8x8x16xf32, #tpu.memory_space<vmem>>, vector<8x8x16xf32>
    %c0_2 = arith.constant 0 : index
    %c0_3 = arith.constant 0 : index
    %1 = vector.load %arg3[%c0_2, %c0_3] : memref<16x192xbf16, #tpu.memory_space<vmem>>, vector<16x192xbf16>
    %c0_4 = arith.constant 0 : index
    %c0_5 = arith.constant 0 : index
    %2 = vector.load %arg4[%c0_4, %c0_5] : memref<64x192xbf16, #tpu.memory_space<vmem>>, vector<64x192xbf16>
    %c0_6 = arith.constant 0 : index
    %c0_7 = arith.constant 0 : index
    %3 = vector.load %arg5[%c0_6, %c0_7] : memref<1x192xf32, #tpu.memory_space<vmem>>, vector<1x192xf32>
    %c0_8 = arith.constant 0 : index
    %c0_9 = arith.constant 0 : index
    %4 = vector.load %arg6[%c0_8, %c0_9] : memref<1x192xf32, #tpu.memory_space<vmem>>, vector<1x192xf32>
    %5 = vector.shape_cast %0 : vector<8x8x16xf32> to vector<64x16xf32>
    %6 = arith.truncf %5 : vector<64x16xf32> to vector<64x16xbf16>
    %cst = arith.constant dense<0.000000e+00> : vector<64x192xf32>
    %7 = tpu.matmul %6, %1, %cst {dimension_numbers = #tpu.dot_dimension_numbers<[1], [0], [0], [1], [0, 0, 1, 1], [], []>} : vector<64x16xbf16>, vector<16x192xbf16>, vector<64x192xf32> -> vector<64x192xf32>
    %8 = vector.broadcast %3 : vector<1x192xf32> to vector<64x192xf32>
    %9 = arith.addf %7, %8 : vector<64x192xf32>
    %10 = vector.shape_cast %9 : vector<64x192xf32> to vector<8x8x192xf32>
    %11 = vector.shape_cast %4 : vector<1x192xf32> to vector<1x192xf32>
    %12 = vector.broadcast %11 : vector<1x192xf32> to vector<8x192xf32>
    %cst_10 = arith.constant 0.000000e+00 : f32
    %13 = vector.broadcast %cst_10 : f32 to vector<8x64xf32>
    %14 = arith.truncf %13 : vector<8x64xf32> to vector<8x64xbf16>
    %cst_11 = arith.constant dense<0.000000e+00> : vector<8x192xf32>
    %15 = tpu.matmul %14, %2, %cst_11 {dimension_numbers = #tpu.dot_dimension_numbers<[1], [0], [0], [1], [0, 0, 1, 1], [], []>} : vector<8x64xbf16>, vector<64x192xbf16>, vector<8x192xf32> -> vector<8x192xf32>
    %16 = arith.addf %15, %12 : vector<8x192xf32>
    %17 = vector.extract_strided_slice %13 {offsets = [0, 0], sizes = [8, 32], strides = [1, 1]} : vector<8x64xf32> to vector<8x32xf32>
    %18 = vector.extract_strided_slice %10 {offsets = [0, 0, 0], sizes = [1, 8, 96], strides = [1, 1, 1]} : vector<8x8x192xf32> to vector<1x8x96xf32>
    %19 = vector.shape_cast %18 : vector<1x8x96xf32> to vector<8x96xf32>
    %20 = vector.extract_strided_slice %16 {offsets = [0, 0], sizes = [8, 96], strides = [1, 1]} : vector<8x192xf32> to vector<8x96xf32>
    %21 = vector.extract_strided_slice %19 {offsets = [0, 0], sizes = [8, 32], strides = [1, 1]} : vector<8x96xf32> to vector<8x32xf32>
    %22 = vector.extract_strided_slice %20 {offsets = [0, 0], sizes = [8, 32], strides = [1, 1]} : vector<8x96xf32> to vector<8x32xf32>
    %23 = arith.addf %21, %22 : vector<8x32xf32>
    %24 = arith.negf %23 : vector<8x32xf32>
    %25 = math.exp %24 : vector<8x32xf32>
    %cst_12 = arith.constant 1.000000e+00 : f32
    %26 = vector.broadcast %cst_12 : f32 to vector<8x32xf32>
    %27 = arith.addf %26, %25 : vector<8x32xf32>
    %28 = arith.divf %26, %27 : vector<8x32xf32>
    %29 = vector.extract_strided_slice %19 {offsets = [0, 32], sizes = [8, 32], strides = [1, 1]} : vector<8x96xf32> to vector<8x32xf32>
    %30 = vector.extract_strided_slice %20 {offsets = [0, 32], sizes = [8, 32], strides = [1, 1]} : vector<8x96xf32> to vector<8x32xf32>
    %31 = arith.addf %29, %30 : vector<8x32xf32>
    %32 = arith.negf %31 : vector<8x32xf32>
    %33 = math.exp %32 : vector<8x32xf32>
    %cst_13 = arith.constant 1.000000e+00 : f32
    %34 = vector.broadcast %cst_13 : f32 to vector<8x32xf32>
    %35 = arith.addf %34, %33 : vector<8x32xf32>
    %36 = arith.divf %34, %35 : vector<8x32xf32>
    %37 = vector.extract_strided_slice %19 {offsets = [0, 64], sizes = [8, 32], strides = [1, 1]} : vector<8x96xf32> to vector<8x32xf32>
    %38 = vector.extract_strided_slice %20 {offsets = [0, 64], sizes = [8, 32], strides = [1, 1]} : vector<8x96xf32> to vector<8x32xf32>
    %39 = arith.mulf %28, %38 : vector<8x32xf32>
    %40 = arith.addf %37, %39 : vector<8x32xf32>
    %41 = math.tanh %40 : vector<8x32xf32>
    %cst_14 = arith.constant 1.000000e+00 : f32
    %42 = vector.broadcast %cst_14 : f32 to vector<8x32xf32>
    %43 = arith.subf %42, %36 : vector<8x32xf32>
    %44 = arith.mulf %43, %41 : vector<8x32xf32>
    %45 = arith.mulf %36, %17 : vector<8x32xf32>
    %46 = arith.addf %44, %45 : vector<8x32xf32>
    %47 = vector.extract_strided_slice %13 {offsets = [0, 32], sizes = [8, 32], strides = [1, 1]} : vector<8x64xf32> to vector<8x32xf32>
    %48 = vector.extract_strided_slice %10 {offsets = [7, 0, 96], sizes = [1, 8, 96], strides = [1, 1, 1]} : vector<8x8x192xf32> to vector<1x8x96xf32>
    %49 = vector.shape_cast %48 : vector<1x8x96xf32> to vector<8x96xf32>
    %50 = vector.extract_strided_slice %16 {offsets = [0, 96], sizes = [8, 96], strides = [1, 1]} : vector<8x192xf32> to vector<8x96xf32>
    %51 = vector.extract_strided_slice %49 {offsets = [0, 0], sizes = [8, 32], strides = [1, 1]} : vector<8x96xf32> to vector<8x32xf32>
    %52 = vector.extract_strided_slice %50 {offsets = [0, 0], sizes = [8, 32], strides = [1, 1]} : vector<8x96xf32> to vector<8x32xf32>
    %53 = arith.addf %51, %52 : vector<8x32xf32>
    %54 = arith.negf %53 : vector<8x32xf32>
    %55 = math.exp %54 : vector<8x32xf32>
    %cst_15 = arith.constant 1.000000e+00 : f32
    %56 = vector.broadcast %cst_15 : f32 to vector<8x32xf32>
    %57 = arith.addf %56, %55 : vector<8x32xf32>
    %58 = arith.divf %56, %57 : vector<8x32xf32>
    %59 = vector.extract_strided_slice %49 {offsets = [0, 32], sizes = [8, 32], strides = [1, 1]} : vector<8x96xf32> to vector<8x32xf32>
    %60 = vector.extract_strided_slice %50 {offsets = [0, 32], sizes = [8, 32], strides = [1, 1]} : vector<8x96xf32> to vector<8x32xf32>
    %61 = arith.addf %59, %60 : vector<8x32xf32>
    %62 = arith.negf %61 : vector<8x32xf32>
    %63 = math.exp %62 : vector<8x32xf32>
    %cst_16 = arith.constant 1.000000e+00 : f32
    %64 = vector.broadcast %cst_16 : f32 to vector<8x32xf32>
    %65 = arith.addf %64, %63 : vector<8x32xf32>
    %66 = arith.divf %64, %65 : vector<8x32xf32>
    %67 = vector.extract_strided_slice %49 {offsets = [0, 64], sizes = [8, 32], strides = [1, 1]} : vector<8x96xf32> to vector<8x32xf32>
    %68 = vector.extract_strided_slice %50 {offsets = [0, 64], sizes = [8, 32], strides = [1, 1]} : vector<8x96xf32> to vector<8x32xf32>
    %69 = arith.mulf %58, %68 : vector<8x32xf32>
    %70 = arith.addf %67, %69 : vector<8x32xf32>
    %71 = math.tanh %70 : vector<8x32xf32>
    %cst_17 = arith.constant 1.000000e+00 : f32
    %72 = vector.broadcast %cst_17 : f32 to vector<8x32xf32>
    %73 = arith.subf %72, %66 : vector<8x32xf32>
    %74 = arith.mulf %73, %71 : vector<8x32xf32>
    %75 = arith.mulf %66, %47 : vector<8x32xf32>
    %76 = arith.addf %74, %75 : vector<8x32xf32>
    %77 = tpu.concatenate %46, %76 in 1 : vector<8x32xf32>, vector<8x32xf32> -> vector<8x64xf32>
    %c0_18 = arith.constant 0 : index
    %c0_19 = arith.constant 0 : index
    %c0_20 = arith.constant 0 : index
    %78 = vector.load %arg27[%c0_18, %c0_19, %c0_20] : memref<8x8x32xf32, #tpu.memory_space<vmem>>, vector<1x8x32xf32>
    %79 = vector.shape_cast %78 : vector<1x8x32xf32> to vector<8x32xf32>
    %80 = vector.shape_cast %46 : vector<8x32xf32> to vector<1x8x32xf32>
    tpu.vector_store %arg27[%c0_18, %c0_19, %c0_20], %80 {strides = array<i32>} : memref<8x8x32xf32, #tpu.memory_space<vmem>>, vector<1x8x32xf32>,
    %c7 = arith.constant 7 : index
    %c0_21 = arith.constant 0 : index
    %c0_22 = arith.constant 0 : index
    %81 = vector.load %arg28[%c7, %c0_21, %c0_22] : memref<8x8x32xf32, #tpu.memory_space<vmem>>, vector<1x8x32xf32>
    %82 = vector.shape_cast %81 : vector<1x8x32xf32> to vector<8x32xf32>
    %83 = vector.shape_cast %76 : vector<8x32xf32> to vector<1x8x32xf32>
    tpu.vector_store %arg28[%c7, %c0_21, %c0_22], %83 {strides = array<i32>} : memref<8x8x32xf32, #tpu.memory_space<vmem>>, vector<1x8x32xf32>,
    %84 = arith.truncf %77 : vector<8x64xf32> to vector<8x64xbf16>
    %cst_23 = arith.constant dense<0.000000e+00> : vector<8x192xf32>
    %85 = tpu.matmul %84, %2, %cst_23 {dimension_numbers = #tpu.dot_dimension_numbers<[1], [0], [0], [1], [0, 0, 1, 1], [], []>} : vector<8x64xbf16>, vector<64x192xbf16>, vector<8x192xf32> -> vector<8x192xf32>
    %86 = arith.addf %85, %12 : vector<8x192xf32>
    %87 = vector.extract_strided_slice %77 {offsets = [0, 0], sizes = [8, 32], strides = [1, 1]} : vector<8x64xf32> to vector<8x32xf32>
    %88 = vector.extract_strided_slice %10 {offsets = [1, 0, 0], sizes = [1, 8, 96], strides = [1, 1, 1]} : vector<8x8x192xf32> to vector<1x8x96xf32>
    %89 = vector.shape_cast %88 : vector<1x8x96xf32> to vector<8x96xf32>
    %90 = vector.extract_strided_slice %86 {offsets = [0, 0], sizes = [8, 96], strides = [1, 1]} : vector<8x192xf32> to vector<8x96xf32>
    %91 = vector.extract_strided_slice %89 {offsets = [0, 0], sizes = [8, 32], strides = [1, 1]} : vector<8x96xf32> to vector<8x32xf32>
    %92 = vector.extract_strided_slice %90 {offsets = [0, 0], sizes = [8, 32], strides = [1, 1]} : vector<8x96xf32> to vector<8x32xf32>
    %93 = arith.addf %91, %92 : vector<8x32xf32>
    %94 = arith.negf %93 : vector<8x32xf32>
    %95 = math.exp %94 : vector<8x32xf32>
    %cst_24 = arith.constant 1.000000e+00 : f32
    %96 = vector.broadcast %cst_24 : f32 to vector<8x32xf32>
    %97 = arith.addf %96, %95 : vector<8x32xf32>
    %98 = arith.divf %96, %97 : vector<8x32xf32>
    %99 = vector.extract_strided_slice %89 {offsets = [0, 32], sizes = [8, 32], strides = [1, 1]} : vector<8x96xf32> to vector<8x32xf32>
    %100 = vector.extract_strided_slice %90 {offsets = [0, 32], sizes = [8, 32], strides = [1, 1]} : vector<8x96xf32> to vector<8x32xf32>
    %101 = arith.addf %99, %100 : vector<8x32xf32>
    %102 = arith.negf %101 : vector<8x32xf32>
    %103 = math.exp %102 : vector<8x32xf32>
    %cst_25 = arith.constant 1.000000e+00 : f32
    %104 = vector.broadcast %cst_25 : f32 to vector<8x32xf32>
    %105 = arith.addf %104, %103 : vector<8x32xf32>
    %106 = arith.divf %104, %105 : vector<8x32xf32>
    %107 = vector.extract_strided_slice %89 {offsets = [0, 64], sizes = [8, 32], strides = [1, 1]} : vector<8x96xf32> to vector<8x32xf32>
    %108 = vector.extract_strided_slice %90 {offsets = [0, 64], sizes = [8, 32], strides = [1, 1]} : vector<8x96xf32> to vector<8x32xf32>
    %109 = arith.mulf %98, %108 : vector<8x32xf32>
    %110 = arith.addf %107, %109 : vector<8x32xf32>
    %111 = math.tanh %110 : vector<8x32xf32>
    %cst_26 = arith.constant 1.000000e+00 : f32
    %112 = vector.broadcast %cst_26 : f32 to vector<8x32xf32>
    %113 = arith.subf %112, %106 : vector<8x32xf32>
    %114 = arith.mulf %113, %111 : vector<8x32xf32>
    %115 = arith.mulf %106, %87 : vector<8x32xf32>
    %116 = arith.addf %114, %115 : vector<8x32xf32>
    %117 = vector.extract_strided_slice %77 {offsets = [0, 32], sizes = [8, 32], strides = [1, 1]} : vector<8x64xf32> to vector<8x32xf32>
    %118 = vector.extract_strided_slice %10 {offsets = [6, 0, 96], sizes = [1, 8, 96], strides = [1, 1, 1]} : vector<8x8x192xf32> to vector<1x8x96xf32>
    %119 = vector.shape_cast %118 : vector<1x8x96xf32> to vector<8x96xf32>
    %120 = vector.extract_strided_slice %86 {offsets = [0, 96], sizes = [8, 96], strides = [1, 1]} : vector<8x192xf32> to vector<8x96xf32>
    %121 = vector.extract_strided_slice %119 {offsets = [0, 0], sizes = [8, 32], strides = [1, 1]} : vector<8x96xf32> to vector<8x32xf32>
    %122 = vector.extract_strided_slice %120 {offsets = [0, 0], sizes = [8, 32], strides = [1, 1]} : vector<8x96xf32> to vector<8x32xf32>
    %123 = arith.addf %121, %122 : vector<8x32xf32>
    %124 = arith.negf %123 : vector<8x32xf32>
    %125 = math.exp %124 : vector<8x32xf32>
    %cst_27 = arith.constant 1.000000e+00 : f32
    %126 = vector.broadcast %cst_27 : f32 to vector<8x32xf32>
    %127 = arith.addf %126, %125 : vector<8x32xf32>
    %128 = arith.divf %126, %127 : vector<8x32xf32>
    %129 = vector.extract_strided_slice %119 {offsets = [0, 32], sizes = [8, 32], strides = [1, 1]} : vector<8x96xf32> to vector<8x32xf32>
    %130 = vector.extract_strided_slice %120 {offsets = [0, 32], sizes = [8, 32], strides = [1, 1]} : vector<8x96xf32> to vector<8x32xf32>
    %131 = arith.addf %129, %130 : vector<8x32xf32>
    %132 = arith.negf %131 : vector<8x32xf32>
    %133 = math.exp %132 : vector<8x32xf32>
    %cst_28 = arith.constant 1.000000e+00 : f32
    %134 = vector.broadcast %cst_28 : f32 to vector<8x32xf32>
    %135 = arith.addf %134, %133 : vector<8x32xf32>
    %136 = arith.divf %134, %135 : vector<8x32xf32>
    %137 = vector.extract_strided_slice %119 {offsets = [0, 64], sizes = [8, 32], strides = [1, 1]} : vector<8x96xf32> to vector<8x32xf32>
    %138 = vector.extract_strided_slice %120 {offsets = [0, 64], sizes = [8, 32], strides = [1, 1]} : vector<8x96xf32> to vector<8x32xf32>
    %139 = arith.mulf %128, %138 : vector<8x32xf32>
    %140 = arith.addf %137, %139 : vector<8x32xf32>
    %141 = math.tanh %140 : vector<8x32xf32>
    %cst_29 = arith.constant 1.000000e+00 : f32
    %142 = vector.broadcast %cst_29 : f32 to vector<8x32xf32>
    %143 = arith.subf %142, %136 : vector<8x32xf32>
    %144 = arith.mulf %143, %141 : vector<8x32xf32>
    %145 = arith.mulf %136, %117 : vector<8x32xf32>
    %146 = arith.addf %144, %145 : vector<8x32xf32>
    %147 = tpu.concatenate %116, %146 in 1 : vector<8x32xf32>, vector<8x32xf32> -> vector<8x64xf32>
    %c1 = arith.constant 1 : index
    %c0_30 = arith.constant 0 : index
    %c0_31 = arith.constant 0 : index
    %148 = vector.load %arg27[%c1, %c0_30, %c0_31] : memref<8x8x32xf32, #tpu.memory_space<vmem>>, vector<1x8x32xf32>
    %149 = vector.shape_cast %148 : vector<1x8x32xf32> to vector<8x32xf32>
    %150 = vector.shape_cast %116 : vector<8x32xf32> to vector<1x8x32xf32>
    tpu.vector_store %arg27[%c1, %c0_30, %c0_31], %150 {strides = array<i32>} : memref<8x8x32xf32, #tpu.memory_space<vmem>>, vector<1x8x32xf32>,
    %c6 = arith.constant 6 : index
    %c0_32 = arith.constant 0 : index
    %c0_33 = arith.constant 0 : index
    %151 = vector.load %arg28[%c6, %c0_32, %c0_33] : memref<8x8x32xf32, #tpu.memory_space<vmem>>, vector<1x8x32xf32>
    %152 = vector.shape_cast %151 : vector<1x8x32xf32> to vector<8x32xf32>
    %153 = vector.shape_cast %146 : vector<8x32xf32> to vector<1x8x32xf32>
    tpu.vector_store %arg28[%c6, %c0_32, %c0_33], %153 {strides = array<i32>} : memref<8x8x32xf32, #tpu.memory_space<vmem>>, vector<1x8x32xf32>,
    %154 = arith.truncf %147 : vector<8x64xf32> to vector<8x64xbf16>
    %cst_34 = arith.constant dense<0.000000e+00> : vector<8x192xf32>
    %155 = tpu.matmul %154, %2, %cst_34 {dimension_numbers = #tpu.dot_dimension_numbers<[1], [0], [0], [1], [0, 0, 1, 1], [], []>} : vector<8x64xbf16>, vector<64x192xbf16>, vector<8x192xf32> -> vector<8x192xf32>
    %156 = arith.addf %155, %12 : vector<8x192xf32>
    %157 = vector.extract_strided_slice %147 {offsets = [0, 0], sizes = [8, 32], strides = [1, 1]} : vector<8x64xf32> to vector<8x32xf32>
    %158 = vector.extract_strided_slice %10 {offsets = [2, 0, 0], sizes = [1, 8, 96], strides = [1, 1, 1]} : vector<8x8x192xf32> to vector<1x8x96xf32>
    %159 = vector.shape_cast %158 : vector<1x8x96xf32> to vector<8x96xf32>
    %160 = vector.extract_strided_slice %156 {offsets = [0, 0], sizes = [8, 96], strides = [1, 1]} : vector<8x192xf32> to vector<8x96xf32>
    %161 = vector.extract_strided_slice %159 {offsets = [0, 0], sizes = [8, 32], strides = [1, 1]} : vector<8x96xf32> to vector<8x32xf32>
    %162 = vector.extract_strided_slice %160 {offsets = [0, 0], sizes = [8, 32], strides = [1, 1]} : vector<8x96xf32> to vector<8x32xf32>
    %163 = arith.addf %161, %162 : vector<8x32xf32>
    %164 = arith.negf %163 : vector<8x32xf32>
    %165 = math.exp %164 : vector<8x32xf32>
    %cst_35 = arith.constant 1.000000e+00 : f32
    %166 = vector.broadcast %cst_35 : f32 to vector<8x32xf32>
    %167 = arith.addf %166, %165 : vector<8x32xf32>
    %168 = arith.divf %166, %167 : vector<8x32xf32>
    %169 = vector.extract_strided_slice %159 {offsets = [0, 32], sizes = [8, 32], strides = [1, 1]} : vector<8x96xf32> to vector<8x32xf32>
    %170 = vector.extract_strided_slice %160 {offsets = [0, 32], sizes = [8, 32], strides = [1, 1]} : vector<8x96xf32> to vector<8x32xf32>
    %171 = arith.addf %169, %170 : vector<8x32xf32>
    %172 = arith.negf %171 : vector<8x32xf32>
    %173 = math.exp %172 : vector<8x32xf32>
    %cst_36 = arith.constant 1.000000e+00 : f32
    %174 = vector.broadcast %cst_36 : f32 to vector<8x32xf32>
    %175 = arith.addf %174, %173 : vector<8x32xf32>
    %176 = arith.divf %174, %175 : vector<8x32xf32>
    %177 = vector.extract_strided_slice %159 {offsets = [0, 64], sizes = [8, 32], strides = [1, 1]} : vector<8x96xf32> to vector<8x32xf32>
    %178 = vector.extract_strided_slice %160 {offsets = [0, 64], sizes = [8, 32], strides = [1, 1]} : vector<8x96xf32> to vector<8x32xf32>
    %179 = arith.mulf %168, %178 : vector<8x32xf32>
    %180 = arith.addf %177, %179 : vector<8x32xf32>
    %181 = math.tanh %180 : vector<8x32xf32>
    %cst_37 = arith.constant 1.000000e+00 : f32
    %182 = vector.broadcast %cst_37 : f32 to vector<8x32xf32>
    %183 = arith.subf %182, %176 : vector<8x32xf32>
    %184 = arith.mulf %183, %181 : vector<8x32xf32>
    %185 = arith.mulf %176, %157 : vector<8x32xf32>
    %186 = arith.addf %184, %185 : vector<8x32xf32>
    %187 = vector.extract_strided_slice %147 {offsets = [0, 32], sizes = [8, 32], strides = [1, 1]} : vector<8x64xf32> to vector<8x32xf32>
    %188 = vector.extract_strided_slice %10 {offsets = [5, 0, 96], sizes = [1, 8, 96], strides = [1, 1, 1]} : vector<8x8x192xf32> to vector<1x8x96xf32>
    %189 = vector.shape_cast %188 : vector<1x8x96xf32> to vector<8x96xf32>
    %190 = vector.extract_strided_slice %156 {offsets = [0, 96], sizes = [8, 96], strides = [1, 1]} : vector<8x192xf32> to vector<8x96xf32>
    %191 = vector.extract_strided_slice %189 {offsets = [0, 0], sizes = [8, 32], strides = [1, 1]} : vector<8x96xf32> to vector<8x32xf32>
    %192 = vector.extract_strided_slice %190 {offsets = [0, 0], sizes = [8, 32], strides = [1, 1]} : vector<8x96xf32> to vector<8x32xf32>
    %193 = arith.addf %191, %192 : vector<8x32xf32>
    %194 = arith.negf %193 : vector<8x32xf32>
    %195 = math.exp %194 : vector<8x32xf32>
    %cst_38 = arith.constant 1.000000e+00 : f32
    %196 = vector.broadcast %cst_38 : f32 to vector<8x32xf32>
    %197 = arith.addf %196, %195 : vector<8x32xf32>
    %198 = arith.divf %196, %197 : vector<8x32xf32>
    %199 = vector.extract_strided_slice %189 {offsets = [0, 32], sizes = [8, 32], strides = [1, 1]} : vector<8x96xf32> to vector<8x32xf32>
    %200 = vector.extract_strided_slice %190 {offsets = [0, 32], sizes = [8, 32], strides = [1, 1]} : vector<8x96xf32> to vector<8x32xf32>
    %201 = arith.addf %199, %200 : vector<8x32xf32>
    %202 = arith.negf %201 : vector<8x32xf32>
    %203 = math.exp %202 : vector<8x32xf32>
    %cst_39 = arith.constant 1.000000e+00 : f32
    %204 = vector.broadcast %cst_39 : f32 to vector<8x32xf32>
    %205 = arith.addf %204, %203 : vector<8x32xf32>
    %206 = arith.divf %204, %205 : vector<8x32xf32>
    %207 = vector.extract_strided_slice %189 {offsets = [0, 64], sizes = [8, 32], strides = [1, 1]} : vector<8x96xf32> to vector<8x32xf32>
    %208 = vector.extract_strided_slice %190 {offsets = [0, 64], sizes = [8, 32], strides = [1, 1]} : vector<8x96xf32> to vector<8x32xf32>
    %209 = arith.mulf %198, %208 : vector<8x32xf32>
    %210 = arith.addf %207, %209 : vector<8x32xf32>
    %211 = math.tanh %210 : vector<8x32xf32>
    %cst_40 = arith.constant 1.000000e+00 : f32
    %212 = vector.broadcast %cst_40 : f32 to vector<8x32xf32>
    %213 = arith.subf %212, %206 : vector<8x32xf32>
    %214 = arith.mulf %213, %211 : vector<8x32xf32>
    %215 = arith.mulf %206, %187 : vector<8x32xf32>
    %216 = arith.addf %214, %215 : vector<8x32xf32>
    %217 = tpu.concatenate %186, %216 in 1 : vector<8x32xf32>, vector<8x32xf32> -> vector<8x64xf32>
    %c2 = arith.constant 2 : index
    %c0_41 = arith.constant 0 : index
    %c0_42 = arith.constant 0 : index
    %218 = vector.load %arg27[%c2, %c0_41, %c0_42] : memref<8x8x32xf32, #tpu.memory_space<vmem>>, vector<1x8x32xf32>
    %219 = vector.shape_cast %218 : vector<1x8x32xf32> to vector<8x32xf32>
    %220 = vector.shape_cast %186 : vector<8x32xf32> to vector<1x8x32xf32>
    tpu.vector_store %arg27[%c2, %c0_41, %c0_42], %220 {strides = array<i32>} : memref<8x8x32xf32, #tpu.memory_space<vmem>>, vector<1x8x32xf32>,
    %c5 = arith.constant 5 : index
    %c0_43 = arith.constant 0 : index
    %c0_44 = arith.constant 0 : index
    %221 = vector.load %arg28[%c5, %c0_43, %c0_44] : memref<8x8x32xf32, #tpu.memory_space<vmem>>, vector<1x8x32xf32>
    %222 = vector.shape_cast %221 : vector<1x8x32xf32> to vector<8x32xf32>
    %223 = vector.shape_cast %216 : vector<8x32xf32> to vector<1x8x32xf32>
    tpu.vector_store %arg28[%c5, %c0_43, %c0_44], %223 {strides = array<i32>} : memref<8x8x32xf32, #tpu.memory_space<vmem>>, vector<1x8x32xf32>,
    %224 = arith.truncf %217 : vector<8x64xf32> to vector<8x64xbf16>
    %cst_45 = arith.constant dense<0.000000e+00> : vector<8x192xf32>
    %225 = tpu.matmul %224, %2, %cst_45 {dimension_numbers = #tpu.dot_dimension_numbers<[1], [0], [0], [1], [0, 0, 1, 1], [], []>} : vector<8x64xbf16>, vector<64x192xbf16>, vector<8x192xf32> -> vector<8x192xf32>
    %226 = arith.addf %225, %12 : vector<8x192xf32>
    %227 = vector.extract_strided_slice %217 {offsets = [0, 0], sizes = [8, 32], strides = [1, 1]} : vector<8x64xf32> to vector<8x32xf32>
    %228 = vector.extract_strided_slice %10 {offsets = [3, 0, 0], sizes = [1, 8, 96], strides = [1, 1, 1]} : vector<8x8x192xf32> to vector<1x8x96xf32>
    %229 = vector.shape_cast %228 : vector<1x8x96xf32> to vector<8x96xf32>
    %230 = vector.extract_strided_slice %226 {offsets = [0, 0], sizes = [8, 96], strides = [1, 1]} : vector<8x192xf32> to vector<8x96xf32>
    %231 = vector.extract_strided_slice %229 {offsets = [0, 0], sizes = [8, 32], strides = [1, 1]} : vector<8x96xf32> to vector<8x32xf32>
    %232 = vector.extract_strided_slice %230 {offsets = [0, 0], sizes = [8, 32], strides = [1, 1]} : vector<8x96xf32> to vector<8x32xf32>
    %233 = arith.addf %231, %232 : vector<8x32xf32>
    %234 = arith.negf %233 : vector<8x32xf32>
    %235 = math.exp %234 : vector<8x32xf32>
    %cst_46 = arith.constant 1.000000e+00 : f32
    %236 = vector.broadcast %cst_46 : f32 to vector<8x32xf32>
    %237 = arith.addf %236, %235 : vector<8x32xf32>
    %238 = arith.divf %236, %237 : vector<8x32xf32>
    %239 = vector.extract_strided_slice %229 {offsets = [0, 32], sizes = [8, 32], strides = [1, 1]} : vector<8x96xf32> to vector<8x32xf32>
    %240 = vector.extract_strided_slice %230 {offsets = [0, 32], sizes = [8, 32], strides = [1, 1]} : vector<8x96xf32> to vector<8x32xf32>
    %241 = arith.addf %239, %240 : vector<8x32xf32>
    %242 = arith.negf %241 : vector<8x32xf32>
    %243 = math.exp %242 : vector<8x32xf32>
    %cst_47 = arith.constant 1.000000e+00 : f32
    %244 = vector.broadcast %cst_47 : f32 to vector<8x32xf32>
    %245 = arith.addf %244, %243 : vector<8x32xf32>
    %246 = arith.divf %244, %245 : vector<8x32xf32>
    %247 = vector.extract_strided_slice %229 {offsets = [0, 64], sizes = [8, 32], strides = [1, 1]} : vector<8x96xf32> to vector<8x32xf32>
    %248 = vector.extract_strided_slice %230 {offsets = [0, 64], sizes = [8, 32], strides = [1, 1]} : vector<8x96xf32> to vector<8x32xf32>
    %249 = arith.mulf %238, %248 : vector<8x32xf32>
    %250 = arith.addf %247, %249 : vector<8x32xf32>
    %251 = math.tanh %250 : vector<8x32xf32>
    %cst_48 = arith.constant 1.000000e+00 : f32
    %252 = vector.broadcast %cst_48 : f32 to vector<8x32xf32>
    %253 = arith.subf %252, %246 : vector<8x32xf32>
    %254 = arith.mulf %253, %251 : vector<8x32xf32>
    %255 = arith.mulf %246, %227 : vector<8x32xf32>
    %256 = arith.addf %254, %255 : vector<8x32xf32>
    %257 = vector.extract_strided_slice %217 {offsets = [0, 32], sizes = [8, 32], strides = [1, 1]} : vector<8x64xf32> to vector<8x32xf32>
    %258 = vector.extract_strided_slice %10 {offsets = [4, 0, 96], sizes = [1, 8, 96], strides = [1, 1, 1]} : vector<8x8x192xf32> to vector<1x8x96xf32>
    %259 = vector.shape_cast %258 : vector<1x8x96xf32> to vector<8x96xf32>
    %260 = vector.extract_strided_slice %226 {offsets = [0, 96], sizes = [8, 96], strides = [1, 1]} : vector<8x192xf32> to vector<8x96xf32>
    %261 = vector.extract_strided_slice %259 {offsets = [0, 0], sizes = [8, 32], strides = [1, 1]} : vector<8x96xf32> to vector<8x32xf32>
    %262 = vector.extract_strided_slice %260 {offsets = [0, 0], sizes = [8, 32], strides = [1, 1]} : vector<8x96xf32> to vector<8x32xf32>
    %263 = arith.addf %261, %262 : vector<8x32xf32>
    %264 = arith.negf %263 : vector<8x32xf32>
    %265 = math.exp %264 : vector<8x32xf32>
    %cst_49 = arith.constant 1.000000e+00 : f32
    %266 = vector.broadcast %cst_49 : f32 to vector<8x32xf32>
    %267 = arith.addf %266, %265 : vector<8x32xf32>
    %268 = arith.divf %266, %267 : vector<8x32xf32>
    %269 = vector.extract_strided_slice %259 {offsets = [0, 32], sizes = [8, 32], strides = [1, 1]} : vector<8x96xf32> to vector<8x32xf32>
    %270 = vector.extract_strided_slice %260 {offsets = [0, 32], sizes = [8, 32], strides = [1, 1]} : vector<8x96xf32> to vector<8x32xf32>
    %271 = arith.addf %269, %270 : vector<8x32xf32>
    %272 = arith.negf %271 : vector<8x32xf32>
    %273 = math.exp %272 : vector<8x32xf32>
    %cst_50 = arith.constant 1.000000e+00 : f32
    %274 = vector.broadcast %cst_50 : f32 to vector<8x32xf32>
    %275 = arith.addf %274, %273 : vector<8x32xf32>
    %276 = arith.divf %274, %275 : vector<8x32xf32>
    %277 = vector.extract_strided_slice %259 {offsets = [0, 64], sizes = [8, 32], strides = [1, 1]} : vector<8x96xf32> to vector<8x32xf32>
    %278 = vector.extract_strided_slice %260 {offsets = [0, 64], sizes = [8, 32], strides = [1, 1]} : vector<8x96xf32> to vector<8x32xf32>
    %279 = arith.mulf %268, %278 : vector<8x32xf32>
    %280 = arith.addf %277, %279 : vector<8x32xf32>
    %281 = math.tanh %280 : vector<8x32xf32>
    %cst_51 = arith.constant 1.000000e+00 : f32
    %282 = vector.broadcast %cst_51 : f32 to vector<8x32xf32>
    %283 = arith.subf %282, %276 : vector<8x32xf32>
    %284 = arith.mulf %283, %281 : vector<8x32xf32>
    %285 = arith.mulf %276, %257 : vector<8x32xf32>
    %286 = arith.addf %284, %285 : vector<8x32xf32>
    %287 = tpu.concatenate %256, %286 in 1 : vector<8x32xf32>, vector<8x32xf32> -> vector<8x64xf32>
    %c3 = arith.constant 3 : index
    %c0_52 = arith.constant 0 : index
    %c0_53 = arith.constant 0 : index
    %288 = vector.load %arg27[%c3, %c0_52, %c0_53] : memref<8x8x32xf32, #tpu.memory_space<vmem>>, vector<1x8x32xf32>
    %289 = vector.shape_cast %288 : vector<1x8x32xf32> to vector<8x32xf32>
    %290 = vector.shape_cast %256 : vector<8x32xf32> to vector<1x8x32xf32>
    tpu.vector_store %arg27[%c3, %c0_52, %c0_53], %290 {strides = array<i32>} : memref<8x8x32xf32, #tpu.memory_space<vmem>>, vector<1x8x32xf32>,
    %c4 = arith.constant 4 : index
    %c0_54 = arith.constant 0 : index
    %c0_55 = arith.constant 0 : index
    %291 = vector.load %arg28[%c4, %c0_54, %c0_55] : memref<8x8x32xf32, #tpu.memory_space<vmem>>, vector<1x8x32xf32>
    %292 = vector.shape_cast %291 : vector<1x8x32xf32> to vector<8x32xf32>
    %293 = vector.shape_cast %286 : vector<8x32xf32> to vector<1x8x32xf32>
    tpu.vector_store %arg28[%c4, %c0_54, %c0_55], %293 {strides = array<i32>} : memref<8x8x32xf32, #tpu.memory_space<vmem>>, vector<1x8x32xf32>,
    %294 = arith.truncf %287 : vector<8x64xf32> to vector<8x64xbf16>
    %cst_56 = arith.constant dense<0.000000e+00> : vector<8x192xf32>
    %295 = tpu.matmul %294, %2, %cst_56 {dimension_numbers = #tpu.dot_dimension_numbers<[1], [0], [0], [1], [0, 0, 1, 1], [], []>} : vector<8x64xbf16>, vector<64x192xbf16>, vector<8x192xf32> -> vector<8x192xf32>
    %296 = arith.addf %295, %12 : vector<8x192xf32>
    %297 = vector.extract_strided_slice %287 {offsets = [0, 0], sizes = [8, 32], strides = [1, 1]} : vector<8x64xf32> to vector<8x32xf32>
    %298 = vector.extract_strided_slice %10 {offsets = [4, 0, 0], sizes = [1, 8, 96], strides = [1, 1, 1]} : vector<8x8x192xf32> to vector<1x8x96xf32>
    %299 = vector.shape_cast %298 : vector<1x8x96xf32> to vector<8x96xf32>
    %300 = vector.extract_strided_slice %296 {offsets = [0, 0], sizes = [8, 96], strides = [1, 1]} : vector<8x192xf32> to vector<8x96xf32>
    %301 = vector.extract_strided_slice %299 {offsets = [0, 0], sizes = [8, 32], strides = [1, 1]} : vector<8x96xf32> to vector<8x32xf32>
    %302 = vector.extract_strided_slice %300 {offsets = [0, 0], sizes = [8, 32], strides = [1, 1]} : vector<8x96xf32> to vector<8x32xf32>
    %303 = arith.addf %301, %302 : vector<8x32xf32>
    %304 = arith.negf %303 : vector<8x32xf32>
    %305 = math.exp %304 : vector<8x32xf32>
    %cst_57 = arith.constant 1.000000e+00 : f32
    %306 = vector.broadcast %cst_57 : f32 to vector<8x32xf32>
    %307 = arith.addf %306, %305 : vector<8x32xf32>
    %308 = arith.divf %306, %307 : vector<8x32xf32>
    %309 = vector.extract_strided_slice %299 {offsets = [0, 32], sizes = [8, 32], strides = [1, 1]} : vector<8x96xf32> to vector<8x32xf32>
    %310 = vector.extract_strided_slice %300 {offsets = [0, 32], sizes = [8, 32], strides = [1, 1]} : vector<8x96xf32> to vector<8x32xf32>
    %311 = arith.addf %309, %310 : vector<8x32xf32>
    %312 = arith.negf %311 : vector<8x32xf32>
    %313 = math.exp %312 : vector<8x32xf32>
    %cst_58 = arith.constant 1.000000e+00 : f32
    %314 = vector.broadcast %cst_58 : f32 to vector<8x32xf32>
    %315 = arith.addf %314, %313 : vector<8x32xf32>
    %316 = arith.divf %314, %315 : vector<8x32xf32>
    %317 = vector.extract_strided_slice %299 {offsets = [0, 64], sizes = [8, 32], strides = [1, 1]} : vector<8x96xf32> to vector<8x32xf32>
    %318 = vector.extract_strided_slice %300 {offsets = [0, 64], sizes = [8, 32], strides = [1, 1]} : vector<8x96xf32> to vector<8x32xf32>
    %319 = arith.mulf %308, %318 : vector<8x32xf32>
    %320 = arith.addf %317, %319 : vector<8x32xf32>
    %321 = math.tanh %320 : vector<8x32xf32>
    %cst_59 = arith.constant 1.000000e+00 : f32
    %322 = vector.broadcast %cst_59 : f32 to vector<8x32xf32>
    %323 = arith.subf %322, %316 : vector<8x32xf32>
    %324 = arith.mulf %323, %321 : vector<8x32xf32>
    %325 = arith.mulf %316, %297 : vector<8x32xf32>
    %326 = arith.addf %324, %325 : vector<8x32xf32>
    %327 = vector.extract_strided_slice %287 {offsets = [0, 32], sizes = [8, 32], strides = [1, 1]} : vector<8x64xf32> to vector<8x32xf32>
    %328 = vector.extract_strided_slice %10 {offsets = [3, 0, 96], sizes = [1, 8, 96], strides = [1, 1, 1]} : vector<8x8x192xf32> to vector<1x8x96xf32>
    %329 = vector.shape_cast %328 : vector<1x8x96xf32> to vector<8x96xf32>
    %330 = vector.extract_strided_slice %296 {offsets = [0, 96], sizes = [8, 96], strides = [1, 1]} : vector<8x192xf32> to vector<8x96xf32>
    %331 = vector.extract_strided_slice %329 {offsets = [0, 0], sizes = [8, 32], strides = [1, 1]} : vector<8x96xf32> to vector<8x32xf32>
    %332 = vector.extract_strided_slice %330 {offsets = [0, 0], sizes = [8, 32], strides = [1, 1]} : vector<8x96xf32> to vector<8x32xf32>
    %333 = arith.addf %331, %332 : vector<8x32xf32>
    %334 = arith.negf %333 : vector<8x32xf32>
    %335 = math.exp %334 : vector<8x32xf32>
    %cst_60 = arith.constant 1.000000e+00 : f32
    %336 = vector.broadcast %cst_60 : f32 to vector<8x32xf32>
    %337 = arith.addf %336, %335 : vector<8x32xf32>
    %338 = arith.divf %336, %337 : vector<8x32xf32>
    %339 = vector.extract_strided_slice %329 {offsets = [0, 32], sizes = [8, 32], strides = [1, 1]} : vector<8x96xf32> to vector<8x32xf32>
    %340 = vector.extract_strided_slice %330 {offsets = [0, 32], sizes = [8, 32], strides = [1, 1]} : vector<8x96xf32> to vector<8x32xf32>
    %341 = arith.addf %339, %340 : vector<8x32xf32>
    %342 = arith.negf %341 : vector<8x32xf32>
    %343 = math.exp %342 : vector<8x32xf32>
    %cst_61 = arith.constant 1.000000e+00 : f32
    %344 = vector.broadcast %cst_61 : f32 to vector<8x32xf32>
    %345 = arith.addf %344, %343 : vector<8x32xf32>
    %346 = arith.divf %344, %345 : vector<8x32xf32>
    %347 = vector.extract_strided_slice %329 {offsets = [0, 64], sizes = [8, 32], strides = [1, 1]} : vector<8x96xf32> to vector<8x32xf32>
    %348 = vector.extract_strided_slice %330 {offsets = [0, 64], sizes = [8, 32], strides = [1, 1]} : vector<8x96xf32> to vector<8x32xf32>
    %349 = arith.mulf %338, %348 : vector<8x32xf32>
    %350 = arith.addf %347, %349 : vector<8x32xf32>
    %351 = math.tanh %350 : vector<8x32xf32>
    %cst_62 = arith.constant 1.000000e+00 : f32
    %352 = vector.broadcast %cst_62 : f32 to vector<8x32xf32>
    %353 = arith.subf %352, %346 : vector<8x32xf32>
    %354 = arith.mulf %353, %351 : vector<8x32xf32>
    %355 = arith.mulf %346, %327 : vector<8x32xf32>
    %356 = arith.addf %354, %355 : vector<8x32xf32>
    %357 = tpu.concatenate %326, %356 in 1 : vector<8x32xf32>, vector<8x32xf32> -> vector<8x64xf32>
    %c4_63 = arith.constant 4 : index
    %c0_64 = arith.constant 0 : index
    %c0_65 = arith.constant 0 : index
    %358 = vector.load %arg27[%c4_63, %c0_64, %c0_65] : memref<8x8x32xf32, #tpu.memory_space<vmem>>, vector<1x8x32xf32>
    %359 = vector.shape_cast %358 : vector<1x8x32xf32> to vector<8x32xf32>
    %360 = vector.shape_cast %326 : vector<8x32xf32> to vector<1x8x32xf32>
    tpu.vector_store %arg27[%c4_63, %c0_64, %c0_65], %360 {strides = array<i32>} : memref<8x8x32xf32, #tpu.memory_space<vmem>>, vector<1x8x32xf32>,
    %c3_66 = arith.constant 3 : index
    %c0_67 = arith.constant 0 : index
    %c0_68 = arith.constant 0 : index
    %361 = vector.load %arg28[%c3_66, %c0_67, %c0_68] : memref<8x8x32xf32, #tpu.memory_space<vmem>>, vector<1x8x32xf32>
    %362 = vector.shape_cast %361 : vector<1x8x32xf32> to vector<8x32xf32>
    %363 = vector.shape_cast %356 : vector<8x32xf32> to vector<1x8x32xf32>
    tpu.vector_store %arg28[%c3_66, %c0_67, %c0_68], %363 {strides = array<i32>} : memref<8x8x32xf32, #tpu.memory_space<vmem>>, vector<1x8x32xf32>,
    %364 = arith.truncf %357 : vector<8x64xf32> to vector<8x64xbf16>
    %cst_69 = arith.constant dense<0.000000e+00> : vector<8x192xf32>
    %365 = tpu.matmul %364, %2, %cst_69 {dimension_numbers = #tpu.dot_dimension_numbers<[1], [0], [0], [1], [0, 0, 1, 1], [], []>} : vector<8x64xbf16>, vector<64x192xbf16>, vector<8x192xf32> -> vector<8x192xf32>
    %366 = arith.addf %365, %12 : vector<8x192xf32>
    %367 = vector.extract_strided_slice %357 {offsets = [0, 0], sizes = [8, 32], strides = [1, 1]} : vector<8x64xf32> to vector<8x32xf32>
    %368 = vector.extract_strided_slice %10 {offsets = [5, 0, 0], sizes = [1, 8, 96], strides = [1, 1, 1]} : vector<8x8x192xf32> to vector<1x8x96xf32>
    %369 = vector.shape_cast %368 : vector<1x8x96xf32> to vector<8x96xf32>
    %370 = vector.extract_strided_slice %366 {offsets = [0, 0], sizes = [8, 96], strides = [1, 1]} : vector<8x192xf32> to vector<8x96xf32>
    %371 = vector.extract_strided_slice %369 {offsets = [0, 0], sizes = [8, 32], strides = [1, 1]} : vector<8x96xf32> to vector<8x32xf32>
    %372 = vector.extract_strided_slice %370 {offsets = [0, 0], sizes = [8, 32], strides = [1, 1]} : vector<8x96xf32> to vector<8x32xf32>
    %373 = arith.addf %371, %372 : vector<8x32xf32>
    %374 = arith.negf %373 : vector<8x32xf32>
    %375 = math.exp %374 : vector<8x32xf32>
    %cst_70 = arith.constant 1.000000e+00 : f32
    %376 = vector.broadcast %cst_70 : f32 to vector<8x32xf32>
    %377 = arith.addf %376, %375 : vector<8x32xf32>
    %378 = arith.divf %376, %377 : vector<8x32xf32>
    %379 = vector.extract_strided_slice %369 {offsets = [0, 32], sizes = [8, 32], strides = [1, 1]} : vector<8x96xf32> to vector<8x32xf32>
    %380 = vector.extract_strided_slice %370 {offsets = [0, 32], sizes = [8, 32], strides = [1, 1]} : vector<8x96xf32> to vector<8x32xf32>
    %381 = arith.addf %379, %380 : vector<8x32xf32>
    %382 = arith.negf %381 : vector<8x32xf32>
    %383 = math.exp %382 : vector<8x32xf32>
    %cst_71 = arith.constant 1.000000e+00 : f32
    %384 = vector.broadcast %cst_71 : f32 to vector<8x32xf32>
    %385 = arith.addf %384, %383 : vector<8x32xf32>
    %386 = arith.divf %384, %385 : vector<8x32xf32>
    %387 = vector.extract_strided_slice %369 {offsets = [0, 64], sizes = [8, 32], strides = [1, 1]} : vector<8x96xf32> to vector<8x32xf32>
    %388 = vector.extract_strided_slice %370 {offsets = [0, 64], sizes = [8, 32], strides = [1, 1]} : vector<8x96xf32> to vector<8x32xf32>
    %389 = arith.mulf %378, %388 : vector<8x32xf32>
    %390 = arith.addf %387, %389 : vector<8x32xf32>
    %391 = math.tanh %390 : vector<8x32xf32>
    %cst_72 = arith.constant 1.000000e+00 : f32
    %392 = vector.broadcast %cst_72 : f32 to vector<8x32xf32>
    %393 = arith.subf %392, %386 : vector<8x32xf32>
    %394 = arith.mulf %393, %391 : vector<8x32xf32>
    %395 = arith.mulf %386, %367 : vector<8x32xf32>
    %396 = arith.addf %394, %395 : vector<8x32xf32>
    %397 = vector.extract_strided_slice %357 {offsets = [0, 32], sizes = [8, 32], strides = [1, 1]} : vector<8x64xf32> to vector<8x32xf32>
    %398 = vector.extract_strided_slice %10 {offsets = [2, 0, 96], sizes = [1, 8, 96], strides = [1, 1, 1]} : vector<8x8x192xf32> to vector<1x8x96xf32>
    %399 = vector.shape_cast %398 : vector<1x8x96xf32> to vector<8x96xf32>
    %400 = vector.extract_strided_slice %366 {offsets = [0, 96], sizes = [8, 96], strides = [1, 1]} : vector<8x192xf32> to vector<8x96xf32>
    %401 = vector.extract_strided_slice %399 {offsets = [0, 0], sizes = [8, 32], strides = [1, 1]} : vector<8x96xf32> to vector<8x32xf32>
    %402 = vector.extract_strided_slice %400 {offsets = [0, 0], sizes = [8, 32], strides = [1, 1]} : vector<8x96xf32> to vector<8x32xf32>
    %403 = arith.addf %401, %402 : vector<8x32xf32>
    %404 = arith.negf %403 : vector<8x32xf32>
    %405 = math.exp %404 : vector<8x32xf32>
    %cst_73 = arith.constant 1.000000e+00 : f32
    %406 = vector.broadcast %cst_73 : f32 to vector<8x32xf32>
    %407 = arith.addf %406, %405 : vector<8x32xf32>
    %408 = arith.divf %406, %407 : vector<8x32xf32>
    %409 = vector.extract_strided_slice %399 {offsets = [0, 32], sizes = [8, 32], strides = [1, 1]} : vector<8x96xf32> to vector<8x32xf32>
    %410 = vector.extract_strided_slice %400 {offsets = [0, 32], sizes = [8, 32], strides = [1, 1]} : vector<8x96xf32> to vector<8x32xf32>
    %411 = arith.addf %409, %410 : vector<8x32xf32>
    %412 = arith.negf %411 : vector<8x32xf32>
    %413 = math.exp %412 : vector<8x32xf32>
    %cst_74 = arith.constant 1.000000e+00 : f32
    %414 = vector.broadcast %cst_74 : f32 to vector<8x32xf32>
    %415 = arith.addf %414, %413 : vector<8x32xf32>
    %416 = arith.divf %414, %415 : vector<8x32xf32>
    %417 = vector.extract_strided_slice %399 {offsets = [0, 64], sizes = [8, 32], strides = [1, 1]} : vector<8x96xf32> to vector<8x32xf32>
    %418 = vector.extract_strided_slice %400 {offsets = [0, 64], sizes = [8, 32], strides = [1, 1]} : vector<8x96xf32> to vector<8x32xf32>
    %419 = arith.mulf %408, %418 : vector<8x32xf32>
    %420 = arith.addf %417, %419 : vector<8x32xf32>
    %421 = math.tanh %420 : vector<8x32xf32>
    %cst_75 = arith.constant 1.000000e+00 : f32
    %422 = vector.broadcast %cst_75 : f32 to vector<8x32xf32>
    %423 = arith.subf %422, %416 : vector<8x32xf32>
    %424 = arith.mulf %423, %421 : vector<8x32xf32>
    %425 = arith.mulf %416, %397 : vector<8x32xf32>
    %426 = arith.addf %424, %425 : vector<8x32xf32>
    %427 = tpu.concatenate %396, %426 in 1 : vector<8x32xf32>, vector<8x32xf32> -> vector<8x64xf32>
    %c5_76 = arith.constant 5 : index
    %c0_77 = arith.constant 0 : index
    %c0_78 = arith.constant 0 : index
    %428 = vector.load %arg27[%c5_76, %c0_77, %c0_78] : memref<8x8x32xf32, #tpu.memory_space<vmem>>, vector<1x8x32xf32>
    %429 = vector.shape_cast %428 : vector<1x8x32xf32> to vector<8x32xf32>
    %430 = vector.shape_cast %396 : vector<8x32xf32> to vector<1x8x32xf32>
    tpu.vector_store %arg27[%c5_76, %c0_77, %c0_78], %430 {strides = array<i32>} : memref<8x8x32xf32, #tpu.memory_space<vmem>>, vector<1x8x32xf32>,
    %c2_79 = arith.constant 2 : index
    %c0_80 = arith.constant 0 : index
    %c0_81 = arith.constant 0 : index
    %431 = vector.load %arg28[%c2_79, %c0_80, %c0_81] : memref<8x8x32xf32, #tpu.memory_space<vmem>>, vector<1x8x32xf32>
    %432 = vector.shape_cast %431 : vector<1x8x32xf32> to vector<8x32xf32>
    %433 = vector.shape_cast %426 : vector<8x32xf32> to vector<1x8x32xf32>
    tpu.vector_store %arg28[%c2_79, %c0_80, %c0_81], %433 {strides = array<i32>} : memref<8x8x32xf32, #tpu.memory_space<vmem>>, vector<1x8x32xf32>,
    %434 = arith.truncf %427 : vector<8x64xf32> to vector<8x64xbf16>
    %cst_82 = arith.constant dense<0.000000e+00> : vector<8x192xf32>
    %435 = tpu.matmul %434, %2, %cst_82 {dimension_numbers = #tpu.dot_dimension_numbers<[1], [0], [0], [1], [0, 0, 1, 1], [], []>} : vector<8x64xbf16>, vector<64x192xbf16>, vector<8x192xf32> -> vector<8x192xf32>
    %436 = arith.addf %435, %12 : vector<8x192xf32>
    %437 = vector.extract_strided_slice %427 {offsets = [0, 0], sizes = [8, 32], strides = [1, 1]} : vector<8x64xf32> to vector<8x32xf32>
    %438 = vector.extract_strided_slice %10 {offsets = [6, 0, 0], sizes = [1, 8, 96], strides = [1, 1, 1]} : vector<8x8x192xf32> to vector<1x8x96xf32>
    %439 = vector.shape_cast %438 : vector<1x8x96xf32> to vector<8x96xf32>
    %440 = vector.extract_strided_slice %436 {offsets = [0, 0], sizes = [8, 96], strides = [1, 1]} : vector<8x192xf32> to vector<8x96xf32>
    %441 = vector.extract_strided_slice %439 {offsets = [0, 0], sizes = [8, 32], strides = [1, 1]} : vector<8x96xf32> to vector<8x32xf32>
    %442 = vector.extract_strided_slice %440 {offsets = [0, 0], sizes = [8, 32], strides = [1, 1]} : vector<8x96xf32> to vector<8x32xf32>
    %443 = arith.addf %441, %442 : vector<8x32xf32>
    %444 = arith.negf %443 : vector<8x32xf32>
    %445 = math.exp %444 : vector<8x32xf32>
    %cst_83 = arith.constant 1.000000e+00 : f32
    %446 = vector.broadcast %cst_83 : f32 to vector<8x32xf32>
    %447 = arith.addf %446, %445 : vector<8x32xf32>
    %448 = arith.divf %446, %447 : vector<8x32xf32>
    %449 = vector.extract_strided_slice %439 {offsets = [0, 32], sizes = [8, 32], strides = [1, 1]} : vector<8x96xf32> to vector<8x32xf32>
    %450 = vector.extract_strided_slice %440 {offsets = [0, 32], sizes = [8, 32], strides = [1, 1]} : vector<8x96xf32> to vector<8x32xf32>
    %451 = arith.addf %449, %450 : vector<8x32xf32>
    %452 = arith.negf %451 : vector<8x32xf32>
    %453 = math.exp %452 : vector<8x32xf32>
    %cst_84 = arith.constant 1.000000e+00 : f32
    %454 = vector.broadcast %cst_84 : f32 to vector<8x32xf32>
    %455 = arith.addf %454, %453 : vector<8x32xf32>
    %456 = arith.divf %454, %455 : vector<8x32xf32>
    %457 = vector.extract_strided_slice %439 {offsets = [0, 64], sizes = [8, 32], strides = [1, 1]} : vector<8x96xf32> to vector<8x32xf32>
    %458 = vector.extract_strided_slice %440 {offsets = [0, 64], sizes = [8, 32], strides = [1, 1]} : vector<8x96xf32> to vector<8x32xf32>
    %459 = arith.mulf %448, %458 : vector<8x32xf32>
    %460 = arith.addf %457, %459 : vector<8x32xf32>
    %461 = math.tanh %460 : vector<8x32xf32>
    %cst_85 = arith.constant 1.000000e+00 : f32
    %462 = vector.broadcast %cst_85 : f32 to vector<8x32xf32>
    %463 = arith.subf %462, %456 : vector<8x32xf32>
    %464 = arith.mulf %463, %461 : vector<8x32xf32>
    %465 = arith.mulf %456, %437 : vector<8x32xf32>
    %466 = arith.addf %464, %465 : vector<8x32xf32>
    %467 = vector.extract_strided_slice %427 {offsets = [0, 32], sizes = [8, 32], strides = [1, 1]} : vector<8x64xf32> to vector<8x32xf32>
    %468 = vector.extract_strided_slice %10 {offsets = [1, 0, 96], sizes = [1, 8, 96], strides = [1, 1, 1]} : vector<8x8x192xf32> to vector<1x8x96xf32>
    %469 = vector.shape_cast %468 : vector<1x8x96xf32> to vector<8x96xf32>
    %470 = vector.extract_strided_slice %436 {offsets = [0, 96], sizes = [8, 96], strides = [1, 1]} : vector<8x192xf32> to vector<8x96xf32>
    %471 = vector.extract_strided_slice %469 {offsets = [0, 0], sizes = [8, 32], strides = [1, 1]} : vector<8x96xf32> to vector<8x32xf32>
    %472 = vector.extract_strided_slice %470 {offsets = [0, 0], sizes = [8, 32], strides = [1, 1]} : vector<8x96xf32> to vector<8x32xf32>
    %473 = arith.addf %471, %472 : vector<8x32xf32>
    %474 = arith.negf %473 : vector<8x32xf32>
    %475 = math.exp %474 : vector<8x32xf32>
    %cst_86 = arith.constant 1.000000e+00 : f32
    %476 = vector.broadcast %cst_86 : f32 to vector<8x32xf32>
    %477 = arith.addf %476, %475 : vector<8x32xf32>
    %478 = arith.divf %476, %477 : vector<8x32xf32>
    %479 = vector.extract_strided_slice %469 {offsets = [0, 32], sizes = [8, 32], strides = [1, 1]} : vector<8x96xf32> to vector<8x32xf32>
    %480 = vector.extract_strided_slice %470 {offsets = [0, 32], sizes = [8, 32], strides = [1, 1]} : vector<8x96xf32> to vector<8x32xf32>
    %481 = arith.addf %479, %480 : vector<8x32xf32>
    %482 = arith.negf %481 : vector<8x32xf32>
    %483 = math.exp %482 : vector<8x32xf32>
    %cst_87 = arith.constant 1.000000e+00 : f32
    %484 = vector.broadcast %cst_87 : f32 to vector<8x32xf32>
    %485 = arith.addf %484, %483 : vector<8x32xf32>
    %486 = arith.divf %484, %485 : vector<8x32xf32>
    %487 = vector.extract_strided_slice %469 {offsets = [0, 64], sizes = [8, 32], strides = [1, 1]} : vector<8x96xf32> to vector<8x32xf32>
    %488 = vector.extract_strided_slice %470 {offsets = [0, 64], sizes = [8, 32], strides = [1, 1]} : vector<8x96xf32> to vector<8x32xf32>
    %489 = arith.mulf %478, %488 : vector<8x32xf32>
    %490 = arith.addf %487, %489 : vector<8x32xf32>
    %491 = math.tanh %490 : vector<8x32xf32>
    %cst_88 = arith.constant 1.000000e+00 : f32
    %492 = vector.broadcast %cst_88 : f32 to vector<8x32xf32>
    %493 = arith.subf %492, %486 : vector<8x32xf32>
    %494 = arith.mulf %493, %491 : vector<8x32xf32>
    %495 = arith.mulf %486, %467 : vector<8x32xf32>
    %496 = arith.addf %494, %495 : vector<8x32xf32>
    %497 = tpu.concatenate %466, %496 in 1 : vector<8x32xf32>, vector<8x32xf32> -> vector<8x64xf32>
    %c6_89 = arith.constant 6 : index
    %c0_90 = arith.constant 0 : index
    %c0_91 = arith.constant 0 : index
    %498 = vector.load %arg27[%c6_89, %c0_90, %c0_91] : memref<8x8x32xf32, #tpu.memory_space<vmem>>, vector<1x8x32xf32>
    %499 = vector.shape_cast %498 : vector<1x8x32xf32> to vector<8x32xf32>
    %500 = vector.shape_cast %466 : vector<8x32xf32> to vector<1x8x32xf32>
    tpu.vector_store %arg27[%c6_89, %c0_90, %c0_91], %500 {strides = array<i32>} : memref<8x8x32xf32, #tpu.memory_space<vmem>>, vector<1x8x32xf32>,
    %c1_92 = arith.constant 1 : index
    %c0_93 = arith.constant 0 : index
    %c0_94 = arith.constant 0 : index
    %501 = vector.load %arg28[%c1_92, %c0_93, %c0_94] : memref<8x8x32xf32, #tpu.memory_space<vmem>>, vector<1x8x32xf32>
    %502 = vector.shape_cast %501 : vector<1x8x32xf32> to vector<8x32xf32>
    %503 = vector.shape_cast %496 : vector<8x32xf32> to vector<1x8x32xf32>
    tpu.vector_store %arg28[%c1_92, %c0_93, %c0_94], %503 {strides = array<i32>} : memref<8x8x32xf32, #tpu.memory_space<vmem>>, vector<1x8x32xf32>,
    %504 = arith.truncf %497 : vector<8x64xf32> to vector<8x64xbf16>
    %cst_95 = arith.constant dense<0.000000e+00> : vector<8x192xf32>
    %505 = tpu.matmul %504, %2, %cst_95 {dimension_numbers = #tpu.dot_dimension_numbers<[1], [0], [0], [1], [0, 0, 1, 1], [], []>} : vector<8x64xbf16>, vector<64x192xbf16>, vector<8x192xf32> -> vector<8x192xf32>
    %506 = arith.addf %505, %12 : vector<8x192xf32>
    %507 = vector.extract_strided_slice %497 {offsets = [0, 0], sizes = [8, 32], strides = [1, 1]} : vector<8x64xf32> to vector<8x32xf32>
    %508 = vector.extract_strided_slice %10 {offsets = [7, 0, 0], sizes = [1, 8, 96], strides = [1, 1, 1]} : vector<8x8x192xf32> to vector<1x8x96xf32>
    %509 = vector.shape_cast %508 : vector<1x8x96xf32> to vector<8x96xf32>
    %510 = vector.extract_strided_slice %506 {offsets = [0, 0], sizes = [8, 96], strides = [1, 1]} : vector<8x192xf32> to vector<8x96xf32>
    %511 = vector.extract_strided_slice %509 {offsets = [0, 0], sizes = [8, 32], strides = [1, 1]} : vector<8x96xf32> to vector<8x32xf32>
    %512 = vector.extract_strided_slice %510 {offsets = [0, 0], sizes = [8, 32], strides = [1, 1]} : vector<8x96xf32> to vector<8x32xf32>
    %513 = arith.addf %511, %512 : vector<8x32xf32>
    %514 = arith.negf %513 : vector<8x32xf32>
    %515 = math.exp %514 : vector<8x32xf32>
    %cst_96 = arith.constant 1.000000e+00 : f32
    %516 = vector.broadcast %cst_96 : f32 to vector<8x32xf32>
    %517 = arith.addf %516, %515 : vector<8x32xf32>
    %518 = arith.divf %516, %517 : vector<8x32xf32>
    %519 = vector.extract_strided_slice %509 {offsets = [0, 32], sizes = [8, 32], strides = [1, 1]} : vector<8x96xf32> to vector<8x32xf32>
    %520 = vector.extract_strided_slice %510 {offsets = [0, 32], sizes = [8, 32], strides = [1, 1]} : vector<8x96xf32> to vector<8x32xf32>
    %521 = arith.addf %519, %520 : vector<8x32xf32>
    %522 = arith.negf %521 : vector<8x32xf32>
    %523 = math.exp %522 : vector<8x32xf32>
    %cst_97 = arith.constant 1.000000e+00 : f32
    %524 = vector.broadcast %cst_97 : f32 to vector<8x32xf32>
    %525 = arith.addf %524, %523 : vector<8x32xf32>
    %526 = arith.divf %524, %525 : vector<8x32xf32>
    %527 = vector.extract_strided_slice %509 {offsets = [0, 64], sizes = [8, 32], strides = [1, 1]} : vector<8x96xf32> to vector<8x32xf32>
    %528 = vector.extract_strided_slice %510 {offsets = [0, 64], sizes = [8, 32], strides = [1, 1]} : vector<8x96xf32> to vector<8x32xf32>
    %529 = arith.mulf %518, %528 : vector<8x32xf32>
    %530 = arith.addf %527, %529 : vector<8x32xf32>
    %531 = math.tanh %530 : vector<8x32xf32>
    %cst_98 = arith.constant 1.000000e+00 : f32
    %532 = vector.broadcast %cst_98 : f32 to vector<8x32xf32>
    %533 = arith.subf %532, %526 : vector<8x32xf32>
    %534 = arith.mulf %533, %531 : vector<8x32xf32>
    %535 = arith.mulf %526, %507 : vector<8x32xf32>
    %536 = arith.addf %534, %535 : vector<8x32xf32>
    %537 = vector.extract_strided_slice %497 {offsets = [0, 32], sizes = [8, 32], strides = [1, 1]} : vector<8x64xf32> to vector<8x32xf32>
    %538 = vector.extract_strided_slice %10 {offsets = [0, 0, 96], sizes = [1, 8, 96], strides = [1, 1, 1]} : vector<8x8x192xf32> to vector<1x8x96xf32>
    %539 = vector.shape_cast %538 : vector<1x8x96xf32> to vector<8x96xf32>
    %540 = vector.extract_strided_slice %506 {offsets = [0, 96], sizes = [8, 96], strides = [1, 1]} : vector<8x192xf32> to vector<8x96xf32>
    %541 = vector.extract_strided_slice %539 {offsets = [0, 0], sizes = [8, 32], strides = [1, 1]} : vector<8x96xf32> to vector<8x32xf32>
    %542 = vector.extract_strided_slice %540 {offsets = [0, 0], sizes = [8, 32], strides = [1, 1]} : vector<8x96xf32> to vector<8x32xf32>
    %543 = arith.addf %541, %542 : vector<8x32xf32>
    %544 = arith.negf %543 : vector<8x32xf32>
    %545 = math.exp %544 : vector<8x32xf32>
    %cst_99 = arith.constant 1.000000e+00 : f32
    %546 = vector.broadcast %cst_99 : f32 to vector<8x32xf32>
    %547 = arith.addf %546, %545 : vector<8x32xf32>
    %548 = arith.divf %546, %547 : vector<8x32xf32>
    %549 = vector.extract_strided_slice %539 {offsets = [0, 32], sizes = [8, 32], strides = [1, 1]} : vector<8x96xf32> to vector<8x32xf32>
    %550 = vector.extract_strided_slice %540 {offsets = [0, 32], sizes = [8, 32], strides = [1, 1]} : vector<8x96xf32> to vector<8x32xf32>
    %551 = arith.addf %549, %550 : vector<8x32xf32>
    %552 = arith.negf %551 : vector<8x32xf32>
    %553 = math.exp %552 : vector<8x32xf32>
    %cst_100 = arith.constant 1.000000e+00 : f32
    %554 = vector.broadcast %cst_100 : f32 to vector<8x32xf32>
    %555 = arith.addf %554, %553 : vector<8x32xf32>
    %556 = arith.divf %554, %555 : vector<8x32xf32>
    %557 = vector.extract_strided_slice %539 {offsets = [0, 64], sizes = [8, 32], strides = [1, 1]} : vector<8x96xf32> to vector<8x32xf32>
    %558 = vector.extract_strided_slice %540 {offsets = [0, 64], sizes = [8, 32], strides = [1, 1]} : vector<8x96xf32> to vector<8x32xf32>
    %559 = arith.mulf %548, %558 : vector<8x32xf32>
    %560 = arith.addf %557, %559 : vector<8x32xf32>
    %561 = math.tanh %560 : vector<8x32xf32>
    %cst_101 = arith.constant 1.000000e+00 : f32
    %562 = vector.broadcast %cst_101 : f32 to vector<8x32xf32>
    %563 = arith.subf %562, %556 : vector<8x32xf32>
    %564 = arith.mulf %563, %561 : vector<8x32xf32>
    %565 = arith.mulf %556, %537 : vector<8x32xf32>
    %566 = arith.addf %564, %565 : vector<8x32xf32>
    %567 = tpu.concatenate %536, %566 in 1 : vector<8x32xf32>, vector<8x32xf32> -> vector<8x64xf32>
    %c7_102 = arith.constant 7 : index
    %c0_103 = arith.constant 0 : index
    %c0_104 = arith.constant 0 : index
    %568 = vector.load %arg27[%c7_102, %c0_103, %c0_104] : memref<8x8x32xf32, #tpu.memory_space<vmem>>, vector<1x8x32xf32>
    %569 = vector.shape_cast %568 : vector<1x8x32xf32> to vector<8x32xf32>
    %570 = vector.shape_cast %536 : vector<8x32xf32> to vector<1x8x32xf32>
    tpu.vector_store %arg27[%c7_102, %c0_103, %c0_104], %570 {strides = array<i32>} : memref<8x8x32xf32, #tpu.memory_space<vmem>>, vector<1x8x32xf32>,
    %c0_105 = arith.constant 0 : index
    %c0_106 = arith.constant 0 : index
    %c0_107 = arith.constant 0 : index
    %571 = vector.load %arg28[%c0_105, %c0_106, %c0_107] : memref<8x8x32xf32, #tpu.memory_space<vmem>>, vector<1x8x32xf32>
    %572 = vector.shape_cast %571 : vector<1x8x32xf32> to vector<8x32xf32>
    %573 = vector.shape_cast %566 : vector<8x32xf32> to vector<1x8x32xf32>
    tpu.vector_store %arg28[%c0_105, %c0_106, %c0_107], %573 {strides = array<i32>} : memref<8x8x32xf32, #tpu.memory_space<vmem>>, vector<1x8x32xf32>,
    %c0_108 = arith.constant 0 : index
    %c0_109 = arith.constant 0 : index
    %c0_110 = arith.constant 0 : index
    %574 = vector.load %arg27[%c0_108, %c0_109, %c0_110] : memref<8x8x32xf32, #tpu.memory_space<vmem>>, vector<8x8x32xf32>
    %c0_111 = arith.constant 0 : index
    %c0_112 = arith.constant 0 : index
    %c0_113 = arith.constant 0 : index
    %575 = vector.load %arg28[%c0_111, %c0_112, %c0_113] : memref<8x8x32xf32, #tpu.memory_space<vmem>>, vector<8x8x32xf32>
    %576 = tpu.concatenate %574, %575 in 2 : vector<8x8x32xf32>, vector<8x8x32xf32> -> vector<8x8x64xf32>
    %c0_114 = arith.constant 0 : index
    %c0_115 = arith.constant 0 : index
    %577 = vector.load %arg7[%c0_114, %c0_115] : memref<64x192xbf16, #tpu.memory_space<vmem>>, vector<64x192xbf16>
    %c0_116 = arith.constant 0 : index
    %c0_117 = arith.constant 0 : index
    %578 = vector.load %arg8[%c0_116, %c0_117] : memref<64x192xbf16, #tpu.memory_space<vmem>>, vector<64x192xbf16>
    %c0_118 = arith.constant 0 : index
    %c0_119 = arith.constant 0 : index
    %579 = vector.load %arg9[%c0_118, %c0_119] : memref<1x192xf32, #tpu.memory_space<vmem>>, vector<1x192xf32>
    %c0_120 = arith.constant 0 : index
    %c0_121 = arith.constant 0 : index
    %580 = vector.load %arg10[%c0_120, %c0_121] : memref<1x192xf32, #tpu.memory_space<vmem>>, vector<1x192xf32>
    %581 = vector.shape_cast %576 : vector<8x8x64xf32> to vector<64x64xf32>
    %582 = arith.truncf %581 : vector<64x64xf32> to vector<64x64xbf16>
    %cst_122 = arith.constant dense<0.000000e+00> : vector<64x192xf32>
    %583 = tpu.matmul %582, %577, %cst_122 {dimension_numbers = #tpu.dot_dimension_numbers<[1], [0], [0], [1], [0, 0, 1, 1], [], []>} : vector<64x64xbf16>, vector<64x192xbf16>, vector<64x192xf32> -> vector<64x192xf32>
    %584 = vector.broadcast %579 : vector<1x192xf32> to vector<64x192xf32>
    %585 = arith.addf %583, %584 : vector<64x192xf32>
    %586 = vector.shape_cast %585 : vector<64x192xf32> to vector<8x8x192xf32>
    %587 = vector.shape_cast %580 : vector<1x192xf32> to vector<1x192xf32>
    %588 = vector.broadcast %587 : vector<1x192xf32> to vector<8x192xf32>
    %cst_123 = arith.constant 0.000000e+00 : f32
    %589 = vector.broadcast %cst_123 : f32 to vector<8x64xf32>
    %590 = arith.truncf %589 : vector<8x64xf32> to vector<8x64xbf16>
    %cst_124 = arith.constant dense<0.000000e+00> : vector<8x192xf32>
    %591 = tpu.matmul %590, %578, %cst_124 {dimension_numbers = #tpu.dot_dimension_numbers<[1], [0], [0], [1], [0, 0, 1, 1], [], []>} : vector<8x64xbf16>, vector<64x192xbf16>, vector<8x192xf32> -> vector<8x192xf32>
    %592 = arith.addf %591, %588 : vector<8x192xf32>
    %593 = vector.extract_strided_slice %589 {offsets = [0, 0], sizes = [8, 32], strides = [1, 1]} : vector<8x64xf32> to vector<8x32xf32>
    %594 = vector.extract_strided_slice %586 {offsets = [0, 0, 0], sizes = [1, 8, 96], strides = [1, 1, 1]} : vector<8x8x192xf32> to vector<1x8x96xf32>
    %595 = vector.shape_cast %594 : vector<1x8x96xf32> to vector<8x96xf32>
    %596 = vector.extract_strided_slice %592 {offsets = [0, 0], sizes = [8, 96], strides = [1, 1]} : vector<8x192xf32> to vector<8x96xf32>
    %597 = vector.extract_strided_slice %595 {offsets = [0, 0], sizes = [8, 32], strides = [1, 1]} : vector<8x96xf32> to vector<8x32xf32>
    %598 = vector.extract_strided_slice %596 {offsets = [0, 0], sizes = [8, 32], strides = [1, 1]} : vector<8x96xf32> to vector<8x32xf32>
    %599 = arith.addf %597, %598 : vector<8x32xf32>
    %600 = arith.negf %599 : vector<8x32xf32>
    %601 = math.exp %600 : vector<8x32xf32>
    %cst_125 = arith.constant 1.000000e+00 : f32
    %602 = vector.broadcast %cst_125 : f32 to vector<8x32xf32>
    %603 = arith.addf %602, %601 : vector<8x32xf32>
    %604 = arith.divf %602, %603 : vector<8x32xf32>
    %605 = vector.extract_strided_slice %595 {offsets = [0, 32], sizes = [8, 32], strides = [1, 1]} : vector<8x96xf32> to vector<8x32xf32>
    %606 = vector.extract_strided_slice %596 {offsets = [0, 32], sizes = [8, 32], strides = [1, 1]} : vector<8x96xf32> to vector<8x32xf32>
    %607 = arith.addf %605, %606 : vector<8x32xf32>
    %608 = arith.negf %607 : vector<8x32xf32>
    %609 = math.exp %608 : vector<8x32xf32>
    %cst_126 = arith.constant 1.000000e+00 : f32
    %610 = vector.broadcast %cst_126 : f32 to vector<8x32xf32>
    %611 = arith.addf %610, %609 : vector<8x32xf32>
    %612 = arith.divf %610, %611 : vector<8x32xf32>
    %613 = vector.extract_strided_slice %595 {offsets = [0, 64], sizes = [8, 32], strides = [1, 1]} : vector<8x96xf32> to vector<8x32xf32>
    %614 = vector.extract_strided_slice %596 {offsets = [0, 64], sizes = [8, 32], strides = [1, 1]} : vector<8x96xf32> to vector<8x32xf32>
    %615 = arith.mulf %604, %614 : vector<8x32xf32>
    %616 = arith.addf %613, %615 : vector<8x32xf32>
    %617 = math.tanh %616 : vector<8x32xf32>
    %cst_127 = arith.constant 1.000000e+00 : f32
    %618 = vector.broadcast %cst_127 : f32 to vector<8x32xf32>
    %619 = arith.subf %618, %612 : vector<8x32xf32>
    %620 = arith.mulf %619, %617 : vector<8x32xf32>
    %621 = arith.mulf %612, %593 : vector<8x32xf32>
    %622 = arith.addf %620, %621 : vector<8x32xf32>
    %623 = vector.extract_strided_slice %589 {offsets = [0, 32], sizes = [8, 32], strides = [1, 1]} : vector<8x64xf32> to vector<8x32xf32>
    %624 = vector.extract_strided_slice %586 {offsets = [7, 0, 96], sizes = [1, 8, 96], strides = [1, 1, 1]} : vector<8x8x192xf32> to vector<1x8x96xf32>
    %625 = vector.shape_cast %624 : vector<1x8x96xf32> to vector<8x96xf32>
    %626 = vector.extract_strided_slice %592 {offsets = [0, 96], sizes = [8, 96], strides = [1, 1]} : vector<8x192xf32> to vector<8x96xf32>
    %627 = vector.extract_strided_slice %625 {offsets = [0, 0], sizes = [8, 32], strides = [1, 1]} : vector<8x96xf32> to vector<8x32xf32>
    %628 = vector.extract_strided_slice %626 {offsets = [0, 0], sizes = [8, 32], strides = [1, 1]} : vector<8x96xf32> to vector<8x32xf32>
    %629 = arith.addf %627, %628 : vector<8x32xf32>
    %630 = arith.negf %629 : vector<8x32xf32>
    %631 = math.exp %630 : vector<8x32xf32>
    %cst_128 = arith.constant 1.000000e+00 : f32
    %632 = vector.broadcast %cst_128 : f32 to vector<8x32xf32>
    %633 = arith.addf %632, %631 : vector<8x32xf32>
    %634 = arith.divf %632, %633 : vector<8x32xf32>
    %635 = vector.extract_strided_slice %625 {offsets = [0, 32], sizes = [8, 32], strides = [1, 1]} : vector<8x96xf32> to vector<8x32xf32>
    %636 = vector.extract_strided_slice %626 {offsets = [0, 32], sizes = [8, 32], strides = [1, 1]} : vector<8x96xf32> to vector<8x32xf32>
    %637 = arith.addf %635, %636 : vector<8x32xf32>
    %638 = arith.negf %637 : vector<8x32xf32>
    %639 = math.exp %638 : vector<8x32xf32>
    %cst_129 = arith.constant 1.000000e+00 : f32
    %640 = vector.broadcast %cst_129 : f32 to vector<8x32xf32>
    %641 = arith.addf %640, %639 : vector<8x32xf32>
    %642 = arith.divf %640, %641 : vector<8x32xf32>
    %643 = vector.extract_strided_slice %625 {offsets = [0, 64], sizes = [8, 32], strides = [1, 1]} : vector<8x96xf32> to vector<8x32xf32>
    %644 = vector.extract_strided_slice %626 {offsets = [0, 64], sizes = [8, 32], strides = [1, 1]} : vector<8x96xf32> to vector<8x32xf32>
    %645 = arith.mulf %634, %644 : vector<8x32xf32>
    %646 = arith.addf %643, %645 : vector<8x32xf32>
    %647 = math.tanh %646 : vector<8x32xf32>
    %cst_130 = arith.constant 1.000000e+00 : f32
    %648 = vector.broadcast %cst_130 : f32 to vector<8x32xf32>
    %649 = arith.subf %648, %642 : vector<8x32xf32>
    %650 = arith.mulf %649, %647 : vector<8x32xf32>
    %651 = arith.mulf %642, %623 : vector<8x32xf32>
    %652 = arith.addf %650, %651 : vector<8x32xf32>
    %653 = tpu.concatenate %622, %652 in 1 : vector<8x32xf32>, vector<8x32xf32> -> vector<8x64xf32>
    %654 = arith.truncf %653 : vector<8x64xf32> to vector<8x64xbf16>
    %cst_131 = arith.constant dense<0.000000e+00> : vector<8x192xf32>
    %655 = tpu.matmul %654, %578, %cst_131 {dimension_numbers = #tpu.dot_dimension_numbers<[1], [0], [0], [1], [0, 0, 1, 1], [], []>} : vector<8x64xbf16>, vector<64x192xbf16>, vector<8x192xf32> -> vector<8x192xf32>
    %656 = arith.addf %655, %588 : vector<8x192xf32>
    %657 = vector.extract_strided_slice %653 {offsets = [0, 0], sizes = [8, 32], strides = [1, 1]} : vector<8x64xf32> to vector<8x32xf32>
    %658 = vector.extract_strided_slice %586 {offsets = [1, 0, 0], sizes = [1, 8, 96], strides = [1, 1, 1]} : vector<8x8x192xf32> to vector<1x8x96xf32>
    %659 = vector.shape_cast %658 : vector<1x8x96xf32> to vector<8x96xf32>
    %660 = vector.extract_strided_slice %656 {offsets = [0, 0], sizes = [8, 96], strides = [1, 1]} : vector<8x192xf32> to vector<8x96xf32>
    %661 = vector.extract_strided_slice %659 {offsets = [0, 0], sizes = [8, 32], strides = [1, 1]} : vector<8x96xf32> to vector<8x32xf32>
    %662 = vector.extract_strided_slice %660 {offsets = [0, 0], sizes = [8, 32], strides = [1, 1]} : vector<8x96xf32> to vector<8x32xf32>
    %663 = arith.addf %661, %662 : vector<8x32xf32>
    %664 = arith.negf %663 : vector<8x32xf32>
    %665 = math.exp %664 : vector<8x32xf32>
    %cst_132 = arith.constant 1.000000e+00 : f32
    %666 = vector.broadcast %cst_132 : f32 to vector<8x32xf32>
    %667 = arith.addf %666, %665 : vector<8x32xf32>
    %668 = arith.divf %666, %667 : vector<8x32xf32>
    %669 = vector.extract_strided_slice %659 {offsets = [0, 32], sizes = [8, 32], strides = [1, 1]} : vector<8x96xf32> to vector<8x32xf32>
    %670 = vector.extract_strided_slice %660 {offsets = [0, 32], sizes = [8, 32], strides = [1, 1]} : vector<8x96xf32> to vector<8x32xf32>
    %671 = arith.addf %669, %670 : vector<8x32xf32>
    %672 = arith.negf %671 : vector<8x32xf32>
    %673 = math.exp %672 : vector<8x32xf32>
    %cst_133 = arith.constant 1.000000e+00 : f32
    %674 = vector.broadcast %cst_133 : f32 to vector<8x32xf32>
    %675 = arith.addf %674, %673 : vector<8x32xf32>
    %676 = arith.divf %674, %675 : vector<8x32xf32>
    %677 = vector.extract_strided_slice %659 {offsets = [0, 64], sizes = [8, 32], strides = [1, 1]} : vector<8x96xf32> to vector<8x32xf32>
    %678 = vector.extract_strided_slice %660 {offsets = [0, 64], sizes = [8, 32], strides = [1, 1]} : vector<8x96xf32> to vector<8x32xf32>
    %679 = arith.mulf %668, %678 : vector<8x32xf32>
    %680 = arith.addf %677, %679 : vector<8x32xf32>
    %681 = math.tanh %680 : vector<8x32xf32>
    %cst_134 = arith.constant 1.000000e+00 : f32
    %682 = vector.broadcast %cst_134 : f32 to vector<8x32xf32>
    %683 = arith.subf %682, %676 : vector<8x32xf32>
    %684 = arith.mulf %683, %681 : vector<8x32xf32>
    %685 = arith.mulf %676, %657 : vector<8x32xf32>
    %686 = arith.addf %684, %685 : vector<8x32xf32>
    %687 = vector.extract_strided_slice %653 {offsets = [0, 32], sizes = [8, 32], strides = [1, 1]} : vector<8x64xf32> to vector<8x32xf32>
    %688 = vector.extract_strided_slice %586 {offsets = [6, 0, 96], sizes = [1, 8, 96], strides = [1, 1, 1]} : vector<8x8x192xf32> to vector<1x8x96xf32>
    %689 = vector.shape_cast %688 : vector<1x8x96xf32> to vector<8x96xf32>
    %690 = vector.extract_strided_slice %656 {offsets = [0, 96], sizes = [8, 96], strides = [1, 1]} : vector<8x192xf32> to vector<8x96xf32>
    %691 = vector.extract_strided_slice %689 {offsets = [0, 0], sizes = [8, 32], strides = [1, 1]} : vector<8x96xf32> to vector<8x32xf32>
    %692 = vector.extract_strided_slice %690 {offsets = [0, 0], sizes = [8, 32], strides = [1, 1]} : vector<8x96xf32> to vector<8x32xf32>
    %693 = arith.addf %691, %692 : vector<8x32xf32>
    %694 = arith.negf %693 : vector<8x32xf32>
    %695 = math.exp %694 : vector<8x32xf32>
    %cst_135 = arith.constant 1.000000e+00 : f32
    %696 = vector.broadcast %cst_135 : f32 to vector<8x32xf32>
    %697 = arith.addf %696, %695 : vector<8x32xf32>
    %698 = arith.divf %696, %697 : vector<8x32xf32>
    %699 = vector.extract_strided_slice %689 {offsets = [0, 32], sizes = [8, 32], strides = [1, 1]} : vector<8x96xf32> to vector<8x32xf32>
    %700 = vector.extract_strided_slice %690 {offsets = [0, 32], sizes = [8, 32], strides = [1, 1]} : vector<8x96xf32> to vector<8x32xf32>
    %701 = arith.addf %699, %700 : vector<8x32xf32>
    %702 = arith.negf %701 : vector<8x32xf32>
    %703 = math.exp %702 : vector<8x32xf32>
    %cst_136 = arith.constant 1.000000e+00 : f32
    %704 = vector.broadcast %cst_136 : f32 to vector<8x32xf32>
    %705 = arith.addf %704, %703 : vector<8x32xf32>
    %706 = arith.divf %704, %705 : vector<8x32xf32>
    %707 = vector.extract_strided_slice %689 {offsets = [0, 64], sizes = [8, 32], strides = [1, 1]} : vector<8x96xf32> to vector<8x32xf32>
    %708 = vector.extract_strided_slice %690 {offsets = [0, 64], sizes = [8, 32], strides = [1, 1]} : vector<8x96xf32> to vector<8x32xf32>
    %709 = arith.mulf %698, %708 : vector<8x32xf32>
    %710 = arith.addf %707, %709 : vector<8x32xf32>
    %711 = math.tanh %710 : vector<8x32xf32>
    %cst_137 = arith.constant 1.000000e+00 : f32
    %712 = vector.broadcast %cst_137 : f32 to vector<8x32xf32>
    %713 = arith.subf %712, %706 : vector<8x32xf32>
    %714 = arith.mulf %713, %711 : vector<8x32xf32>
    %715 = arith.mulf %706, %687 : vector<8x32xf32>
    %716 = arith.addf %714, %715 : vector<8x32xf32>
    %717 = tpu.concatenate %686, %716 in 1 : vector<8x32xf32>, vector<8x32xf32> -> vector<8x64xf32>
    %718 = arith.truncf %717 : vector<8x64xf32> to vector<8x64xbf16>
    %cst_138 = arith.constant dense<0.000000e+00> : vector<8x192xf32>
    %719 = tpu.matmul %718, %578, %cst_138 {dimension_numbers = #tpu.dot_dimension_numbers<[1], [0], [0], [1], [0, 0, 1, 1], [], []>} : vector<8x64xbf16>, vector<64x192xbf16>, vector<8x192xf32> -> vector<8x192xf32>
    %720 = arith.addf %719, %588 : vector<8x192xf32>
    %721 = vector.extract_strided_slice %717 {offsets = [0, 0], sizes = [8, 32], strides = [1, 1]} : vector<8x64xf32> to vector<8x32xf32>
    %722 = vector.extract_strided_slice %586 {offsets = [2, 0, 0], sizes = [1, 8, 96], strides = [1, 1, 1]} : vector<8x8x192xf32> to vector<1x8x96xf32>
    %723 = vector.shape_cast %722 : vector<1x8x96xf32> to vector<8x96xf32>
    %724 = vector.extract_strided_slice %720 {offsets = [0, 0], sizes = [8, 96], strides = [1, 1]} : vector<8x192xf32> to vector<8x96xf32>
    %725 = vector.extract_strided_slice %723 {offsets = [0, 0], sizes = [8, 32], strides = [1, 1]} : vector<8x96xf32> to vector<8x32xf32>
    %726 = vector.extract_strided_slice %724 {offsets = [0, 0], sizes = [8, 32], strides = [1, 1]} : vector<8x96xf32> to vector<8x32xf32>
    %727 = arith.addf %725, %726 : vector<8x32xf32>
    %728 = arith.negf %727 : vector<8x32xf32>
    %729 = math.exp %728 : vector<8x32xf32>
    %cst_139 = arith.constant 1.000000e+00 : f32
    %730 = vector.broadcast %cst_139 : f32 to vector<8x32xf32>
    %731 = arith.addf %730, %729 : vector<8x32xf32>
    %732 = arith.divf %730, %731 : vector<8x32xf32>
    %733 = vector.extract_strided_slice %723 {offsets = [0, 32], sizes = [8, 32], strides = [1, 1]} : vector<8x96xf32> to vector<8x32xf32>
    %734 = vector.extract_strided_slice %724 {offsets = [0, 32], sizes = [8, 32], strides = [1, 1]} : vector<8x96xf32> to vector<8x32xf32>
    %735 = arith.addf %733, %734 : vector<8x32xf32>
    %736 = arith.negf %735 : vector<8x32xf32>
    %737 = math.exp %736 : vector<8x32xf32>
    %cst_140 = arith.constant 1.000000e+00 : f32
    %738 = vector.broadcast %cst_140 : f32 to vector<8x32xf32>
    %739 = arith.addf %738, %737 : vector<8x32xf32>
    %740 = arith.divf %738, %739 : vector<8x32xf32>
    %741 = vector.extract_strided_slice %723 {offsets = [0, 64], sizes = [8, 32], strides = [1, 1]} : vector<8x96xf32> to vector<8x32xf32>
    %742 = vector.extract_strided_slice %724 {offsets = [0, 64], sizes = [8, 32], strides = [1, 1]} : vector<8x96xf32> to vector<8x32xf32>
    %743 = arith.mulf %732, %742 : vector<8x32xf32>
    %744 = arith.addf %741, %743 : vector<8x32xf32>
    %745 = math.tanh %744 : vector<8x32xf32>
    %cst_141 = arith.constant 1.000000e+00 : f32
    %746 = vector.broadcast %cst_141 : f32 to vector<8x32xf32>
    %747 = arith.subf %746, %740 : vector<8x32xf32>
    %748 = arith.mulf %747, %745 : vector<8x32xf32>
    %749 = arith.mulf %740, %721 : vector<8x32xf32>
    %750 = arith.addf %748, %749 : vector<8x32xf32>
    %751 = vector.extract_strided_slice %717 {offsets = [0, 32], sizes = [8, 32], strides = [1, 1]} : vector<8x64xf32> to vector<8x32xf32>
    %752 = vector.extract_strided_slice %586 {offsets = [5, 0, 96], sizes = [1, 8, 96], strides = [1, 1, 1]} : vector<8x8x192xf32> to vector<1x8x96xf32>
    %753 = vector.shape_cast %752 : vector<1x8x96xf32> to vector<8x96xf32>
    %754 = vector.extract_strided_slice %720 {offsets = [0, 96], sizes = [8, 96], strides = [1, 1]} : vector<8x192xf32> to vector<8x96xf32>
    %755 = vector.extract_strided_slice %753 {offsets = [0, 0], sizes = [8, 32], strides = [1, 1]} : vector<8x96xf32> to vector<8x32xf32>
    %756 = vector.extract_strided_slice %754 {offsets = [0, 0], sizes = [8, 32], strides = [1, 1]} : vector<8x96xf32> to vector<8x32xf32>
    %757 = arith.addf %755, %756 : vector<8x32xf32>
    %758 = arith.negf %757 : vector<8x32xf32>
    %759 = math.exp %758 : vector<8x32xf32>
    %cst_142 = arith.constant 1.000000e+00 : f32
    %760 = vector.broadcast %cst_142 : f32 to vector<8x32xf32>
    %761 = arith.addf %760, %759 : vector<8x32xf32>
    %762 = arith.divf %760, %761 : vector<8x32xf32>
    %763 = vector.extract_strided_slice %753 {offsets = [0, 32], sizes = [8, 32], strides = [1, 1]} : vector<8x96xf32> to vector<8x32xf32>
    %764 = vector.extract_strided_slice %754 {offsets = [0, 32], sizes = [8, 32], strides = [1, 1]} : vector<8x96xf32> to vector<8x32xf32>
    %765 = arith.addf %763, %764 : vector<8x32xf32>
    %766 = arith.negf %765 : vector<8x32xf32>
    %767 = math.exp %766 : vector<8x32xf32>
    %cst_143 = arith.constant 1.000000e+00 : f32
    %768 = vector.broadcast %cst_143 : f32 to vector<8x32xf32>
    %769 = arith.addf %768, %767 : vector<8x32xf32>
    %770 = arith.divf %768, %769 : vector<8x32xf32>
    %771 = vector.extract_strided_slice %753 {offsets = [0, 64], sizes = [8, 32], strides = [1, 1]} : vector<8x96xf32> to vector<8x32xf32>
    %772 = vector.extract_strided_slice %754 {offsets = [0, 64], sizes = [8, 32], strides = [1, 1]} : vector<8x96xf32> to vector<8x32xf32>
    %773 = arith.mulf %762, %772 : vector<8x32xf32>
    %774 = arith.addf %771, %773 : vector<8x32xf32>
    %775 = math.tanh %774 : vector<8x32xf32>
    %cst_144 = arith.constant 1.000000e+00 : f32
    %776 = vector.broadcast %cst_144 : f32 to vector<8x32xf32>
    %777 = arith.subf %776, %770 : vector<8x32xf32>
    %778 = arith.mulf %777, %775 : vector<8x32xf32>
    %779 = arith.mulf %770, %751 : vector<8x32xf32>
    %780 = arith.addf %778, %779 : vector<8x32xf32>
    %781 = tpu.concatenate %750, %780 in 1 : vector<8x32xf32>, vector<8x32xf32> -> vector<8x64xf32>
    %782 = arith.truncf %781 : vector<8x64xf32> to vector<8x64xbf16>
    %cst_145 = arith.constant dense<0.000000e+00> : vector<8x192xf32>
    %783 = tpu.matmul %782, %578, %cst_145 {dimension_numbers = #tpu.dot_dimension_numbers<[1], [0], [0], [1], [0, 0, 1, 1], [], []>} : vector<8x64xbf16>, vector<64x192xbf16>, vector<8x192xf32> -> vector<8x192xf32>
    %784 = arith.addf %783, %588 : vector<8x192xf32>
    %785 = vector.extract_strided_slice %781 {offsets = [0, 0], sizes = [8, 32], strides = [1, 1]} : vector<8x64xf32> to vector<8x32xf32>
    %786 = vector.extract_strided_slice %586 {offsets = [3, 0, 0], sizes = [1, 8, 96], strides = [1, 1, 1]} : vector<8x8x192xf32> to vector<1x8x96xf32>
    %787 = vector.shape_cast %786 : vector<1x8x96xf32> to vector<8x96xf32>
    %788 = vector.extract_strided_slice %784 {offsets = [0, 0], sizes = [8, 96], strides = [1, 1]} : vector<8x192xf32> to vector<8x96xf32>
    %789 = vector.extract_strided_slice %787 {offsets = [0, 0], sizes = [8, 32], strides = [1, 1]} : vector<8x96xf32> to vector<8x32xf32>
    %790 = vector.extract_strided_slice %788 {offsets = [0, 0], sizes = [8, 32], strides = [1, 1]} : vector<8x96xf32> to vector<8x32xf32>
    %791 = arith.addf %789, %790 : vector<8x32xf32>
    %792 = arith.negf %791 : vector<8x32xf32>
    %793 = math.exp %792 : vector<8x32xf32>
    %cst_146 = arith.constant 1.000000e+00 : f32
    %794 = vector.broadcast %cst_146 : f32 to vector<8x32xf32>
    %795 = arith.addf %794, %793 : vector<8x32xf32>
    %796 = arith.divf %794, %795 : vector<8x32xf32>
    %797 = vector.extract_strided_slice %787 {offsets = [0, 32], sizes = [8, 32], strides = [1, 1]} : vector<8x96xf32> to vector<8x32xf32>
    %798 = vector.extract_strided_slice %788 {offsets = [0, 32], sizes = [8, 32], strides = [1, 1]} : vector<8x96xf32> to vector<8x32xf32>
    %799 = arith.addf %797, %798 : vector<8x32xf32>
    %800 = arith.negf %799 : vector<8x32xf32>
    %801 = math.exp %800 : vector<8x32xf32>
    %cst_147 = arith.constant 1.000000e+00 : f32
    %802 = vector.broadcast %cst_147 : f32 to vector<8x32xf32>
    %803 = arith.addf %802, %801 : vector<8x32xf32>
    %804 = arith.divf %802, %803 : vector<8x32xf32>
    %805 = vector.extract_strided_slice %787 {offsets = [0, 64], sizes = [8, 32], strides = [1, 1]} : vector<8x96xf32> to vector<8x32xf32>
    %806 = vector.extract_strided_slice %788 {offsets = [0, 64], sizes = [8, 32], strides = [1, 1]} : vector<8x96xf32> to vector<8x32xf32>
    %807 = arith.mulf %796, %806 : vector<8x32xf32>
    %808 = arith.addf %805, %807 : vector<8x32xf32>
    %809 = math.tanh %808 : vector<8x32xf32>
    %cst_148 = arith.constant 1.000000e+00 : f32
    %810 = vector.broadcast %cst_148 : f32 to vector<8x32xf32>
    %811 = arith.subf %810, %804 : vector<8x32xf32>
    %812 = arith.mulf %811, %809 : vector<8x32xf32>
    %813 = arith.mulf %804, %785 : vector<8x32xf32>
    %814 = arith.addf %812, %813 : vector<8x32xf32>
    %815 = vector.extract_strided_slice %781 {offsets = [0, 32], sizes = [8, 32], strides = [1, 1]} : vector<8x64xf32> to vector<8x32xf32>
    %816 = vector.extract_strided_slice %586 {offsets = [4, 0, 96], sizes = [1, 8, 96], strides = [1, 1, 1]} : vector<8x8x192xf32> to vector<1x8x96xf32>
    %817 = vector.shape_cast %816 : vector<1x8x96xf32> to vector<8x96xf32>
    %818 = vector.extract_strided_slice %784 {offsets = [0, 96], sizes = [8, 96], strides = [1, 1]} : vector<8x192xf32> to vector<8x96xf32>
    %819 = vector.extract_strided_slice %817 {offsets = [0, 0], sizes = [8, 32], strides = [1, 1]} : vector<8x96xf32> to vector<8x32xf32>
    %820 = vector.extract_strided_slice %818 {offsets = [0, 0], sizes = [8, 32], strides = [1, 1]} : vector<8x96xf32> to vector<8x32xf32>
    %821 = arith.addf %819, %820 : vector<8x32xf32>
    %822 = arith.negf %821 : vector<8x32xf32>
    %823 = math.exp %822 : vector<8x32xf32>
    %cst_149 = arith.constant 1.000000e+00 : f32
    %824 = vector.broadcast %cst_149 : f32 to vector<8x32xf32>
    %825 = arith.addf %824, %823 : vector<8x32xf32>
    %826 = arith.divf %824, %825 : vector<8x32xf32>
    %827 = vector.extract_strided_slice %817 {offsets = [0, 32], sizes = [8, 32], strides = [1, 1]} : vector<8x96xf32> to vector<8x32xf32>
    %828 = vector.extract_strided_slice %818 {offsets = [0, 32], sizes = [8, 32], strides = [1, 1]} : vector<8x96xf32> to vector<8x32xf32>
    %829 = arith.addf %827, %828 : vector<8x32xf32>
    %830 = arith.negf %829 : vector<8x32xf32>
    %831 = math.exp %830 : vector<8x32xf32>
    %cst_150 = arith.constant 1.000000e+00 : f32
    %832 = vector.broadcast %cst_150 : f32 to vector<8x32xf32>
    %833 = arith.addf %832, %831 : vector<8x32xf32>
    %834 = arith.divf %832, %833 : vector<8x32xf32>
    %835 = vector.extract_strided_slice %817 {offsets = [0, 64], sizes = [8, 32], strides = [1, 1]} : vector<8x96xf32> to vector<8x32xf32>
    %836 = vector.extract_strided_slice %818 {offsets = [0, 64], sizes = [8, 32], strides = [1, 1]} : vector<8x96xf32> to vector<8x32xf32>
    %837 = arith.mulf %826, %836 : vector<8x32xf32>
    %838 = arith.addf %835, %837 : vector<8x32xf32>
    %839 = math.tanh %838 : vector<8x32xf32>
    %cst_151 = arith.constant 1.000000e+00 : f32
    %840 = vector.broadcast %cst_151 : f32 to vector<8x32xf32>
    %841 = arith.subf %840, %834 : vector<8x32xf32>
    %842 = arith.mulf %841, %839 : vector<8x32xf32>
    %843 = arith.mulf %834, %815 : vector<8x32xf32>
    %844 = arith.addf %842, %843 : vector<8x32xf32>
    %845 = tpu.concatenate %814, %844 in 1 : vector<8x32xf32>, vector<8x32xf32> -> vector<8x64xf32>
    %846 = arith.truncf %845 : vector<8x64xf32> to vector<8x64xbf16>
    %cst_152 = arith.constant dense<0.000000e+00> : vector<8x192xf32>
    %847 = tpu.matmul %846, %578, %cst_152 {dimension_numbers = #tpu.dot_dimension_numbers<[1], [0], [0], [1], [0, 0, 1, 1], [], []>} : vector<8x64xbf16>, vector<64x192xbf16>, vector<8x192xf32> -> vector<8x192xf32>
    %848 = arith.addf %847, %588 : vector<8x192xf32>
    %849 = vector.extract_strided_slice %845 {offsets = [0, 0], sizes = [8, 32], strides = [1, 1]} : vector<8x64xf32> to vector<8x32xf32>
    %850 = vector.extract_strided_slice %586 {offsets = [4, 0, 0], sizes = [1, 8, 96], strides = [1, 1, 1]} : vector<8x8x192xf32> to vector<1x8x96xf32>
    %851 = vector.shape_cast %850 : vector<1x8x96xf32> to vector<8x96xf32>
    %852 = vector.extract_strided_slice %848 {offsets = [0, 0], sizes = [8, 96], strides = [1, 1]} : vector<8x192xf32> to vector<8x96xf32>
    %853 = vector.extract_strided_slice %851 {offsets = [0, 0], sizes = [8, 32], strides = [1, 1]} : vector<8x96xf32> to vector<8x32xf32>
    %854 = vector.extract_strided_slice %852 {offsets = [0, 0], sizes = [8, 32], strides = [1, 1]} : vector<8x96xf32> to vector<8x32xf32>
    %855 = arith.addf %853, %854 : vector<8x32xf32>
    %856 = arith.negf %855 : vector<8x32xf32>
    %857 = math.exp %856 : vector<8x32xf32>
    %cst_153 = arith.constant 1.000000e+00 : f32
    %858 = vector.broadcast %cst_153 : f32 to vector<8x32xf32>
    %859 = arith.addf %858, %857 : vector<8x32xf32>
    %860 = arith.divf %858, %859 : vector<8x32xf32>
    %861 = vector.extract_strided_slice %851 {offsets = [0, 32], sizes = [8, 32], strides = [1, 1]} : vector<8x96xf32> to vector<8x32xf32>
    %862 = vector.extract_strided_slice %852 {offsets = [0, 32], sizes = [8, 32], strides = [1, 1]} : vector<8x96xf32> to vector<8x32xf32>
    %863 = arith.addf %861, %862 : vector<8x32xf32>
    %864 = arith.negf %863 : vector<8x32xf32>
    %865 = math.exp %864 : vector<8x32xf32>
    %cst_154 = arith.constant 1.000000e+00 : f32
    %866 = vector.broadcast %cst_154 : f32 to vector<8x32xf32>
    %867 = arith.addf %866, %865 : vector<8x32xf32>
    %868 = arith.divf %866, %867 : vector<8x32xf32>
    %869 = vector.extract_strided_slice %851 {offsets = [0, 64], sizes = [8, 32], strides = [1, 1]} : vector<8x96xf32> to vector<8x32xf32>
    %870 = vector.extract_strided_slice %852 {offsets = [0, 64], sizes = [8, 32], strides = [1, 1]} : vector<8x96xf32> to vector<8x32xf32>
    %871 = arith.mulf %860, %870 : vector<8x32xf32>
    %872 = arith.addf %869, %871 : vector<8x32xf32>
    %873 = math.tanh %872 : vector<8x32xf32>
    %cst_155 = arith.constant 1.000000e+00 : f32
    %874 = vector.broadcast %cst_155 : f32 to vector<8x32xf32>
    %875 = arith.subf %874, %868 : vector<8x32xf32>
    %876 = arith.mulf %875, %873 : vector<8x32xf32>
    %877 = arith.mulf %868, %849 : vector<8x32xf32>
    %878 = arith.addf %876, %877 : vector<8x32xf32>
    %879 = vector.extract_strided_slice %845 {offsets = [0, 32], sizes = [8, 32], strides = [1, 1]} : vector<8x64xf32> to vector<8x32xf32>
    %880 = vector.extract_strided_slice %586 {offsets = [3, 0, 96], sizes = [1, 8, 96], strides = [1, 1, 1]} : vector<8x8x192xf32> to vector<1x8x96xf32>
    %881 = vector.shape_cast %880 : vector<1x8x96xf32> to vector<8x96xf32>
    %882 = vector.extract_strided_slice %848 {offsets = [0, 96], sizes = [8, 96], strides = [1, 1]} : vector<8x192xf32> to vector<8x96xf32>
    %883 = vector.extract_strided_slice %881 {offsets = [0, 0], sizes = [8, 32], strides = [1, 1]} : vector<8x96xf32> to vector<8x32xf32>
    %884 = vector.extract_strided_slice %882 {offsets = [0, 0], sizes = [8, 32], strides = [1, 1]} : vector<8x96xf32> to vector<8x32xf32>
    %885 = arith.addf %883, %884 : vector<8x32xf32>
    %886 = arith.negf %885 : vector<8x32xf32>
    %887 = math.exp %886 : vector<8x32xf32>
    %cst_156 = arith.constant 1.000000e+00 : f32
    %888 = vector.broadcast %cst_156 : f32 to vector<8x32xf32>
    %889 = arith.addf %888, %887 : vector<8x32xf32>
    %890 = arith.divf %888, %889 : vector<8x32xf32>
    %891 = vector.extract_strided_slice %881 {offsets = [0, 32], sizes = [8, 32], strides = [1, 1]} : vector<8x96xf32> to vector<8x32xf32>
    %892 = vector.extract_strided_slice %882 {offsets = [0, 32], sizes = [8, 32], strides = [1, 1]} : vector<8x96xf32> to vector<8x32xf32>
    %893 = arith.addf %891, %892 : vector<8x32xf32>
    %894 = arith.negf %893 : vector<8x32xf32>
    %895 = math.exp %894 : vector<8x32xf32>
    %cst_157 = arith.constant 1.000000e+00 : f32
    %896 = vector.broadcast %cst_157 : f32 to vector<8x32xf32>
    %897 = arith.addf %896, %895 : vector<8x32xf32>
    %898 = arith.divf %896, %897 : vector<8x32xf32>
    %899 = vector.extract_strided_slice %881 {offsets = [0, 64], sizes = [8, 32], strides = [1, 1]} : vector<8x96xf32> to vector<8x32xf32>
    %900 = vector.extract_strided_slice %882 {offsets = [0, 64], sizes = [8, 32], strides = [1, 1]} : vector<8x96xf32> to vector<8x32xf32>
    %901 = arith.mulf %890, %900 : vector<8x32xf32>
    %902 = arith.addf %899, %901 : vector<8x32xf32>
    %903 = math.tanh %902 : vector<8x32xf32>
    %cst_158 = arith.constant 1.000000e+00 : f32
    %904 = vector.broadcast %cst_158 : f32 to vector<8x32xf32>
    %905 = arith.subf %904, %898 : vector<8x32xf32>
    %906 = arith.mulf %905, %903 : vector<8x32xf32>
    %907 = arith.mulf %898, %879 : vector<8x32xf32>
    %908 = arith.addf %906, %907 : vector<8x32xf32>
    %909 = tpu.concatenate %878, %908 in 1 : vector<8x32xf32>, vector<8x32xf32> -> vector<8x64xf32>
    %910 = arith.truncf %909 : vector<8x64xf32> to vector<8x64xbf16>
    %cst_159 = arith.constant dense<0.000000e+00> : vector<8x192xf32>
    %911 = tpu.matmul %910, %578, %cst_159 {dimension_numbers = #tpu.dot_dimension_numbers<[1], [0], [0], [1], [0, 0, 1, 1], [], []>} : vector<8x64xbf16>, vector<64x192xbf16>, vector<8x192xf32> -> vector<8x192xf32>
    %912 = arith.addf %911, %588 : vector<8x192xf32>
    %913 = vector.extract_strided_slice %909 {offsets = [0, 0], sizes = [8, 32], strides = [1, 1]} : vector<8x64xf32> to vector<8x32xf32>
    %914 = vector.extract_strided_slice %586 {offsets = [5, 0, 0], sizes = [1, 8, 96], strides = [1, 1, 1]} : vector<8x8x192xf32> to vector<1x8x96xf32>
    %915 = vector.shape_cast %914 : vector<1x8x96xf32> to vector<8x96xf32>
    %916 = vector.extract_strided_slice %912 {offsets = [0, 0], sizes = [8, 96], strides = [1, 1]} : vector<8x192xf32> to vector<8x96xf32>
    %917 = vector.extract_strided_slice %915 {offsets = [0, 0], sizes = [8, 32], strides = [1, 1]} : vector<8x96xf32> to vector<8x32xf32>
    %918 = vector.extract_strided_slice %916 {offsets = [0, 0], sizes = [8, 32], strides = [1, 1]} : vector<8x96xf32> to vector<8x32xf32>
    %919 = arith.addf %917, %918 : vector<8x32xf32>
    %920 = arith.negf %919 : vector<8x32xf32>
    %921 = math.exp %920 : vector<8x32xf32>
    %cst_160 = arith.constant 1.000000e+00 : f32
    %922 = vector.broadcast %cst_160 : f32 to vector<8x32xf32>
    %923 = arith.addf %922, %921 : vector<8x32xf32>
    %924 = arith.divf %922, %923 : vector<8x32xf32>
    %925 = vector.extract_strided_slice %915 {offsets = [0, 32], sizes = [8, 32], strides = [1, 1]} : vector<8x96xf32> to vector<8x32xf32>
    %926 = vector.extract_strided_slice %916 {offsets = [0, 32], sizes = [8, 32], strides = [1, 1]} : vector<8x96xf32> to vector<8x32xf32>
    %927 = arith.addf %925, %926 : vector<8x32xf32>
    %928 = arith.negf %927 : vector<8x32xf32>
    %929 = math.exp %928 : vector<8x32xf32>
    %cst_161 = arith.constant 1.000000e+00 : f32
    %930 = vector.broadcast %cst_161 : f32 to vector<8x32xf32>
    %931 = arith.addf %930, %929 : vector<8x32xf32>
    %932 = arith.divf %930, %931 : vector<8x32xf32>
    %933 = vector.extract_strided_slice %915 {offsets = [0, 64], sizes = [8, 32], strides = [1, 1]} : vector<8x96xf32> to vector<8x32xf32>
    %934 = vector.extract_strided_slice %916 {offsets = [0, 64], sizes = [8, 32], strides = [1, 1]} : vector<8x96xf32> to vector<8x32xf32>
    %935 = arith.mulf %924, %934 : vector<8x32xf32>
    %936 = arith.addf %933, %935 : vector<8x32xf32>
    %937 = math.tanh %936 : vector<8x32xf32>
    %cst_162 = arith.constant 1.000000e+00 : f32
    %938 = vector.broadcast %cst_162 : f32 to vector<8x32xf32>
    %939 = arith.subf %938, %932 : vector<8x32xf32>
    %940 = arith.mulf %939, %937 : vector<8x32xf32>
    %941 = arith.mulf %932, %913 : vector<8x32xf32>
    %942 = arith.addf %940, %941 : vector<8x32xf32>
    %943 = vector.extract_strided_slice %909 {offsets = [0, 32], sizes = [8, 32], strides = [1, 1]} : vector<8x64xf32> to vector<8x32xf32>
    %944 = vector.extract_strided_slice %586 {offsets = [2, 0, 96], sizes = [1, 8, 96], strides = [1, 1, 1]} : vector<8x8x192xf32> to vector<1x8x96xf32>
    %945 = vector.shape_cast %944 : vector<1x8x96xf32> to vector<8x96xf32>
    %946 = vector.extract_strided_slice %912 {offsets = [0, 96], sizes = [8, 96], strides = [1, 1]} : vector<8x192xf32> to vector<8x96xf32>
    %947 = vector.extract_strided_slice %945 {offsets = [0, 0], sizes = [8, 32], strides = [1, 1]} : vector<8x96xf32> to vector<8x32xf32>
    %948 = vector.extract_strided_slice %946 {offsets = [0, 0], sizes = [8, 32], strides = [1, 1]} : vector<8x96xf32> to vector<8x32xf32>
    %949 = arith.addf %947, %948 : vector<8x32xf32>
    %950 = arith.negf %949 : vector<8x32xf32>
    %951 = math.exp %950 : vector<8x32xf32>
    %cst_163 = arith.constant 1.000000e+00 : f32
    %952 = vector.broadcast %cst_163 : f32 to vector<8x32xf32>
    %953 = arith.addf %952, %951 : vector<8x32xf32>
    %954 = arith.divf %952, %953 : vector<8x32xf32>
    %955 = vector.extract_strided_slice %945 {offsets = [0, 32], sizes = [8, 32], strides = [1, 1]} : vector<8x96xf32> to vector<8x32xf32>
    %956 = vector.extract_strided_slice %946 {offsets = [0, 32], sizes = [8, 32], strides = [1, 1]} : vector<8x96xf32> to vector<8x32xf32>
    %957 = arith.addf %955, %956 : vector<8x32xf32>
    %958 = arith.negf %957 : vector<8x32xf32>
    %959 = math.exp %958 : vector<8x32xf32>
    %cst_164 = arith.constant 1.000000e+00 : f32
    %960 = vector.broadcast %cst_164 : f32 to vector<8x32xf32>
    %961 = arith.addf %960, %959 : vector<8x32xf32>
    %962 = arith.divf %960, %961 : vector<8x32xf32>
    %963 = vector.extract_strided_slice %945 {offsets = [0, 64], sizes = [8, 32], strides = [1, 1]} : vector<8x96xf32> to vector<8x32xf32>
    %964 = vector.extract_strided_slice %946 {offsets = [0, 64], sizes = [8, 32], strides = [1, 1]} : vector<8x96xf32> to vector<8x32xf32>
    %965 = arith.mulf %954, %964 : vector<8x32xf32>
    %966 = arith.addf %963, %965 : vector<8x32xf32>
    %967 = math.tanh %966 : vector<8x32xf32>
    %cst_165 = arith.constant 1.000000e+00 : f32
    %968 = vector.broadcast %cst_165 : f32 to vector<8x32xf32>
    %969 = arith.subf %968, %962 : vector<8x32xf32>
    %970 = arith.mulf %969, %967 : vector<8x32xf32>
    %971 = arith.mulf %962, %943 : vector<8x32xf32>
    %972 = arith.addf %970, %971 : vector<8x32xf32>
    %973 = tpu.concatenate %942, %972 in 1 : vector<8x32xf32>, vector<8x32xf32> -> vector<8x64xf32>
    %974 = arith.truncf %973 : vector<8x64xf32> to vector<8x64xbf16>
    %cst_166 = arith.constant dense<0.000000e+00> : vector<8x192xf32>
    %975 = tpu.matmul %974, %578, %cst_166 {dimension_numbers = #tpu.dot_dimension_numbers<[1], [0], [0], [1], [0, 0, 1, 1], [], []>} : vector<8x64xbf16>, vector<64x192xbf16>, vector<8x192xf32> -> vector<8x192xf32>
    %976 = arith.addf %975, %588 : vector<8x192xf32>
    %977 = vector.extract_strided_slice %973 {offsets = [0, 0], sizes = [8, 32], strides = [1, 1]} : vector<8x64xf32> to vector<8x32xf32>
    %978 = vector.extract_strided_slice %586 {offsets = [6, 0, 0], sizes = [1, 8, 96], strides = [1, 1, 1]} : vector<8x8x192xf32> to vector<1x8x96xf32>
    %979 = vector.shape_cast %978 : vector<1x8x96xf32> to vector<8x96xf32>
    %980 = vector.extract_strided_slice %976 {offsets = [0, 0], sizes = [8, 96], strides = [1, 1]} : vector<8x192xf32> to vector<8x96xf32>
    %981 = vector.extract_strided_slice %979 {offsets = [0, 0], sizes = [8, 32], strides = [1, 1]} : vector<8x96xf32> to vector<8x32xf32>
    %982 = vector.extract_strided_slice %980 {offsets = [0, 0], sizes = [8, 32], strides = [1, 1]} : vector<8x96xf32> to vector<8x32xf32>
    %983 = arith.addf %981, %982 : vector<8x32xf32>
    %984 = arith.negf %983 : vector<8x32xf32>
    %985 = math.exp %984 : vector<8x32xf32>
    %cst_167 = arith.constant 1.000000e+00 : f32
    %986 = vector.broadcast %cst_167 : f32 to vector<8x32xf32>
    %987 = arith.addf %986, %985 : vector<8x32xf32>
    %988 = arith.divf %986, %987 : vector<8x32xf32>
    %989 = vector.extract_strided_slice %979 {offsets = [0, 32], sizes = [8, 32], strides = [1, 1]} : vector<8x96xf32> to vector<8x32xf32>
    %990 = vector.extract_strided_slice %980 {offsets = [0, 32], sizes = [8, 32], strides = [1, 1]} : vector<8x96xf32> to vector<8x32xf32>
    %991 = arith.addf %989, %990 : vector<8x32xf32>
    %992 = arith.negf %991 : vector<8x32xf32>
    %993 = math.exp %992 : vector<8x32xf32>
    %cst_168 = arith.constant 1.000000e+00 : f32
    %994 = vector.broadcast %cst_168 : f32 to vector<8x32xf32>
    %995 = arith.addf %994, %993 : vector<8x32xf32>
    %996 = arith.divf %994, %995 : vector<8x32xf32>
    %997 = vector.extract_strided_slice %979 {offsets = [0, 64], sizes = [8, 32], strides = [1, 1]} : vector<8x96xf32> to vector<8x32xf32>
    %998 = vector.extract_strided_slice %980 {offsets = [0, 64], sizes = [8, 32], strides = [1, 1]} : vector<8x96xf32> to vector<8x32xf32>
    %999 = arith.mulf %988, %998 : vector<8x32xf32>
    %1000 = arith.addf %997, %999 : vector<8x32xf32>
    %1001 = math.tanh %1000 : vector<8x32xf32>
    %cst_169 = arith.constant 1.000000e+00 : f32
    %1002 = vector.broadcast %cst_169 : f32 to vector<8x32xf32>
    %1003 = arith.subf %1002, %996 : vector<8x32xf32>
    %1004 = arith.mulf %1003, %1001 : vector<8x32xf32>
    %1005 = arith.mulf %996, %977 : vector<8x32xf32>
    %1006 = arith.addf %1004, %1005 : vector<8x32xf32>
    %1007 = vector.extract_strided_slice %973 {offsets = [0, 32], sizes = [8, 32], strides = [1, 1]} : vector<8x64xf32> to vector<8x32xf32>
    %1008 = vector.extract_strided_slice %586 {offsets = [1, 0, 96], sizes = [1, 8, 96], strides = [1, 1, 1]} : vector<8x8x192xf32> to vector<1x8x96xf32>
    %1009 = vector.shape_cast %1008 : vector<1x8x96xf32> to vector<8x96xf32>
    %1010 = vector.extract_strided_slice %976 {offsets = [0, 96], sizes = [8, 96], strides = [1, 1]} : vector<8x192xf32> to vector<8x96xf32>
    %1011 = vector.extract_strided_slice %1009 {offsets = [0, 0], sizes = [8, 32], strides = [1, 1]} : vector<8x96xf32> to vector<8x32xf32>
    %1012 = vector.extract_strided_slice %1010 {offsets = [0, 0], sizes = [8, 32], strides = [1, 1]} : vector<8x96xf32> to vector<8x32xf32>
    %1013 = arith.addf %1011, %1012 : vector<8x32xf32>
    %1014 = arith.negf %1013 : vector<8x32xf32>
    %1015 = math.exp %1014 : vector<8x32xf32>
    %cst_170 = arith.constant 1.000000e+00 : f32
    %1016 = vector.broadcast %cst_170 : f32 to vector<8x32xf32>
    %1017 = arith.addf %1016, %1015 : vector<8x32xf32>
    %1018 = arith.divf %1016, %1017 : vector<8x32xf32>
    %1019 = vector.extract_strided_slice %1009 {offsets = [0, 32], sizes = [8, 32], strides = [1, 1]} : vector<8x96xf32> to vector<8x32xf32>
    %1020 = vector.extract_strided_slice %1010 {offsets = [0, 32], sizes = [8, 32], strides = [1, 1]} : vector<8x96xf32> to vector<8x32xf32>
    %1021 = arith.addf %1019, %1020 : vector<8x32xf32>
    %1022 = arith.negf %1021 : vector<8x32xf32>
    %1023 = math.exp %1022 : vector<8x32xf32>
    %cst_171 = arith.constant 1.000000e+00 : f32
    %1024 = vector.broadcast %cst_171 : f32 to vector<8x32xf32>
    %1025 = arith.addf %1024, %1023 : vector<8x32xf32>
    %1026 = arith.divf %1024, %1025 : vector<8x32xf32>
    %1027 = vector.extract_strided_slice %1009 {offsets = [0, 64], sizes = [8, 32], strides = [1, 1]} : vector<8x96xf32> to vector<8x32xf32>
    %1028 = vector.extract_strided_slice %1010 {offsets = [0, 64], sizes = [8, 32], strides = [1, 1]} : vector<8x96xf32> to vector<8x32xf32>
    %1029 = arith.mulf %1018, %1028 : vector<8x32xf32>
    %1030 = arith.addf %1027, %1029 : vector<8x32xf32>
    %1031 = math.tanh %1030 : vector<8x32xf32>
    %cst_172 = arith.constant 1.000000e+00 : f32
    %1032 = vector.broadcast %cst_172 : f32 to vector<8x32xf32>
    %1033 = arith.subf %1032, %1026 : vector<8x32xf32>
    %1034 = arith.mulf %1033, %1031 : vector<8x32xf32>
    %1035 = arith.mulf %1026, %1007 : vector<8x32xf32>
    %1036 = arith.addf %1034, %1035 : vector<8x32xf32>
    %1037 = tpu.concatenate %1006, %1036 in 1 : vector<8x32xf32>, vector<8x32xf32> -> vector<8x64xf32>
    %1038 = arith.truncf %1037 : vector<8x64xf32> to vector<8x64xbf16>
    %cst_173 = arith.constant dense<0.000000e+00> : vector<8x192xf32>
    %1039 = tpu.matmul %1038, %578, %cst_173 {dimension_numbers = #tpu.dot_dimension_numbers<[1], [0], [0], [1], [0, 0, 1, 1], [], []>} : vector<8x64xbf16>, vector<64x192xbf16>, vector<8x192xf32> -> vector<8x192xf32>
    %1040 = arith.addf %1039, %588 : vector<8x192xf32>
    %1041 = vector.extract_strided_slice %1037 {offsets = [0, 0], sizes = [8, 32], strides = [1, 1]} : vector<8x64xf32> to vector<8x32xf32>
    %1042 = vector.extract_strided_slice %586 {offsets = [7, 0, 0], sizes = [1, 8, 96], strides = [1, 1, 1]} : vector<8x8x192xf32> to vector<1x8x96xf32>
    %1043 = vector.shape_cast %1042 : vector<1x8x96xf32> to vector<8x96xf32>
    %1044 = vector.extract_strided_slice %1040 {offsets = [0, 0], sizes = [8, 96], strides = [1, 1]} : vector<8x192xf32> to vector<8x96xf32>
    %1045 = vector.extract_strided_slice %1043 {offsets = [0, 0], sizes = [8, 32], strides = [1, 1]} : vector<8x96xf32> to vector<8x32xf32>
    %1046 = vector.extract_strided_slice %1044 {offsets = [0, 0], sizes = [8, 32], strides = [1, 1]} : vector<8x96xf32> to vector<8x32xf32>
    %1047 = arith.addf %1045, %1046 : vector<8x32xf32>
    %1048 = arith.negf %1047 : vector<8x32xf32>
    %1049 = math.exp %1048 : vector<8x32xf32>
    %cst_174 = arith.constant 1.000000e+00 : f32
    %1050 = vector.broadcast %cst_174 : f32 to vector<8x32xf32>
    %1051 = arith.addf %1050, %1049 : vector<8x32xf32>
    %1052 = arith.divf %1050, %1051 : vector<8x32xf32>
    %1053 = vector.extract_strided_slice %1043 {offsets = [0, 32], sizes = [8, 32], strides = [1, 1]} : vector<8x96xf32> to vector<8x32xf32>
    %1054 = vector.extract_strided_slice %1044 {offsets = [0, 32], sizes = [8, 32], strides = [1, 1]} : vector<8x96xf32> to vector<8x32xf32>
    %1055 = arith.addf %1053, %1054 : vector<8x32xf32>
    %1056 = arith.negf %1055 : vector<8x32xf32>
    %1057 = math.exp %1056 : vector<8x32xf32>
    %cst_175 = arith.constant 1.000000e+00 : f32
    %1058 = vector.broadcast %cst_175 : f32 to vector<8x32xf32>
    %1059 = arith.addf %1058, %1057 : vector<8x32xf32>
    %1060 = arith.divf %1058, %1059 : vector<8x32xf32>
    %1061 = vector.extract_strided_slice %1043 {offsets = [0, 64], sizes = [8, 32], strides = [1, 1]} : vector<8x96xf32> to vector<8x32xf32>
    %1062 = vector.extract_strided_slice %1044 {offsets = [0, 64], sizes = [8, 32], strides = [1, 1]} : vector<8x96xf32> to vector<8x32xf32>
    %1063 = arith.mulf %1052, %1062 : vector<8x32xf32>
    %1064 = arith.addf %1061, %1063 : vector<8x32xf32>
    %1065 = math.tanh %1064 : vector<8x32xf32>
    %cst_176 = arith.constant 1.000000e+00 : f32
    %1066 = vector.broadcast %cst_176 : f32 to vector<8x32xf32>
    %1067 = arith.subf %1066, %1060 : vector<8x32xf32>
    %1068 = arith.mulf %1067, %1065 : vector<8x32xf32>
    %1069 = arith.mulf %1060, %1041 : vector<8x32xf32>
    %1070 = arith.addf %1068, %1069 : vector<8x32xf32>
    %1071 = vector.extract_strided_slice %1037 {offsets = [0, 32], sizes = [8, 32], strides = [1, 1]} : vector<8x64xf32> to vector<8x32xf32>
    %1072 = vector.extract_strided_slice %586 {offsets = [0, 0, 96], sizes = [1, 8, 96], strides = [1, 1, 1]} : vector<8x8x192xf32> to vector<1x8x96xf32>
    %1073 = vector.shape_cast %1072 : vector<1x8x96xf32> to vector<8x96xf32>
    %1074 = vector.extract_strided_slice %1040 {offsets = [0, 96], sizes = [8, 96], strides = [1, 1]} : vector<8x192xf32> to vector<8x96xf32>
    %1075 = vector.extract_strided_slice %1073 {offsets = [0, 0], sizes = [8, 32], strides = [1, 1]} : vector<8x96xf32> to vector<8x32xf32>
    %1076 = vector.extract_strided_slice %1074 {offsets = [0, 0], sizes = [8, 32], strides = [1, 1]} : vector<8x96xf32> to vector<8x32xf32>
    %1077 = arith.addf %1075, %1076 : vector<8x32xf32>
    %1078 = arith.negf %1077 : vector<8x32xf32>
    %1079 = math.exp %1078 : vector<8x32xf32>
    %cst_177 = arith.constant 1.000000e+00 : f32
    %1080 = vector.broadcast %cst_177 : f32 to vector<8x32xf32>
    %1081 = arith.addf %1080, %1079 : vector<8x32xf32>
    %1082 = arith.divf %1080, %1081 : vector<8x32xf32>
    %1083 = vector.extract_strided_slice %1073 {offsets = [0, 32], sizes = [8, 32], strides = [1, 1]} : vector<8x96xf32> to vector<8x32xf32>
    %1084 = vector.extract_strided_slice %1074 {offsets = [0, 32], sizes = [8, 32], strides = [1, 1]} : vector<8x96xf32> to vector<8x32xf32>
    %1085 = arith.addf %1083, %1084 : vector<8x32xf32>
    %1086 = arith.negf %1085 : vector<8x32xf32>
    %1087 = math.exp %1086 : vector<8x32xf32>
    %cst_178 = arith.constant 1.000000e+00 : f32
    %1088 = vector.broadcast %cst_178 : f32 to vector<8x32xf32>
    %1089 = arith.addf %1088, %1087 : vector<8x32xf32>
    %1090 = arith.divf %1088, %1089 : vector<8x32xf32>
    %1091 = vector.extract_strided_slice %1073 {offsets = [0, 64], sizes = [8, 32], strides = [1, 1]} : vector<8x96xf32> to vector<8x32xf32>
    %1092 = vector.extract_strided_slice %1074 {offsets = [0, 64], sizes = [8, 32], strides = [1, 1]} : vector<8x96xf32> to vector<8x32xf32>
    %1093 = arith.mulf %1082, %1092 : vector<8x32xf32>
    %1094 = arith.addf %1091, %1093 : vector<8x32xf32>
    %1095 = math.tanh %1094 : vector<8x32xf32>
    %cst_179 = arith.constant 1.000000e+00 : f32
    %1096 = vector.broadcast %cst_179 : f32 to vector<8x32xf32>
    %1097 = arith.subf %1096, %1090 : vector<8x32xf32>
    %1098 = arith.mulf %1097, %1095 : vector<8x32xf32>
    %1099 = arith.mulf %1090, %1071 : vector<8x32xf32>
    %1100 = arith.addf %1098, %1099 : vector<8x32xf32>
    %1101 = tpu.concatenate %1070, %1100 in 1 : vector<8x32xf32>, vector<8x32xf32> -> vector<8x64xf32>
    %c0_180 = arith.constant 0 : index
    %c0_181 = arith.constant 0 : index
    %1102 = vector.load %arg11[%c0_180, %c0_181] : memref<12x16xf32, #tpu.memory_space<vmem>>, vector<12x16xf32>
    %c0_182 = arith.constant 0 : index
    %c0_183 = arith.constant 0 : index
    %c0_184 = arith.constant 0 : index
    %1103 = vector.load %arg1[%c0_182, %c0_183, %c0_184] : memref<8x8x12xf32, #tpu.memory_space<vmem>>, vector<8x8x12xf32>
    %1104 = vector.shape_cast %1103 : vector<8x8x12xf32> to vector<64x12xf32>
    %cst_185 = arith.constant dense<0.000000e+00> : vector<64x16xf32>
    %1105 = tpu.matmul %1104, %1102, %cst_185 {dimension_numbers = #tpu.dot_dimension_numbers<[1], [0], [0], [1], [0, 0, 1, 1], [], []>} : vector<64x12xf32>, vector<12x16xf32>, vector<64x16xf32> -> vector<64x16xf32>
    %1106 = vector.shape_cast %1105 : vector<64x16xf32> to vector<8x8x16xf32>
    %c0_186 = arith.constant 0 : index
    %c0_187 = arith.constant 0 : index
    %1107 = vector.load %arg12[%c0_186, %c0_187] : memref<16x192xbf16, #tpu.memory_space<vmem>>, vector<16x192xbf16>
    %c0_188 = arith.constant 0 : index
    %c0_189 = arith.constant 0 : index
    %1108 = vector.load %arg13[%c0_188, %c0_189] : memref<64x192xbf16, #tpu.memory_space<vmem>>, vector<64x192xbf16>
    %c0_190 = arith.constant 0 : index
    %c0_191 = arith.constant 0 : index
    %1109 = vector.load %arg14[%c0_190, %c0_191] : memref<1x192xf32, #tpu.memory_space<vmem>>, vector<1x192xf32>
    %1110 = vector.shape_cast %1109 : vector<1x192xf32> to vector<1x192xf32>
    %1111 = vector.broadcast %1110 : vector<1x192xf32> to vector<8x192xf32>
    %c0_192 = arith.constant 0 : index
    %c0_193 = arith.constant 0 : index
    %1112 = vector.load %arg15[%c0_192, %c0_193] : memref<1x192xf32, #tpu.memory_space<vmem>>, vector<1x192xf32>
    %1113 = vector.shape_cast %1112 : vector<1x192xf32> to vector<1x192xf32>
    %1114 = vector.broadcast %1113 : vector<1x192xf32> to vector<8x192xf32>
    %c0_194 = arith.constant 0 : index
    %c0_195 = arith.constant 0 : index
    %1115 = vector.load %arg16[%c0_194, %c0_195] : memref<64x192xbf16, #tpu.memory_space<vmem>>, vector<64x192xbf16>
    %c0_196 = arith.constant 0 : index
    %c0_197 = arith.constant 0 : index
    %1116 = vector.load %arg17[%c0_196, %c0_197] : memref<64x192xbf16, #tpu.memory_space<vmem>>, vector<64x192xbf16>
    %c0_198 = arith.constant 0 : index
    %c0_199 = arith.constant 0 : index
    %1117 = vector.load %arg18[%c0_198, %c0_199] : memref<1x192xf32, #tpu.memory_space<vmem>>, vector<1x192xf32>
    %1118 = vector.shape_cast %1117 : vector<1x192xf32> to vector<1x192xf32>
    %1119 = vector.broadcast %1118 : vector<1x192xf32> to vector<8x192xf32>
    %c0_200 = arith.constant 0 : index
    %c0_201 = arith.constant 0 : index
    %1120 = vector.load %arg19[%c0_200, %c0_201] : memref<1x192xf32, #tpu.memory_space<vmem>>, vector<1x192xf32>
    %1121 = vector.shape_cast %1120 : vector<1x192xf32> to vector<1x192xf32>
    %1122 = vector.broadcast %1121 : vector<1x192xf32> to vector<8x192xf32>
    %c0_202 = arith.constant 0 : index
    %c0_203 = arith.constant 0 : index
    %1123 = vector.load %arg20[%c0_202, %c0_203] : memref<64x128xbf16, #tpu.memory_space<vmem>>, vector<64x128xbf16>
    %c0_204 = arith.constant 0 : index
    %c0_205 = arith.constant 0 : index
    %1124 = vector.load %arg21[%c0_204, %c0_205] : memref<1x128xf32, #tpu.memory_space<vmem>>, vector<1x128xf32>
    %1125 = vector.shape_cast %1124 : vector<1x128xf32> to vector<1x128xf32>
    %1126 = vector.broadcast %1125 : vector<1x128xf32> to vector<8x128xf32>
    %c0_206 = arith.constant 0 : index
    %c0_207 = arith.constant 0 : index
    %1127 = vector.load %arg22[%c0_206, %c0_207] : memref<128x256xbf16, #tpu.memory_space<vmem>>, vector<128x256xbf16>
    %c0_208 = arith.constant 0 : index
    %c0_209 = arith.constant 0 : index
    %1128 = vector.load %arg23[%c0_208, %c0_209] : memref<1x256xf32, #tpu.memory_space<vmem>>, vector<1x256xf32>
    %1129 = vector.shape_cast %1128 : vector<1x256xf32> to vector<1x256xf32>
    %1130 = vector.broadcast %1129 : vector<1x256xf32> to vector<8x256xf32>
    %c0_210 = arith.constant 0 : index
    %c0_211 = arith.constant 0 : index
    %1131 = vector.load %arg24[%c0_210, %c0_211] : memref<256x128xbf16, #tpu.memory_space<vmem>>, vector<256x128xbf16>
    %c0_212 = arith.constant 0 : index
    %c0_213 = arith.constant 0 : index
    %1132 = vector.load %arg25[%c0_212, %c0_213] : memref<1x128xf32, #tpu.memory_space<vmem>>, vector<1x128xf32>
    %1133 = vector.shape_cast %1132 : vector<1x128xf32> to vector<1x128xf32>
    %1134 = vector.broadcast %1133 : vector<1x128xf32> to vector<8x128xf32>
    %cst_214 = arith.constant 0.000000e+00 : f32
    %1135 = vector.broadcast %cst_214 : f32 to vector<8x128xf32>
    %c0_215 = arith.constant 0 : index
    %c0_216 = arith.constant 0 : index
    %c0_217 = arith.constant 0 : index
    %1136 = vector.load %arg26[%c0_215, %c0_216, %c0_217] : memref<8x8x128xf32, #tpu.memory_space<vmem>>, vector<1x8x128xf32>
    %1137 = vector.shape_cast %1136 : vector<1x8x128xf32> to vector<8x128xf32>
    %1138 = vector.shape_cast %1135 : vector<8x128xf32> to vector<1x8x128xf32>
    tpu.vector_store %arg26[%c0_215, %c0_216, %c0_217], %1138 {strides = array<i32>} : memref<8x8x128xf32, #tpu.memory_space<vmem>>, vector<1x8x128xf32>,
    %1139 = vector.extract_strided_slice %1106 {offsets = [0, 0, 0], sizes = [1, 8, 16], strides = [1, 1, 1]} : vector<8x8x16xf32> to vector<1x8x16xf32>
    %1140 = vector.shape_cast %1139 : vector<1x8x16xf32> to vector<8x16xf32>
    %c0_218 = arith.constant 0 : index
    %c0_219 = arith.constant 0 : index
    %1141 = vector.load %arg29[%c0_218, %c0_219] : memref<8x16xf32, #tpu.memory_space<vmem>>, vector<8x16xf32>
    tpu.vector_store %arg29[%c0_218, %c0_219], %1140 {strides = array<i32>} : memref<8x16xf32, #tpu.memory_space<vmem>>, vector<8x16xf32>,
    %c0_220 = arith.constant 0 : index
    %c0_221 = arith.constant 0 : index
    %1142 = vector.load %arg29[%c0_220, %c0_221] : memref<8x16xf32, #tpu.memory_space<vmem>>, vector<8x16xf32>
    %1143 = arith.truncf %1142 : vector<8x16xf32> to vector<8x16xbf16>
    %cst_222 = arith.constant dense<0.000000e+00> : vector<8x192xf32>
    %1144 = tpu.matmul %1143, %1107, %cst_222 {dimension_numbers = #tpu.dot_dimension_numbers<[1], [0], [0], [1], [0, 0, 1, 1], [], []>} : vector<8x16xbf16>, vector<16x192xbf16>, vector<8x192xf32> -> vector<8x192xf32>
    %1145 = arith.addf %1144, %1111 : vector<8x192xf32>
    %1146 = arith.truncf %567 : vector<8x64xf32> to vector<8x64xbf16>
    %cst_223 = arith.constant dense<0.000000e+00> : vector<8x192xf32>
    %1147 = tpu.matmul %1146, %1108, %cst_223 {dimension_numbers = #tpu.dot_dimension_numbers<[1], [0], [0], [1], [0, 0, 1, 1], [], []>} : vector<8x64xbf16>, vector<64x192xbf16>, vector<8x192xf32> -> vector<8x192xf32>
    %1148 = arith.addf %1147, %1114 : vector<8x192xf32>
    %1149 = vector.extract_strided_slice %1145 {offsets = [0, 0], sizes = [8, 64], strides = [1, 1]} : vector<8x192xf32> to vector<8x64xf32>
    %1150 = vector.extract_strided_slice %1148 {offsets = [0, 0], sizes = [8, 64], strides = [1, 1]} : vector<8x192xf32> to vector<8x64xf32>
    %1151 = arith.addf %1149, %1150 : vector<8x64xf32>
    %1152 = arith.negf %1151 : vector<8x64xf32>
    %1153 = math.exp %1152 : vector<8x64xf32>
    %cst_224 = arith.constant 1.000000e+00 : f32
    %1154 = vector.broadcast %cst_224 : f32 to vector<8x64xf32>
    %1155 = arith.addf %1154, %1153 : vector<8x64xf32>
    %1156 = arith.divf %1154, %1155 : vector<8x64xf32>
    %1157 = vector.extract_strided_slice %1145 {offsets = [0, 64], sizes = [8, 64], strides = [1, 1]} : vector<8x192xf32> to vector<8x64xf32>
    %1158 = vector.extract_strided_slice %1148 {offsets = [0, 64], sizes = [8, 64], strides = [1, 1]} : vector<8x192xf32> to vector<8x64xf32>
    %1159 = arith.addf %1157, %1158 : vector<8x64xf32>
    %1160 = arith.negf %1159 : vector<8x64xf32>
    %1161 = math.exp %1160 : vector<8x64xf32>
    %cst_225 = arith.constant 1.000000e+00 : f32
    %1162 = vector.broadcast %cst_225 : f32 to vector<8x64xf32>
    %1163 = arith.addf %1162, %1161 : vector<8x64xf32>
    %1164 = arith.divf %1162, %1163 : vector<8x64xf32>
    %1165 = vector.extract_strided_slice %1145 {offsets = [0, 128], sizes = [8, 64], strides = [1, 1]} : vector<8x192xf32> to vector<8x64xf32>
    %1166 = vector.extract_strided_slice %1148 {offsets = [0, 128], sizes = [8, 64], strides = [1, 1]} : vector<8x192xf32> to vector<8x64xf32>
    %1167 = arith.mulf %1156, %1166 : vector<8x64xf32>
    %1168 = arith.addf %1165, %1167 : vector<8x64xf32>
    %1169 = math.tanh %1168 : vector<8x64xf32>
    %cst_226 = arith.constant 1.000000e+00 : f32
    %1170 = vector.broadcast %cst_226 : f32 to vector<8x64xf32>
    %1171 = arith.subf %1170, %1164 : vector<8x64xf32>
    %1172 = arith.mulf %1171, %1169 : vector<8x64xf32>
    %1173 = arith.mulf %1164, %567 : vector<8x64xf32>
    %1174 = arith.addf %1172, %1173 : vector<8x64xf32>
    %1175 = arith.truncf %1174 : vector<8x64xf32> to vector<8x64xbf16>
    %cst_227 = arith.constant dense<0.000000e+00> : vector<8x192xf32>
    %1176 = tpu.matmul %1175, %1115, %cst_227 {dimension_numbers = #tpu.dot_dimension_numbers<[1], [0], [0], [1], [0, 0, 1, 1], [], []>} : vector<8x64xbf16>, vector<64x192xbf16>, vector<8x192xf32> -> vector<8x192xf32>
    %1177 = arith.addf %1176, %1119 : vector<8x192xf32>
    %1178 = arith.truncf %1101 : vector<8x64xf32> to vector<8x64xbf16>
    %cst_228 = arith.constant dense<0.000000e+00> : vector<8x192xf32>
    %1179 = tpu.matmul %1178, %1116, %cst_228 {dimension_numbers = #tpu.dot_dimension_numbers<[1], [0], [0], [1], [0, 0, 1, 1], [], []>} : vector<8x64xbf16>, vector<64x192xbf16>, vector<8x192xf32> -> vector<8x192xf32>
    %1180 = arith.addf %1179, %1122 : vector<8x192xf32>
    %1181 = vector.extract_strided_slice %1177 {offsets = [0, 0], sizes = [8, 64], strides = [1, 1]} : vector<8x192xf32> to vector<8x64xf32>
    %1182 = vector.extract_strided_slice %1180 {offsets = [0, 0], sizes = [8, 64], strides = [1, 1]} : vector<8x192xf32> to vector<8x64xf32>
    %1183 = arith.addf %1181, %1182 : vector<8x64xf32>
    %1184 = arith.negf %1183 : vector<8x64xf32>
    %1185 = math.exp %1184 : vector<8x64xf32>
    %cst_229 = arith.constant 1.000000e+00 : f32
    %1186 = vector.broadcast %cst_229 : f32 to vector<8x64xf32>
    %1187 = arith.addf %1186, %1185 : vector<8x64xf32>
    %1188 = arith.divf %1186, %1187 : vector<8x64xf32>
    %1189 = vector.extract_strided_slice %1177 {offsets = [0, 64], sizes = [8, 64], strides = [1, 1]} : vector<8x192xf32> to vector<8x64xf32>
    %1190 = vector.extract_strided_slice %1180 {offsets = [0, 64], sizes = [8, 64], strides = [1, 1]} : vector<8x192xf32> to vector<8x64xf32>
    %1191 = arith.addf %1189, %1190 : vector<8x64xf32>
    %1192 = arith.negf %1191 : vector<8x64xf32>
    %1193 = math.exp %1192 : vector<8x64xf32>
    %cst_230 = arith.constant 1.000000e+00 : f32
    %1194 = vector.broadcast %cst_230 : f32 to vector<8x64xf32>
    %1195 = arith.addf %1194, %1193 : vector<8x64xf32>
    %1196 = arith.divf %1194, %1195 : vector<8x64xf32>
    %1197 = vector.extract_strided_slice %1177 {offsets = [0, 128], sizes = [8, 64], strides = [1, 1]} : vector<8x192xf32> to vector<8x64xf32>
    %1198 = vector.extract_strided_slice %1180 {offsets = [0, 128], sizes = [8, 64], strides = [1, 1]} : vector<8x192xf32> to vector<8x64xf32>
    %1199 = arith.mulf %1188, %1198 : vector<8x64xf32>
    %1200 = arith.addf %1197, %1199 : vector<8x64xf32>
    %1201 = math.tanh %1200 : vector<8x64xf32>
    %cst_231 = arith.constant 1.000000e+00 : f32
    %1202 = vector.broadcast %cst_231 : f32 to vector<8x64xf32>
    %1203 = arith.subf %1202, %1196 : vector<8x64xf32>
    %1204 = arith.mulf %1203, %1201 : vector<8x64xf32>
    %1205 = arith.mulf %1196, %1101 : vector<8x64xf32>
    %1206 = arith.addf %1204, %1205 : vector<8x64xf32>
    %1207 = arith.truncf %1206 : vector<8x64xf32> to vector<8x64xbf16>
    %cst_232 = arith.constant dense<0.000000e+00> : vector<8x128xf32>
    %1208 = tpu.matmul %1207, %1123, %cst_232 {dimension_numbers = #tpu.dot_dimension_numbers<[1], [0], [0], [1], [0, 0, 1, 1], [], []>} : vector<8x64xbf16>, vector<64x128xbf16>, vector<8x128xf32> -> vector<8x128xf32>
    %1209 = arith.addf %1208, %1126 : vector<8x128xf32>
    %1210 = arith.truncf %1209 : vector<8x128xf32> to vector<8x128xbf16>
    %cst_233 = arith.constant dense<0.000000e+00> : vector<8x256xf32>
    %1211 = tpu.matmul %1210, %1127, %cst_233 {dimension_numbers = #tpu.dot_dimension_numbers<[1], [0], [0], [1], [0, 0, 1, 1], [], []>} : vector<8x128xbf16>, vector<128x256xbf16>, vector<8x256xf32> -> vector<8x256xf32>
    %1212 = arith.addf %1211, %1130 : vector<8x256xf32>
    %1213 = arith.truncf %1212 : vector<8x256xf32> to vector<8x256xbf16>
    %cst_234 = arith.constant dense<0.000000e+00> : vector<8x128xf32>
    %1214 = tpu.matmul %1213, %1131, %cst_234 {dimension_numbers = #tpu.dot_dimension_numbers<[1], [0], [0], [1], [0, 0, 1, 1], [], []>} : vector<8x256xbf16>, vector<256x128xbf16>, vector<8x128xf32> -> vector<8x128xf32>
    %1215 = arith.addf %1214, %1134 : vector<8x128xf32>
    %c1_235 = arith.constant 1 : index
    %c0_236 = arith.constant 0 : index
    %c0_237 = arith.constant 0 : index
    %1216 = vector.load %arg26[%c1_235, %c0_236, %c0_237] : memref<8x8x128xf32, #tpu.memory_space<vmem>>, vector<1x8x128xf32>
    %1217 = vector.shape_cast %1216 : vector<1x8x128xf32> to vector<8x128xf32>
    %1218 = vector.shape_cast %1215 : vector<8x128xf32> to vector<1x8x128xf32>
    tpu.vector_store %arg26[%c1_235, %c0_236, %c0_237], %1218 {strides = array<i32>} : memref<8x8x128xf32, #tpu.memory_space<vmem>>, vector<1x8x128xf32>,
    %1219 = vector.extract_strided_slice %1106 {offsets = [1, 0, 0], sizes = [1, 8, 16], strides = [1, 1, 1]} : vector<8x8x16xf32> to vector<1x8x16xf32>
    %1220 = vector.shape_cast %1219 : vector<1x8x16xf32> to vector<8x16xf32>
    %c0_238 = arith.constant 0 : index
    %c0_239 = arith.constant 0 : index
    %1221 = vector.load %arg29[%c0_238, %c0_239] : memref<8x16xf32, #tpu.memory_space<vmem>>, vector<8x16xf32>
    tpu.vector_store %arg29[%c0_238, %c0_239], %1220 {strides = array<i32>} : memref<8x16xf32, #tpu.memory_space<vmem>>, vector<8x16xf32>,
    %c1_240 = arith.constant 1 : index
    %1222 = memref.load %arg2[%c1_240] : memref<8xi32, #tpu.memory_space<smem>>
    %c0_i32 = arith.constant 0 : i32
    %1223 = arith.cmpi eq, %1222, %c0_i32 : i32
    %1224 = arith.extui %1223 : i1 to i32
    %c0_i32_241 = arith.constant 0 : i32
    %1225 = arith.cmpi ne, %1224, %c0_i32_241 : i32
    scf.if %1225 {
      %cst_375 = arith.constant dense<0xFF800000> : vector<8xf32>
      %1723 = vector.multi_reduction <maximumf>, %1215, %cst_375 [1] : vector<8x128xf32> to vector<8xf32>
      %1724 = vector.shape_cast %1723 : vector<8xf32> to vector<8x1xf32>
      %1725 = tpu.iota {dimensions = array<i32: 1>} : vector<8x128xi32>
      %1726 = vector.broadcast %1724 : vector<8x1xf32> to vector<8x128xf32>
      %1727 = arith.cmpf oge, %1215, %1726 : vector<8x128xf32>
      %c128_i32 = arith.constant 128 : i32
      %1728 = vector.broadcast %c128_i32 : i32 to vector<8x128xi32>
      %1729 = arith.select %1727, %1725, %1728 : vector<8x128xi1>, vector<8x128xi32>
      %cst_376 = arith.constant dense<2147483647> : vector<8xi32>
      %1730 = vector.multi_reduction <minsi>, %1729, %cst_376 [1] : vector<8x128xi32> to vector<8xi32>
      %1731 = vector.shape_cast %1730 : vector<8xi32> to vector<8x1xi32>
      %1732 = tpu.iota {dimensions = array<i32: 1>} : vector<8x12xi32>
      %1733 = vector.broadcast %1731 : vector<8x1xi32> to vector<8x12xi32>
      %1734 = arith.cmpi eq, %1733, %1732 : vector<8x12xi32>
      %1735 = arith.extui %1734 : vector<8x12xi1> to vector<8x12xi32>
      %1736 = arith.sitofp %1735 : vector<8x12xi32> to vector<8x12xf32>
      %cst_377 = arith.constant dense<0.000000e+00> : vector<8x16xf32>
      %1737 = tpu.matmul %1736, %1102, %cst_377 {dimension_numbers = #tpu.dot_dimension_numbers<[1], [0], [0], [1], [0, 0, 1, 1], [], []>} : vector<8x12xf32>, vector<12x16xf32>, vector<8x16xf32> -> vector<8x16xf32>
      %c0_378 = arith.constant 0 : index
      %c0_379 = arith.constant 0 : index
      %1738 = vector.load %arg29[%c0_378, %c0_379] : memref<8x16xf32, #tpu.memory_space<vmem>>, vector<8x16xf32>
      tpu.vector_store %arg29[%c0_378, %c0_379], %1737 {strides = array<i32>} : memref<8x16xf32, #tpu.memory_space<vmem>>, vector<8x16xf32>,
    } else {
    }
    %c0_242 = arith.constant 0 : index
    %c0_243 = arith.constant 0 : index
    %1226 = vector.load %arg29[%c0_242, %c0_243] : memref<8x16xf32, #tpu.memory_space<vmem>>, vector<8x16xf32>
    %1227 = arith.truncf %1226 : vector<8x16xf32> to vector<8x16xbf16>
    %cst_244 = arith.constant dense<0.000000e+00> : vector<8x192xf32>
    %1228 = tpu.matmul %1227, %1107, %cst_244 {dimension_numbers = #tpu.dot_dimension_numbers<[1], [0], [0], [1], [0, 0, 1, 1], [], []>} : vector<8x16xbf16>, vector<16x192xbf16>, vector<8x192xf32> -> vector<8x192xf32>
    %1229 = arith.addf %1228, %1111 : vector<8x192xf32>
    %1230 = arith.truncf %1174 : vector<8x64xf32> to vector<8x64xbf16>
    %cst_245 = arith.constant dense<0.000000e+00> : vector<8x192xf32>
    %1231 = tpu.matmul %1230, %1108, %cst_245 {dimension_numbers = #tpu.dot_dimension_numbers<[1], [0], [0], [1], [0, 0, 1, 1], [], []>} : vector<8x64xbf16>, vector<64x192xbf16>, vector<8x192xf32> -> vector<8x192xf32>
    %1232 = arith.addf %1231, %1114 : vector<8x192xf32>
    %1233 = vector.extract_strided_slice %1229 {offsets = [0, 0], sizes = [8, 64], strides = [1, 1]} : vector<8x192xf32> to vector<8x64xf32>
    %1234 = vector.extract_strided_slice %1232 {offsets = [0, 0], sizes = [8, 64], strides = [1, 1]} : vector<8x192xf32> to vector<8x64xf32>
    %1235 = arith.addf %1233, %1234 : vector<8x64xf32>
    %1236 = arith.negf %1235 : vector<8x64xf32>
    %1237 = math.exp %1236 : vector<8x64xf32>
    %cst_246 = arith.constant 1.000000e+00 : f32
    %1238 = vector.broadcast %cst_246 : f32 to vector<8x64xf32>
    %1239 = arith.addf %1238, %1237 : vector<8x64xf32>
    %1240 = arith.divf %1238, %1239 : vector<8x64xf32>
    %1241 = vector.extract_strided_slice %1229 {offsets = [0, 64], sizes = [8, 64], strides = [1, 1]} : vector<8x192xf32> to vector<8x64xf32>
    %1242 = vector.extract_strided_slice %1232 {offsets = [0, 64], sizes = [8, 64], strides = [1, 1]} : vector<8x192xf32> to vector<8x64xf32>
    %1243 = arith.addf %1241, %1242 : vector<8x64xf32>
    %1244 = arith.negf %1243 : vector<8x64xf32>
    %1245 = math.exp %1244 : vector<8x64xf32>
    %cst_247 = arith.constant 1.000000e+00 : f32
    %1246 = vector.broadcast %cst_247 : f32 to vector<8x64xf32>
    %1247 = arith.addf %1246, %1245 : vector<8x64xf32>
    %1248 = arith.divf %1246, %1247 : vector<8x64xf32>
    %1249 = vector.extract_strided_slice %1229 {offsets = [0, 128], sizes = [8, 64], strides = [1, 1]} : vector<8x192xf32> to vector<8x64xf32>
    %1250 = vector.extract_strided_slice %1232 {offsets = [0, 128], sizes = [8, 64], strides = [1, 1]} : vector<8x192xf32> to vector<8x64xf32>
    %1251 = arith.mulf %1240, %1250 : vector<8x64xf32>
    %1252 = arith.addf %1249, %1251 : vector<8x64xf32>
    %1253 = math.tanh %1252 : vector<8x64xf32>
    %cst_248 = arith.constant 1.000000e+00 : f32
    %1254 = vector.broadcast %cst_248 : f32 to vector<8x64xf32>
    %1255 = arith.subf %1254, %1248 : vector<8x64xf32>
    %1256 = arith.mulf %1255, %1253 : vector<8x64xf32>
    %1257 = arith.mulf %1248, %1174 : vector<8x64xf32>
    %1258 = arith.addf %1256, %1257 : vector<8x64xf32>
    %1259 = arith.truncf %1258 : vector<8x64xf32> to vector<8x64xbf16>
    %cst_249 = arith.constant dense<0.000000e+00> : vector<8x192xf32>
    %1260 = tpu.matmul %1259, %1115, %cst_249 {dimension_numbers = #tpu.dot_dimension_numbers<[1], [0], [0], [1], [0, 0, 1, 1], [], []>} : vector<8x64xbf16>, vector<64x192xbf16>, vector<8x192xf32> -> vector<8x192xf32>
    %1261 = arith.addf %1260, %1119 : vector<8x192xf32>
    %1262 = arith.truncf %1206 : vector<8x64xf32> to vector<8x64xbf16>
    %cst_250 = arith.constant dense<0.000000e+00> : vector<8x192xf32>
    %1263 = tpu.matmul %1262, %1116, %cst_250 {dimension_numbers = #tpu.dot_dimension_numbers<[1], [0], [0], [1], [0, 0, 1, 1], [], []>} : vector<8x64xbf16>, vector<64x192xbf16>, vector<8x192xf32> -> vector<8x192xf32>
    %1264 = arith.addf %1263, %1122 : vector<8x192xf32>
    %1265 = vector.extract_strided_slice %1261 {offsets = [0, 0], sizes = [8, 64], strides = [1, 1]} : vector<8x192xf32> to vector<8x64xf32>
    %1266 = vector.extract_strided_slice %1264 {offsets = [0, 0], sizes = [8, 64], strides = [1, 1]} : vector<8x192xf32> to vector<8x64xf32>
    %1267 = arith.addf %1265, %1266 : vector<8x64xf32>
    %1268 = arith.negf %1267 : vector<8x64xf32>
    %1269 = math.exp %1268 : vector<8x64xf32>
    %cst_251 = arith.constant 1.000000e+00 : f32
    %1270 = vector.broadcast %cst_251 : f32 to vector<8x64xf32>
    %1271 = arith.addf %1270, %1269 : vector<8x64xf32>
    %1272 = arith.divf %1270, %1271 : vector<8x64xf32>
    %1273 = vector.extract_strided_slice %1261 {offsets = [0, 64], sizes = [8, 64], strides = [1, 1]} : vector<8x192xf32> to vector<8x64xf32>
    %1274 = vector.extract_strided_slice %1264 {offsets = [0, 64], sizes = [8, 64], strides = [1, 1]} : vector<8x192xf32> to vector<8x64xf32>
    %1275 = arith.addf %1273, %1274 : vector<8x64xf32>
    %1276 = arith.negf %1275 : vector<8x64xf32>
    %1277 = math.exp %1276 : vector<8x64xf32>
    %cst_252 = arith.constant 1.000000e+00 : f32
    %1278 = vector.broadcast %cst_252 : f32 to vector<8x64xf32>
    %1279 = arith.addf %1278, %1277 : vector<8x64xf32>
    %1280 = arith.divf %1278, %1279 : vector<8x64xf32>
    %1281 = vector.extract_strided_slice %1261 {offsets = [0, 128], sizes = [8, 64], strides = [1, 1]} : vector<8x192xf32> to vector<8x64xf32>
    %1282 = vector.extract_strided_slice %1264 {offsets = [0, 128], sizes = [8, 64], strides = [1, 1]} : vector<8x192xf32> to vector<8x64xf32>
    %1283 = arith.mulf %1272, %1282 : vector<8x64xf32>
    %1284 = arith.addf %1281, %1283 : vector<8x64xf32>
    %1285 = math.tanh %1284 : vector<8x64xf32>
    %cst_253 = arith.constant 1.000000e+00 : f32
    %1286 = vector.broadcast %cst_253 : f32 to vector<8x64xf32>
    %1287 = arith.subf %1286, %1280 : vector<8x64xf32>
    %1288 = arith.mulf %1287, %1285 : vector<8x64xf32>
    %1289 = arith.mulf %1280, %1206 : vector<8x64xf32>
    %1290 = arith.addf %1288, %1289 : vector<8x64xf32>
    %1291 = arith.truncf %1290 : vector<8x64xf32> to vector<8x64xbf16>
    %cst_254 = arith.constant dense<0.000000e+00> : vector<8x128xf32>
    %1292 = tpu.matmul %1291, %1123, %cst_254 {dimension_numbers = #tpu.dot_dimension_numbers<[1], [0], [0], [1], [0, 0, 1, 1], [], []>} : vector<8x64xbf16>, vector<64x128xbf16>, vector<8x128xf32> -> vector<8x128xf32>
    %1293 = arith.addf %1292, %1126 : vector<8x128xf32>
    %1294 = arith.truncf %1293 : vector<8x128xf32> to vector<8x128xbf16>
    %cst_255 = arith.constant dense<0.000000e+00> : vector<8x256xf32>
    %1295 = tpu.matmul %1294, %1127, %cst_255 {dimension_numbers = #tpu.dot_dimension_numbers<[1], [0], [0], [1], [0, 0, 1, 1], [], []>} : vector<8x128xbf16>, vector<128x256xbf16>, vector<8x256xf32> -> vector<8x256xf32>
    %1296 = arith.addf %1295, %1130 : vector<8x256xf32>
    %1297 = arith.truncf %1296 : vector<8x256xf32> to vector<8x256xbf16>
    %cst_256 = arith.constant dense<0.000000e+00> : vector<8x128xf32>
    %1298 = tpu.matmul %1297, %1131, %cst_256 {dimension_numbers = #tpu.dot_dimension_numbers<[1], [0], [0], [1], [0, 0, 1, 1], [], []>} : vector<8x256xbf16>, vector<256x128xbf16>, vector<8x128xf32> -> vector<8x128xf32>
    %1299 = arith.addf %1298, %1134 : vector<8x128xf32>
    %c2_257 = arith.constant 2 : index
    %c0_258 = arith.constant 0 : index
    %c0_259 = arith.constant 0 : index
    %1300 = vector.load %arg26[%c2_257, %c0_258, %c0_259] : memref<8x8x128xf32, #tpu.memory_space<vmem>>, vector<1x8x128xf32>
    %1301 = vector.shape_cast %1300 : vector<1x8x128xf32> to vector<8x128xf32>
    %1302 = vector.shape_cast %1299 : vector<8x128xf32> to vector<1x8x128xf32>
    tpu.vector_store %arg26[%c2_257, %c0_258, %c0_259], %1302 {strides = array<i32>} : memref<8x8x128xf32, #tpu.memory_space<vmem>>, vector<1x8x128xf32>,
    %1303 = vector.extract_strided_slice %1106 {offsets = [2, 0, 0], sizes = [1, 8, 16], strides = [1, 1, 1]} : vector<8x8x16xf32> to vector<1x8x16xf32>
    %1304 = vector.shape_cast %1303 : vector<1x8x16xf32> to vector<8x16xf32>
    %c0_260 = arith.constant 0 : index
    %c0_261 = arith.constant 0 : index
    %1305 = vector.load %arg29[%c0_260, %c0_261] : memref<8x16xf32, #tpu.memory_space<vmem>>, vector<8x16xf32>
    tpu.vector_store %arg29[%c0_260, %c0_261], %1304 {strides = array<i32>} : memref<8x16xf32, #tpu.memory_space<vmem>>, vector<8x16xf32>,
    %c2_262 = arith.constant 2 : index
    %1306 = memref.load %arg2[%c2_262] : memref<8xi32, #tpu.memory_space<smem>>
    %c0_i32_263 = arith.constant 0 : i32
    %1307 = arith.cmpi eq, %1306, %c0_i32_263 : i32
    %1308 = arith.extui %1307 : i1 to i32
    %c0_i32_264 = arith.constant 0 : i32
    %1309 = arith.cmpi ne, %1308, %c0_i32_264 : i32
    scf.if %1309 {
      %cst_375 = arith.constant dense<0xFF800000> : vector<8xf32>
      %1723 = vector.multi_reduction <maximumf>, %1299, %cst_375 [1] : vector<8x128xf32> to vector<8xf32>
      %1724 = vector.shape_cast %1723 : vector<8xf32> to vector<8x1xf32>
      %1725 = tpu.iota {dimensions = array<i32: 1>} : vector<8x128xi32>
      %1726 = vector.broadcast %1724 : vector<8x1xf32> to vector<8x128xf32>
      %1727 = arith.cmpf oge, %1299, %1726 : vector<8x128xf32>
      %c128_i32 = arith.constant 128 : i32
      %1728 = vector.broadcast %c128_i32 : i32 to vector<8x128xi32>
      %1729 = arith.select %1727, %1725, %1728 : vector<8x128xi1>, vector<8x128xi32>
      %cst_376 = arith.constant dense<2147483647> : vector<8xi32>
      %1730 = vector.multi_reduction <minsi>, %1729, %cst_376 [1] : vector<8x128xi32> to vector<8xi32>
      %1731 = vector.shape_cast %1730 : vector<8xi32> to vector<8x1xi32>
      %1732 = tpu.iota {dimensions = array<i32: 1>} : vector<8x12xi32>
      %1733 = vector.broadcast %1731 : vector<8x1xi32> to vector<8x12xi32>
      %1734 = arith.cmpi eq, %1733, %1732 : vector<8x12xi32>
      %1735 = arith.extui %1734 : vector<8x12xi1> to vector<8x12xi32>
      %1736 = arith.sitofp %1735 : vector<8x12xi32> to vector<8x12xf32>
      %cst_377 = arith.constant dense<0.000000e+00> : vector<8x16xf32>
      %1737 = tpu.matmul %1736, %1102, %cst_377 {dimension_numbers = #tpu.dot_dimension_numbers<[1], [0], [0], [1], [0, 0, 1, 1], [], []>} : vector<8x12xf32>, vector<12x16xf32>, vector<8x16xf32> -> vector<8x16xf32>
      %c0_378 = arith.constant 0 : index
      %c0_379 = arith.constant 0 : index
      %1738 = vector.load %arg29[%c0_378, %c0_379] : memref<8x16xf32, #tpu.memory_space<vmem>>, vector<8x16xf32>
      tpu.vector_store %arg29[%c0_378, %c0_379], %1737 {strides = array<i32>} : memref<8x16xf32, #tpu.memory_space<vmem>>, vector<8x16xf32>,
    } else {
    }
    %c0_265 = arith.constant 0 : index
    %c0_266 = arith.constant 0 : index
    %1310 = vector.load %arg29[%c0_265, %c0_266] : memref<8x16xf32, #tpu.memory_space<vmem>>, vector<8x16xf32>
    %1311 = arith.truncf %1310 : vector<8x16xf32> to vector<8x16xbf16>
    %cst_267 = arith.constant dense<0.000000e+00> : vector<8x192xf32>
    %1312 = tpu.matmul %1311, %1107, %cst_267 {dimension_numbers = #tpu.dot_dimension_numbers<[1], [0], [0], [1], [0, 0, 1, 1], [], []>} : vector<8x16xbf16>, vector<16x192xbf16>, vector<8x192xf32> -> vector<8x192xf32>
    %1313 = arith.addf %1312, %1111 : vector<8x192xf32>
    %1314 = arith.truncf %1258 : vector<8x64xf32> to vector<8x64xbf16>
    %cst_268 = arith.constant dense<0.000000e+00> : vector<8x192xf32>
    %1315 = tpu.matmul %1314, %1108, %cst_268 {dimension_numbers = #tpu.dot_dimension_numbers<[1], [0], [0], [1], [0, 0, 1, 1], [], []>} : vector<8x64xbf16>, vector<64x192xbf16>, vector<8x192xf32> -> vector<8x192xf32>
    %1316 = arith.addf %1315, %1114 : vector<8x192xf32>
    %1317 = vector.extract_strided_slice %1313 {offsets = [0, 0], sizes = [8, 64], strides = [1, 1]} : vector<8x192xf32> to vector<8x64xf32>
    %1318 = vector.extract_strided_slice %1316 {offsets = [0, 0], sizes = [8, 64], strides = [1, 1]} : vector<8x192xf32> to vector<8x64xf32>
    %1319 = arith.addf %1317, %1318 : vector<8x64xf32>
    %1320 = arith.negf %1319 : vector<8x64xf32>
    %1321 = math.exp %1320 : vector<8x64xf32>
    %cst_269 = arith.constant 1.000000e+00 : f32
    %1322 = vector.broadcast %cst_269 : f32 to vector<8x64xf32>
    %1323 = arith.addf %1322, %1321 : vector<8x64xf32>
    %1324 = arith.divf %1322, %1323 : vector<8x64xf32>
    %1325 = vector.extract_strided_slice %1313 {offsets = [0, 64], sizes = [8, 64], strides = [1, 1]} : vector<8x192xf32> to vector<8x64xf32>
    %1326 = vector.extract_strided_slice %1316 {offsets = [0, 64], sizes = [8, 64], strides = [1, 1]} : vector<8x192xf32> to vector<8x64xf32>
    %1327 = arith.addf %1325, %1326 : vector<8x64xf32>
    %1328 = arith.negf %1327 : vector<8x64xf32>
    %1329 = math.exp %1328 : vector<8x64xf32>
    %cst_270 = arith.constant 1.000000e+00 : f32
    %1330 = vector.broadcast %cst_270 : f32 to vector<8x64xf32>
    %1331 = arith.addf %1330, %1329 : vector<8x64xf32>
    %1332 = arith.divf %1330, %1331 : vector<8x64xf32>
    %1333 = vector.extract_strided_slice %1313 {offsets = [0, 128], sizes = [8, 64], strides = [1, 1]} : vector<8x192xf32> to vector<8x64xf32>
    %1334 = vector.extract_strided_slice %1316 {offsets = [0, 128], sizes = [8, 64], strides = [1, 1]} : vector<8x192xf32> to vector<8x64xf32>
    %1335 = arith.mulf %1324, %1334 : vector<8x64xf32>
    %1336 = arith.addf %1333, %1335 : vector<8x64xf32>
    %1337 = math.tanh %1336 : vector<8x64xf32>
    %cst_271 = arith.constant 1.000000e+00 : f32
    %1338 = vector.broadcast %cst_271 : f32 to vector<8x64xf32>
    %1339 = arith.subf %1338, %1332 : vector<8x64xf32>
    %1340 = arith.mulf %1339, %1337 : vector<8x64xf32>
    %1341 = arith.mulf %1332, %1258 : vector<8x64xf32>
    %1342 = arith.addf %1340, %1341 : vector<8x64xf32>
    %1343 = arith.truncf %1342 : vector<8x64xf32> to vector<8x64xbf16>
    %cst_272 = arith.constant dense<0.000000e+00> : vector<8x192xf32>
    %1344 = tpu.matmul %1343, %1115, %cst_272 {dimension_numbers = #tpu.dot_dimension_numbers<[1], [0], [0], [1], [0, 0, 1, 1], [], []>} : vector<8x64xbf16>, vector<64x192xbf16>, vector<8x192xf32> -> vector<8x192xf32>
    %1345 = arith.addf %1344, %1119 : vector<8x192xf32>
    %1346 = arith.truncf %1290 : vector<8x64xf32> to vector<8x64xbf16>
    %cst_273 = arith.constant dense<0.000000e+00> : vector<8x192xf32>
    %1347 = tpu.matmul %1346, %1116, %cst_273 {dimension_numbers = #tpu.dot_dimension_numbers<[1], [0], [0], [1], [0, 0, 1, 1], [], []>} : vector<8x64xbf16>, vector<64x192xbf16>, vector<8x192xf32> -> vector<8x192xf32>
    %1348 = arith.addf %1347, %1122 : vector<8x192xf32>
    %1349 = vector.extract_strided_slice %1345 {offsets = [0, 0], sizes = [8, 64], strides = [1, 1]} : vector<8x192xf32> to vector<8x64xf32>
    %1350 = vector.extract_strided_slice %1348 {offsets = [0, 0], sizes = [8, 64], strides = [1, 1]} : vector<8x192xf32> to vector<8x64xf32>
    %1351 = arith.addf %1349, %1350 : vector<8x64xf32>
    %1352 = arith.negf %1351 : vector<8x64xf32>
    %1353 = math.exp %1352 : vector<8x64xf32>
    %cst_274 = arith.constant 1.000000e+00 : f32
    %1354 = vector.broadcast %cst_274 : f32 to vector<8x64xf32>
    %1355 = arith.addf %1354, %1353 : vector<8x64xf32>
    %1356 = arith.divf %1354, %1355 : vector<8x64xf32>
    %1357 = vector.extract_strided_slice %1345 {offsets = [0, 64], sizes = [8, 64], strides = [1, 1]} : vector<8x192xf32> to vector<8x64xf32>
    %1358 = vector.extract_strided_slice %1348 {offsets = [0, 64], sizes = [8, 64], strides = [1, 1]} : vector<8x192xf32> to vector<8x64xf32>
    %1359 = arith.addf %1357, %1358 : vector<8x64xf32>
    %1360 = arith.negf %1359 : vector<8x64xf32>
    %1361 = math.exp %1360 : vector<8x64xf32>
    %cst_275 = arith.constant 1.000000e+00 : f32
    %1362 = vector.broadcast %cst_275 : f32 to vector<8x64xf32>
    %1363 = arith.addf %1362, %1361 : vector<8x64xf32>
    %1364 = arith.divf %1362, %1363 : vector<8x64xf32>
    %1365 = vector.extract_strided_slice %1345 {offsets = [0, 128], sizes = [8, 64], strides = [1, 1]} : vector<8x192xf32> to vector<8x64xf32>
    %1366 = vector.extract_strided_slice %1348 {offsets = [0, 128], sizes = [8, 64], strides = [1, 1]} : vector<8x192xf32> to vector<8x64xf32>
    %1367 = arith.mulf %1356, %1366 : vector<8x64xf32>
    %1368 = arith.addf %1365, %1367 : vector<8x64xf32>
    %1369 = math.tanh %1368 : vector<8x64xf32>
    %cst_276 = arith.constant 1.000000e+00 : f32
    %1370 = vector.broadcast %cst_276 : f32 to vector<8x64xf32>
    %1371 = arith.subf %1370, %1364 : vector<8x64xf32>
    %1372 = arith.mulf %1371, %1369 : vector<8x64xf32>
    %1373 = arith.mulf %1364, %1290 : vector<8x64xf32>
    %1374 = arith.addf %1372, %1373 : vector<8x64xf32>
    %1375 = arith.truncf %1374 : vector<8x64xf32> to vector<8x64xbf16>
    %cst_277 = arith.constant dense<0.000000e+00> : vector<8x128xf32>
    %1376 = tpu.matmul %1375, %1123, %cst_277 {dimension_numbers = #tpu.dot_dimension_numbers<[1], [0], [0], [1], [0, 0, 1, 1], [], []>} : vector<8x64xbf16>, vector<64x128xbf16>, vector<8x128xf32> -> vector<8x128xf32>
    %1377 = arith.addf %1376, %1126 : vector<8x128xf32>
    %1378 = arith.truncf %1377 : vector<8x128xf32> to vector<8x128xbf16>
    %cst_278 = arith.constant dense<0.000000e+00> : vector<8x256xf32>
    %1379 = tpu.matmul %1378, %1127, %cst_278 {dimension_numbers = #tpu.dot_dimension_numbers<[1], [0], [0], [1], [0, 0, 1, 1], [], []>} : vector<8x128xbf16>, vector<128x256xbf16>, vector<8x256xf32> -> vector<8x256xf32>
    %1380 = arith.addf %1379, %1130 : vector<8x256xf32>
    %1381 = arith.truncf %1380 : vector<8x256xf32> to vector<8x256xbf16>
    %cst_279 = arith.constant dense<0.000000e+00> : vector<8x128xf32>
    %1382 = tpu.matmul %1381, %1131, %cst_279 {dimension_numbers = #tpu.dot_dimension_numbers<[1], [0], [0], [1], [0, 0, 1, 1], [], []>} : vector<8x256xbf16>, vector<256x128xbf16>, vector<8x128xf32> -> vector<8x128xf32>
    %1383 = arith.addf %1382, %1134 : vector<8x128xf32>
    %c3_280 = arith.constant 3 : index
    %c0_281 = arith.constant 0 : index
    %c0_282 = arith.constant 0 : index
    %1384 = vector.load %arg26[%c3_280, %c0_281, %c0_282] : memref<8x8x128xf32, #tpu.memory_space<vmem>>, vector<1x8x128xf32>
    %1385 = vector.shape_cast %1384 : vector<1x8x128xf32> to vector<8x128xf32>
    %1386 = vector.shape_cast %1383 : vector<8x128xf32> to vector<1x8x128xf32>
    tpu.vector_store %arg26[%c3_280, %c0_281, %c0_282], %1386 {strides = array<i32>} : memref<8x8x128xf32, #tpu.memory_space<vmem>>, vector<1x8x128xf32>,
    %1387 = vector.extract_strided_slice %1106 {offsets = [3, 0, 0], sizes = [1, 8, 16], strides = [1, 1, 1]} : vector<8x8x16xf32> to vector<1x8x16xf32>
    %1388 = vector.shape_cast %1387 : vector<1x8x16xf32> to vector<8x16xf32>
    %c0_283 = arith.constant 0 : index
    %c0_284 = arith.constant 0 : index
    %1389 = vector.load %arg29[%c0_283, %c0_284] : memref<8x16xf32, #tpu.memory_space<vmem>>, vector<8x16xf32>
    tpu.vector_store %arg29[%c0_283, %c0_284], %1388 {strides = array<i32>} : memref<8x16xf32, #tpu.memory_space<vmem>>, vector<8x16xf32>,
    %c3_285 = arith.constant 3 : index
    %1390 = memref.load %arg2[%c3_285] : memref<8xi32, #tpu.memory_space<smem>>
    %c0_i32_286 = arith.constant 0 : i32
    %1391 = arith.cmpi eq, %1390, %c0_i32_286 : i32
    %1392 = arith.extui %1391 : i1 to i32
    %c0_i32_287 = arith.constant 0 : i32
    %1393 = arith.cmpi ne, %1392, %c0_i32_287 : i32
    scf.if %1393 {
      %cst_375 = arith.constant dense<0xFF800000> : vector<8xf32>
      %1723 = vector.multi_reduction <maximumf>, %1383, %cst_375 [1] : vector<8x128xf32> to vector<8xf32>
      %1724 = vector.shape_cast %1723 : vector<8xf32> to vector<8x1xf32>
      %1725 = tpu.iota {dimensions = array<i32: 1>} : vector<8x128xi32>
      %1726 = vector.broadcast %1724 : vector<8x1xf32> to vector<8x128xf32>
      %1727 = arith.cmpf oge, %1383, %1726 : vector<8x128xf32>
      %c128_i32 = arith.constant 128 : i32
      %1728 = vector.broadcast %c128_i32 : i32 to vector<8x128xi32>
      %1729 = arith.select %1727, %1725, %1728 : vector<8x128xi1>, vector<8x128xi32>
      %cst_376 = arith.constant dense<2147483647> : vector<8xi32>
      %1730 = vector.multi_reduction <minsi>, %1729, %cst_376 [1] : vector<8x128xi32> to vector<8xi32>
      %1731 = vector.shape_cast %1730 : vector<8xi32> to vector<8x1xi32>
      %1732 = tpu.iota {dimensions = array<i32: 1>} : vector<8x12xi32>
      %1733 = vector.broadcast %1731 : vector<8x1xi32> to vector<8x12xi32>
      %1734 = arith.cmpi eq, %1733, %1732 : vector<8x12xi32>
      %1735 = arith.extui %1734 : vector<8x12xi1> to vector<8x12xi32>
      %1736 = arith.sitofp %1735 : vector<8x12xi32> to vector<8x12xf32>
      %cst_377 = arith.constant dense<0.000000e+00> : vector<8x16xf32>
      %1737 = tpu.matmul %1736, %1102, %cst_377 {dimension_numbers = #tpu.dot_dimension_numbers<[1], [0], [0], [1], [0, 0, 1, 1], [], []>} : vector<8x12xf32>, vector<12x16xf32>, vector<8x16xf32> -> vector<8x16xf32>
      %c0_378 = arith.constant 0 : index
      %c0_379 = arith.constant 0 : index
      %1738 = vector.load %arg29[%c0_378, %c0_379] : memref<8x16xf32, #tpu.memory_space<vmem>>, vector<8x16xf32>
      tpu.vector_store %arg29[%c0_378, %c0_379], %1737 {strides = array<i32>} : memref<8x16xf32, #tpu.memory_space<vmem>>, vector<8x16xf32>,
    } else {
    }
    %c0_288 = arith.constant 0 : index
    %c0_289 = arith.constant 0 : index
    %1394 = vector.load %arg29[%c0_288, %c0_289] : memref<8x16xf32, #tpu.memory_space<vmem>>, vector<8x16xf32>
    %1395 = arith.truncf %1394 : vector<8x16xf32> to vector<8x16xbf16>
    %cst_290 = arith.constant dense<0.000000e+00> : vector<8x192xf32>
    %1396 = tpu.matmul %1395, %1107, %cst_290 {dimension_numbers = #tpu.dot_dimension_numbers<[1], [0], [0], [1], [0, 0, 1, 1], [], []>} : vector<8x16xbf16>, vector<16x192xbf16>, vector<8x192xf32> -> vector<8x192xf32>
    %1397 = arith.addf %1396, %1111 : vector<8x192xf32>
    %1398 = arith.truncf %1342 : vector<8x64xf32> to vector<8x64xbf16>
    %cst_291 = arith.constant dense<0.000000e+00> : vector<8x192xf32>
    %1399 = tpu.matmul %1398, %1108, %cst_291 {dimension_numbers = #tpu.dot_dimension_numbers<[1], [0], [0], [1], [0, 0, 1, 1], [], []>} : vector<8x64xbf16>, vector<64x192xbf16>, vector<8x192xf32> -> vector<8x192xf32>
    %1400 = arith.addf %1399, %1114 : vector<8x192xf32>
    %1401 = vector.extract_strided_slice %1397 {offsets = [0, 0], sizes = [8, 64], strides = [1, 1]} : vector<8x192xf32> to vector<8x64xf32>
    %1402 = vector.extract_strided_slice %1400 {offsets = [0, 0], sizes = [8, 64], strides = [1, 1]} : vector<8x192xf32> to vector<8x64xf32>
    %1403 = arith.addf %1401, %1402 : vector<8x64xf32>
    %1404 = arith.negf %1403 : vector<8x64xf32>
    %1405 = math.exp %1404 : vector<8x64xf32>
    %cst_292 = arith.constant 1.000000e+00 : f32
    %1406 = vector.broadcast %cst_292 : f32 to vector<8x64xf32>
    %1407 = arith.addf %1406, %1405 : vector<8x64xf32>
    %1408 = arith.divf %1406, %1407 : vector<8x64xf32>
    %1409 = vector.extract_strided_slice %1397 {offsets = [0, 64], sizes = [8, 64], strides = [1, 1]} : vector<8x192xf32> to vector<8x64xf32>
    %1410 = vector.extract_strided_slice %1400 {offsets = [0, 64], sizes = [8, 64], strides = [1, 1]} : vector<8x192xf32> to vector<8x64xf32>
    %1411 = arith.addf %1409, %1410 : vector<8x64xf32>
    %1412 = arith.negf %1411 : vector<8x64xf32>
    %1413 = math.exp %1412 : vector<8x64xf32>
    %cst_293 = arith.constant 1.000000e+00 : f32
    %1414 = vector.broadcast %cst_293 : f32 to vector<8x64xf32>
    %1415 = arith.addf %1414, %1413 : vector<8x64xf32>
    %1416 = arith.divf %1414, %1415 : vector<8x64xf32>
    %1417 = vector.extract_strided_slice %1397 {offsets = [0, 128], sizes = [8, 64], strides = [1, 1]} : vector<8x192xf32> to vector<8x64xf32>
    %1418 = vector.extract_strided_slice %1400 {offsets = [0, 128], sizes = [8, 64], strides = [1, 1]} : vector<8x192xf32> to vector<8x64xf32>
    %1419 = arith.mulf %1408, %1418 : vector<8x64xf32>
    %1420 = arith.addf %1417, %1419 : vector<8x64xf32>
    %1421 = math.tanh %1420 : vector<8x64xf32>
    %cst_294 = arith.constant 1.000000e+00 : f32
    %1422 = vector.broadcast %cst_294 : f32 to vector<8x64xf32>
    %1423 = arith.subf %1422, %1416 : vector<8x64xf32>
    %1424 = arith.mulf %1423, %1421 : vector<8x64xf32>
    %1425 = arith.mulf %1416, %1342 : vector<8x64xf32>
    %1426 = arith.addf %1424, %1425 : vector<8x64xf32>
    %1427 = arith.truncf %1426 : vector<8x64xf32> to vector<8x64xbf16>
    %cst_295 = arith.constant dense<0.000000e+00> : vector<8x192xf32>
    %1428 = tpu.matmul %1427, %1115, %cst_295 {dimension_numbers = #tpu.dot_dimension_numbers<[1], [0], [0], [1], [0, 0, 1, 1], [], []>} : vector<8x64xbf16>, vector<64x192xbf16>, vector<8x192xf32> -> vector<8x192xf32>
    %1429 = arith.addf %1428, %1119 : vector<8x192xf32>
    %1430 = arith.truncf %1374 : vector<8x64xf32> to vector<8x64xbf16>
    %cst_296 = arith.constant dense<0.000000e+00> : vector<8x192xf32>
    %1431 = tpu.matmul %1430, %1116, %cst_296 {dimension_numbers = #tpu.dot_dimension_numbers<[1], [0], [0], [1], [0, 0, 1, 1], [], []>} : vector<8x64xbf16>, vector<64x192xbf16>, vector<8x192xf32> -> vector<8x192xf32>
    %1432 = arith.addf %1431, %1122 : vector<8x192xf32>
    %1433 = vector.extract_strided_slice %1429 {offsets = [0, 0], sizes = [8, 64], strides = [1, 1]} : vector<8x192xf32> to vector<8x64xf32>
    %1434 = vector.extract_strided_slice %1432 {offsets = [0, 0], sizes = [8, 64], strides = [1, 1]} : vector<8x192xf32> to vector<8x64xf32>
    %1435 = arith.addf %1433, %1434 : vector<8x64xf32>
    %1436 = arith.negf %1435 : vector<8x64xf32>
    %1437 = math.exp %1436 : vector<8x64xf32>
    %cst_297 = arith.constant 1.000000e+00 : f32
    %1438 = vector.broadcast %cst_297 : f32 to vector<8x64xf32>
    %1439 = arith.addf %1438, %1437 : vector<8x64xf32>
    %1440 = arith.divf %1438, %1439 : vector<8x64xf32>
    %1441 = vector.extract_strided_slice %1429 {offsets = [0, 64], sizes = [8, 64], strides = [1, 1]} : vector<8x192xf32> to vector<8x64xf32>
    %1442 = vector.extract_strided_slice %1432 {offsets = [0, 64], sizes = [8, 64], strides = [1, 1]} : vector<8x192xf32> to vector<8x64xf32>
    %1443 = arith.addf %1441, %1442 : vector<8x64xf32>
    %1444 = arith.negf %1443 : vector<8x64xf32>
    %1445 = math.exp %1444 : vector<8x64xf32>
    %cst_298 = arith.constant 1.000000e+00 : f32
    %1446 = vector.broadcast %cst_298 : f32 to vector<8x64xf32>
    %1447 = arith.addf %1446, %1445 : vector<8x64xf32>
    %1448 = arith.divf %1446, %1447 : vector<8x64xf32>
    %1449 = vector.extract_strided_slice %1429 {offsets = [0, 128], sizes = [8, 64], strides = [1, 1]} : vector<8x192xf32> to vector<8x64xf32>
    %1450 = vector.extract_strided_slice %1432 {offsets = [0, 128], sizes = [8, 64], strides = [1, 1]} : vector<8x192xf32> to vector<8x64xf32>
    %1451 = arith.mulf %1440, %1450 : vector<8x64xf32>
    %1452 = arith.addf %1449, %1451 : vector<8x64xf32>
    %1453 = math.tanh %1452 : vector<8x64xf32>
    %cst_299 = arith.constant 1.000000e+00 : f32
    %1454 = vector.broadcast %cst_299 : f32 to vector<8x64xf32>
    %1455 = arith.subf %1454, %1448 : vector<8x64xf32>
    %1456 = arith.mulf %1455, %1453 : vector<8x64xf32>
    %1457 = arith.mulf %1448, %1374 : vector<8x64xf32>
    %1458 = arith.addf %1456, %1457 : vector<8x64xf32>
    %1459 = arith.truncf %1458 : vector<8x64xf32> to vector<8x64xbf16>
    %cst_300 = arith.constant dense<0.000000e+00> : vector<8x128xf32>
    %1460 = tpu.matmul %1459, %1123, %cst_300 {dimension_numbers = #tpu.dot_dimension_numbers<[1], [0], [0], [1], [0, 0, 1, 1], [], []>} : vector<8x64xbf16>, vector<64x128xbf16>, vector<8x128xf32> -> vector<8x128xf32>
    %1461 = arith.addf %1460, %1126 : vector<8x128xf32>
    %1462 = arith.truncf %1461 : vector<8x128xf32> to vector<8x128xbf16>
    %cst_301 = arith.constant dense<0.000000e+00> : vector<8x256xf32>
    %1463 = tpu.matmul %1462, %1127, %cst_301 {dimension_numbers = #tpu.dot_dimension_numbers<[1], [0], [0], [1], [0, 0, 1, 1], [], []>} : vector<8x128xbf16>, vector<128x256xbf16>, vector<8x256xf32> -> vector<8x256xf32>
    %1464 = arith.addf %1463, %1130 : vector<8x256xf32>
    %1465 = arith.truncf %1464 : vector<8x256xf32> to vector<8x256xbf16>
    %cst_302 = arith.constant dense<0.000000e+00> : vector<8x128xf32>
    %1466 = tpu.matmul %1465, %1131, %cst_302 {dimension_numbers = #tpu.dot_dimension_numbers<[1], [0], [0], [1], [0, 0, 1, 1], [], []>} : vector<8x256xbf16>, vector<256x128xbf16>, vector<8x128xf32> -> vector<8x128xf32>
    %1467 = arith.addf %1466, %1134 : vector<8x128xf32>
    %c4_303 = arith.constant 4 : index
    %c0_304 = arith.constant 0 : index
    %c0_305 = arith.constant 0 : index
    %1468 = vector.load %arg26[%c4_303, %c0_304, %c0_305] : memref<8x8x128xf32, #tpu.memory_space<vmem>>, vector<1x8x128xf32>
    %1469 = vector.shape_cast %1468 : vector<1x8x128xf32> to vector<8x128xf32>
    %1470 = vector.shape_cast %1467 : vector<8x128xf32> to vector<1x8x128xf32>
    tpu.vector_store %arg26[%c4_303, %c0_304, %c0_305], %1470 {strides = array<i32>} : memref<8x8x128xf32, #tpu.memory_space<vmem>>, vector<1x8x128xf32>,
    %1471 = vector.extract_strided_slice %1106 {offsets = [4, 0, 0], sizes = [1, 8, 16], strides = [1, 1, 1]} : vector<8x8x16xf32> to vector<1x8x16xf32>
    %1472 = vector.shape_cast %1471 : vector<1x8x16xf32> to vector<8x16xf32>
    %c0_306 = arith.constant 0 : index
    %c0_307 = arith.constant 0 : index
    %1473 = vector.load %arg29[%c0_306, %c0_307] : memref<8x16xf32, #tpu.memory_space<vmem>>, vector<8x16xf32>
    tpu.vector_store %arg29[%c0_306, %c0_307], %1472 {strides = array<i32>} : memref<8x16xf32, #tpu.memory_space<vmem>>, vector<8x16xf32>,
    %c4_308 = arith.constant 4 : index
    %1474 = memref.load %arg2[%c4_308] : memref<8xi32, #tpu.memory_space<smem>>
    %c0_i32_309 = arith.constant 0 : i32
    %1475 = arith.cmpi eq, %1474, %c0_i32_309 : i32
    %1476 = arith.extui %1475 : i1 to i32
    %c0_i32_310 = arith.constant 0 : i32
    %1477 = arith.cmpi ne, %1476, %c0_i32_310 : i32
    scf.if %1477 {
      %cst_375 = arith.constant dense<0xFF800000> : vector<8xf32>
      %1723 = vector.multi_reduction <maximumf>, %1467, %cst_375 [1] : vector<8x128xf32> to vector<8xf32>
      %1724 = vector.shape_cast %1723 : vector<8xf32> to vector<8x1xf32>
      %1725 = tpu.iota {dimensions = array<i32: 1>} : vector<8x128xi32>
      %1726 = vector.broadcast %1724 : vector<8x1xf32> to vector<8x128xf32>
      %1727 = arith.cmpf oge, %1467, %1726 : vector<8x128xf32>
      %c128_i32 = arith.constant 128 : i32
      %1728 = vector.broadcast %c128_i32 : i32 to vector<8x128xi32>
      %1729 = arith.select %1727, %1725, %1728 : vector<8x128xi1>, vector<8x128xi32>
      %cst_376 = arith.constant dense<2147483647> : vector<8xi32>
      %1730 = vector.multi_reduction <minsi>, %1729, %cst_376 [1] : vector<8x128xi32> to vector<8xi32>
      %1731 = vector.shape_cast %1730 : vector<8xi32> to vector<8x1xi32>
      %1732 = tpu.iota {dimensions = array<i32: 1>} : vector<8x12xi32>
      %1733 = vector.broadcast %1731 : vector<8x1xi32> to vector<8x12xi32>
      %1734 = arith.cmpi eq, %1733, %1732 : vector<8x12xi32>
      %1735 = arith.extui %1734 : vector<8x12xi1> to vector<8x12xi32>
      %1736 = arith.sitofp %1735 : vector<8x12xi32> to vector<8x12xf32>
      %cst_377 = arith.constant dense<0.000000e+00> : vector<8x16xf32>
      %1737 = tpu.matmul %1736, %1102, %cst_377 {dimension_numbers = #tpu.dot_dimension_numbers<[1], [0], [0], [1], [0, 0, 1, 1], [], []>} : vector<8x12xf32>, vector<12x16xf32>, vector<8x16xf32> -> vector<8x16xf32>
      %c0_378 = arith.constant 0 : index
      %c0_379 = arith.constant 0 : index
      %1738 = vector.load %arg29[%c0_378, %c0_379] : memref<8x16xf32, #tpu.memory_space<vmem>>, vector<8x16xf32>
      tpu.vector_store %arg29[%c0_378, %c0_379], %1737 {strides = array<i32>} : memref<8x16xf32, #tpu.memory_space<vmem>>, vector<8x16xf32>,
    } else {
    }
    %c0_311 = arith.constant 0 : index
    %c0_312 = arith.constant 0 : index
    %1478 = vector.load %arg29[%c0_311, %c0_312] : memref<8x16xf32, #tpu.memory_space<vmem>>, vector<8x16xf32>
    %1479 = arith.truncf %1478 : vector<8x16xf32> to vector<8x16xbf16>
    %cst_313 = arith.constant dense<0.000000e+00> : vector<8x192xf32>
    %1480 = tpu.matmul %1479, %1107, %cst_313 {dimension_numbers = #tpu.dot_dimension_numbers<[1], [0], [0], [1], [0, 0, 1, 1], [], []>} : vector<8x16xbf16>, vector<16x192xbf16>, vector<8x192xf32> -> vector<8x192xf32>
    %1481 = arith.addf %1480, %1111 : vector<8x192xf32>
    %1482 = arith.truncf %1426 : vector<8x64xf32> to vector<8x64xbf16>
    %cst_314 = arith.constant dense<0.000000e+00> : vector<8x192xf32>
    %1483 = tpu.matmul %1482, %1108, %cst_314 {dimension_numbers = #tpu.dot_dimension_numbers<[1], [0], [0], [1], [0, 0, 1, 1], [], []>} : vector<8x64xbf16>, vector<64x192xbf16>, vector<8x192xf32> -> vector<8x192xf32>
    %1484 = arith.addf %1483, %1114 : vector<8x192xf32>
    %1485 = vector.extract_strided_slice %1481 {offsets = [0, 0], sizes = [8, 64], strides = [1, 1]} : vector<8x192xf32> to vector<8x64xf32>
    %1486 = vector.extract_strided_slice %1484 {offsets = [0, 0], sizes = [8, 64], strides = [1, 1]} : vector<8x192xf32> to vector<8x64xf32>
    %1487 = arith.addf %1485, %1486 : vector<8x64xf32>
    %1488 = arith.negf %1487 : vector<8x64xf32>
    %1489 = math.exp %1488 : vector<8x64xf32>
    %cst_315 = arith.constant 1.000000e+00 : f32
    %1490 = vector.broadcast %cst_315 : f32 to vector<8x64xf32>
    %1491 = arith.addf %1490, %1489 : vector<8x64xf32>
    %1492 = arith.divf %1490, %1491 : vector<8x64xf32>
    %1493 = vector.extract_strided_slice %1481 {offsets = [0, 64], sizes = [8, 64], strides = [1, 1]} : vector<8x192xf32> to vector<8x64xf32>
    %1494 = vector.extract_strided_slice %1484 {offsets = [0, 64], sizes = [8, 64], strides = [1, 1]} : vector<8x192xf32> to vector<8x64xf32>
    %1495 = arith.addf %1493, %1494 : vector<8x64xf32>
    %1496 = arith.negf %1495 : vector<8x64xf32>
    %1497 = math.exp %1496 : vector<8x64xf32>
    %cst_316 = arith.constant 1.000000e+00 : f32
    %1498 = vector.broadcast %cst_316 : f32 to vector<8x64xf32>
    %1499 = arith.addf %1498, %1497 : vector<8x64xf32>
    %1500 = arith.divf %1498, %1499 : vector<8x64xf32>
    %1501 = vector.extract_strided_slice %1481 {offsets = [0, 128], sizes = [8, 64], strides = [1, 1]} : vector<8x192xf32> to vector<8x64xf32>
    %1502 = vector.extract_strided_slice %1484 {offsets = [0, 128], sizes = [8, 64], strides = [1, 1]} : vector<8x192xf32> to vector<8x64xf32>
    %1503 = arith.mulf %1492, %1502 : vector<8x64xf32>
    %1504 = arith.addf %1501, %1503 : vector<8x64xf32>
    %1505 = math.tanh %1504 : vector<8x64xf32>
    %cst_317 = arith.constant 1.000000e+00 : f32
    %1506 = vector.broadcast %cst_317 : f32 to vector<8x64xf32>
    %1507 = arith.subf %1506, %1500 : vector<8x64xf32>
    %1508 = arith.mulf %1507, %1505 : vector<8x64xf32>
    %1509 = arith.mulf %1500, %1426 : vector<8x64xf32>
    %1510 = arith.addf %1508, %1509 : vector<8x64xf32>
    %1511 = arith.truncf %1510 : vector<8x64xf32> to vector<8x64xbf16>
    %cst_318 = arith.constant dense<0.000000e+00> : vector<8x192xf32>
    %1512 = tpu.matmul %1511, %1115, %cst_318 {dimension_numbers = #tpu.dot_dimension_numbers<[1], [0], [0], [1], [0, 0, 1, 1], [], []>} : vector<8x64xbf16>, vector<64x192xbf16>, vector<8x192xf32> -> vector<8x192xf32>
    %1513 = arith.addf %1512, %1119 : vector<8x192xf32>
    %1514 = arith.truncf %1458 : vector<8x64xf32> to vector<8x64xbf16>
    %cst_319 = arith.constant dense<0.000000e+00> : vector<8x192xf32>
    %1515 = tpu.matmul %1514, %1116, %cst_319 {dimension_numbers = #tpu.dot_dimension_numbers<[1], [0], [0], [1], [0, 0, 1, 1], [], []>} : vector<8x64xbf16>, vector<64x192xbf16>, vector<8x192xf32> -> vector<8x192xf32>
    %1516 = arith.addf %1515, %1122 : vector<8x192xf32>
    %1517 = vector.extract_strided_slice %1513 {offsets = [0, 0], sizes = [8, 64], strides = [1, 1]} : vector<8x192xf32> to vector<8x64xf32>
    %1518 = vector.extract_strided_slice %1516 {offsets = [0, 0], sizes = [8, 64], strides = [1, 1]} : vector<8x192xf32> to vector<8x64xf32>
    %1519 = arith.addf %1517, %1518 : vector<8x64xf32>
    %1520 = arith.negf %1519 : vector<8x64xf32>
    %1521 = math.exp %1520 : vector<8x64xf32>
    %cst_320 = arith.constant 1.000000e+00 : f32
    %1522 = vector.broadcast %cst_320 : f32 to vector<8x64xf32>
    %1523 = arith.addf %1522, %1521 : vector<8x64xf32>
    %1524 = arith.divf %1522, %1523 : vector<8x64xf32>
    %1525 = vector.extract_strided_slice %1513 {offsets = [0, 64], sizes = [8, 64], strides = [1, 1]} : vector<8x192xf32> to vector<8x64xf32>
    %1526 = vector.extract_strided_slice %1516 {offsets = [0, 64], sizes = [8, 64], strides = [1, 1]} : vector<8x192xf32> to vector<8x64xf32>
    %1527 = arith.addf %1525, %1526 : vector<8x64xf32>
    %1528 = arith.negf %1527 : vector<8x64xf32>
    %1529 = math.exp %1528 : vector<8x64xf32>
    %cst_321 = arith.constant 1.000000e+00 : f32
    %1530 = vector.broadcast %cst_321 : f32 to vector<8x64xf32>
    %1531 = arith.addf %1530, %1529 : vector<8x64xf32>
    %1532 = arith.divf %1530, %1531 : vector<8x64xf32>
    %1533 = vector.extract_strided_slice %1513 {offsets = [0, 128], sizes = [8, 64], strides = [1, 1]} : vector<8x192xf32> to vector<8x64xf32>
    %1534 = vector.extract_strided_slice %1516 {offsets = [0, 128], sizes = [8, 64], strides = [1, 1]} : vector<8x192xf32> to vector<8x64xf32>
    %1535 = arith.mulf %1524, %1534 : vector<8x64xf32>
    %1536 = arith.addf %1533, %1535 : vector<8x64xf32>
    %1537 = math.tanh %1536 : vector<8x64xf32>
    %cst_322 = arith.constant 1.000000e+00 : f32
    %1538 = vector.broadcast %cst_322 : f32 to vector<8x64xf32>
    %1539 = arith.subf %1538, %1532 : vector<8x64xf32>
    %1540 = arith.mulf %1539, %1537 : vector<8x64xf32>
    %1541 = arith.mulf %1532, %1458 : vector<8x64xf32>
    %1542 = arith.addf %1540, %1541 : vector<8x64xf32>
    %1543 = arith.truncf %1542 : vector<8x64xf32> to vector<8x64xbf16>
    %cst_323 = arith.constant dense<0.000000e+00> : vector<8x128xf32>
    %1544 = tpu.matmul %1543, %1123, %cst_323 {dimension_numbers = #tpu.dot_dimension_numbers<[1], [0], [0], [1], [0, 0, 1, 1], [], []>} : vector<8x64xbf16>, vector<64x128xbf16>, vector<8x128xf32> -> vector<8x128xf32>
    %1545 = arith.addf %1544, %1126 : vector<8x128xf32>
    %1546 = arith.truncf %1545 : vector<8x128xf32> to vector<8x128xbf16>
    %cst_324 = arith.constant dense<0.000000e+00> : vector<8x256xf32>
    %1547 = tpu.matmul %1546, %1127, %cst_324 {dimension_numbers = #tpu.dot_dimension_numbers<[1], [0], [0], [1], [0, 0, 1, 1], [], []>} : vector<8x128xbf16>, vector<128x256xbf16>, vector<8x256xf32> -> vector<8x256xf32>
    %1548 = arith.addf %1547, %1130 : vector<8x256xf32>
    %1549 = arith.truncf %1548 : vector<8x256xf32> to vector<8x256xbf16>
    %cst_325 = arith.constant dense<0.000000e+00> : vector<8x128xf32>
    %1550 = tpu.matmul %1549, %1131, %cst_325 {dimension_numbers = #tpu.dot_dimension_numbers<[1], [0], [0], [1], [0, 0, 1, 1], [], []>} : vector<8x256xbf16>, vector<256x128xbf16>, vector<8x128xf32> -> vector<8x128xf32>
    %1551 = arith.addf %1550, %1134 : vector<8x128xf32>
    %c5_326 = arith.constant 5 : index
    %c0_327 = arith.constant 0 : index
    %c0_328 = arith.constant 0 : index
    %1552 = vector.load %arg26[%c5_326, %c0_327, %c0_328] : memref<8x8x128xf32, #tpu.memory_space<vmem>>, vector<1x8x128xf32>
    %1553 = vector.shape_cast %1552 : vector<1x8x128xf32> to vector<8x128xf32>
    %1554 = vector.shape_cast %1551 : vector<8x128xf32> to vector<1x8x128xf32>
    tpu.vector_store %arg26[%c5_326, %c0_327, %c0_328], %1554 {strides = array<i32>} : memref<8x8x128xf32, #tpu.memory_space<vmem>>, vector<1x8x128xf32>,
    %1555 = vector.extract_strided_slice %1106 {offsets = [5, 0, 0], sizes = [1, 8, 16], strides = [1, 1, 1]} : vector<8x8x16xf32> to vector<1x8x16xf32>
    %1556 = vector.shape_cast %1555 : vector<1x8x16xf32> to vector<8x16xf32>
    %c0_329 = arith.constant 0 : index
    %c0_330 = arith.constant 0 : index
    %1557 = vector.load %arg29[%c0_329, %c0_330] : memref<8x16xf32, #tpu.memory_space<vmem>>, vector<8x16xf32>
    tpu.vector_store %arg29[%c0_329, %c0_330], %1556 {strides = array<i32>} : memref<8x16xf32, #tpu.memory_space<vmem>>, vector<8x16xf32>,
    %c5_331 = arith.constant 5 : index
    %1558 = memref.load %arg2[%c5_331] : memref<8xi32, #tpu.memory_space<smem>>
    %c0_i32_332 = arith.constant 0 : i32
    %1559 = arith.cmpi eq, %1558, %c0_i32_332 : i32
    %1560 = arith.extui %1559 : i1 to i32
    %c0_i32_333 = arith.constant 0 : i32
    %1561 = arith.cmpi ne, %1560, %c0_i32_333 : i32
    scf.if %1561 {
      %cst_375 = arith.constant dense<0xFF800000> : vector<8xf32>
      %1723 = vector.multi_reduction <maximumf>, %1551, %cst_375 [1] : vector<8x128xf32> to vector<8xf32>
      %1724 = vector.shape_cast %1723 : vector<8xf32> to vector<8x1xf32>
      %1725 = tpu.iota {dimensions = array<i32: 1>} : vector<8x128xi32>
      %1726 = vector.broadcast %1724 : vector<8x1xf32> to vector<8x128xf32>
      %1727 = arith.cmpf oge, %1551, %1726 : vector<8x128xf32>
      %c128_i32 = arith.constant 128 : i32
      %1728 = vector.broadcast %c128_i32 : i32 to vector<8x128xi32>
      %1729 = arith.select %1727, %1725, %1728 : vector<8x128xi1>, vector<8x128xi32>
      %cst_376 = arith.constant dense<2147483647> : vector<8xi32>
      %1730 = vector.multi_reduction <minsi>, %1729, %cst_376 [1] : vector<8x128xi32> to vector<8xi32>
      %1731 = vector.shape_cast %1730 : vector<8xi32> to vector<8x1xi32>
      %1732 = tpu.iota {dimensions = array<i32: 1>} : vector<8x12xi32>
      %1733 = vector.broadcast %1731 : vector<8x1xi32> to vector<8x12xi32>
      %1734 = arith.cmpi eq, %1733, %1732 : vector<8x12xi32>
      %1735 = arith.extui %1734 : vector<8x12xi1> to vector<8x12xi32>
      %1736 = arith.sitofp %1735 : vector<8x12xi32> to vector<8x12xf32>
      %cst_377 = arith.constant dense<0.000000e+00> : vector<8x16xf32>
      %1737 = tpu.matmul %1736, %1102, %cst_377 {dimension_numbers = #tpu.dot_dimension_numbers<[1], [0], [0], [1], [0, 0, 1, 1], [], []>} : vector<8x12xf32>, vector<12x16xf32>, vector<8x16xf32> -> vector<8x16xf32>
      %c0_378 = arith.constant 0 : index
      %c0_379 = arith.constant 0 : index
      %1738 = vector.load %arg29[%c0_378, %c0_379] : memref<8x16xf32, #tpu.memory_space<vmem>>, vector<8x16xf32>
      tpu.vector_store %arg29[%c0_378, %c0_379], %1737 {strides = array<i32>} : memref<8x16xf32, #tpu.memory_space<vmem>>, vector<8x16xf32>,
    } else {
    }
    %c0_334 = arith.constant 0 : index
    %c0_335 = arith.constant 0 : index
    %1562 = vector.load %arg29[%c0_334, %c0_335] : memref<8x16xf32, #tpu.memory_space<vmem>>, vector<8x16xf32>
    %1563 = arith.truncf %1562 : vector<8x16xf32> to vector<8x16xbf16>
    %cst_336 = arith.constant dense<0.000000e+00> : vector<8x192xf32>
    %1564 = tpu.matmul %1563, %1107, %cst_336 {dimension_numbers = #tpu.dot_dimension_numbers<[1], [0], [0], [1], [0, 0, 1, 1], [], []>} : vector<8x16xbf16>, vector<16x192xbf16>, vector<8x192xf32> -> vector<8x192xf32>
    %1565 = arith.addf %1564, %1111 : vector<8x192xf32>
    %1566 = arith.truncf %1510 : vector<8x64xf32> to vector<8x64xbf16>
    %cst_337 = arith.constant dense<0.000000e+00> : vector<8x192xf32>
    %1567 = tpu.matmul %1566, %1108, %cst_337 {dimension_numbers = #tpu.dot_dimension_numbers<[1], [0], [0], [1], [0, 0, 1, 1], [], []>} : vector<8x64xbf16>, vector<64x192xbf16>, vector<8x192xf32> -> vector<8x192xf32>
    %1568 = arith.addf %1567, %1114 : vector<8x192xf32>
    %1569 = vector.extract_strided_slice %1565 {offsets = [0, 0], sizes = [8, 64], strides = [1, 1]} : vector<8x192xf32> to vector<8x64xf32>
    %1570 = vector.extract_strided_slice %1568 {offsets = [0, 0], sizes = [8, 64], strides = [1, 1]} : vector<8x192xf32> to vector<8x64xf32>
    %1571 = arith.addf %1569, %1570 : vector<8x64xf32>
    %1572 = arith.negf %1571 : vector<8x64xf32>
    %1573 = math.exp %1572 : vector<8x64xf32>
    %cst_338 = arith.constant 1.000000e+00 : f32
    %1574 = vector.broadcast %cst_338 : f32 to vector<8x64xf32>
    %1575 = arith.addf %1574, %1573 : vector<8x64xf32>
    %1576 = arith.divf %1574, %1575 : vector<8x64xf32>
    %1577 = vector.extract_strided_slice %1565 {offsets = [0, 64], sizes = [8, 64], strides = [1, 1]} : vector<8x192xf32> to vector<8x64xf32>
    %1578 = vector.extract_strided_slice %1568 {offsets = [0, 64], sizes = [8, 64], strides = [1, 1]} : vector<8x192xf32> to vector<8x64xf32>
    %1579 = arith.addf %1577, %1578 : vector<8x64xf32>
    %1580 = arith.negf %1579 : vector<8x64xf32>
    %1581 = math.exp %1580 : vector<8x64xf32>
    %cst_339 = arith.constant 1.000000e+00 : f32
    %1582 = vector.broadcast %cst_339 : f32 to vector<8x64xf32>
    %1583 = arith.addf %1582, %1581 : vector<8x64xf32>
    %1584 = arith.divf %1582, %1583 : vector<8x64xf32>
    %1585 = vector.extract_strided_slice %1565 {offsets = [0, 128], sizes = [8, 64], strides = [1, 1]} : vector<8x192xf32> to vector<8x64xf32>
    %1586 = vector.extract_strided_slice %1568 {offsets = [0, 128], sizes = [8, 64], strides = [1, 1]} : vector<8x192xf32> to vector<8x64xf32>
    %1587 = arith.mulf %1576, %1586 : vector<8x64xf32>
    %1588 = arith.addf %1585, %1587 : vector<8x64xf32>
    %1589 = math.tanh %1588 : vector<8x64xf32>
    %cst_340 = arith.constant 1.000000e+00 : f32
    %1590 = vector.broadcast %cst_340 : f32 to vector<8x64xf32>
    %1591 = arith.subf %1590, %1584 : vector<8x64xf32>
    %1592 = arith.mulf %1591, %1589 : vector<8x64xf32>
    %1593 = arith.mulf %1584, %1510 : vector<8x64xf32>
    %1594 = arith.addf %1592, %1593 : vector<8x64xf32>
    %1595 = arith.truncf %1594 : vector<8x64xf32> to vector<8x64xbf16>
    %cst_341 = arith.constant dense<0.000000e+00> : vector<8x192xf32>
    %1596 = tpu.matmul %1595, %1115, %cst_341 {dimension_numbers = #tpu.dot_dimension_numbers<[1], [0], [0], [1], [0, 0, 1, 1], [], []>} : vector<8x64xbf16>, vector<64x192xbf16>, vector<8x192xf32> -> vector<8x192xf32>
    %1597 = arith.addf %1596, %1119 : vector<8x192xf32>
    %1598 = arith.truncf %1542 : vector<8x64xf32> to vector<8x64xbf16>
    %cst_342 = arith.constant dense<0.000000e+00> : vector<8x192xf32>
    %1599 = tpu.matmul %1598, %1116, %cst_342 {dimension_numbers = #tpu.dot_dimension_numbers<[1], [0], [0], [1], [0, 0, 1, 1], [], []>} : vector<8x64xbf16>, vector<64x192xbf16>, vector<8x192xf32> -> vector<8x192xf32>
    %1600 = arith.addf %1599, %1122 : vector<8x192xf32>
    %1601 = vector.extract_strided_slice %1597 {offsets = [0, 0], sizes = [8, 64], strides = [1, 1]} : vector<8x192xf32> to vector<8x64xf32>
    %1602 = vector.extract_strided_slice %1600 {offsets = [0, 0], sizes = [8, 64], strides = [1, 1]} : vector<8x192xf32> to vector<8x64xf32>
    %1603 = arith.addf %1601, %1602 : vector<8x64xf32>
    %1604 = arith.negf %1603 : vector<8x64xf32>
    %1605 = math.exp %1604 : vector<8x64xf32>
    %cst_343 = arith.constant 1.000000e+00 : f32
    %1606 = vector.broadcast %cst_343 : f32 to vector<8x64xf32>
    %1607 = arith.addf %1606, %1605 : vector<8x64xf32>
    %1608 = arith.divf %1606, %1607 : vector<8x64xf32>
    %1609 = vector.extract_strided_slice %1597 {offsets = [0, 64], sizes = [8, 64], strides = [1, 1]} : vector<8x192xf32> to vector<8x64xf32>
    %1610 = vector.extract_strided_slice %1600 {offsets = [0, 64], sizes = [8, 64], strides = [1, 1]} : vector<8x192xf32> to vector<8x64xf32>
    %1611 = arith.addf %1609, %1610 : vector<8x64xf32>
    %1612 = arith.negf %1611 : vector<8x64xf32>
    %1613 = math.exp %1612 : vector<8x64xf32>
    %cst_344 = arith.constant 1.000000e+00 : f32
    %1614 = vector.broadcast %cst_344 : f32 to vector<8x64xf32>
    %1615 = arith.addf %1614, %1613 : vector<8x64xf32>
    %1616 = arith.divf %1614, %1615 : vector<8x64xf32>
    %1617 = vector.extract_strided_slice %1597 {offsets = [0, 128], sizes = [8, 64], strides = [1, 1]} : vector<8x192xf32> to vector<8x64xf32>
    %1618 = vector.extract_strided_slice %1600 {offsets = [0, 128], sizes = [8, 64], strides = [1, 1]} : vector<8x192xf32> to vector<8x64xf32>
    %1619 = arith.mulf %1608, %1618 : vector<8x64xf32>
    %1620 = arith.addf %1617, %1619 : vector<8x64xf32>
    %1621 = math.tanh %1620 : vector<8x64xf32>
    %cst_345 = arith.constant 1.000000e+00 : f32
    %1622 = vector.broadcast %cst_345 : f32 to vector<8x64xf32>
    %1623 = arith.subf %1622, %1616 : vector<8x64xf32>
    %1624 = arith.mulf %1623, %1621 : vector<8x64xf32>
    %1625 = arith.mulf %1616, %1542 : vector<8x64xf32>
    %1626 = arith.addf %1624, %1625 : vector<8x64xf32>
    %1627 = arith.truncf %1626 : vector<8x64xf32> to vector<8x64xbf16>
    %cst_346 = arith.constant dense<0.000000e+00> : vector<8x128xf32>
    %1628 = tpu.matmul %1627, %1123, %cst_346 {dimension_numbers = #tpu.dot_dimension_numbers<[1], [0], [0], [1], [0, 0, 1, 1], [], []>} : vector<8x64xbf16>, vector<64x128xbf16>, vector<8x128xf32> -> vector<8x128xf32>
    %1629 = arith.addf %1628, %1126 : vector<8x128xf32>
    %1630 = arith.truncf %1629 : vector<8x128xf32> to vector<8x128xbf16>
    %cst_347 = arith.constant dense<0.000000e+00> : vector<8x256xf32>
    %1631 = tpu.matmul %1630, %1127, %cst_347 {dimension_numbers = #tpu.dot_dimension_numbers<[1], [0], [0], [1], [0, 0, 1, 1], [], []>} : vector<8x128xbf16>, vector<128x256xbf16>, vector<8x256xf32> -> vector<8x256xf32>
    %1632 = arith.addf %1631, %1130 : vector<8x256xf32>
    %1633 = arith.truncf %1632 : vector<8x256xf32> to vector<8x256xbf16>
    %cst_348 = arith.constant dense<0.000000e+00> : vector<8x128xf32>
    %1634 = tpu.matmul %1633, %1131, %cst_348 {dimension_numbers = #tpu.dot_dimension_numbers<[1], [0], [0], [1], [0, 0, 1, 1], [], []>} : vector<8x256xbf16>, vector<256x128xbf16>, vector<8x128xf32> -> vector<8x128xf32>
    %1635 = arith.addf %1634, %1134 : vector<8x128xf32>
    %c6_349 = arith.constant 6 : index
    %c0_350 = arith.constant 0 : index
    %c0_351 = arith.constant 0 : index
    %1636 = vector.load %arg26[%c6_349, %c0_350, %c0_351] : memref<8x8x128xf32, #tpu.memory_space<vmem>>, vector<1x8x128xf32>
    %1637 = vector.shape_cast %1636 : vector<1x8x128xf32> to vector<8x128xf32>
    %1638 = vector.shape_cast %1635 : vector<8x128xf32> to vector<1x8x128xf32>
    tpu.vector_store %arg26[%c6_349, %c0_350, %c0_351], %1638 {strides = array<i32>} : memref<8x8x128xf32, #tpu.memory_space<vmem>>, vector<1x8x128xf32>,
    %1639 = vector.extract_strided_slice %1106 {offsets = [6, 0, 0], sizes = [1, 8, 16], strides = [1, 1, 1]} : vector<8x8x16xf32> to vector<1x8x16xf32>
    %1640 = vector.shape_cast %1639 : vector<1x8x16xf32> to vector<8x16xf32>
    %c0_352 = arith.constant 0 : index
    %c0_353 = arith.constant 0 : index
    %1641 = vector.load %arg29[%c0_352, %c0_353] : memref<8x16xf32, #tpu.memory_space<vmem>>, vector<8x16xf32>
    tpu.vector_store %arg29[%c0_352, %c0_353], %1640 {strides = array<i32>} : memref<8x16xf32, #tpu.memory_space<vmem>>, vector<8x16xf32>,
    %c6_354 = arith.constant 6 : index
    %1642 = memref.load %arg2[%c6_354] : memref<8xi32, #tpu.memory_space<smem>>
    %c0_i32_355 = arith.constant 0 : i32
    %1643 = arith.cmpi eq, %1642, %c0_i32_355 : i32
    %1644 = arith.extui %1643 : i1 to i32
    %c0_i32_356 = arith.constant 0 : i32
    %1645 = arith.cmpi ne, %1644, %c0_i32_356 : i32
    scf.if %1645 {
      %cst_375 = arith.constant dense<0xFF800000> : vector<8xf32>
      %1723 = vector.multi_reduction <maximumf>, %1635, %cst_375 [1] : vector<8x128xf32> to vector<8xf32>
      %1724 = vector.shape_cast %1723 : vector<8xf32> to vector<8x1xf32>
      %1725 = tpu.iota {dimensions = array<i32: 1>} : vector<8x128xi32>
      %1726 = vector.broadcast %1724 : vector<8x1xf32> to vector<8x128xf32>
      %1727 = arith.cmpf oge, %1635, %1726 : vector<8x128xf32>
      %c128_i32 = arith.constant 128 : i32
      %1728 = vector.broadcast %c128_i32 : i32 to vector<8x128xi32>
      %1729 = arith.select %1727, %1725, %1728 : vector<8x128xi1>, vector<8x128xi32>
      %cst_376 = arith.constant dense<2147483647> : vector<8xi32>
      %1730 = vector.multi_reduction <minsi>, %1729, %cst_376 [1] : vector<8x128xi32> to vector<8xi32>
      %1731 = vector.shape_cast %1730 : vector<8xi32> to vector<8x1xi32>
      %1732 = tpu.iota {dimensions = array<i32: 1>} : vector<8x12xi32>
      %1733 = vector.broadcast %1731 : vector<8x1xi32> to vector<8x12xi32>
      %1734 = arith.cmpi eq, %1733, %1732 : vector<8x12xi32>
      %1735 = arith.extui %1734 : vector<8x12xi1> to vector<8x12xi32>
      %1736 = arith.sitofp %1735 : vector<8x12xi32> to vector<8x12xf32>
      %cst_377 = arith.constant dense<0.000000e+00> : vector<8x16xf32>
      %1737 = tpu.matmul %1736, %1102, %cst_377 {dimension_numbers = #tpu.dot_dimension_numbers<[1], [0], [0], [1], [0, 0, 1, 1], [], []>} : vector<8x12xf32>, vector<12x16xf32>, vector<8x16xf32> -> vector<8x16xf32>
      %c0_378 = arith.constant 0 : index
      %c0_379 = arith.constant 0 : index
      %1738 = vector.load %arg29[%c0_378, %c0_379] : memref<8x16xf32, #tpu.memory_space<vmem>>, vector<8x16xf32>
      tpu.vector_store %arg29[%c0_378, %c0_379], %1737 {strides = array<i32>} : memref<8x16xf32, #tpu.memory_space<vmem>>, vector<8x16xf32>,
    } else {
    }
    %c0_357 = arith.constant 0 : index
    %c0_358 = arith.constant 0 : index
    %1646 = vector.load %arg29[%c0_357, %c0_358] : memref<8x16xf32, #tpu.memory_space<vmem>>, vector<8x16xf32>
    %1647 = arith.truncf %1646 : vector<8x16xf32> to vector<8x16xbf16>
    %cst_359 = arith.constant dense<0.000000e+00> : vector<8x192xf32>
    %1648 = tpu.matmul %1647, %1107, %cst_359 {dimension_numbers = #tpu.dot_dimension_numbers<[1], [0], [0], [1], [0, 0, 1, 1], [], []>} : vector<8x16xbf16>, vector<16x192xbf16>, vector<8x192xf32> -> vector<8x192xf32>
    %1649 = arith.addf %1648, %1111 : vector<8x192xf32>
    %1650 = arith.truncf %1594 : vector<8x64xf32> to vector<8x64xbf16>
    %cst_360 = arith.constant dense<0.000000e+00> : vector<8x192xf32>
    %1651 = tpu.matmul %1650, %1108, %cst_360 {dimension_numbers = #tpu.dot_dimension_numbers<[1], [0], [0], [1], [0, 0, 1, 1], [], []>} : vector<8x64xbf16>, vector<64x192xbf16>, vector<8x192xf32> -> vector<8x192xf32>
    %1652 = arith.addf %1651, %1114 : vector<8x192xf32>
    %1653 = vector.extract_strided_slice %1649 {offsets = [0, 0], sizes = [8, 64], strides = [1, 1]} : vector<8x192xf32> to vector<8x64xf32>
    %1654 = vector.extract_strided_slice %1652 {offsets = [0, 0], sizes = [8, 64], strides = [1, 1]} : vector<8x192xf32> to vector<8x64xf32>
    %1655 = arith.addf %1653, %1654 : vector<8x64xf32>
    %1656 = arith.negf %1655 : vector<8x64xf32>
    %1657 = math.exp %1656 : vector<8x64xf32>
    %cst_361 = arith.constant 1.000000e+00 : f32
    %1658 = vector.broadcast %cst_361 : f32 to vector<8x64xf32>
    %1659 = arith.addf %1658, %1657 : vector<8x64xf32>
    %1660 = arith.divf %1658, %1659 : vector<8x64xf32>
    %1661 = vector.extract_strided_slice %1649 {offsets = [0, 64], sizes = [8, 64], strides = [1, 1]} : vector<8x192xf32> to vector<8x64xf32>
    %1662 = vector.extract_strided_slice %1652 {offsets = [0, 64], sizes = [8, 64], strides = [1, 1]} : vector<8x192xf32> to vector<8x64xf32>
    %1663 = arith.addf %1661, %1662 : vector<8x64xf32>
    %1664 = arith.negf %1663 : vector<8x64xf32>
    %1665 = math.exp %1664 : vector<8x64xf32>
    %cst_362 = arith.constant 1.000000e+00 : f32
    %1666 = vector.broadcast %cst_362 : f32 to vector<8x64xf32>
    %1667 = arith.addf %1666, %1665 : vector<8x64xf32>
    %1668 = arith.divf %1666, %1667 : vector<8x64xf32>
    %1669 = vector.extract_strided_slice %1649 {offsets = [0, 128], sizes = [8, 64], strides = [1, 1]} : vector<8x192xf32> to vector<8x64xf32>
    %1670 = vector.extract_strided_slice %1652 {offsets = [0, 128], sizes = [8, 64], strides = [1, 1]} : vector<8x192xf32> to vector<8x64xf32>
    %1671 = arith.mulf %1660, %1670 : vector<8x64xf32>
    %1672 = arith.addf %1669, %1671 : vector<8x64xf32>
    %1673 = math.tanh %1672 : vector<8x64xf32>
    %cst_363 = arith.constant 1.000000e+00 : f32
    %1674 = vector.broadcast %cst_363 : f32 to vector<8x64xf32>
    %1675 = arith.subf %1674, %1668 : vector<8x64xf32>
    %1676 = arith.mulf %1675, %1673 : vector<8x64xf32>
    %1677 = arith.mulf %1668, %1594 : vector<8x64xf32>
    %1678 = arith.addf %1676, %1677 : vector<8x64xf32>
    %1679 = arith.truncf %1678 : vector<8x64xf32> to vector<8x64xbf16>
    %cst_364 = arith.constant dense<0.000000e+00> : vector<8x192xf32>
    %1680 = tpu.matmul %1679, %1115, %cst_364 {dimension_numbers = #tpu.dot_dimension_numbers<[1], [0], [0], [1], [0, 0, 1, 1], [], []>} : vector<8x64xbf16>, vector<64x192xbf16>, vector<8x192xf32> -> vector<8x192xf32>
    %1681 = arith.addf %1680, %1119 : vector<8x192xf32>
    %1682 = arith.truncf %1626 : vector<8x64xf32> to vector<8x64xbf16>
    %cst_365 = arith.constant dense<0.000000e+00> : vector<8x192xf32>
    %1683 = tpu.matmul %1682, %1116, %cst_365 {dimension_numbers = #tpu.dot_dimension_numbers<[1], [0], [0], [1], [0, 0, 1, 1], [], []>} : vector<8x64xbf16>, vector<64x192xbf16>, vector<8x192xf32> -> vector<8x192xf32>
    %1684 = arith.addf %1683, %1122 : vector<8x192xf32>
    %1685 = vector.extract_strided_slice %1681 {offsets = [0, 0], sizes = [8, 64], strides = [1, 1]} : vector<8x192xf32> to vector<8x64xf32>
    %1686 = vector.extract_strided_slice %1684 {offsets = [0, 0], sizes = [8, 64], strides = [1, 1]} : vector<8x192xf32> to vector<8x64xf32>
    %1687 = arith.addf %1685, %1686 : vector<8x64xf32>
    %1688 = arith.negf %1687 : vector<8x64xf32>
    %1689 = math.exp %1688 : vector<8x64xf32>
    %cst_366 = arith.constant 1.000000e+00 : f32
    %1690 = vector.broadcast %cst_366 : f32 to vector<8x64xf32>
    %1691 = arith.addf %1690, %1689 : vector<8x64xf32>
    %1692 = arith.divf %1690, %1691 : vector<8x64xf32>
    %1693 = vector.extract_strided_slice %1681 {offsets = [0, 64], sizes = [8, 64], strides = [1, 1]} : vector<8x192xf32> to vector<8x64xf32>
    %1694 = vector.extract_strided_slice %1684 {offsets = [0, 64], sizes = [8, 64], strides = [1, 1]} : vector<8x192xf32> to vector<8x64xf32>
    %1695 = arith.addf %1693, %1694 : vector<8x64xf32>
    %1696 = arith.negf %1695 : vector<8x64xf32>
    %1697 = math.exp %1696 : vector<8x64xf32>
    %cst_367 = arith.constant 1.000000e+00 : f32
    %1698 = vector.broadcast %cst_367 : f32 to vector<8x64xf32>
    %1699 = arith.addf %1698, %1697 : vector<8x64xf32>
    %1700 = arith.divf %1698, %1699 : vector<8x64xf32>
    %1701 = vector.extract_strided_slice %1681 {offsets = [0, 128], sizes = [8, 64], strides = [1, 1]} : vector<8x192xf32> to vector<8x64xf32>
    %1702 = vector.extract_strided_slice %1684 {offsets = [0, 128], sizes = [8, 64], strides = [1, 1]} : vector<8x192xf32> to vector<8x64xf32>
    %1703 = arith.mulf %1692, %1702 : vector<8x64xf32>
    %1704 = arith.addf %1701, %1703 : vector<8x64xf32>
    %1705 = math.tanh %1704 : vector<8x64xf32>
    %cst_368 = arith.constant 1.000000e+00 : f32
    %1706 = vector.broadcast %cst_368 : f32 to vector<8x64xf32>
    %1707 = arith.subf %1706, %1700 : vector<8x64xf32>
    %1708 = arith.mulf %1707, %1705 : vector<8x64xf32>
    %1709 = arith.mulf %1700, %1626 : vector<8x64xf32>
    %1710 = arith.addf %1708, %1709 : vector<8x64xf32>
    %1711 = arith.truncf %1710 : vector<8x64xf32> to vector<8x64xbf16>
    %cst_369 = arith.constant dense<0.000000e+00> : vector<8x128xf32>
    %1712 = tpu.matmul %1711, %1123, %cst_369 {dimension_numbers = #tpu.dot_dimension_numbers<[1], [0], [0], [1], [0, 0, 1, 1], [], []>} : vector<8x64xbf16>, vector<64x128xbf16>, vector<8x128xf32> -> vector<8x128xf32>
    %1713 = arith.addf %1712, %1126 : vector<8x128xf32>
    %1714 = arith.truncf %1713 : vector<8x128xf32> to vector<8x128xbf16>
    %cst_370 = arith.constant dense<0.000000e+00> : vector<8x256xf32>
    %1715 = tpu.matmul %1714, %1127, %cst_370 {dimension_numbers = #tpu.dot_dimension_numbers<[1], [0], [0], [1], [0, 0, 1, 1], [], []>} : vector<8x128xbf16>, vector<128x256xbf16>, vector<8x256xf32> -> vector<8x256xf32>
    %1716 = arith.addf %1715, %1130 : vector<8x256xf32>
    %1717 = arith.truncf %1716 : vector<8x256xf32> to vector<8x256xbf16>
    %cst_371 = arith.constant dense<0.000000e+00> : vector<8x128xf32>
    %1718 = tpu.matmul %1717, %1131, %cst_371 {dimension_numbers = #tpu.dot_dimension_numbers<[1], [0], [0], [1], [0, 0, 1, 1], [], []>} : vector<8x256xbf16>, vector<256x128xbf16>, vector<8x128xf32> -> vector<8x128xf32>
    %1719 = arith.addf %1718, %1134 : vector<8x128xf32>
    %c7_372 = arith.constant 7 : index
    %c0_373 = arith.constant 0 : index
    %c0_374 = arith.constant 0 : index
    %1720 = vector.load %arg26[%c7_372, %c0_373, %c0_374] : memref<8x8x128xf32, #tpu.memory_space<vmem>>, vector<1x8x128xf32>
    %1721 = vector.shape_cast %1720 : vector<1x8x128xf32> to vector<8x128xf32>
    %1722 = vector.shape_cast %1719 : vector<8x128xf32> to vector<1x8x128xf32>
    tpu.vector_store %arg26[%c7_372, %c0_373, %c0_374], %1722 {strides = array<i32>} : memref<8x8x128xf32, #tpu.memory_space<vmem>>, vector<1x8x128xf32>,
    return
  }
}

</mosaic_0001>

<llo_original>
// kernel: seq2seq_forward.1
$region0: #{seq2seq_forward.1}
  #allocation0 [shape = 'u32[]', space=smem, size = 0x4, offset = 0x4, fixed_abs, tag = 'smem constant byte address 0x4 - core index']
  #allocation1 [shape = 'u32[144,128]{1,0:T(1,128)}', space=vmem, size = 0x12000, scoped, tag = 'internal scratch']
  #allocation2 [shape = 'f32[8,8,32]{2,1,0:T(8,128)}', space=vmem, size = 0x8000, scoped, tag = 'scratch operand']
  #allocation3 [shape = 'f32[8,8,32]{2,1,0:T(8,128)}', space=vmem, size = 0x8000, scoped, tag = 'scratch operand']
  #allocation4 [shape = 'f32[8,16]{1,0:T(8,128)}', space=vmem, size = 0x1000, scoped, tag = 'scratch operand']
  %s0 = inlined_call_operand.vmem [shape: f32[8,8,16], index: 0, kind: input, shape index: {}]
  %s1 = inlined_call_operand.vmem [shape: f32[8,8,12], index: 1, kind: input, shape index: {}]
  %s2 = inlined_call_operand.vmem [shape: s32[8], index: 2, kind: input, shape index: {}]
  %s3 = inlined_call_operand.vmem [shape: bf16[16,192], index: 3, kind: input, shape index: {}]
  %s4 = inlined_call_operand.vmem [shape: bf16[64,192], index: 4, kind: input, shape index: {}]
  %s5 = inlined_call_operand.vmem [shape: f32[1,192], index: 5, kind: input, shape index: {}]
  %s6 = inlined_call_operand.vmem [shape: f32[1,192], index: 6, kind: input, shape index: {}]
  %s7 = inlined_call_operand.vmem [shape: bf16[64,192], index: 7, kind: input, shape index: {}]
  %s8 = inlined_call_operand.vmem [shape: bf16[64,192], index: 8, kind: input, shape index: {}]
  %s9 = inlined_call_operand.vmem [shape: f32[1,192], index: 9, kind: input, shape index: {}]
  %s10 = inlined_call_operand.vmem [shape: f32[1,192], index: 10, kind: input, shape index: {}]
  %s11 = inlined_call_operand.vmem [shape: f32[12,16], index: 11, kind: input, shape index: {}]
  %s12 = inlined_call_operand.vmem [shape: bf16[16,192], index: 12, kind: input, shape index: {}]
  %s13 = inlined_call_operand.vmem [shape: bf16[64,192], index: 13, kind: input, shape index: {}]
  %s14 = inlined_call_operand.vmem [shape: f32[1,192], index: 14, kind: input, shape index: {}]
  %s15 = inlined_call_operand.vmem [shape: f32[1,192], index: 15, kind: input, shape index: {}]
  %s16 = inlined_call_operand.vmem [shape: bf16[64,192], index: 16, kind: input, shape index: {}]
  %s17 = inlined_call_operand.vmem [shape: bf16[64,192], index: 17, kind: input, shape index: {}]
  %s18 = inlined_call_operand.vmem [shape: f32[1,192], index: 18, kind: input, shape index: {}]
  %s19 = inlined_call_operand.vmem [shape: f32[1,192], index: 19, kind: input, shape index: {}]
  %s20 = inlined_call_operand.vmem [shape: bf16[64,128], index: 20, kind: input, shape index: {}]
  %s21 = inlined_call_operand.vmem [shape: f32[1,128], index: 21, kind: input, shape index: {}]
  %s22 = inlined_call_operand.vmem [shape: bf16[128,256], index: 22, kind: input, shape index: {}]
  %s23 = inlined_call_operand.vmem [shape: f32[1,256], index: 23, kind: input, shape index: {}]
  %s24 = inlined_call_operand.vmem [shape: bf16[256,128], index: 24, kind: input, shape index: {}]
  %s25 = inlined_call_operand.vmem [shape: f32[1,128], index: 25, kind: input, shape index: {}]
  %s26 = inlined_call_operand.vmem [shape: f32[8,8,128], index: 26, kind: output, shape index: {}]
  %s27 = sld [smem:[#allocation0]]
  $region142: #{seq2seq_forward.1} parent=0
    _
  %s29 = ssub.s32 1, %s27
  %s30 = scalar_select 0, %s29, %s27
  $region1: #{seq2seq_forward.1} parent=0
    #allocation5 [shape = 'u8[512]{0}', space=smem, size = 0x200, scoped, tag = 'input window, operand 2, single buffered']
    #allocation6 [shape = 's32[1]{0}', space=sflag, size = 0x4, scoped, tag = 'scoped memory for seq2seq_forward.1']
    %31 = vsyncpa [#allocation6], 0
    // Predicated region
    $region2: #{seq2seq_forward.1} parent=1 // pred_check
      _
    $region3: #{seq2seq_forward.1} parent=1 // pred_check_branch
      %33 = sbr.rel (0) target = $region5
    $region4: #{seq2seq_forward.1} parent=1 // pred_region
      _
    $region5: #{seq2seq_forward.1} parent=1 // pred_fallthru
      _
    // Predicated region
    $region6: #{seq2seq_forward.1} parent=1 // pred_check
      _
    $region7: #{seq2seq_forward.1} parent=1 // pred_check_branch
      %35 = sbr.rel (0) target = $region9
    $region8: #{seq2seq_forward.1} parent=1 // pred_region
      _
    $region9: #{seq2seq_forward.1} parent=1 // pred_fallthru
      _
    // Predicated region
    $region10: #{seq2seq_forward.1} parent=1 // pred_check
      _
    $region11: #{seq2seq_forward.1} parent=1 // pred_check_branch
      %37 = sbr.rel (0) target = $region13
    $region12: #{seq2seq_forward.1} parent=1 // pred_region
      %s39 = ssub.s32 16, 16
      %40 = vsyncadd [#allocation6], %s39
      %s42 = sshll.u32 %s2, 4
      %s43 = int_to_ptr.vmem [resolvable:$true] %s42
      %45 = dma.vmem_to_smem %s43, 16, [#allocation5], [#allocation6]
    $region13: #{seq2seq_forward.1} parent=1 // pred_fallthru
      _
    // Predicated region
    $region14: #{seq2seq_forward.1} parent=1 // pred_check
      _
    $region15: #{seq2seq_forward.1} parent=1 // pred_check_branch
      %47 = sbr.rel (0) target = $region17
    $region16: #{seq2seq_forward.1} parent=1 // pred_region
      _
    $region17: #{seq2seq_forward.1} parent=1 // pred_fallthru
      _
    // Predicated region
    $region18: #{seq2seq_forward.1} parent=1 // pred_check
      _
    $region19: #{seq2seq_forward.1} parent=1 // pred_check_branch
      %49 = sbr.rel (0) target = $region21
    $region20: #{seq2seq_forward.1} parent=1 // pred_region
      _
    $region21: #{seq2seq_forward.1} parent=1 // pred_fallthru
      _
    // Predicated region
    $region22: #{seq2seq_forward.1} parent=1 // pred_check
      _
    $region23: #{seq2seq_forward.1} parent=1 // pred_check_branch
      %51 = sbr.rel (0) target = $region25
    $region24: #{seq2seq_forward.1} parent=1 // pred_region
      _
    $region25: #{seq2seq_forward.1} parent=1 // pred_fallthru
      _
    // Predicated region
    $region26: #{seq2seq_forward.1} parent=1 // pred_check
      _
    $region27: #{seq2seq_forward.1} parent=1 // pred_check_branch
      %53 = sbr.rel (0) target = $region29
    $region28: #{seq2seq_forward.1} parent=1 // pred_region
      _
    $region29: #{seq2seq_forward.1} parent=1 // pred_fallthru
      _
    // Predicated region
    $region30: #{seq2seq_forward.1} parent=1 // pred_check
      _
    $region31: #{seq2seq_forward.1} parent=1 // pred_check_branch
      %55 = sbr.rel (0) target = $region33
    $region32: #{seq2seq_forward.1} parent=1 // pred_region
      _
    $region33: #{seq2seq_forward.1} parent=1 // pred_fallthru
      _
    // Predicated region
    $region34: #{seq2seq_forward.1} parent=1 // pred_check
      _
    $region35: #{seq2seq_forward.1} parent=1 // pred_check_branch
      %57 = sbr.rel (0) target = $region37
    $region36: #{seq2seq_forward.1} parent=1 // pred_region
      _
    $region37: #{seq2seq_forward.1} parent=1 // pred_fallthru
      _
    // Predicated region
    $region38: #{seq2seq_forward.1} parent=1 // pred_check
      _
    $region39: #{seq2seq_forward.1} parent=1 // pred_check_branch
      %59 = sbr.rel (0) target = $region41
    $region40: #{seq2seq_forward.1} parent=1 // pred_region
      _
    $region41: #{seq2seq_forward.1} parent=1 // pred_fallthru
      _
    // Predicated region
    $region42: #{seq2seq_forward.1} parent=1 // pred_check
      _
    $region43: #{seq2seq_forward.1} parent=1 // pred_check_branch
      %61 = sbr.rel (0) target = $region45
    $region44: #{seq2seq_forward.1} parent=1 // pred_region
      _
    $region45: #{seq2seq_forward.1} parent=1 // pred_fallthru
      _
    // Predicated region
    $region46: #{seq2seq_forward.1} parent=1 // pred_check
      _
    $region47: #{seq2seq_forward.1} parent=1 // pred_check_branch
      %63 = sbr.rel (0) target = $region49
    $region48: #{seq2seq_forward.1} parent=1 // pred_region
      _
    $region49: #{seq2seq_forward.1} parent=1 // pred_fallthru
      _
    // Predicated region
    $region50: #{seq2seq_forward.1} parent=1 // pred_check
      _
    $region51: #{seq2seq_forward.1} parent=1 // pred_check_branch
      %65 = sbr.rel (0) target = $region53
    $region52: #{seq2seq_forward.1} parent=1 // pred_region
      _
    $region53: #{seq2seq_forward.1} parent=1 // pred_fallthru
      _
    // Predicated region
    $region54: #{seq2seq_forward.1} parent=1 // pred_check
      _
    $region55: #{seq2seq_forward.1} parent=1 // pred_check_branch
      %67 = sbr.rel (0) target = $region57
    $region56: #{seq2seq_forward.1} parent=1 // pred_region
      _
    $region57: #{seq2seq_forward.1} parent=1 // pred_fallthru
      _
    // Predicated region
    $region58: #{seq2seq_forward.1} parent=1 // pred_check
      _
    $region59: #{seq2seq_forward.1} parent=1 // pred_check_branch
      %69 = sbr.rel (0) target = $region61
    $region60: #{seq2seq_forward.1} parent=1 // pred_region
      _
    $region61: #{seq2seq_forward.1} parent=1 // pred_fallthru
      _
    // Predicated region
    $region62: #{seq2seq_forward.1} parent=1 // pred_check
      _
    $region63: #{seq2seq_forward.1} parent=1 // pred_check_branch
      %71 = sbr.rel (0) target = $region65
    $region64: #{seq2seq_forward.1} parent=1 // pred_region
      _
    $region65: #{seq2seq_forward.1} parent=1 // pred_fallthru
      _
    // Predicated region
    $region66: #{seq2seq_forward.1} parent=1 // pred_check
      _
    $region67: #{seq2seq_forward.1} parent=1 // pred_check_branch
      %73 = sbr.rel (0) target = $region69
    $region68: #{seq2seq_forward.1} parent=1 // pred_region
      _
    $region69: #{seq2seq_forward.1} parent=1 // pred_fallthru
      _
    // Predicated region
    $region70: #{seq2seq_forward.1} parent=1 // pred_check
      _
    $region71: #{seq2seq_forward.1} parent=1 // pred_check_branch
      %75 = sbr.rel (0) target = $region73
    $region72: #{seq2seq_forward.1} parent=1 // pred_region
      _
    $region73: #{seq2seq_forward.1} parent=1 // pred_fallthru
      _
    // Predicated region
    $region74: #{seq2seq_forward.1} parent=1 // pred_check
      _
    $region75: #{seq2seq_forward.1} parent=1 // pred_check_branch
      %77 = sbr.rel (0) target = $region77
    $region76: #{seq2seq_forward.1} parent=1 // pred_region
      _
    $region77: #{seq2seq_forward.1} parent=1 // pred_fallthru
      _
    // Predicated region
    $region78: #{seq2seq_forward.1} parent=1 // pred_check
      _
    $region79: #{seq2seq_forward.1} parent=1 // pred_check_branch
      %79 = sbr.rel (0) target = $region81
    $region80: #{seq2seq_forward.1} parent=1 // pred_region
      _
    $region81: #{seq2seq_forward.1} parent=1 // pred_fallthru
      _
    // Predicated region
    $region82: #{seq2seq_forward.1} parent=1 // pred_check
      _
    $region83: #{seq2seq_forward.1} parent=1 // pred_check_branch
      %81 = sbr.rel (0) target = $region85
    $region84: #{seq2seq_forward.1} parent=1 // pred_region
      _
    $region85: #{seq2seq_forward.1} parent=1 // pred_fallthru
      _
    // Predicated region
    $region86: #{seq2seq_forward.1} parent=1 // pred_check
      _
    $region87: #{seq2seq_forward.1} parent=1 // pred_check_branch
      %83 = sbr.rel (0) target = $region89
    $region88: #{seq2seq_forward.1} parent=1 // pred_region
      _
    $region89: #{seq2seq_forward.1} parent=1 // pred_fallthru
      _
    // Predicated region
    $region90: #{seq2seq_forward.1} parent=1 // pred_check
      _
    $region91: #{seq2seq_forward.1} parent=1 // pred_check_branch
      %85 = sbr.rel (0) target = $region93
    $region92: #{seq2seq_forward.1} parent=1 // pred_region
      _
    $region93: #{seq2seq_forward.1} parent=1 // pred_fallthru
      _
    // Predicated region
    $region94: #{seq2seq_forward.1} parent=1 // pred_check
      _
    $region95: #{seq2seq_forward.1} parent=1 // pred_check_branch
      %87 = sbr.rel (0) target = $region97
    $region96: #{seq2seq_forward.1} parent=1 // pred_region
      _
    $region97: #{seq2seq_forward.1} parent=1 // pred_fallthru
      _
    // Predicated region
    $region98: #{seq2seq_forward.1} parent=1 // pred_check
      _
    $region99: #{seq2seq_forward.1} parent=1 // pred_check_branch
      %89 = sbr.rel (0) target = $region101
    $region100: #{seq2seq_forward.1} parent=1 // pred_region
      _
    $region101: #{seq2seq_forward.1} parent=1 // pred_fallthru
      _
    // Predicated region
    $region102: #{seq2seq_forward.1} parent=1 // pred_check
      _
    $region103: #{seq2seq_forward.1} parent=1 // pred_check_branch
      %91 = sbr.rel (0) target = $region105
    $region104: #{seq2seq_forward.1} parent=1 // pred_region
      _
    $region105: #{seq2seq_forward.1} parent=1 // pred_fallthru
      _
    // Predicated region
    $region106: #{seq2seq_forward.1} parent=1 // pred_check
      _
    $region107: #{seq2seq_forward.1} parent=1 // pred_check_branch
      %93 = sbr.rel (0) target = $region109
    $region108: #{seq2seq_forward.1} parent=1 // pred_region
      %94 = dma.done [#allocation6], 16
    $region109: #{seq2seq_forward.1} parent=1 // pred_fallthru
      _
    %95 = sfence
    %v97 = vld [vmem:[%s0] sm:$0xff]
    %v98 = vld [vmem:[%s0 + $0x8] sm:$0xff]
    %v99 = vld [vmem:[%s0 + $0x10] sm:$0xff]
    %v100 = vld [vmem:[%s0 + $0x18] sm:$0xff]
    %v101 = vld [vmem:[%s0 + $0x20] sm:$0xff]
    %v102 = vld [vmem:[%s0 + $0x28] sm:$0xff]
    %v103 = vld [vmem:[%s0 + $0x30] sm:$0xff]
    %v104 = vld [vmem:[%s0 + $0x38] sm:$0xff]
    %v105 = vld [vmem:[%s3] sm:$0xff]
    %v106 = vld [vmem:[%s3 + $0x8] sm:$0xff]
    %v107 = vld [vmem:[%s4] sm:$0xff]
    %v108 = vld [vmem:[%s4 + $0x8] sm:$0xff]
    %v109 = vld [vmem:[%s4 + $0x10] sm:$0xff]
    %v110 = vld [vmem:[%s4 + $0x18] sm:$0xff]
    %v111 = vld [vmem:[%s4 + $0x20] sm:$0xff]
    %v112 = vld [vmem:[%s4 + $0x28] sm:$0xff]
    %v113 = vld [vmem:[%s4 + $0x30] sm:$0xff]
    %v114 = vld [vmem:[%s4 + $0x38] sm:$0xff]
    %v115 = vld [vmem:[%s5] sm:$0x3]
    %v116 = vld [vmem:[%s6] sm:$0x3]
    %v117 = vpack.c.bf16 %v98, %v97
    %v118 = vpack.c.bf16 %v100, %v99
    %v119 = vpack.c.bf16 %v102, %v101
    %v120 = vpack.c.bf16 %v104, %v103
    %v122 = vlaneseq
    %v123 = vshrl.u32 %v122, 7
    %v124 = vsub.s32 0, %v123
    %v125 = vrot.slane %v115, %v124
    %v126 = vlaneseq
    %v127 = vshrl.u32 %v126, 7
    %v128 = vsub.s32 1, %v127
    %v129 = vrot.slane %v115, %v128
    %v134 = vunpack.c.l.b16 %v105
    %v135 = vunpack.c.h.b16 %v105
    %v136 = vunpack.c.l.b16 %v106
    %v137 = vunpack.c.h.b16 %v106
    %v138 = vpack.c.b16 %v136, %v134
    %v139 = vpack.c.b16 %v137, %v135
    %vm142 = vcmask 130048
    %v144 = vsel %vm142, %v117, 0
    %v147 = vsel %vm142, %v118, 0
    %v150 = vsel %vm142, %v119, 0
    %v153 = vsel %vm142, %v120, 0
    %155 = vmatprep.subr.bf16.mxu0 %v139
    %156 = vmatpush1.bf16.msra.mxu0 %v138
    %157 = vmatprep.subr.bf16.mxu0 0
    %158 = vmatpush1.bf16.msra.mxu0 0
    %159 = vmatprep.subr.bf16.mxu0 0
    %160 = vmatpush1.bf16.msra.mxu0 0
    %161 = vmatprep.subr.bf16.mxu0 0
    %162 = vmatpush1.bf16.msra.mxu0 0
    %163 = vmatprep.subr.bf16.mxu0 0
    %164 = vmatpush1.bf16.msra.mxu0 0
    %165 = vmatprep.subr.bf16.mxu0 0
    %166 = vmatpush1.bf16.msra.mxu0 0
    %167 = vmatprep.subr.bf16.mxu0 0
    %168 = vmatpush1.bf16.msra.mxu0 0
    %169 = vmatprep.subr.bf16.mxu0 0
    %170 = vmatpush1.bf16.msra.mxu0 0
    %171 = vmatprep.subr.bf16.mxu0 0
    %172 = vmatpush1.bf16.msra.mxu0 0
    %173 = vmatprep.subr.bf16.mxu0 0
    %174 = vmatpush1.bf16.msra.mxu0 0
    %175 = vmatprep.subr.bf16.mxu0 0
    %176 = vmatpush1.bf16.msra.mxu0 0
    %177 = vmatprep.subr.bf16.mxu0 0
    %178 = vmatpush1.bf16.msra.mxu0 0
    %179 = vmatprep.subr.bf16.mxu0 0
    %180 = vmatpush1.bf16.msra.mxu0 0
    %181 = vmatprep.subr.bf16.mxu0 0
    %182 = vmatpush1.bf16.msra.mxu0 0
    %183 = vmatprep.subr.bf16.mxu0 0
    %184 = vmatpush1.bf16.msra.mxu0 0
    %185 = vmatprep.subr.bf16.mxu0 0
    %186 = vmatpush1.bf16.msra.mxu0 0
    %187 = vmatprep.mubr.bf16.mxu0 0
    %188 = vmatmul.mubr.bf16.gmra.mrb[0].mxu0 %v144
    %v189 = vpop.f32.mrb[0].mxu0
    %v190 = vadd.f32 %v125, %v189
    %v191 = vpop.f32.mrb[0].mxu0
    %v192 = vadd.f32 %v129, %v191
    %v193 = vpop.f32.mrb[0].mxu0
    %v194 = vadd.f32 %v125, %v193
    %v195 = vpop.f32.mrb[0].mxu0
    %v196 = vadd.f32 %v129, %v195
    %197 = vmatprep.mubr.bf16.mxu0 0
    %198 = vmatmul.mubr.bf16.gmra.mrb[0].mxu0 %v147
    %v199 = vpop.f32.mrb[0].mxu0
    %v200 = vadd.f32 %v125, %v199
    %v201 = vpop.f32.mrb[0].mxu0
    %v202 = vadd.f32 %v129, %v201
    %v203 = vpop.f32.mrb[0].mxu0
    %v204 = vadd.f32 %v125, %v203
    %v205 = vpop.f32.mrb[0].mxu0
    %v206 = vadd.f32 %v129, %v205
    %207 = vmatprep.mubr.bf16.mxu0 0
    %208 = vmatmul.mubr.bf16.gmra.mrb[0].mxu0 %v150
    %v209 = vpop.f32.mrb[0].mxu0
    %v210 = vadd.f32 %v125, %v209
    %v211 = vpop.f32.mrb[0].mxu0
    %v212 = vadd.f32 %v129, %v211
    %v213 = vpop.f32.mrb[0].mxu0
    %v214 = vadd.f32 %v125, %v213
    %v215 = vpop.f32.mrb[0].mxu0
    %v216 = vadd.f32 %v129, %v215
    %217 = vmatprep.mubr.bf16.mxu0 0
    %218 = vmatmul.mubr.bf16.gmra.mrb[0].mxu0 %v153
    %v219 = vpop.f32.mrb[0].mxu0
    %v220 = vadd.f32 %v125, %v219
    %v221 = vpop.f32.mrb[0].mxu0
    %v222 = vadd.f32 %v129, %v221
    %v223 = vpop.f32.mrb[0].mxu0
    %v224 = vadd.f32 %v125, %v223
    %v225 = vpop.f32.mrb[0].mxu0
    %v226 = vadd.f32 %v129, %v225
    %227 = vdwg.mxu0
    %v229 = vlaneseq
    %v230 = vshrl.u32 %v229, 7
    %v231 = vsub.s32 0, %v230
    %v232 = vrot.slane %v116, %v231
    %v233 = vlaneseq
    %v234 = vshrl.u32 %v233, 7
    %v235 = vsub.s32 1, %v234
    %v236 = vrot.slane %v116, %v235
    %v247 = vunpack.c.l.b16 %v107
    %v248 = vunpack.c.h.b16 %v107
    %v249 = vunpack.c.l.b16 %v108
    %v250 = vunpack.c.h.b16 %v108
    %v251 = vunpack.c.l.b16 %v109
    %v252 = vunpack.c.h.b16 %v109
    %v253 = vunpack.c.l.b16 %v110
    %v254 = vunpack.c.h.b16 %v110
    %v255 = vunpack.c.l.b16 %v111
    %v256 = vunpack.c.h.b16 %v111
    %v257 = vunpack.c.l.b16 %v112
    %v258 = vunpack.c.h.b16 %v112
    %v259 = vunpack.c.l.b16 %v113
    %v260 = vunpack.c.h.b16 %v113
    %v261 = vunpack.c.l.b16 %v114
    %v262 = vunpack.c.h.b16 %v114
    %v263 = vpack.c.b16 %v249, %v247
    %v264 = vpack.c.b16 %v250, %v248
    %v265 = vpack.c.b16 %v253, %v251
    %v266 = vpack.c.b16 %v254, %v252
    %v267 = vpack.c.b16 %v257, %v255
    %v268 = vpack.c.b16 %v258, %v256
    %v269 = vpack.c.b16 %v261, %v259
    %v270 = vpack.c.b16 %v262, %v260
    %vm279 = vcmask 523264
    %v281 = vsel %vm279, 0, 0
    %283 = vmatprep.subr.bf16.mxu0 %v264
    %284 = vmatpush1.bf16.msra.mxu0 %v263
    %285 = vmatprep.subr.bf16.mxu0 %v266
    %286 = vmatpush1.bf16.msra.mxu0 %v265
    %287 = vmatprep.subr.bf16.mxu0 %v268
    %288 = vmatpush1.bf16.msra.mxu0 %v267
    %289 = vmatprep.subr.bf16.mxu0 %v270
    %290 = vmatpush1.bf16.msra.mxu0 %v269
    %291 = vmatprep.subr.bf16.mxu0 0
    %292 = vmatpush1.bf16.msra.mxu0 0
    %293 = vmatprep.subr.bf16.mxu0 0
    %294 = vmatpush1.bf16.msra.mxu0 0
    %295 = vmatprep.subr.bf16.mxu0 0
    %296 = vmatpush1.bf16.msra.mxu0 0
    %297 = vmatprep.subr.bf16.mxu0 0
    %298 = vmatpush1.bf16.msra.mxu0 0
    %299 = vmatprep.subr.bf16.mxu0 0
    %300 = vmatpush1.bf16.msra.mxu0 0
    %301 = vmatprep.subr.bf16.mxu0 0
    %302 = vmatpush1.bf16.msra.mxu0 0
    %303 = vmatprep.subr.bf16.mxu0 0
    %304 = vmatpush1.bf16.msra.mxu0 0
    %305 = vmatprep.subr.bf16.mxu0 0
    %306 = vmatpush1.bf16.msra.mxu0 0
    %307 = vmatprep.subr.bf16.mxu0 0
    %308 = vmatpush1.bf16.msra.mxu0 0
    %309 = vmatprep.subr.bf16.mxu0 0
    %310 = vmatpush1.bf16.msra.mxu0 0
    %311 = vmatprep.subr.bf16.mxu0 0
    %312 = vmatpush1.bf16.msra.mxu0 0
    %313 = vmatprep.subr.bf16.mxu0 0
    %314 = vmatpush1.bf16.msra.mxu0 0
    %315 = vmatprep.mubr.bf16.mxu0 0
    %316 = vmatmul.mubr.bf16.gmra.mrb[0].mxu0 %v281
    %v317 = vpop.f32.mrb[0].mxu0
    %v318 = vadd.f32 %v232, %v317
    %v319 = vpop.f32.mrb[0].mxu0
    %v320 = vadd.f32 %v236, %v319
    %v321 = vpop.f32.mrb[0].mxu0
    %v322 = vpop.f32.mrb[0].mxu0
    %323 = vdwg.mxu0
    %v324 = vadd.f32 %v190, %v318
    %v325 = vxor.u32 %v324, 2147483648
    %v326 = vmul.f32 %v325, 1.442695
    %v327 = vpow.pop %v326
    %v328 = vadd.f32 %v327, 1.0
    %v329 = vrcp.pop %v328
    %v330 = vmul.f32 1.0, %v329
    %332 = vrot.lane.b32.xlu0 %v318, 64
    %v333 = vpop.permute.xlu0 %332
    %v335 = vmul.f32 %v330, %v333
    %337 = vrot.lane.b32.xlu0 %v335, 64
    %v338 = vpop.permute.xlu0 %337
    %v340 = vadd.f32 %v190, %v338
    %v341 = vtanh.pop %v340
    %v342 = vsub.f32 1.0, %v330
    %344 = vrot.lane.b32.xlu0 %v341, 96
    %v345 = vpop.permute.xlu0 %344
    %v347 = vmul.f32 %v342, %v345
    %v348 = vmul.f32 %v330, 0.0
    %v349 = vadd.f32 %v347, %v348
    %v350 = vadd.f32 %v224, %v318
    %v351 = vxor.u32 %v350, 2147483648
    %v352 = vmul.f32 %v351, 1.442695
    %v353 = vpow.pop %v352
    %v354 = vadd.f32 %v353, 1.0
    %v355 = vrcp.pop %v354
    %v356 = vmul.f32 1.0, %v355
    %v357 = vadd.f32 %v226, %v320
    %v358 = vxor.u32 %v357, 2147483648
    %v359 = vmul.f32 %v358, 1.442695
    %v360 = vpow.pop %v359
    %v361 = vadd.f32 %v360, 1.0
    %v362 = vrcp.pop %v361
    %v363 = vmul.f32 1.0, %v362
    %365 = vrot.lane.b32.xlu0 %v320, 64
    %v366 = vpop.permute.xlu0 %365
    %v368 = vmul.f32 %v356, %v366
    %370 = vrot.lane.b32.xlu0 %v368, 64
    %v371 = vpop.permute.xlu0 %370
    %v373 = vadd.f32 %v226, %v371
    %v374 = vtanh.pop %v373
    %v375 = vsub.f32 1.0, %v363
    %377 = vrot.lane.b32.xlu0 %v374, 96
    %v378 = vpop.permute.xlu0 %377
    %v380 = vmul.f32 %v375, %v378
    %v381 = vmul.f32 %v363, 0.0
    %v382 = vadd.f32 %v380, %v381
    %384 = vrot.lane.b32.xlu0 %v349, 96
    %v385 = vpop.permute.xlu0 %384
    %388 = vrot.lane.b32.xlu0 %v382, 32
    %v389 = vpop.permute.xlu0 %388
    %vm391 = vcmask 261120
    %v392 = vsel %vm391, %v385, %v389
    %393 = vst.msk [vmem:[#allocation2] sm:$0xff] %vm391, %v385
    %s394 = scalar_lea.vmem [#allocation3], 56
    %395 = vst.msk [vmem:[%s394] sm:$0xff] %vm391, %v382
    %v396 = vpack.c.bf16 %v392, %v392
    %v398 = vsel %vm279, %v396, 0
    %400 = vmatprep.subr.bf16.mxu0 %v264
    %401 = vmatpush1.bf16.msra.mxu0 %v263
    %402 = vmatprep.subr.bf16.mxu0 %v266
    %403 = vmatpush1.bf16.msra.mxu0 %v265
    %404 = vmatprep.subr.bf16.mxu0 %v268
    %405 = vmatpush1.bf16.msra.mxu0 %v267
    %406 = vmatprep.subr.bf16.mxu0 %v270
    %407 = vmatpush1.bf16.msra.mxu0 %v269
    %408 = vmatprep.subr.bf16.mxu0 0
    %409 = vmatpush1.bf16.msra.mxu0 0
    %410 = vmatprep.subr.bf16.mxu0 0
    %411 = vmatpush1.bf16.msra.mxu0 0
    %412 = vmatprep.subr.bf16.mxu0 0
    %413 = vmatpush1.bf16.msra.mxu0 0
    %414 = vmatprep.subr.bf16.mxu0 0
    %415 = vmatpush1.bf16.msra.mxu0 0
    %416 = vmatprep.subr.bf16.mxu0 0
    %417 = vmatpush1.bf16.msra.mxu0 0
    %418 = vmatprep.subr.bf16.mxu0 0
    %419 = vmatpush1.bf16.msra.mxu0 0
    %420 = vmatprep.subr.bf16.mxu0 0
    %421 = vmatpush1.bf16.msra.mxu0 0
    %422 = vmatprep.subr.bf16.mxu0 0
    %423 = vmatpush1.bf16.msra.mxu0 0
    %424 = vmatprep.subr.bf16.mxu0 0
    %425 = vmatpush1.bf16.msra.mxu0 0
    %426 = vmatprep.subr.bf16.mxu0 0
    %427 = vmatpush1.bf16.msra.mxu0 0
    %428 = vmatprep.subr.bf16.mxu0 0
    %429 = vmatpush1.bf16.msra.mxu0 0
    %430 = vmatprep.subr.bf16.mxu0 0
    %431 = vmatpush1.bf16.msra.mxu0 0
    %432 = vmatprep.mubr.bf16.mxu0 0
    %433 = vmatmul.mubr.bf16.gmra.mrb[0].mxu0 %v398
    %v434 = vpop.f32.mrb[0].mxu0
    %v435 = vadd.f32 %v232, %v434
    %v436 = vpop.f32.mrb[0].mxu0
    %v437 = vadd.f32 %v236, %v436
    %v438 = vpop.f32.mrb[0].mxu0
    %v439 = vpop.f32.mrb[0].mxu0
    %440 = vdwg.mxu0
    %v441 = vadd.f32 %v194, %v435
    %v442 = vxor.u32 %v441, 2147483648
    %v443 = vmul.f32 %v442, 1.442695
    %v444 = vpow.pop %v443
    %v445 = vadd.f32 %v444, 1.0
    %v446 = vrcp.pop %v445
    %v447 = vmul.f32 1.0, %v446
    %449 = vrot.lane.b32.xlu0 %v435, 64
    %v450 = vpop.permute.xlu0 %449
    %v452 = vmul.f32 %v447, %v450
    %454 = vrot.lane.b32.xlu0 %v452, 64
    %v455 = vpop.permute.xlu0 %454
    %v457 = vadd.f32 %v194, %v455
    %v458 = vtanh.pop %v457
    %v459 = vsub.f32 1.0, %v447
    %461 = vrot.lane.b32.xlu0 %v458, 96
    %v462 = vpop.permute.xlu0 %461
    %v464 = vmul.f32 %v459, %v462
    %466 = vrot.lane.b32.xlu0 %v392, 32
    %v467 = vpop.permute.xlu0 %466
    %v469 = vmul.f32 %v447, %v467
    %v470 = vadd.f32 %v464, %v469
    %v471 = vadd.f32 %v220, %v435
    %v472 = vxor.u32 %v471, 2147483648
    %v473 = vmul.f32 %v472, 1.442695
    %v474 = vpow.pop %v473
    %v475 = vadd.f32 %v474, 1.0
    %v476 = vrcp.pop %v475
    %v477 = vmul.f32 1.0, %v476
    %v478 = vadd.f32 %v222, %v437
    %v479 = vxor.u32 %v478, 2147483648
    %v480 = vmul.f32 %v479, 1.442695
    %v481 = vpow.pop %v480
    %v482 = vadd.f32 %v481, 1.0
    %v483 = vrcp.pop %v482
    %v484 = vmul.f32 1.0, %v483
    %486 = vrot.lane.b32.xlu0 %v437, 64
    %v487 = vpop.permute.xlu0 %486
    %v489 = vmul.f32 %v477, %v487
    %491 = vrot.lane.b32.xlu0 %v489, 64
    %v492 = vpop.permute.xlu0 %491
    %v494 = vadd.f32 %v222, %v492
    %v495 = vtanh.pop %v494
    %v496 = vsub.f32 1.0, %v484
    %498 = vrot.lane.b32.xlu0 %v495, 96
    %v499 = vpop.permute.xlu0 %498
    %v501 = vmul.f32 %v496, %v499
    %502 = vrot.lane.b32.xlu0 %v392, 96
    %v503 = vpop.permute.xlu0 %502
    %v505 = vmul.f32 %v484, %v503
    %v506 = vadd.f32 %v501, %v505
    %508 = vrot.lane.b32.xlu0 %v470, 96
    %v509 = vpop.permute.xlu0 %508
    %512 = vrot.lane.b32.xlu0 %v506, 32
    %v513 = vpop.permute.xlu0 %512
    %v515 = vsel %vm391, %v509, %v513
    %s516 = scalar_lea.vmem [#allocation2], 8
    %517 = vst.msk [vmem:[%s516] sm:$0xff] %vm391, %v509
    %s518 = scalar_lea.vmem [#allocation3], 48
    %519 = vst.msk [vmem:[%s518] sm:$0xff] %vm391, %v506
    %v520 = vpack.c.bf16 %v515, %v515
    %v522 = vsel %vm279, %v520, 0
    %524 = vmatprep.subr.bf16.mxu0 %v264
    %525 = vmatpush1.bf16.msra.mxu0 %v263
    %526 = vmatprep.subr.bf16.mxu0 %v266
    %527 = vmatpush1.bf16.msra.mxu0 %v265
    %528 = vmatprep.subr.bf16.mxu0 %v268
    %529 = vmatpush1.bf16.msra.mxu0 %v267
    %530 = vmatprep.subr.bf16.mxu0 %v270
    %531 = vmatpush1.bf16.msra.mxu0 %v269
    %532 = vmatprep.subr.bf16.mxu0 0
    %533 = vmatpush1.bf16.msra.mxu0 0
    %534 = vmatprep.subr.bf16.mxu0 0
    %535 = vmatpush1.bf16.msra.mxu0 0
    %536 = vmatprep.subr.bf16.mxu0 0
    %537 = vmatpush1.bf16.msra.mxu0 0
    %538 = vmatprep.subr.bf16.mxu0 0
    %539 = vmatpush1.bf16.msra.mxu0 0
    %540 = vmatprep.subr.bf16.mxu0 0
    %541 = vmatpush1.bf16.msra.mxu0 0
    %542 = vmatprep.subr.bf16.mxu0 0
    %543 = vmatpush1.bf16.msra.mxu0 0
    %544 = vmatprep.subr.bf16.mxu0 0
    %545 = vmatpush1.bf16.msra.mxu0 0
    %546 = vmatprep.subr.bf16.mxu0 0
    %547 = vmatpush1.bf16.msra.mxu0 0
    %548 = vmatprep.subr.bf16.mxu0 0
    %549 = vmatpush1.bf16.msra.mxu0 0
    %550 = vmatprep.subr.bf16.mxu0 0
    %551 = vmatpush1.bf16.msra.mxu0 0
    %552 = vmatprep.subr.bf16.mxu0 0
    %553 = vmatpush1.bf16.msra.mxu0 0
    %554 = vmatprep.subr.bf16.mxu0 0
    %555 = vmatpush1.bf16.msra.mxu0 0
    %556 = vmatprep.mubr.bf16.mxu0 0
    %557 = vmatmul.mubr.bf16.gmra.mrb[0].mxu0 %v522
    %v558 = vpop.f32.mrb[0].mxu0
    %v559 = vadd.f32 %v232, %v558
    %v560 = vpop.f32.mrb[0].mxu0
    %v561 = vadd.f32 %v236, %v560
    %v562 = vpop.f32.mrb[0].mxu0
    %v563 = vpop.f32.mrb[0].mxu0
    %564 = vdwg.mxu0
    %v565 = vadd.f32 %v200, %v559
    %v566 = vxor.u32 %v565, 2147483648
    %v567 = vmul.f32 %v566, 1.442695
    %v568 = vpow.pop %v567
    %v569 = vadd.f32 %v568, 1.0
    %v570 = vrcp.pop %v569
    %v571 = vmul.f32 1.0, %v570
    %573 = vrot.lane.b32.xlu0 %v559, 64
    %v574 = vpop.permute.xlu0 %573
    %v576 = vmul.f32 %v571, %v574
    %578 = vrot.lane.b32.xlu0 %v576, 64
    %v579 = vpop.permute.xlu0 %578
    %v581 = vadd.f32 %v200, %v579
    %v582 = vtanh.pop %v581
    %v583 = vsub.f32 1.0, %v571
    %585 = vrot.lane.b32.xlu0 %v582, 96
    %v586 = vpop.permute.xlu0 %585
    %v588 = vmul.f32 %v583, %v586
    %590 = vrot.lane.b32.xlu0 %v515, 32
    %v591 = vpop.permute.xlu0 %590
    %v593 = vmul.f32 %v571, %v591
    %v594 = vadd.f32 %v588, %v593
    %v595 = vadd.f32 %v214, %v559
    %v596 = vxor.u32 %v595, 2147483648
    %v597 = vmul.f32 %v596, 1.442695
    %v598 = vpow.pop %v597
    %v599 = vadd.f32 %v598, 1.0
    %v600 = vrcp.pop %v599
    %v601 = vmul.f32 1.0, %v600
    %v602 = vadd.f32 %v216, %v561
    %v603 = vxor.u32 %v602, 2147483648
    %v604 = vmul.f32 %v603, 1.442695
    %v605 = vpow.pop %v604
    %v606 = vadd.f32 %v605, 1.0
    %v607 = vrcp.pop %v606
    %v608 = vmul.f32 1.0, %v607
    %610 = vrot.lane.b32.xlu0 %v561, 64
    %v611 = vpop.permute.xlu0 %610
    %v613 = vmul.f32 %v601, %v611
    %615 = vrot.lane.b32.xlu0 %v613, 64
    %v616 = vpop.permute.xlu0 %615
    %v618 = vadd.f32 %v216, %v616
    %v619 = vtanh.pop %v618
    %v620 = vsub.f32 1.0, %v608
    %622 = vrot.lane.b32.xlu0 %v619, 96
    %v623 = vpop.permute.xlu0 %622
    %v625 = vmul.f32 %v620, %v623
    %626 = vrot.lane.b32.xlu0 %v515, 96
    %v627 = vpop.permute.xlu0 %626
    %v629 = vmul.f32 %v608, %v627
    %v630 = vadd.f32 %v625, %v629
    %632 = vrot.lane.b32.xlu0 %v594, 96
    %v633 = vpop.permute.xlu0 %632
    %636 = vrot.lane.b32.xlu0 %v630, 32
    %v637 = vpop.permute.xlu0 %636
    %v639 = vsel %vm391, %v633, %v637
    %s640 = scalar_lea.vmem [#allocation2], 16
    %641 = vst.msk [vmem:[%s640] sm:$0xff] %vm391, %v633
    %s642 = scalar_lea.vmem [#allocation3], 40
    %643 = vst.msk [vmem:[%s642] sm:$0xff] %vm391, %v630
    %v644 = vpack.c.bf16 %v639, %v639
    %v646 = vsel %vm279, %v644, 0
    %648 = vmatprep.subr.bf16.mxu0 %v264
    %649 = vmatpush1.bf16.msra.mxu0 %v263
    %650 = vmatprep.subr.bf16.mxu0 %v266
    %651 = vmatpush1.bf16.msra.mxu0 %v265
    %652 = vmatprep.subr.bf16.mxu0 %v268
    %653 = vmatpush1.bf16.msra.mxu0 %v267
    %654 = vmatprep.subr.bf16.mxu0 %v270
    %655 = vmatpush1.bf16.msra.mxu0 %v269
    %656 = vmatprep.subr.bf16.mxu0 0
    %657 = vmatpush1.bf16.msra.mxu0 0
    %658 = vmatprep.subr.bf16.mxu0 0
    %659 = vmatpush1.bf16.msra.mxu0 0
    %660 = vmatprep.subr.bf16.mxu0 0
    %661 = vmatpush1.bf16.msra.mxu0 0
    %662 = vmatprep.subr.bf16.mxu0 0
    %663 = vmatpush1.bf16.msra.mxu0 0
    %664 = vmatprep.subr.bf16.mxu0 0
    %665 = vmatpush1.bf16.msra.mxu0 0
    %666 = vmatprep.subr.bf16.mxu0 0
    %667 = vmatpush1.bf16.msra.mxu0 0
    %668 = vmatprep.subr.bf16.mxu0 0
    %669 = vmatpush1.bf16.msra.mxu0 0
    %670 = vmatprep.subr.bf16.mxu0 0
    %671 = vmatpush1.bf16.msra.mxu0 0
    %672 = vmatprep.subr.bf16.mxu0 0
    %673 = vmatpush1.bf16.msra.mxu0 0
    %674 = vmatprep.subr.bf16.mxu0 0
    %675 = vmatpush1.bf16.msra.mxu0 0
    %676 = vmatprep.subr.bf16.mxu0 0
    %677 = vmatpush1.bf16.msra.mxu0 0
    %678 = vmatprep.subr.bf16.mxu0 0
    %679 = vmatpush1.bf16.msra.mxu0 0
    %680 = vmatprep.mubr.bf16.mxu0 0
    %681 = vmatmul.mubr.bf16.gmra.mrb[0].mxu0 %v646
    %v682 = vpop.f32.mrb[0].mxu0
    %v683 = vadd.f32 %v232, %v682
    %v684 = vpop.f32.mrb[0].mxu0
    %v685 = vadd.f32 %v236, %v684
    %v686 = vpop.f32.mrb[0].mxu0
    %v687 = vpop.f32.mrb[0].mxu0
    %688 = vdwg.mxu0
    %v689 = vadd.f32 %v204, %v683
    %v690 = vxor.u32 %v689, 2147483648
    %v691 = vmul.f32 %v690, 1.442695
    %v692 = vpow.pop %v691
    %v693 = vadd.f32 %v692, 1.0
    %v694 = vrcp.pop %v693
    %v695 = vmul.f32 1.0, %v694
    %697 = vrot.lane.b32.xlu0 %v683, 64
    %v698 = vpop.permute.xlu0 %697
    %v700 = vmul.f32 %v695, %v698
    %702 = vrot.lane.b32.xlu0 %v700, 64
    %v703 = vpop.permute.xlu0 %702
    %v705 = vadd.f32 %v204, %v703
    %v706 = vtanh.pop %v705
    %v707 = vsub.f32 1.0, %v695
    %709 = vrot.lane.b32.xlu0 %v706, 96
    %v710 = vpop.permute.xlu0 %709
    %v712 = vmul.f32 %v707, %v710
    %714 = vrot.lane.b32.xlu0 %v639, 32
    %v715 = vpop.permute.xlu0 %714
    %v717 = vmul.f32 %v695, %v715
    %v718 = vadd.f32 %v712, %v717
    %v719 = vadd.f32 %v210, %v683
    %v720 = vxor.u32 %v719, 2147483648
    %v721 = vmul.f32 %v720, 1.442695
    %v722 = vpow.pop %v721
    %v723 = vadd.f32 %v722, 1.0
    %v724 = vrcp.pop %v723
    %v725 = vmul.f32 1.0, %v724
    %v726 = vadd.f32 %v212, %v685
    %v727 = vxor.u32 %v726, 2147483648
    %v728 = vmul.f32 %v727, 1.442695
    %v729 = vpow.pop %v728
    %v730 = vadd.f32 %v729, 1.0
    %v731 = vrcp.pop %v730
    %v732 = vmul.f32 1.0, %v731
    %734 = vrot.lane.b32.xlu0 %v685, 64
    %v735 = vpop.permute.xlu0 %734
    %v737 = vmul.f32 %v725, %v735
    %739 = vrot.lane.b32.xlu0 %v737, 64
    %v740 = vpop.permute.xlu0 %739
    %v742 = vadd.f32 %v212, %v740
    %v743 = vtanh.pop %v742
    %v744 = vsub.f32 1.0, %v732
    %746 = vrot.lane.b32.xlu0 %v743, 96
    %v747 = vpop.permute.xlu0 %746
    %v749 = vmul.f32 %v744, %v747
    %750 = vrot.lane.b32.xlu0 %v639, 96
    %v751 = vpop.permute.xlu0 %750
    %v753 = vmul.f32 %v732, %v751
    %v754 = vadd.f32 %v749, %v753
    %756 = vrot.lane.b32.xlu0 %v718, 96
    %v757 = vpop.permute.xlu0 %756
    %760 = vrot.lane.b32.xlu0 %v754, 32
    %v761 = vpop.permute.xlu0 %760
    %v763 = vsel %vm391, %v757, %v761
    %s764 = scalar_lea.vmem [#allocation2], 24
    %765 = vst.msk [vmem:[%s764] sm:$0xff] %vm391, %v757
    %s766 = scalar_lea.vmem [#allocation3], 32
    %767 = vst.msk [vmem:[%s766] sm:$0xff] %vm391, %v754
    %v768 = vpack.c.bf16 %v763, %v763
    %v770 = vsel %vm279, %v768, 0
    %772 = vmatprep.subr.bf16.mxu0 %v264
    %773 = vmatpush1.bf16.msra.mxu0 %v263
    %774 = vmatprep.subr.bf16.mxu0 %v266
    %775 = vmatpush1.bf16.msra.mxu0 %v265
    %776 = vmatprep.subr.bf16.mxu0 %v268
    %777 = vmatpush1.bf16.msra.mxu0 %v267
    %778 = vmatprep.subr.bf16.mxu0 %v270
    %779 = vmatpush1.bf16.msra.mxu0 %v269
    %780 = vmatprep.subr.bf16.mxu0 0
    %781 = vmatpush1.bf16.msra.mxu0 0
    %782 = vmatprep.subr.bf16.mxu0 0
    %783 = vmatpush1.bf16.msra.mxu0 0
    %784 = vmatprep.subr.bf16.mxu0 0
    %785 = vmatpush1.bf16.msra.mxu0 0
    %786 = vmatprep.subr.bf16.mxu0 0
    %787 = vmatpush1.bf16.msra.mxu0 0
    %788 = vmatprep.subr.bf16.mxu0 0
    %789 = vmatpush1.bf16.msra.mxu0 0
    %790 = vmatprep.subr.bf16.mxu0 0
    %791 = vmatpush1.bf16.msra.mxu0 0
    %792 = vmatprep.subr.bf16.mxu0 0
    %793 = vmatpush1.bf16.msra.mxu0 0
    %794 = vmatprep.subr.bf16.mxu0 0
    %795 = vmatpush1.bf16.msra.mxu0 0
    %796 = vmatprep.subr.bf16.mxu0 0
    %797 = vmatpush1.bf16.msra.mxu0 0
    %798 = vmatprep.subr.bf16.mxu0 0
    %799 = vmatpush1.bf16.msra.mxu0 0
    %800 = vmatprep.subr.bf16.mxu0 0
    %801 = vmatpush1.bf16.msra.mxu0 0
    %802 = vmatprep.subr.bf16.mxu0 0
    %803 = vmatpush1.bf16.msra.mxu0 0
    %804 = vmatprep.mubr.bf16.mxu0 0
    %805 = vmatmul.mubr.bf16.gmra.mrb[0].mxu0 %v770
    %v806 = vpop.f32.mrb[0].mxu0
    %v807 = vadd.f32 %v232, %v806
    %v808 = vpop.f32.mrb[0].mxu0
    %v809 = vadd.f32 %v236, %v808
    %v810 = vpop.f32.mrb[0].mxu0
    %v811 = vpop.f32.mrb[0].mxu0
    %812 = vdwg.mxu0
    %v813 = vadd.f32 %v210, %v807
    %v814 = vxor.u32 %v813, 2147483648
    %v815 = vmul.f32 %v814, 1.442695
    %v816 = vpow.pop %v815
    %v817 = vadd.f32 %v816, 1.0
    %v818 = vrcp.pop %v817
    %v819 = vmul.f32 1.0, %v818
    %821 = vrot.lane.b32.xlu0 %v807, 64
    %v822 = vpop.permute.xlu0 %821
    %v824 = vmul.f32 %v819, %v822
    %826 = vrot.lane.b32.xlu0 %v824, 64
    %v827 = vpop.permute.xlu0 %826
    %v829 = vadd.f32 %v210, %v827
    %v830 = vtanh.pop %v829
    %v831 = vsub.f32 1.0, %v819
    %833 = vrot.lane.b32.xlu0 %v830, 96
    %v834 = vpop.permute.xlu0 %833
    %v836 = vmul.f32 %v831, %v834
    %838 = vrot.lane.b32.xlu0 %v763, 32
    %v839 = vpop.permute.xlu0 %838
    %v841 = vmul.f32 %v819, %v839
    %v842 = vadd.f32 %v836, %v841
    %v843 = vadd.f32 %v204, %v807
    %v844 = vxor.u32 %v843, 2147483648
    %v845 = vmul.f32 %v844, 1.442695
    %v846 = vpow.pop %v845
    %v847 = vadd.f32 %v846, 1.0
    %v848 = vrcp.pop %v847
    %v849 = vmul.f32 1.0, %v848
    %v850 = vadd.f32 %v206, %v809
    %v851 = vxor.u32 %v850, 2147483648
    %v852 = vmul.f32 %v851, 1.442695
    %v853 = vpow.pop %v852
    %v854 = vadd.f32 %v853, 1.0
    %v855 = vrcp.pop %v854
    %v856 = vmul.f32 1.0, %v855
    %858 = vrot.lane.b32.xlu0 %v809, 64
    %v859 = vpop.permute.xlu0 %858
    %v861 = vmul.f32 %v849, %v859
    %863 = vrot.lane.b32.xlu0 %v861, 64
    %v864 = vpop.permute.xlu0 %863
    %v866 = vadd.f32 %v206, %v864
    %v867 = vtanh.pop %v866
    %v868 = vsub.f32 1.0, %v856
    %870 = vrot.lane.b32.xlu0 %v867, 96
    %v871 = vpop.permute.xlu0 %870
    %v873 = vmul.f32 %v868, %v871
    %874 = vrot.lane.b32.xlu0 %v763, 96
    %v875 = vpop.permute.xlu0 %874
    %v877 = vmul.f32 %v856, %v875
    %v878 = vadd.f32 %v873, %v877
    %880 = vrot.lane.b32.xlu0 %v842, 96
    %v881 = vpop.permute.xlu0 %880
    %884 = vrot.lane.b32.xlu0 %v878, 32
    %v885 = vpop.permute.xlu0 %884
    %v887 = vsel %vm391, %v881, %v885
    %s888 = scalar_lea.vmem [#allocation2], 32
    %889 = vst.msk [vmem:[%s888] sm:$0xff] %vm391, %v881
    %s890 = scalar_lea.vmem [#allocation3], 24
    %891 = vst.msk [vmem:[%s890] sm:$0xff] %vm391, %v878
    %v892 = vpack.c.bf16 %v887, %v887
    %v894 = vsel %vm279, %v892, 0
    %896 = vmatprep.subr.bf16.mxu0 %v264
    %897 = vmatpush1.bf16.msra.mxu0 %v263
    %898 = vmatprep.subr.bf16.mxu0 %v266
    %899 = vmatpush1.bf16.msra.mxu0 %v265
    %900 = vmatprep.subr.bf16.mxu0 %v268
    %901 = vmatpush1.bf16.msra.mxu0 %v267
    %902 = vmatprep.subr.bf16.mxu0 %v270
    %903 = vmatpush1.bf16.msra.mxu0 %v269
    %904 = vmatprep.subr.bf16.mxu0 0
    %905 = vmatpush1.bf16.msra.mxu0 0
    %906 = vmatprep.subr.bf16.mxu0 0
    %907 = vmatpush1.bf16.msra.mxu0 0
    %908 = vmatprep.subr.bf16.mxu0 0
    %909 = vmatpush1.bf16.msra.mxu0 0
    %910 = vmatprep.subr.bf16.mxu0 0
    %911 = vmatpush1.bf16.msra.mxu0 0
    %912 = vmatprep.subr.bf16.mxu0 0
    %913 = vmatpush1.bf16.msra.mxu0 0
    %914 = vmatprep.subr.bf16.mxu0 0
    %915 = vmatpush1.bf16.msra.mxu0 0
    %916 = vmatprep.subr.bf16.mxu0 0
    %917 = vmatpush1.bf16.msra.mxu0 0
    %918 = vmatprep.subr.bf16.mxu0 0
    %919 = vmatpush1.bf16.msra.mxu0 0
    %920 = vmatprep.subr.bf16.mxu0 0
    %921 = vmatpush1.bf16.msra.mxu0 0
    %922 = vmatprep.subr.bf16.mxu0 0
    %923 = vmatpush1.bf16.msra.mxu0 0
    %924 = vmatprep.subr.bf16.mxu0 0
    %925 = vmatpush1.bf16.msra.mxu0 0
    %926 = vmatprep.subr.bf16.mxu0 0
    %927 = vmatpush1.bf16.msra.mxu0 0
    %928 = vmatprep.mubr.bf16.mxu0 0
    %929 = vmatmul.mubr.bf16.gmra.mrb[0].mxu0 %v894
    %v930 = vpop.f32.mrb[0].mxu0
    %v931 = vadd.f32 %v232, %v930
    %v932 = vpop.f32.mrb[0].mxu0
    %v933 = vadd.f32 %v236, %v932
    %v934 = vpop.f32.mrb[0].mxu0
    %v935 = vpop.f32.mrb[0].mxu0
    %936 = vdwg.mxu0
    %v937 = vadd.f32 %v214, %v931
    %v938 = vxor.u32 %v937, 2147483648
    %v939 = vmul.f32 %v938, 1.442695
    %v940 = vpow.pop %v939
    %v941 = vadd.f32 %v940, 1.0
    %v942 = vrcp.pop %v941
    %v943 = vmul.f32 1.0, %v942
    %945 = vrot.lane.b32.xlu0 %v931, 64
    %v946 = vpop.permute.xlu0 %945
    %v948 = vmul.f32 %v943, %v946
    %950 = vrot.lane.b32.xlu0 %v948, 64
    %v951 = vpop.permute.xlu0 %950
    %v953 = vadd.f32 %v214, %v951
    %v954 = vtanh.pop %v953
    %v955 = vsub.f32 1.0, %v943
    %957 = vrot.lane.b32.xlu0 %v954, 96
    %v958 = vpop.permute.xlu0 %957
    %v960 = vmul.f32 %v955, %v958
    %962 = vrot.lane.b32.xlu0 %v887, 32
    %v963 = vpop.permute.xlu0 %962
    %v965 = vmul.f32 %v943, %v963
    %v966 = vadd.f32 %v960, %v965
    %v967 = vadd.f32 %v200, %v931
    %v968 = vxor.u32 %v967, 2147483648
    %v969 = vmul.f32 %v968, 1.442695
    %v970 = vpow.pop %v969
    %v971 = vadd.f32 %v970, 1.0
    %v972 = vrcp.pop %v971
    %v973 = vmul.f32 1.0, %v972
    %v974 = vadd.f32 %v202, %v933
    %v975 = vxor.u32 %v974, 2147483648
    %v976 = vmul.f32 %v975, 1.442695
    %v977 = vpow.pop %v976
    %v978 = vadd.f32 %v977, 1.0
    %v979 = vrcp.pop %v978
    %v980 = vmul.f32 1.0, %v979
    %982 = vrot.lane.b32.xlu0 %v933, 64
    %v983 = vpop.permute.xlu0 %982
    %v985 = vmul.f32 %v973, %v983
    %987 = vrot.lane.b32.xlu0 %v985, 64
    %v988 = vpop.permute.xlu0 %987
    %v990 = vadd.f32 %v202, %v988
    %v991 = vtanh.pop %v990
    %v992 = vsub.f32 1.0, %v980
    %994 = vrot.lane.b32.xlu0 %v991, 96
    %v995 = vpop.permute.xlu0 %994
    %v997 = vmul.f32 %v992, %v995
    %998 = vrot.lane.b32.xlu0 %v887, 96
    %v999 = vpop.permute.xlu0 %998
    %v1001 = vmul.f32 %v980, %v999
    %v1002 = vadd.f32 %v997, %v1001
    %1004 = vrot.lane.b32.xlu0 %v966, 96
    %v1005 = vpop.permute.xlu0 %1004
    %1008 = vrot.lane.b32.xlu0 %v1002, 32
    %v1009 = vpop.permute.xlu0 %1008
    %v1011 = vsel %vm391, %v1005, %v1009
    %s1012 = scalar_lea.vmem [#allocation2], 40
    %1013 = vst.msk [vmem:[%s1012] sm:$0xff] %vm391, %v1005
    %s1014 = scalar_lea.vmem [#allocation3], 16
    %1015 = vst.msk [vmem:[%s1014] sm:$0xff] %vm391, %v1002
    %v1016 = vpack.c.bf16 %v1011, %v1011
    %v1018 = vsel %vm279, %v1016, 0
    %1020 = vmatprep.subr.bf16.mxu0 %v264
    %1021 = vmatpush1.bf16.msra.mxu0 %v263
    %1022 = vmatprep.subr.bf16.mxu0 %v266
    %1023 = vmatpush1.bf16.msra.mxu0 %v265
    %1024 = vmatprep.subr.bf16.mxu0 %v268
    %1025 = vmatpush1.bf16.msra.mxu0 %v267
    %1026 = vmatprep.subr.bf16.mxu0 %v270
    %1027 = vmatpush1.bf16.msra.mxu0 %v269
    %1028 = vmatprep.subr.bf16.mxu0 0
    %1029 = vmatpush1.bf16.msra.mxu0 0
    %1030 = vmatprep.subr.bf16.mxu0 0
    %1031 = vmatpush1.bf16.msra.mxu0 0
    %1032 = vmatprep.subr.bf16.mxu0 0
    %1033 = vmatpush1.bf16.msra.mxu0 0
    %1034 = vmatprep.subr.bf16.mxu0 0
    %1035 = vmatpush1.bf16.msra.mxu0 0
    %1036 = vmatprep.subr.bf16.mxu0 0
    %1037 = vmatpush1.bf16.msra.mxu0 0
    %1038 = vmatprep.subr.bf16.mxu0 0
    %1039 = vmatpush1.bf16.msra.mxu0 0
    %1040 = vmatprep.subr.bf16.mxu0 0
    %1041 = vmatpush1.bf16.msra.mxu0 0
    %1042 = vmatprep.subr.bf16.mxu0 0
    %1043 = vmatpush1.bf16.msra.mxu0 0
    %1044 = vmatprep.subr.bf16.mxu0 0
    %1045 = vmatpush1.bf16.msra.mxu0 0
    %1046 = vmatprep.subr.bf16.mxu0 0
    %1047 = vmatpush1.bf16.msra.mxu0 0
    %1048 = vmatprep.subr.bf16.mxu0 0
    %1049 = vmatpush1.bf16.msra.mxu0 0
    %1050 = vmatprep.subr.bf16.mxu0 0
    %1051 = vmatpush1.bf16.msra.mxu0 0
    %1052 = vmatprep.mubr.bf16.mxu0 0
    %1053 = vmatmul.mubr.bf16.gmra.mrb[0].mxu0 %v1018
    %v1054 = vpop.f32.mrb[0].mxu0
    %v1055 = vadd.f32 %v232, %v1054
    %v1056 = vpop.f32.mrb[0].mxu0
    %v1057 = vadd.f32 %v236, %v1056
    %v1058 = vpop.f32.mrb[0].mxu0
    %v1059 = vpop.f32.mrb[0].mxu0
    %1060 = vdwg.mxu0
    %v1061 = vadd.f32 %v220, %v1055
    %v1062 = vxor.u32 %v1061, 2147483648
    %v1063 = vmul.f32 %v1062, 1.442695
    %v1064 = vpow.pop %v1063
    %v1065 = vadd.f32 %v1064, 1.0
    %v1066 = vrcp.pop %v1065
    %v1067 = vmul.f32 1.0, %v1066
    %1069 = vrot.lane.b32.xlu0 %v1055, 64
    %v1070 = vpop.permute.xlu0 %1069
    %v1072 = vmul.f32 %v1067, %v1070
    %1074 = vrot.lane.b32.xlu0 %v1072, 64
    %v1075 = vpop.permute.xlu0 %1074
    %v1077 = vadd.f32 %v220, %v1075
    %v1078 = vtanh.pop %v1077
    %v1079 = vsub.f32 1.0, %v1067
    %1081 = vrot.lane.b32.xlu0 %v1078, 96
    %v1082 = vpop.permute.xlu0 %1081
    %v1084 = vmul.f32 %v1079, %v1082
    %1086 = vrot.lane.b32.xlu0 %v1011, 32
    %v1087 = vpop.permute.xlu0 %1086
    %v1089 = vmul.f32 %v1067, %v1087
    %v1090 = vadd.f32 %v1084, %v1089
    %v1091 = vadd.f32 %v194, %v1055
    %v1092 = vxor.u32 %v1091, 2147483648
    %v1093 = vmul.f32 %v1092, 1.442695
    %v1094 = vpow.pop %v1093
    %v1095 = vadd.f32 %v1094, 1.0
    %v1096 = vrcp.pop %v1095
    %v1097 = vmul.f32 1.0, %v1096
    %v1098 = vadd.f32 %v196, %v1057
    %v1099 = vxor.u32 %v1098, 2147483648
    %v1100 = vmul.f32 %v1099, 1.442695
    %v1101 = vpow.pop %v1100
    %v1102 = vadd.f32 %v1101, 1.0
    %v1103 = vrcp.pop %v1102
    %v1104 = vmul.f32 1.0, %v1103
    %1106 = vrot.lane.b32.xlu0 %v1057, 64
    %v1107 = vpop.permute.xlu0 %1106
    %v1109 = vmul.f32 %v1097, %v1107
    %1111 = vrot.lane.b32.xlu0 %v1109, 64
    %v1112 = vpop.permute.xlu0 %1111
    %v1114 = vadd.f32 %v196, %v1112
    %v1115 = vtanh.pop %v1114
    %v1116 = vsub.f32 1.0, %v1104
    %1118 = vrot.lane.b32.xlu0 %v1115, 96
    %v1119 = vpop.permute.xlu0 %1118
    %v1121 = vmul.f32 %v1116, %v1119
    %1122 = vrot.lane.b32.xlu0 %v1011, 96
    %v1123 = vpop.permute.xlu0 %1122
    %v1125 = vmul.f32 %v1104, %v1123
    %v1126 = vadd.f32 %v1121, %v1125
    %1128 = vrot.lane.b32.xlu0 %v1090, 96
    %v1129 = vpop.permute.xlu0 %1128
    %1132 = vrot.lane.b32.xlu0 %v1126, 32
    %v1133 = vpop.permute.xlu0 %1132
    %v1135 = vsel %vm391, %v1129, %v1133
    %s1136 = scalar_lea.vmem [#allocation2], 48
    %1137 = vst.msk [vmem:[%s1136] sm:$0xff] %vm391, %v1129
    %s1138 = scalar_lea.vmem [#allocation3], 8
    %1139 = vst.msk [vmem:[%s1138] sm:$0xff] %vm391, %v1126
    %v1140 = vpack.c.bf16 %v1135, %v1135
    %v1142 = vsel %vm279, %v1140, 0
    %1144 = vmatprep.subr.bf16.mxu0 %v264
    %1145 = vmatpush1.bf16.msra.mxu0 %v263
    %1146 = vmatprep.subr.bf16.mxu0 %v266
    %1147 = vmatpush1.bf16.msra.mxu0 %v265
    %1148 = vmatprep.subr.bf16.mxu0 %v268
    %1149 = vmatpush1.bf16.msra.mxu0 %v267
    %1150 = vmatprep.subr.bf16.mxu0 %v270
    %1151 = vmatpush1.bf16.msra.mxu0 %v269
    %1152 = vmatprep.subr.bf16.mxu0 0
    %1153 = vmatpush1.bf16.msra.mxu0 0
    %1154 = vmatprep.subr.bf16.mxu0 0
    %1155 = vmatpush1.bf16.msra.mxu0 0
    %1156 = vmatprep.subr.bf16.mxu0 0
    %1157 = vmatpush1.bf16.msra.mxu0 0
    %1158 = vmatprep.subr.bf16.mxu0 0
    %1159 = vmatpush1.bf16.msra.mxu0 0
    %1160 = vmatprep.subr.bf16.mxu0 0
    %1161 = vmatpush1.bf16.msra.mxu0 0
    %1162 = vmatprep.subr.bf16.mxu0 0
    %1163 = vmatpush1.bf16.msra.mxu0 0
    %1164 = vmatprep.subr.bf16.mxu0 0
    %1165 = vmatpush1.bf16.msra.mxu0 0
    %1166 = vmatprep.subr.bf16.mxu0 0
    %1167 = vmatpush1.bf16.msra.mxu0 0
    %1168 = vmatprep.subr.bf16.mxu0 0
    %1169 = vmatpush1.bf16.msra.mxu0 0
    %1170 = vmatprep.subr.bf16.mxu0 0
    %1171 = vmatpush1.bf16.msra.mxu0 0
    %1172 = vmatprep.subr.bf16.mxu0 0
    %1173 = vmatpush1.bf16.msra.mxu0 0
    %1174 = vmatprep.subr.bf16.mxu0 0
    %1175 = vmatpush1.bf16.msra.mxu0 0
    %1176 = vmatprep.mubr.bf16.mxu0 0
    %1177 = vmatmul.mubr.bf16.gmra.mrb[0].mxu0 %v1142
    %v1178 = vpop.f32.mrb[0].mxu0
    %v1179 = vadd.f32 %v232, %v1178
    %v1180 = vpop.f32.mrb[0].mxu0
    %v1181 = vadd.f32 %v236, %v1180
    %v1182 = vpop.f32.mrb[0].mxu0
    %v1183 = vpop.f32.mrb[0].mxu0
    %1184 = vdwg.mxu0
    %v1185 = vadd.f32 %v224, %v1179
    %v1186 = vxor.u32 %v1185, 2147483648
    %v1187 = vmul.f32 %v1186, 1.442695
    %v1188 = vpow.pop %v1187
    %v1189 = vadd.f32 %v1188, 1.0
    %v1190 = vrcp.pop %v1189
    %v1191 = vmul.f32 1.0, %v1190
    %1193 = vrot.lane.b32.xlu0 %v1179, 64
    %v1194 = vpop.permute.xlu0 %1193
    %v1196 = vmul.f32 %v1191, %v1194
    %1198 = vrot.lane.b32.xlu0 %v1196, 64
    %v1199 = vpop.permute.xlu0 %1198
    %v1201 = vadd.f32 %v224, %v1199
    %v1202 = vtanh.pop %v1201
    %v1203 = vsub.f32 1.0, %v1191
    %1205 = vrot.lane.b32.xlu0 %v1202, 96
    %v1206 = vpop.permute.xlu0 %1205
    %v1208 = vmul.f32 %v1203, %v1206
    %1210 = vrot.lane.b32.xlu0 %v1135, 32
    %v1211 = vpop.permute.xlu0 %1210
    %v1213 = vmul.f32 %v1191, %v1211
    %v1214 = vadd.f32 %v1208, %v1213
    %v1215 = vadd.f32 %v190, %v1179
    %v1216 = vxor.u32 %v1215, 2147483648
    %v1217 = vmul.f32 %v1216, 1.442695
    %v1218 = vpow.pop %v1217
    %v1219 = vadd.f32 %v1218, 1.0
    %v1220 = vrcp.pop %v1219
    %v1221 = vmul.f32 1.0, %v1220
    %v1222 = vadd.f32 %v192, %v1181
    %v1223 = vxor.u32 %v1222, 2147483648
    %v1224 = vmul.f32 %v1223, 1.442695
    %v1225 = vpow.pop %v1224
    %v1226 = vadd.f32 %v1225, 1.0
    %v1227 = vrcp.pop %v1226
    %v1228 = vmul.f32 1.0, %v1227
    %1230 = vrot.lane.b32.xlu0 %v1181, 64
    %v1231 = vpop.permute.xlu0 %1230
    %v1233 = vmul.f32 %v1221, %v1231
    %1235 = vrot.lane.b32.xlu0 %v1233, 64
    %v1236 = vpop.permute.xlu0 %1235
    %v1238 = vadd.f32 %v192, %v1236
    %v1239 = vtanh.pop %v1238
    %v1240 = vsub.f32 1.0, %v1228
    %1242 = vrot.lane.b32.xlu0 %v1239, 96
    %v1243 = vpop.permute.xlu0 %1242
    %v1245 = vmul.f32 %v1240, %v1243
    %1246 = vrot.lane.b32.xlu0 %v1135, 96
    %v1247 = vpop.permute.xlu0 %1246
    %v1249 = vmul.f32 %v1228, %v1247
    %v1250 = vadd.f32 %v1245, %v1249
    %1252 = vrot.lane.b32.xlu0 %v1214, 96
    %v1253 = vpop.permute.xlu0 %1252
    %1256 = vrot.lane.b32.xlu0 %v1250, 32
    %v1257 = vpop.permute.xlu0 %1256
    %v1259 = vsel %vm391, %v1253, %v1257
    %s1260 = scalar_lea.vmem [#allocation2], 56
    %1261 = vst.msk [vmem:[%s1260] sm:$0xff] %vm391, %v1253
    %1262 = vst.msk [vmem:[#allocation3] sm:$0xff] %vm391, %v1250
    %v1263 = vld [vmem:[#allocation2] sm:$0xff]
    %v1264 = vld [vmem:[#allocation2 + $0x8] sm:$0xff]
    %v1265 = vld [vmem:[#allocation2 + $0x10] sm:$0xff]
    %v1266 = vld [vmem:[#allocation2 + $0x18] sm:$0xff]
    %v1267 = vld [vmem:[#allocation2 + $0x20] sm:$0xff]
    %v1268 = vld [vmem:[#allocation2 + $0x28] sm:$0xff]
    %v1269 = vld [vmem:[#allocation2 + $0x30] sm:$0xff]
    %v1270 = vld [vmem:[#allocation2 + $0x38] sm:$0xff]
    %v1271 = vld [vmem:[#allocation3] sm:$0xff]
    %v1272 = vld [vmem:[#allocation3 + $0x8] sm:$0xff]
    %v1273 = vld [vmem:[#allocation3 + $0x10] sm:$0xff]
    %v1274 = vld [vmem:[#allocation3 + $0x18] sm:$0xff]
    %v1275 = vld [vmem:[#allocation3 + $0x20] sm:$0xff]
    %v1276 = vld [vmem:[#allocation3 + $0x28] sm:$0xff]
    %v1277 = vld [vmem:[#allocation3 + $0x30] sm:$0xff]
    %v1278 = vld [vmem:[#allocation3 + $0x38] sm:$0xff]
    %1287 = vrot.lane.b32.xlu0 %v1271, 32
    %v1288 = vpop.permute.xlu0 %1287
    %1289 = vrot.lane.b32.xlu0 %v1272, 32
    %v1290 = vpop.permute.xlu0 %1289
    %1291 = vrot.lane.b32.xlu0 %v1273, 32
    %v1292 = vpop.permute.xlu0 %1291
    %1293 = vrot.lane.b32.xlu0 %v1274, 32
    %v1294 = vpop.permute.xlu0 %1293
    %1295 = vrot.lane.b32.xlu0 %v1275, 32
    %v1296 = vpop.permute.xlu0 %1295
    %1297 = vrot.lane.b32.xlu0 %v1276, 32
    %v1298 = vpop.permute.xlu0 %1297
    %1299 = vrot.lane.b32.xlu0 %v1277, 32
    %v1300 = vpop.permute.xlu0 %1299
    %1301 = vrot.lane.b32.xlu0 %v1278, 32
    %v1302 = vpop.permute.xlu0 %1301
    %v1311 = vsel %vm391, %v1263, %v1288
    %v1312 = vsel %vm391, %v1264, %v1290
    %v1313 = vsel %vm391, %v1265, %v1292
    %v1314 = vsel %vm391, %v1266, %v1294
    %v1315 = vsel %vm391, %v1267, %v1296
    %v1316 = vsel %vm391, %v1268, %v1298
    %v1317 = vsel %vm391, %v1269, %v1300
    %v1318 = vsel %vm391, %v1270, %v1302
    %v1319 = vld [vmem:[%s7] sm:$0xff]
    %v1320 = vld [vmem:[%s7 + $0x8] sm:$0xff]
    %v1321 = vld [vmem:[%s7 + $0x10] sm:$0xff]
    %v1322 = vld [vmem:[%s7 + $0x18] sm:$0xff]
    %v1323 = vld [vmem:[%s7 + $0x20] sm:$0xff]
    %v1324 = vld [vmem:[%s7 + $0x28] sm:$0xff]
    %v1325 = vld [vmem:[%s7 + $0x30] sm:$0xff]
    %v1326 = vld [vmem:[%s7 + $0x38] sm:$0xff]
    %v1327 = vld [vmem:[%s8] sm:$0xff]
    %v1328 = vld [vmem:[%s8 + $0x8] sm:$0xff]
    %v1329 = vld [vmem:[%s8 + $0x10] sm:$0xff]
    %v1330 = vld [vmem:[%s8 + $0x18] sm:$0xff]
    %v1331 = vld [vmem:[%s8 + $0x20] sm:$0xff]
    %v1332 = vld [vmem:[%s8 + $0x28] sm:$0xff]
    %v1333 = vld [vmem:[%s8 + $0x30] sm:$0xff]
    %v1334 = vld [vmem:[%s8 + $0x38] sm:$0xff]
    %v1335 = vld [vmem:[%s9] sm:$0x3]
    %v1336 = vld [vmem:[%s10] sm:$0x3]
    %v1337 = vpack.c.bf16 %v1312, %v1311
    %v1338 = vpack.c.bf16 %v1314, %v1313
    %v1339 = vpack.c.bf16 %v1316, %v1315
    %v1340 = vpack.c.bf16 %v1318, %v1317
    %v1342 = vlaneseq
    %v1343 = vshrl.u32 %v1342, 7
    %v1344 = vsub.s32 0, %v1343
    %v1345 = vrot.slane %v1335, %v1344
    %v1346 = vlaneseq
    %v1347 = vshrl.u32 %v1346, 7
    %v1348 = vsub.s32 1, %v1347
    %v1349 = vrot.slane %v1335, %v1348
    %v1360 = vunpack.c.l.b16 %v1319
    %v1361 = vunpack.c.h.b16 %v1319
    %v1362 = vunpack.c.l.b16 %v1320
    %v1363 = vunpack.c.h.b16 %v1320
    %v1364 = vunpack.c.l.b16 %v1321
    %v1365 = vunpack.c.h.b16 %v1321
    %v1366 = vunpack.c.l.b16 %v1322
    %v1367 = vunpack.c.h.b16 %v1322
    %v1368 = vunpack.c.l.b16 %v1323
    %v1369 = vunpack.c.h.b16 %v1323
    %v1370 = vunpack.c.l.b16 %v1324
    %v1371 = vunpack.c.h.b16 %v1324
    %v1372 = vunpack.c.l.b16 %v1325
    %v1373 = vunpack.c.h.b16 %v1325
    %v1374 = vunpack.c.l.b16 %v1326
    %v1375 = vunpack.c.h.b16 %v1326
    %v1376 = vpack.c.b16 %v1362, %v1360
    %v1377 = vpack.c.b16 %v1363, %v1361
    %v1378 = vpack.c.b16 %v1366, %v1364
    %v1379 = vpack.c.b16 %v1367, %v1365
    %v1380 = vpack.c.b16 %v1370, %v1368
    %v1381 = vpack.c.b16 %v1371, %v1369
    %v1382 = vpack.c.b16 %v1374, %v1372
    %v1383 = vpack.c.b16 %v1375, %v1373
    %v1393 = vsel %vm279, %v1337, 0
    %v1396 = vsel %vm279, %v1338, 0
    %v1399 = vsel %vm279, %v1339, 0
    %v1402 = vsel %vm279, %v1340, 0
    %1404 = vmatprep.subr.bf16.mxu0 %v1377
    %1405 = vmatpush1.bf16.msra.mxu0 %v1376
    %1406 = vmatprep.subr.bf16.mxu0 %v1379
    %1407 = vmatpush1.bf16.msra.mxu0 %v1378
    %1408 = vmatprep.subr.bf16.mxu0 %v1381
    %1409 = vmatpush1.bf16.msra.mxu0 %v1380
    %1410 = vmatprep.subr.bf16.mxu0 %v1383
    %1411 = vmatpush1.bf16.msra.mxu0 %v1382
    %1412 = vmatprep.subr.bf16.mxu0 0
    %1413 = vmatpush1.bf16.msra.mxu0 0
    %1414 = vmatprep.subr.bf16.mxu0 0
    %1415 = vmatpush1.bf16.msra.mxu0 0
    %1416 = vmatprep.subr.bf16.mxu0 0
    %1417 = vmatpush1.bf16.msra.mxu0 0
    %1418 = vmatprep.subr.bf16.mxu0 0
    %1419 = vmatpush1.bf16.msra.mxu0 0
    %1420 = vmatprep.subr.bf16.mxu0 0
    %1421 = vmatpush1.bf16.msra.mxu0 0
    %1422 = vmatprep.subr.bf16.mxu0 0
    %1423 = vmatpush1.bf16.msra.mxu0 0
    %1424 = vmatprep.subr.bf16.mxu0 0
    %1425 = vmatpush1.bf16.msra.mxu0 0
    %1426 = vmatprep.subr.bf16.mxu0 0
    %1427 = vmatpush1.bf16.msra.mxu0 0
    %1428 = vmatprep.subr.bf16.mxu0 0
    %1429 = vmatpush1.bf16.msra.mxu0 0
    %1430 = vmatprep.subr.bf16.mxu0 0
    %1431 = vmatpush1.bf16.msra.mxu0 0
    %1432 = vmatprep.subr.bf16.mxu0 0
    %1433 = vmatpush1.bf16.msra.mxu0 0
    %1434 = vmatprep.subr.bf16.mxu0 0
    %1435 = vmatpush1.bf16.msra.mxu0 0
    %1436 = vmatprep.mubr.bf16.mxu0 0
    %1437 = vmatmul.mubr.bf16.gmra.mrb[0].mxu0 %v1393
    %v1438 = vpop.f32.mrb[0].mxu0
    %v1439 = vadd.f32 %v1345, %v1438
    %v1440 = vpop.f32.mrb[0].mxu0
    %v1441 = vadd.f32 %v1349, %v1440
    %v1442 = vpop.f32.mrb[0].mxu0
    %v1443 = vadd.f32 %v1345, %v1442
    %v1444 = vpop.f32.mrb[0].mxu0
    %v1445 = vadd.f32 %v1349, %v1444
    %1446 = vmatprep.mubr.bf16.mxu0 0
    %1447 = vmatmul.mubr.bf16.gmra.mrb[0].mxu0 %v1396
    %v1448 = vpop.f32.mrb[0].mxu0
    %v1449 = vadd.f32 %v1345, %v1448
    %v1450 = vpop.f32.mrb[0].mxu0
    %v1451 = vadd.f32 %v1349, %v1450
    %v1452 = vpop.f32.mrb[0].mxu0
    %v1453 = vadd.f32 %v1345, %v1452
    %v1454 = vpop.f32.mrb[0].mxu0
    %v1455 = vadd.f32 %v1349, %v1454
    %1456 = vmatprep.mubr.bf16.mxu0 0
    %1457 = vmatmul.mubr.bf16.gmra.mrb[0].mxu0 %v1399
    %v1458 = vpop.f32.mrb[0].mxu0
    %v1459 = vadd.f32 %v1345, %v1458
    %v1460 = vpop.f32.mrb[0].mxu0
    %v1461 = vadd.f32 %v1349, %v1460
    %v1462 = vpop.f32.mrb[0].mxu0
    %v1463 = vadd.f32 %v1345, %v1462
    %v1464 = vpop.f32.mrb[0].mxu0
    %v1465 = vadd.f32 %v1349, %v1464
    %1466 = vmatprep.mubr.bf16.mxu0 0
    %1467 = vmatmul.mubr.bf16.gmra.mrb[0].mxu0 %v1402
    %v1468 = vpop.f32.mrb[0].mxu0
    %v1469 = vadd.f32 %v1345, %v1468
    %v1470 = vpop.f32.mrb[0].mxu0
    %v1471 = vadd.f32 %v1349, %v1470
    %v1472 = vpop.f32.mrb[0].mxu0
    %v1473 = vadd.f32 %v1345, %v1472
    %v1474 = vpop.f32.mrb[0].mxu0
    %v1475 = vadd.f32 %v1349, %v1474
    %1476 = vdwg.mxu0
    %v1478 = vlaneseq
    %v1479 = vshrl.u32 %v1478, 7
    %v1480 = vsub.s32 0, %v1479
    %v1481 = vrot.slane %v1336, %v1480
    %v1482 = vlaneseq
    %v1483 = vshrl.u32 %v1482, 7
    %v1484 = vsub.s32 1, %v1483
    %v1485 = vrot.slane %v1336, %v1484
    %v1496 = vunpack.c.l.b16 %v1327
    %v1497 = vunpack.c.h.b16 %v1327
    %v1498 = vunpack.c.l.b16 %v1328
    %v1499 = vunpack.c.h.b16 %v1328
    %v1500 = vunpack.c.l.b16 %v1329
    %v1501 = vunpack.c.h.b16 %v1329
    %v1502 = vunpack.c.l.b16 %v1330
    %v1503 = vunpack.c.h.b16 %v1330
    %v1504 = vunpack.c.l.b16 %v1331
    %v1505 = vunpack.c.h.b16 %v1331
    %v1506 = vunpack.c.l.b16 %v1332
    %v1507 = vunpack.c.h.b16 %v1332
    %v1508 = vunpack.c.l.b16 %v1333
    %v1509 = vunpack.c.h.b16 %v1333
    %v1510 = vunpack.c.l.b16 %v1334
    %v1511 = vunpack.c.h.b16 %v1334
    %v1512 = vpack.c.b16 %v1498, %v1496
    %v1513 = vpack.c.b16 %v1499, %v1497
    %v1514 = vpack.c.b16 %v1502, %v1500
    %v1515 = vpack.c.b16 %v1503, %v1501
    %v1516 = vpack.c.b16 %v1506, %v1504
    %v1517 = vpack.c.b16 %v1507, %v1505
    %v1518 = vpack.c.b16 %v1510, %v1508
    %v1519 = vpack.c.b16 %v1511, %v1509
    %1528 = vmatprep.subr.bf16.mxu0 %v1513
    %1529 = vmatpush1.bf16.msra.mxu0 %v1512
    %1530 = vmatprep.subr.bf16.mxu0 %v1515
    %1531 = vmatpush1.bf16.msra.mxu0 %v1514
    %1532 = vmatprep.subr.bf16.mxu0 %v1517
    %1533 = vmatpush1.bf16.msra.mxu0 %v1516
    %1534 = vmatprep.subr.bf16.mxu0 %v1519
    %1535 = vmatpush1.bf16.msra.mxu0 %v1518
    %1536 = vmatprep.subr.bf16.mxu0 0
    %1537 = vmatpush1.bf16.msra.mxu0 0
    %1538 = vmatprep.subr.bf16.mxu0 0
    %1539 = vmatpush1.bf16.msra.mxu0 0
    %1540 = vmatprep.subr.bf16.mxu0 0
    %1541 = vmatpush1.bf16.msra.mxu0 0
    %1542 = vmatprep.subr.bf16.mxu0 0
    %1543 = vmatpush1.bf16.msra.mxu0 0
    %1544 = vmatprep.subr.bf16.mxu0 0
    %1545 = vmatpush1.bf16.msra.mxu0 0
    %1546 = vmatprep.subr.bf16.mxu0 0
    %1547 = vmatpush1.bf16.msra.mxu0 0
    %1548 = vmatprep.subr.bf16.mxu0 0
    %1549 = vmatpush1.bf16.msra.mxu0 0
    %1550 = vmatprep.subr.bf16.mxu0 0
    %1551 = vmatpush1.bf16.msra.mxu0 0
    %1552 = vmatprep.subr.bf16.mxu0 0
    %1553 = vmatpush1.bf16.msra.mxu0 0
    %1554 = vmatprep.subr.bf16.mxu0 0
    %1555 = vmatpush1.bf16.msra.mxu0 0
    %1556 = vmatprep.subr.bf16.mxu0 0
    %1557 = vmatpush1.bf16.msra.mxu0 0
    %1558 = vmatprep.subr.bf16.mxu0 0
    %1559 = vmatpush1.bf16.msra.mxu0 0
    %1560 = vmatprep.mubr.bf16.mxu0 0
    %1561 = vmatmul.mubr.bf16.gmra.mrb[0].mxu0 %v281
    %v1562 = vpop.f32.mrb[0].mxu0
    %v1563 = vadd.f32 %v1481, %v1562
    %v1564 = vpop.f32.mrb[0].mxu0
    %v1565 = vadd.f32 %v1485, %v1564
    %v1566 = vpop.f32.mrb[0].mxu0
    %v1567 = vpop.f32.mrb[0].mxu0
    %1568 = vdwg.mxu0
    %v1569 = vadd.f32 %v1439, %v1563
    %v1570 = vxor.u32 %v1569, 2147483648
    %v1571 = vmul.f32 %v1570, 1.442695
    %v1572 = vpow.pop %v1571
    %v1573 = vadd.f32 %v1572, 1.0
    %v1574 = vrcp.pop %v1573
    %v1575 = vmul.f32 1.0, %v1574
    %1577 = vrot.lane.b32.xlu0 %v1563, 64
    %v1578 = vpop.permute.xlu0 %1577
    %v1580 = vmul.f32 %v1575, %v1578
    %1582 = vrot.lane.b32.xlu0 %v1580, 64
    %v1583 = vpop.permute.xlu0 %1582
    %v1585 = vadd.f32 %v1439, %v1583
    %v1586 = vtanh.pop %v1585
    %v1587 = vsub.f32 1.0, %v1575
    %1589 = vrot.lane.b32.xlu0 %v1586, 96
    %v1590 = vpop.permute.xlu0 %1589
    %v1592 = vmul.f32 %v1587, %v1590
    %v1593 = vmul.f32 %v1575, 0.0
    %v1594 = vadd.f32 %v1592, %v1593
    %v1595 = vadd.f32 %v1473, %v1563
    %v1596 = vxor.u32 %v1595, 2147483648
    %v1597 = vmul.f32 %v1596, 1.442695
    %v1598 = vpow.pop %v1597
    %v1599 = vadd.f32 %v1598, 1.0
    %v1600 = vrcp.pop %v1599
    %v1601 = vmul.f32 1.0, %v1600
    %v1602 = vadd.f32 %v1475, %v1565
    %v1603 = vxor.u32 %v1602, 2147483648
    %v1604 = vmul.f32 %v1603, 1.442695
    %v1605 = vpow.pop %v1604
    %v1606 = vadd.f32 %v1605, 1.0
    %v1607 = vrcp.pop %v1606
    %v1608 = vmul.f32 1.0, %v1607
    %1610 = vrot.lane.b32.xlu0 %v1565, 64
    %v1611 = vpop.permute.xlu0 %1610
    %v1613 = vmul.f32 %v1601, %v1611
    %1615 = vrot.lane.b32.xlu0 %v1613, 64
    %v1616 = vpop.permute.xlu0 %1615
    %v1618 = vadd.f32 %v1475, %v1616
    %v1619 = vtanh.pop %v1618
    %v1620 = vsub.f32 1.0, %v1608
    %1622 = vrot.lane.b32.xlu0 %v1619, 96
    %v1623 = vpop.permute.xlu0 %1622
    %v1625 = vmul.f32 %v1620, %v1623
    %v1626 = vmul.f32 %v1608, 0.0
    %v1627 = vadd.f32 %v1625, %v1626
    %1629 = vrot.lane.b32.xlu0 %v1594, 96
    %v1630 = vpop.permute.xlu0 %1629
    %1633 = vrot.lane.b32.xlu0 %v1627, 32
    %v1634 = vpop.permute.xlu0 %1633
    %v1636 = vsel %vm391, %v1630, %v1634
    %v1637 = vpack.c.bf16 %v1636, %v1636
    %v1639 = vsel %vm279, %v1637, 0
    %1641 = vmatprep.subr.bf16.mxu0 %v1513
    %1642 = vmatpush1.bf16.msra.mxu0 %v1512
    %1643 = vmatprep.subr.bf16.mxu0 %v1515
    %1644 = vmatpush1.bf16.msra.mxu0 %v1514
    %1645 = vmatprep.subr.bf16.mxu0 %v1517
    %1646 = vmatpush1.bf16.msra.mxu0 %v1516
    %1647 = vmatprep.subr.bf16.mxu0 %v1519
    %1648 = vmatpush1.bf16.msra.mxu0 %v1518
    %1649 = vmatprep.subr.bf16.mxu0 0
    %1650 = vmatpush1.bf16.msra.mxu0 0
    %1651 = vmatprep.subr.bf16.mxu0 0
    %1652 = vmatpush1.bf16.msra.mxu0 0
    %1653 = vmatprep.subr.bf16.mxu0 0
    %1654 = vmatpush1.bf16.msra.mxu0 0
    %1655 = vmatprep.subr.bf16.mxu0 0
    %1656 = vmatpush1.bf16.msra.mxu0 0
    %1657 = vmatprep.subr.bf16.mxu0 0
    %1658 = vmatpush1.bf16.msra.mxu0 0
    %1659 = vmatprep.subr.bf16.mxu0 0
    %1660 = vmatpush1.bf16.msra.mxu0 0
    %1661 = vmatprep.subr.bf16.mxu0 0
    %1662 = vmatpush1.bf16.msra.mxu0 0
    %1663 = vmatprep.subr.bf16.mxu0 0
    %1664 = vmatpush1.bf16.msra.mxu0 0
    %1665 = vmatprep.subr.bf16.mxu0 0
    %1666 = vmatpush1.bf16.msra.mxu0 0
    %1667 = vmatprep.subr.bf16.mxu0 0
    %1668 = vmatpush1.bf16.msra.mxu0 0
    %1669 = vmatprep.subr.bf16.mxu0 0
    %1670 = vmatpush1.bf16.msra.mxu0 0
    %1671 = vmatprep.subr.bf16.mxu0 0
    %1672 = vmatpush1.bf16.msra.mxu0 0
    %1673 = vmatprep.mubr.bf16.mxu0 0
    %1674 = vmatmul.mubr.bf16.gmra.mrb[0].mxu0 %v1639
    %v1675 = vpop.f32.mrb[0].mxu0
    %v1676 = vadd.f32 %v1481, %v1675
    %v1677 = vpop.f32.mrb[0].mxu0
    %v1678 = vadd.f32 %v1485, %v1677
    %v1679 = vpop.f32.mrb[0].mxu0
    %v1680 = vpop.f32.mrb[0].mxu0
    %1681 = vdwg.mxu0
    %v1682 = vadd.f32 %v1443, %v1676
    %v1683 = vxor.u32 %v1682, 2147483648
    %v1684 = vmul.f32 %v1683, 1.442695
    %v1685 = vpow.pop %v1684
    %v1686 = vadd.f32 %v1685, 1.0
    %v1687 = vrcp.pop %v1686
    %v1688 = vmul.f32 1.0, %v1687
    %1690 = vrot.lane.b32.xlu0 %v1676, 64
    %v1691 = vpop.permute.xlu0 %1690
    %v1693 = vmul.f32 %v1688, %v1691
    %1695 = vrot.lane.b32.xlu0 %v1693, 64
    %v1696 = vpop.permute.xlu0 %1695
    %v1698 = vadd.f32 %v1443, %v1696
    %v1699 = vtanh.pop %v1698
    %v1700 = vsub.f32 1.0, %v1688
    %1702 = vrot.lane.b32.xlu0 %v1699, 96
    %v1703 = vpop.permute.xlu0 %1702
    %v1705 = vmul.f32 %v1700, %v1703
    %1707 = vrot.lane.b32.xlu0 %v1636, 32
    %v1708 = vpop.permute.xlu0 %1707
    %v1710 = vmul.f32 %v1688, %v1708
    %v1711 = vadd.f32 %v1705, %v1710
    %v1712 = vadd.f32 %v1469, %v1676
    %v1713 = vxor.u32 %v1712, 2147483648
    %v1714 = vmul.f32 %v1713, 1.442695
    %v1715 = vpow.pop %v1714
    %v1716 = vadd.f32 %v1715, 1.0
    %v1717 = vrcp.pop %v1716
    %v1718 = vmul.f32 1.0, %v1717
    %v1719 = vadd.f32 %v1471, %v1678
    %v1720 = vxor.u32 %v1719, 2147483648
    %v1721 = vmul.f32 %v1720, 1.442695
    %v1722 = vpow.pop %v1721
    %v1723 = vadd.f32 %v1722, 1.0
    %v1724 = vrcp.pop %v1723
    %v1725 = vmul.f32 1.0, %v1724
    %1727 = vrot.lane.b32.xlu0 %v1678, 64
    %v1728 = vpop.permute.xlu0 %1727
    %v1730 = vmul.f32 %v1718, %v1728
    %1732 = vrot.lane.b32.xlu0 %v1730, 64
    %v1733 = vpop.permute.xlu0 %1732
    %v1735 = vadd.f32 %v1471, %v1733
    %v1736 = vtanh.pop %v1735
    %v1737 = vsub.f32 1.0, %v1725
    %1739 = vrot.lane.b32.xlu0 %v1736, 96
    %v1740 = vpop.permute.xlu0 %1739
    %v1742 = vmul.f32 %v1737, %v1740
    %1743 = vrot.lane.b32.xlu0 %v1636, 96
    %v1744 = vpop.permute.xlu0 %1743
    %v1746 = vmul.f32 %v1725, %v1744
    %v1747 = vadd.f32 %v1742, %v1746
    %1749 = vrot.lane.b32.xlu0 %v1711, 96
    %v1750 = vpop.permute.xlu0 %1749
    %1753 = vrot.lane.b32.xlu0 %v1747, 32
    %v1754 = vpop.permute.xlu0 %1753
    %v1756 = vsel %vm391, %v1750, %v1754
    %v1757 = vpack.c.bf16 %v1756, %v1756
    %v1759 = vsel %vm279, %v1757, 0
    %1761 = vmatprep.subr.bf16.mxu0 %v1513
    %1762 = vmatpush1.bf16.msra.mxu0 %v1512
    %1763 = vmatprep.subr.bf16.mxu0 %v1515
    %1764 = vmatpush1.bf16.msra.mxu0 %v1514
    %1765 = vmatprep.subr.bf16.mxu0 %v1517
    %1766 = vmatpush1.bf16.msra.mxu0 %v1516
    %1767 = vmatprep.subr.bf16.mxu0 %v1519
    %1768 = vmatpush1.bf16.msra.mxu0 %v1518
    %1769 = vmatprep.subr.bf16.mxu0 0
    %1770 = vmatpush1.bf16.msra.mxu0 0
    %1771 = vmatprep.subr.bf16.mxu0 0
    %1772 = vmatpush1.bf16.msra.mxu0 0
    %1773 = vmatprep.subr.bf16.mxu0 0
    %1774 = vmatpush1.bf16.msra.mxu0 0
    %1775 = vmatprep.subr.bf16.mxu0 0
    %1776 = vmatpush1.bf16.msra.mxu0 0
    %1777 = vmatprep.subr.bf16.mxu0 0
    %1778 = vmatpush1.bf16.msra.mxu0 0
    %1779 = vmatprep.subr.bf16.mxu0 0
    %1780 = vmatpush1.bf16.msra.mxu0 0
    %1781 = vmatprep.subr.bf16.mxu0 0
    %1782 = vmatpush1.bf16.msra.mxu0 0
    %1783 = vmatprep.subr.bf16.mxu0 0
    %1784 = vmatpush1.bf16.msra.mxu0 0
    %1785 = vmatprep.subr.bf16.mxu0 0
    %1786 = vmatpush1.bf16.msra.mxu0 0
    %1787 = vmatprep.subr.bf16.mxu0 0
    %1788 = vmatpush1.bf16.msra.mxu0 0
    %1789 = vmatprep.subr.bf16.mxu0 0
    %1790 = vmatpush1.bf16.msra.mxu0 0
    %1791 = vmatprep.subr.bf16.mxu0 0
    %1792 = vmatpush1.bf16.msra.mxu0 0
    %1793 = vmatprep.mubr.bf16.mxu0 0
    %1794 = vmatmul.mubr.bf16.gmra.mrb[0].mxu0 %v1759
    %v1795 = vpop.f32.mrb[0].mxu0
    %v1796 = vadd.f32 %v1481, %v1795
    %v1797 = vpop.f32.mrb[0].mxu0
    %v1798 = vadd.f32 %v1485, %v1797
    %v1799 = vpop.f32.mrb[0].mxu0
    %v1800 = vpop.f32.mrb[0].mxu0
    %1801 = vdwg.mxu0
    %v1802 = vadd.f32 %v1449, %v1796
    %v1803 = vxor.u32 %v1802, 2147483648
    %v1804 = vmul.f32 %v1803, 1.442695
    %v1805 = vpow.pop %v1804
    %v1806 = vadd.f32 %v1805, 1.0
    %v1807 = vrcp.pop %v1806
    %v1808 = vmul.f32 1.0, %v1807
    %1810 = vrot.lane.b32.xlu0 %v1796, 64
    %v1811 = vpop.permute.xlu0 %1810
    %v1813 = vmul.f32 %v1808, %v1811
    %1815 = vrot.lane.b32.xlu0 %v1813, 64
    %v1816 = vpop.permute.xlu0 %1815
    %v1818 = vadd.f32 %v1449, %v1816
    %v1819 = vtanh.pop %v1818
    %v1820 = vsub.f32 1.0, %v1808
    %1822 = vrot.lane.b32.xlu0 %v1819, 96
    %v1823 = vpop.permute.xlu0 %1822
    %v1825 = vmul.f32 %v1820, %v1823
    %1827 = vrot.lane.b32.xlu0 %v1756, 32
    %v1828 = vpop.permute.xlu0 %1827
    %v1830 = vmul.f32 %v1808, %v1828
    %v1831 = vadd.f32 %v1825, %v1830
    %v1832 = vadd.f32 %v1463, %v1796
    %v1833 = vxor.u32 %v1832, 2147483648
    %v1834 = vmul.f32 %v1833, 1.442695
    %v1835 = vpow.pop %v1834
    %v1836 = vadd.f32 %v1835, 1.0
    %v1837 = vrcp.pop %v1836
    %v1838 = vmul.f32 1.0, %v1837
    %v1839 = vadd.f32 %v1465, %v1798
    %v1840 = vxor.u32 %v1839, 2147483648
    %v1841 = vmul.f32 %v1840, 1.442695
    %v1842 = vpow.pop %v1841
    %v1843 = vadd.f32 %v1842, 1.0
    %v1844 = vrcp.pop %v1843
    %v1845 = vmul.f32 1.0, %v1844
    %1847 = vrot.lane.b32.xlu0 %v1798, 64
    %v1848 = vpop.permute.xlu0 %1847
    %v1850 = vmul.f32 %v1838, %v1848
    %1852 = vrot.lane.b32.xlu0 %v1850, 64
    %v1853 = vpop.permute.xlu0 %1852
    %v1855 = vadd.f32 %v1465, %v1853
    %v1856 = vtanh.pop %v1855
    %v1857 = vsub.f32 1.0, %v1845
    %1859 = vrot.lane.b32.xlu0 %v1856, 96
    %v1860 = vpop.permute.xlu0 %1859
    %v1862 = vmul.f32 %v1857, %v1860
    %1863 = vrot.lane.b32.xlu0 %v1756, 96
    %v1864 = vpop.permute.xlu0 %1863
    %v1866 = vmul.f32 %v1845, %v1864
    %v1867 = vadd.f32 %v1862, %v1866
    %1869 = vrot.lane.b32.xlu0 %v1831, 96
    %v1870 = vpop.permute.xlu0 %1869
    %1873 = vrot.lane.b32.xlu0 %v1867, 32
    %v1874 = vpop.permute.xlu0 %1873
    %v1876 = vsel %vm391, %v1870, %v1874
    %v1877 = vpack.c.bf16 %v1876, %v1876
    %v1879 = vsel %vm279, %v1877, 0
    %1881 = vmatprep.subr.bf16.mxu0 %v1513
    %1882 = vmatpush1.bf16.msra.mxu0 %v1512
    %1883 = vmatprep.subr.bf16.mxu0 %v1515
    %1884 = vmatpush1.bf16.msra.mxu0 %v1514
    %1885 = vmatprep.subr.bf16.mxu0 %v1517
    %1886 = vmatpush1.bf16.msra.mxu0 %v1516
    %1887 = vmatprep.subr.bf16.mxu0 %v1519
    %1888 = vmatpush1.bf16.msra.mxu0 %v1518
    %1889 = vmatprep.subr.bf16.mxu0 0
    %1890 = vmatpush1.bf16.msra.mxu0 0
    %1891 = vmatprep.subr.bf16.mxu0 0
    %1892 = vmatpush1.bf16.msra.mxu0 0
    %1893 = vmatprep.subr.bf16.mxu0 0
    %1894 = vmatpush1.bf16.msra.mxu0 0
    %1895 = vmatprep.subr.bf16.mxu0 0
    %1896 = vmatpush1.bf16.msra.mxu0 0
    %1897 = vmatprep.subr.bf16.mxu0 0
    %1898 = vmatpush1.bf16.msra.mxu0 0
    %1899 = vmatprep.subr.bf16.mxu0 0
    %1900 = vmatpush1.bf16.msra.mxu0 0
    %1901 = vmatprep.subr.bf16.mxu0 0
    %1902 = vmatpush1.bf16.msra.mxu0 0
    %1903 = vmatprep.subr.bf16.mxu0 0
    %1904 = vmatpush1.bf16.msra.mxu0 0
    %1905 = vmatprep.subr.bf16.mxu0 0
    %1906 = vmatpush1.bf16.msra.mxu0 0
    %1907 = vmatprep.subr.bf16.mxu0 0
    %1908 = vmatpush1.bf16.msra.mxu0 0
    %1909 = vmatprep.subr.bf16.mxu0 0
    %1910 = vmatpush1.bf16.msra.mxu0 0
    %1911 = vmatprep.subr.bf16.mxu0 0
    %1912 = vmatpush1.bf16.msra.mxu0 0
    %1913 = vmatprep.mubr.bf16.mxu0 0
    %1914 = vmatmul.mubr.bf16.gmra.mrb[0].mxu0 %v1879
    %v1915 = vpop.f32.mrb[0].mxu0
    %v1916 = vadd.f32 %v1481, %v1915
    %v1917 = vpop.f32.mrb[0].mxu0
    %v1918 = vadd.f32 %v1485, %v1917
    %v1919 = vpop.f32.mrb[0].mxu0
    %v1920 = vpop.f32.mrb[0].mxu0
    %1921 = vdwg.mxu0
    %v1922 = vadd.f32 %v1453, %v1916
    %v1923 = vxor.u32 %v1922, 2147483648
    %v1924 = vmul.f32 %v1923, 1.442695
    %v1925 = vpow.pop %v1924
    %v1926 = vadd.f32 %v1925, 1.0
    %v1927 = vrcp.pop %v1926
    %v1928 = vmul.f32 1.0, %v1927
    %1930 = vrot.lane.b32.xlu0 %v1916, 64
    %v1931 = vpop.permute.xlu0 %1930
    %v1933 = vmul.f32 %v1928, %v1931
    %1935 = vrot.lane.b32.xlu0 %v1933, 64
    %v1936 = vpop.permute.xlu0 %1935
    %v1938 = vadd.f32 %v1453, %v1936
    %v1939 = vtanh.pop %v1938
    %v1940 = vsub.f32 1.0, %v1928
    %1942 = vrot.lane.b32.xlu0 %v1939, 96
    %v1943 = vpop.permute.xlu0 %1942
    %v1945 = vmul.f32 %v1940, %v1943
    %1947 = vrot.lane.b32.xlu0 %v1876, 32
    %v1948 = vpop.permute.xlu0 %1947
    %v1950 = vmul.f32 %v1928, %v1948
    %v1951 = vadd.f32 %v1945, %v1950
    %v1952 = vadd.f32 %v1459, %v1916
    %v1953 = vxor.u32 %v1952, 2147483648
    %v1954 = vmul.f32 %v1953, 1.442695
    %v1955 = vpow.pop %v1954
    %v1956 = vadd.f32 %v1955, 1.0
    %v1957 = vrcp.pop %v1956
    %v1958 = vmul.f32 1.0, %v1957
    %v1959 = vadd.f32 %v1461, %v1918
    %v1960 = vxor.u32 %v1959, 2147483648
    %v1961 = vmul.f32 %v1960, 1.442695
    %v1962 = vpow.pop %v1961
    %v1963 = vadd.f32 %v1962, 1.0
    %v1964 = vrcp.pop %v1963
    %v1965 = vmul.f32 1.0, %v1964
    %1967 = vrot.lane.b32.xlu0 %v1918, 64
    %v1968 = vpop.permute.xlu0 %1967
    %v1970 = vmul.f32 %v1958, %v1968
    %1972 = vrot.lane.b32.xlu0 %v1970, 64
    %v1973 = vpop.permute.xlu0 %1972
    %v1975 = vadd.f32 %v1461, %v1973
    %v1976 = vtanh.pop %v1975
    %v1977 = vsub.f32 1.0, %v1965
    %1979 = vrot.lane.b32.xlu0 %v1976, 96
    %v1980 = vpop.permute.xlu0 %1979
    %v1982 = vmul.f32 %v1977, %v1980
    %1983 = vrot.lane.b32.xlu0 %v1876, 96
    %v1984 = vpop.permute.xlu0 %1983
    %v1986 = vmul.f32 %v1965, %v1984
    %v1987 = vadd.f32 %v1982, %v1986
    %1989 = vrot.lane.b32.xlu0 %v1951, 96
    %v1990 = vpop.permute.xlu0 %1989
    %1993 = vrot.lane.b32.xlu0 %v1987, 32
    %v1994 = vpop.permute.xlu0 %1993
    %v1996 = vsel %vm391, %v1990, %v1994
    %v1997 = vpack.c.bf16 %v1996, %v1996
    %v1999 = vsel %vm279, %v1997, 0
    %2001 = vmatprep.subr.bf16.mxu0 %v1513
    %2002 = vmatpush1.bf16.msra.mxu0 %v1512
    %2003 = vmatprep.subr.bf16.mxu0 %v1515
    %2004 = vmatpush1.bf16.msra.mxu0 %v1514
    %2005 = vmatprep.subr.bf16.mxu0 %v1517
    %2006 = vmatpush1.bf16.msra.mxu0 %v1516
    %2007 = vmatprep.subr.bf16.mxu0 %v1519
    %2008 = vmatpush1.bf16.msra.mxu0 %v1518
    %2009 = vmatprep.subr.bf16.mxu0 0
    %2010 = vmatpush1.bf16.msra.mxu0 0
    %2011 = vmatprep.subr.bf16.mxu0 0
    %2012 = vmatpush1.bf16.msra.mxu0 0
    %2013 = vmatprep.subr.bf16.mxu0 0
    %2014 = vmatpush1.bf16.msra.mxu0 0
    %2015 = vmatprep.subr.bf16.mxu0 0
    %2016 = vmatpush1.bf16.msra.mxu0 0
    %2017 = vmatprep.subr.bf16.mxu0 0
    %2018 = vmatpush1.bf16.msra.mxu0 0
    %2019 = vmatprep.subr.bf16.mxu0 0
    %2020 = vmatpush1.bf16.msra.mxu0 0
    %2021 = vmatprep.subr.bf16.mxu0 0
    %2022 = vmatpush1.bf16.msra.mxu0 0
    %2023 = vmatprep.subr.bf16.mxu0 0
    %2024 = vmatpush1.bf16.msra.mxu0 0
    %2025 = vmatprep.subr.bf16.mxu0 0
    %2026 = vmatpush1.bf16.msra.mxu0 0
    %2027 = vmatprep.subr.bf16.mxu0 0
    %2028 = vmatpush1.bf16.msra.mxu0 0
    %2029 = vmatprep.subr.bf16.mxu0 0
    %2030 = vmatpush1.bf16.msra.mxu0 0
    %2031 = vmatprep.subr.bf16.mxu0 0
    %2032 = vmatpush1.bf16.msra.mxu0 0
    %2033 = vmatprep.mubr.bf16.mxu0 0
    %2034 = vmatmul.mubr.bf16.gmra.mrb[0].mxu0 %v1999
    %v2035 = vpop.f32.mrb[0].mxu0
    %v2036 = vadd.f32 %v1481, %v2035
    %v2037 = vpop.f32.mrb[0].mxu0
    %v2038 = vadd.f32 %v1485, %v2037
    %v2039 = vpop.f32.mrb[0].mxu0
    %v2040 = vpop.f32.mrb[0].mxu0
    %2041 = vdwg.mxu0
    %v2042 = vadd.f32 %v1459, %v2036
    %v2043 = vxor.u32 %v2042, 2147483648
    %v2044 = vmul.f32 %v2043, 1.442695
    %v2045 = vpow.pop %v2044
    %v2046 = vadd.f32 %v2045, 1.0
    %v2047 = vrcp.pop %v2046
    %v2048 = vmul.f32 1.0, %v2047
    %2050 = vrot.lane.b32.xlu0 %v2036, 64
    %v2051 = vpop.permute.xlu0 %2050
    %v2053 = vmul.f32 %v2048, %v2051
    %2055 = vrot.lane.b32.xlu0 %v2053, 64
    %v2056 = vpop.permute.xlu0 %2055
    %v2058 = vadd.f32 %v1459, %v2056
    %v2059 = vtanh.pop %v2058
    %v2060 = vsub.f32 1.0, %v2048
    %2062 = vrot.lane.b32.xlu0 %v2059, 96
    %v2063 = vpop.permute.xlu0 %2062
    %v2065 = vmul.f32 %v2060, %v2063
    %2067 = vrot.lane.b32.xlu0 %v1996, 32
    %v2068 = vpop.permute.xlu0 %2067
    %v2070 = vmul.f32 %v2048, %v2068
    %v2071 = vadd.f32 %v2065, %v2070
    %v2072 = vadd.f32 %v1453, %v2036
    %v2073 = vxor.u32 %v2072, 2147483648
    %v2074 = vmul.f32 %v2073, 1.442695
    %v2075 = vpow.pop %v2074
    %v2076 = vadd.f32 %v2075, 1.0
    %v2077 = vrcp.pop %v2076
    %v2078 = vmul.f32 1.0, %v2077
    %v2079 = vadd.f32 %v1455, %v2038
    %v2080 = vxor.u32 %v2079, 2147483648
    %v2081 = vmul.f32 %v2080, 1.442695
    %v2082 = vpow.pop %v2081
    %v2083 = vadd.f32 %v2082, 1.0
    %v2084 = vrcp.pop %v2083
    %v2085 = vmul.f32 1.0, %v2084
    %2087 = vrot.lane.b32.xlu0 %v2038, 64
    %v2088 = vpop.permute.xlu0 %2087
    %v2090 = vmul.f32 %v2078, %v2088
    %2092 = vrot.lane.b32.xlu0 %v2090, 64
    %v2093 = vpop.permute.xlu0 %2092
    %v2095 = vadd.f32 %v1455, %v2093
    %v2096 = vtanh.pop %v2095
    %v2097 = vsub.f32 1.0, %v2085
    %2099 = vrot.lane.b32.xlu0 %v2096, 96
    %v2100 = vpop.permute.xlu0 %2099
    %v2102 = vmul.f32 %v2097, %v2100
    %2103 = vrot.lane.b32.xlu0 %v1996, 96
    %v2104 = vpop.permute.xlu0 %2103
    %v2106 = vmul.f32 %v2085, %v2104
    %v2107 = vadd.f32 %v2102, %v2106
    %2109 = vrot.lane.b32.xlu0 %v2071, 96
    %v2110 = vpop.permute.xlu0 %2109
    %2113 = vrot.lane.b32.xlu0 %v2107, 32
    %v2114 = vpop.permute.xlu0 %2113
    %v2116 = vsel %vm391, %v2110, %v2114
    %v2117 = vpack.c.bf16 %v2116, %v2116
    %v2119 = vsel %vm279, %v2117, 0
    %2121 = vmatprep.subr.bf16.mxu0 %v1513
    %2122 = vmatpush1.bf16.msra.mxu0 %v1512
    %2123 = vmatprep.subr.bf16.mxu0 %v1515
    %2124 = vmatpush1.bf16.msra.mxu0 %v1514
    %2125 = vmatprep.subr.bf16.mxu0 %v1517
    %2126 = vmatpush1.bf16.msra.mxu0 %v1516
    %2127 = vmatprep.subr.bf16.mxu0 %v1519
    %2128 = vmatpush1.bf16.msra.mxu0 %v1518
    %2129 = vmatprep.subr.bf16.mxu0 0
    %2130 = vmatpush1.bf16.msra.mxu0 0
    %2131 = vmatprep.subr.bf16.mxu0 0
    %2132 = vmatpush1.bf16.msra.mxu0 0
    %2133 = vmatprep.subr.bf16.mxu0 0
    %2134 = vmatpush1.bf16.msra.mxu0 0
    %2135 = vmatprep.subr.bf16.mxu0 0
    %2136 = vmatpush1.bf16.msra.mxu0 0
    %2137 = vmatprep.subr.bf16.mxu0 0
    %2138 = vmatpush1.bf16.msra.mxu0 0
    %2139 = vmatprep.subr.bf16.mxu0 0
    %2140 = vmatpush1.bf16.msra.mxu0 0
    %2141 = vmatprep.subr.bf16.mxu0 0
    %2142 = vmatpush1.bf16.msra.mxu0 0
    %2143 = vmatprep.subr.bf16.mxu0 0
    %2144 = vmatpush1.bf16.msra.mxu0 0
    %2145 = vmatprep.subr.bf16.mxu0 0
    %2146 = vmatpush1.bf16.msra.mxu0 0
    %2147 = vmatprep.subr.bf16.mxu0 0
    %2148 = vmatpush1.bf16.msra.mxu0 0
    %2149 = vmatprep.subr.bf16.mxu0 0
    %2150 = vmatpush1.bf16.msra.mxu0 0
    %2151 = vmatprep.subr.bf16.mxu0 0
    %2152 = vmatpush1.bf16.msra.mxu0 0
    %2153 = vmatprep.mubr.bf16.mxu0 0
    %2154 = vmatmul.mubr.bf16.gmra.mrb[0].mxu0 %v2119
    %v2155 = vpop.f32.mrb[0].mxu0
    %v2156 = vadd.f32 %v1481, %v2155
    %v2157 = vpop.f32.mrb[0].mxu0
    %v2158 = vadd.f32 %v1485, %v2157
    %v2159 = vpop.f32.mrb[0].mxu0
    %v2160 = vpop.f32.mrb[0].mxu0
    %2161 = vdwg.mxu0
    %v2162 = vadd.f32 %v1463, %v2156
    %v2163 = vxor.u32 %v2162, 2147483648
    %v2164 = vmul.f32 %v2163, 1.442695
    %v2165 = vpow.pop %v2164
    %v2166 = vadd.f32 %v2165, 1.0
    %v2167 = vrcp.pop %v2166
    %v2168 = vmul.f32 1.0, %v2167
    %2170 = vrot.lane.b32.xlu0 %v2156, 64
    %v2171 = vpop.permute.xlu0 %2170
    %v2173 = vmul.f32 %v2168, %v2171
    %2175 = vrot.lane.b32.xlu0 %v2173, 64
    %v2176 = vpop.permute.xlu0 %2175
    %v2178 = vadd.f32 %v1463, %v2176
    %v2179 = vtanh.pop %v2178
    %v2180 = vsub.f32 1.0, %v2168
    %2182 = vrot.lane.b32.xlu0 %v2179, 96
    %v2183 = vpop.permute.xlu0 %2182
    %v2185 = vmul.f32 %v2180, %v2183
    %2187 = vrot.lane.b32.xlu0 %v2116, 32
    %v2188 = vpop.permute.xlu0 %2187
    %v2190 = vmul.f32 %v2168, %v2188
    %v2191 = vadd.f32 %v2185, %v2190
    %v2192 = vadd.f32 %v1449, %v2156
    %v2193 = vxor.u32 %v2192, 2147483648
    %v2194 = vmul.f32 %v2193, 1.442695
    %v2195 = vpow.pop %v2194
    %v2196 = vadd.f32 %v2195, 1.0
    %v2197 = vrcp.pop %v2196
    %v2198 = vmul.f32 1.0, %v2197
    %v2199 = vadd.f32 %v1451, %v2158
    %v2200 = vxor.u32 %v2199, 2147483648
    %v2201 = vmul.f32 %v2200, 1.442695
    %v2202 = vpow.pop %v2201
    %v2203 = vadd.f32 %v2202, 1.0
    %v2204 = vrcp.pop %v2203
    %v2205 = vmul.f32 1.0, %v2204
    %2207 = vrot.lane.b32.xlu0 %v2158, 64
    %v2208 = vpop.permute.xlu0 %2207
    %v2210 = vmul.f32 %v2198, %v2208
    %2212 = vrot.lane.b32.xlu0 %v2210, 64
    %v2213 = vpop.permute.xlu0 %2212
    %v2215 = vadd.f32 %v1451, %v2213
    %v2216 = vtanh.pop %v2215
    %v2217 = vsub.f32 1.0, %v2205
    %2219 = vrot.lane.b32.xlu0 %v2216, 96
    %v2220 = vpop.permute.xlu0 %2219
    %v2222 = vmul.f32 %v2217, %v2220
    %2223 = vrot.lane.b32.xlu0 %v2116, 96
    %v2224 = vpop.permute.xlu0 %2223
    %v2226 = vmul.f32 %v2205, %v2224
    %v2227 = vadd.f32 %v2222, %v2226
    %2229 = vrot.lane.b32.xlu0 %v2191, 96
    %v2230 = vpop.permute.xlu0 %2229
    %2233 = vrot.lane.b32.xlu0 %v2227, 32
    %v2234 = vpop.permute.xlu0 %2233
    %v2236 = vsel %vm391, %v2230, %v2234
    %v2237 = vpack.c.bf16 %v2236, %v2236
    %v2239 = vsel %vm279, %v2237, 0
    %2241 = vmatprep.subr.bf16.mxu0 %v1513
    %2242 = vmatpush1.bf16.msra.mxu0 %v1512
    %2243 = vmatprep.subr.bf16.mxu0 %v1515
    %2244 = vmatpush1.bf16.msra.mxu0 %v1514
    %2245 = vmatprep.subr.bf16.mxu0 %v1517
    %2246 = vmatpush1.bf16.msra.mxu0 %v1516
    %2247 = vmatprep.subr.bf16.mxu0 %v1519
    %2248 = vmatpush1.bf16.msra.mxu0 %v1518
    %2249 = vmatprep.subr.bf16.mxu0 0
    %2250 = vmatpush1.bf16.msra.mxu0 0
    %2251 = vmatprep.subr.bf16.mxu0 0
    %2252 = vmatpush1.bf16.msra.mxu0 0
    %2253 = vmatprep.subr.bf16.mxu0 0
    %2254 = vmatpush1.bf16.msra.mxu0 0
    %2255 = vmatprep.subr.bf16.mxu0 0
    %2256 = vmatpush1.bf16.msra.mxu0 0
    %2257 = vmatprep.subr.bf16.mxu0 0
    %2258 = vmatpush1.bf16.msra.mxu0 0
    %2259 = vmatprep.subr.bf16.mxu0 0
    %2260 = vmatpush1.bf16.msra.mxu0 0
    %2261 = vmatprep.subr.bf16.mxu0 0
    %2262 = vmatpush1.bf16.msra.mxu0 0
    %2263 = vmatprep.subr.bf16.mxu0 0
    %2264 = vmatpush1.bf16.msra.mxu0 0
    %2265 = vmatprep.subr.bf16.mxu0 0
    %2266 = vmatpush1.bf16.msra.mxu0 0
    %2267 = vmatprep.subr.bf16.mxu0 0
    %2268 = vmatpush1.bf16.msra.mxu0 0
    %2269 = vmatprep.subr.bf16.mxu0 0
    %2270 = vmatpush1.bf16.msra.mxu0 0
    %2271 = vmatprep.subr.bf16.mxu0 0
    %2272 = vmatpush1.bf16.msra.mxu0 0
    %2273 = vmatprep.mubr.bf16.mxu0 0
    %2274 = vmatmul.mubr.bf16.gmra.mrb[0].mxu0 %v2239
    %v2275 = vpop.f32.mrb[0].mxu0
    %v2276 = vadd.f32 %v1481, %v2275
    %v2277 = vpop.f32.mrb[0].mxu0
    %v2278 = vadd.f32 %v1485, %v2277
    %v2279 = vpop.f32.mrb[0].mxu0
    %v2280 = vpop.f32.mrb[0].mxu0
    %2281 = vdwg.mxu0
    %v2282 = vadd.f32 %v1469, %v2276
    %v2283 = vxor.u32 %v2282, 2147483648
    %v2284 = vmul.f32 %v2283, 1.442695
    %v2285 = vpow.pop %v2284
    %v2286 = vadd.f32 %v2285, 1.0
    %v2287 = vrcp.pop %v2286
    %v2288 = vmul.f32 1.0, %v2287
    %2290 = vrot.lane.b32.xlu0 %v2276, 64
    %v2291 = vpop.permute.xlu0 %2290
    %v2293 = vmul.f32 %v2288, %v2291
    %2295 = vrot.lane.b32.xlu0 %v2293, 64
    %v2296 = vpop.permute.xlu0 %2295
    %v2298 = vadd.f32 %v1469, %v2296
    %v2299 = vtanh.pop %v2298
    %v2300 = vsub.f32 1.0, %v2288
    %2302 = vrot.lane.b32.xlu0 %v2299, 96
    %v2303 = vpop.permute.xlu0 %2302
    %v2305 = vmul.f32 %v2300, %v2303
    %2307 = vrot.lane.b32.xlu0 %v2236, 32
    %v2308 = vpop.permute.xlu0 %2307
    %v2310 = vmul.f32 %v2288, %v2308
    %v2311 = vadd.f32 %v2305, %v2310
    %v2312 = vadd.f32 %v1443, %v2276
    %v2313 = vxor.u32 %v2312, 2147483648
    %v2314 = vmul.f32 %v2313, 1.442695
    %v2315 = vpow.pop %v2314
    %v2316 = vadd.f32 %v2315, 1.0
    %v2317 = vrcp.pop %v2316
    %v2318 = vmul.f32 1.0, %v2317
    %v2319 = vadd.f32 %v1445, %v2278
    %v2320 = vxor.u32 %v2319, 2147483648
    %v2321 = vmul.f32 %v2320, 1.442695
    %v2322 = vpow.pop %v2321
    %v2323 = vadd.f32 %v2322, 1.0
    %v2324 = vrcp.pop %v2323
    %v2325 = vmul.f32 1.0, %v2324
    %2327 = vrot.lane.b32.xlu0 %v2278, 64
    %v2328 = vpop.permute.xlu0 %2327
    %v2330 = vmul.f32 %v2318, %v2328
    %2332 = vrot.lane.b32.xlu0 %v2330, 64
    %v2333 = vpop.permute.xlu0 %2332
    %v2335 = vadd.f32 %v1445, %v2333
    %v2336 = vtanh.pop %v2335
    %v2337 = vsub.f32 1.0, %v2325
    %2339 = vrot.lane.b32.xlu0 %v2336, 96
    %v2340 = vpop.permute.xlu0 %2339
    %v2342 = vmul.f32 %v2337, %v2340
    %2343 = vrot.lane.b32.xlu0 %v2236, 96
    %v2344 = vpop.permute.xlu0 %2343
    %v2346 = vmul.f32 %v2325, %v2344
    %v2347 = vadd.f32 %v2342, %v2346
    %2349 = vrot.lane.b32.xlu0 %v2311, 96
    %v2350 = vpop.permute.xlu0 %2349
    %2353 = vrot.lane.b32.xlu0 %v2347, 32
    %v2354 = vpop.permute.xlu0 %2353
    %v2356 = vsel %vm391, %v2350, %v2354
    %v2357 = vpack.c.bf16 %v2356, %v2356
    %v2359 = vsel %vm279, %v2357, 0
    %2361 = vmatprep.subr.bf16.mxu0 %v1513
    %2362 = vmatpush1.bf16.msra.mxu0 %v1512
    %2363 = vmatprep.subr.bf16.mxu0 %v1515
    %2364 = vmatpush1.bf16.msra.mxu0 %v1514
    %2365 = vmatprep.subr.bf16.mxu0 %v1517
    %2366 = vmatpush1.bf16.msra.mxu0 %v1516
    %2367 = vmatprep.subr.bf16.mxu0 %v1519
    %2368 = vmatpush1.bf16.msra.mxu0 %v1518
    %2369 = vmatprep.subr.bf16.mxu0 0
    %2370 = vmatpush1.bf16.msra.mxu0 0
    %2371 = vmatprep.subr.bf16.mxu0 0
    %2372 = vmatpush1.bf16.msra.mxu0 0
    %2373 = vmatprep.subr.bf16.mxu0 0
    %2374 = vmatpush1.bf16.msra.mxu0 0
    %2375 = vmatprep.subr.bf16.mxu0 0
    %2376 = vmatpush1.bf16.msra.mxu0 0
    %2377 = vmatprep.subr.bf16.mxu0 0
    %2378 = vmatpush1.bf16.msra.mxu0 0
    %2379 = vmatprep.subr.bf16.mxu0 0
    %2380 = vmatpush1.bf16.msra.mxu0 0
    %2381 = vmatprep.subr.bf16.mxu0 0
    %2382 = vmatpush1.bf16.msra.mxu0 0
    %2383 = vmatprep.subr.bf16.mxu0 0
    %2384 = vmatpush1.bf16.msra.mxu0 0
    %2385 = vmatprep.subr.bf16.mxu0 0
    %2386 = vmatpush1.bf16.msra.mxu0 0
    %2387 = vmatprep.subr.bf16.mxu0 0
    %2388 = vmatpush1.bf16.msra.mxu0 0
    %2389 = vmatprep.subr.bf16.mxu0 0
    %2390 = vmatpush1.bf16.msra.mxu0 0
    %2391 = vmatprep.subr.bf16.mxu0 0
    %2392 = vmatpush1.bf16.msra.mxu0 0
    %2393 = vmatprep.mubr.bf16.mxu0 0
    %2394 = vmatmul.mubr.bf16.gmra.mrb[0].mxu0 %v2359
    %v2395 = vpop.f32.mrb[0].mxu0
    %v2396 = vadd.f32 %v1481, %v2395
    %v2397 = vpop.f32.mrb[0].mxu0
    %v2398 = vadd.f32 %v1485, %v2397
    %v2399 = vpop.f32.mrb[0].mxu0
    %v2400 = vpop.f32.mrb[0].mxu0
    %2401 = vdwg.mxu0
    %v2402 = vadd.f32 %v1473, %v2396
    %v2403 = vxor.u32 %v2402, 2147483648
    %v2404 = vmul.f32 %v2403, 1.442695
    %v2405 = vpow.pop %v2404
    %v2406 = vadd.f32 %v2405, 1.0
    %v2407 = vrcp.pop %v2406
    %v2408 = vmul.f32 1.0, %v2407
    %2410 = vrot.lane.b32.xlu0 %v2396, 64
    %v2411 = vpop.permute.xlu0 %2410
    %v2413 = vmul.f32 %v2408, %v2411
    %2415 = vrot.lane.b32.xlu0 %v2413, 64
    %v2416 = vpop.permute.xlu0 %2415
    %v2418 = vadd.f32 %v1473, %v2416
    %v2419 = vtanh.pop %v2418
    %v2420 = vsub.f32 1.0, %v2408
    %2422 = vrot.lane.b32.xlu0 %v2419, 96
    %v2423 = vpop.permute.xlu0 %2422
    %v2425 = vmul.f32 %v2420, %v2423
    %2427 = vrot.lane.b32.xlu0 %v2356, 32
    %v2428 = vpop.permute.xlu0 %2427
    %v2430 = vmul.f32 %v2408, %v2428
    %v2431 = vadd.f32 %v2425, %v2430
    %v2432 = vadd.f32 %v1439, %v2396
    %v2433 = vxor.u32 %v2432, 2147483648
    %v2434 = vmul.f32 %v2433, 1.442695
    %v2435 = vpow.pop %v2434
    %v2436 = vadd.f32 %v2435, 1.0
    %v2437 = vrcp.pop %v2436
    %v2438 = vmul.f32 1.0, %v2437
    %v2439 = vadd.f32 %v1441, %v2398
    %v2440 = vxor.u32 %v2439, 2147483648
    %v2441 = vmul.f32 %v2440, 1.442695
    %v2442 = vpow.pop %v2441
    %v2443 = vadd.f32 %v2442, 1.0
    %v2444 = vrcp.pop %v2443
    %v2445 = vmul.f32 1.0, %v2444
    %2447 = vrot.lane.b32.xlu0 %v2398, 64
    %v2448 = vpop.permute.xlu0 %2447
    %v2450 = vmul.f32 %v2438, %v2448
    %2452 = vrot.lane.b32.xlu0 %v2450, 64
    %v2453 = vpop.permute.xlu0 %2452
    %v2455 = vadd.f32 %v1441, %v2453
    %v2456 = vtanh.pop %v2455
    %v2457 = vsub.f32 1.0, %v2445
    %2459 = vrot.lane.b32.xlu0 %v2456, 96
    %v2460 = vpop.permute.xlu0 %2459
    %v2462 = vmul.f32 %v2457, %v2460
    %2463 = vrot.lane.b32.xlu0 %v2356, 96
    %v2464 = vpop.permute.xlu0 %2463
    %v2466 = vmul.f32 %v2445, %v2464
    %v2467 = vadd.f32 %v2462, %v2466
    %2469 = vrot.lane.b32.xlu0 %v2431, 96
    %v2470 = vpop.permute.xlu0 %2469
    %2473 = vrot.lane.b32.xlu0 %v2467, 32
    %v2474 = vpop.permute.xlu0 %2473
    %v2476 = vsel %vm391, %v2470, %v2474
    %v2477 = vld [vmem:[%s11] sm:$0xff]
    %v2478 = vld [vmem:[%s11 + $0x8] sm:$0xf]
    %v2479 = vld [vmem:[%s1] sm:$0xff]
    %v2480 = vld [vmem:[%s1 + $0x8] sm:$0xff]
    %v2481 = vld [vmem:[%s1 + $0x10] sm:$0xff]
    %v2482 = vld [vmem:[%s1 + $0x18] sm:$0xff]
    %v2483 = vld [vmem:[%s1 + $0x20] sm:$0xff]
    %v2484 = vld [vmem:[%s1 + $0x28] sm:$0xff]
    %v2485 = vld [vmem:[%s1 + $0x30] sm:$0xff]
    %v2486 = vld [vmem:[%s1 + $0x38] sm:$0xff]
    %vm2487 = vcmask 97280
    %v2489 = vsel %vm2487, %v2479, 0
    %v2492 = vsel %vm2487, %v2480, 0
    %v2495 = vsel %vm2487, %v2481, 0
    %v2498 = vsel %vm2487, %v2482, 0
    %v2501 = vsel %vm2487, %v2483, 0
    %v2504 = vsel %vm2487, %v2484, 0
    %v2507 = vsel %vm2487, %v2485, 0
    %v2510 = vsel %vm2487, %v2486, 0
    %vm2512 = vcmask 1043456
    %v2514 = vsel %vm2512, %v2478, 0
    %2516 = vmatprep.subr.mxu0 0.0
    %2517 = vmatpush1.msra.mxu0 %v2477
    %2518 = vmatprep.subr.mxu0 0.0
    %2519 = vmatpush1.msra.mxu0 %v2514
    %2520 = vmatprep.subr.mxu0 0.0
    %2521 = vmatpush1.msra.mxu0 0.0
    %2522 = vmatprep.subr.mxu0 0.0
    %2523 = vmatpush1.msra.mxu0 0.0
    %2524 = vmatprep.subr.mxu0 0.0
    %2525 = vmatpush1.msra.mxu0 0.0
    %2526 = vmatprep.subr.mxu0 0.0
    %2527 = vmatpush1.msra.mxu0 0.0
    %2528 = vmatprep.subr.mxu0 0.0
    %2529 = vmatpush1.msra.mxu0 0.0
    %2530 = vmatprep.subr.mxu0 0.0
    %2531 = vmatpush1.msra.mxu0 0.0
    %2532 = vmatprep.subr.mxu0 0.0
    %2533 = vmatpush1.msra.mxu0 0.0
    %2534 = vmatprep.subr.mxu0 0.0
    %2535 = vmatpush1.msra.mxu0 0.0
    %2536 = vmatprep.subr.mxu0 0.0
    %2537 = vmatpush1.msra.mxu0 0.0
    %2538 = vmatprep.subr.mxu0 0.0
    %2539 = vmatpush1.msra.mxu0 0.0
    %2540 = vmatprep.subr.mxu0 0.0
    %2541 = vmatpush1.msra.mxu0 0.0
    %2542 = vmatprep.subr.mxu0 0.0
    %2543 = vmatpush1.msra.mxu0 0.0
    %2544 = vmatprep.subr.mxu0 0.0
    %2545 = vmatpush1.msra.mxu0 0.0
    %2546 = vmatprep.subr.mxu0 0.0
    %2547 = vmatpush1.msra.mxu0 0.0
    %2548 = vmatprep.subr.mxu0 0.0
    %2549 = vmatpush1.msra.mxu0 0.0
    %2550 = vmatprep.subr.mxu0 0.0
    %2551 = vmatpush1.msra.mxu0 0.0
    %2552 = vmatprep.subr.mxu0 0.0
    %2553 = vmatpush1.msra.mxu0 0.0
    %2554 = vmatprep.subr.mxu0 0.0
    %2555 = vmatpush1.msra.mxu0 0.0
    %2556 = vmatprep.subr.mxu0 0.0
    %2557 = vmatpush1.msra.mxu0 0.0
    %2558 = vmatprep.subr.mxu0 0.0
    %2559 = vmatpush1.msra.mxu0 0.0
    %2560 = vmatprep.subr.mxu0 0.0
    %2561 = vmatpush1.msra.mxu0 0.0
    %2562 = vmatprep.subr.mxu0 0.0
    %2563 = vmatpush1.msra.mxu0 0.0
    %2564 = vmatprep.subr.mxu0 0.0
    %2565 = vmatpush1.msra.mxu0 0.0
    %2566 = vmatprep.subr.mxu0 0.0
    %2567 = vmatpush1.msra.mxu0 0.0
    %2568 = vmatprep.subr.mxu0 0.0
    %2569 = vmatpush1.msra.mxu0 0.0
    %2570 = vmatprep.subr.mxu0 0.0
    %2571 = vmatpush1.msra.mxu0 0.0
    %2572 = vmatprep.subr.mxu0 0.0
    %2573 = vmatpush1.msra.mxu0 0.0
    %2574 = vmatprep.subr.mxu0 0.0
    %2575 = vmatpush1.msra.mxu0 0.0
    %2576 = vmatprep.subr.mxu0 0.0
    %2577 = vmatpush1.msra.mxu0 0.0
    %2578 = vmatprep.subr.mxu0 0.0
    %2579 = vmatpush1.msra.mxu0 0.0
    %2580 = vmatprep.mubr.f32.mxu0 0.0
    %2581 = vmatmul.mubr.f32.gmra.mrb[0].mxu0 %v2489
    %v2582 = vpop.f32.mrb[0].mxu0
    %v2583 = vadd.f32 0.0, %v2582
    %v2584 = vpop.f32.mrb[0].mxu0
    %2585 = vmatprep.mubr.f32.mxu0 0.0
    %2586 = vmatmul.mubr.f32.gmra.mrb[0].mxu0 %v2492
    %v2587 = vpop.f32.mrb[0].mxu0
    %v2588 = vadd.f32 0.0, %v2587
    %v2589 = vpop.f32.mrb[0].mxu0
    %2590 = vmatprep.mubr.f32.mxu0 0.0
    %2591 = vmatmul.mubr.f32.gmra.mrb[0].mxu0 %v2495
    %v2592 = vpop.f32.mrb[0].mxu0
    %v2593 = vadd.f32 0.0, %v2592
    %v2594 = vpop.f32.mrb[0].mxu0
    %2595 = vmatprep.mubr.f32.mxu0 0.0
    %2596 = vmatmul.mubr.f32.gmra.mrb[0].mxu0 %v2498
    %v2597 = vpop.f32.mrb[0].mxu0
    %v2598 = vadd.f32 0.0, %v2597
    %v2599 = vpop.f32.mrb[0].mxu0
    %2600 = vmatprep.mubr.f32.mxu0 0.0
    %2601 = vmatmul.mubr.f32.gmra.mrb[0].mxu0 %v2501
    %v2602 = vpop.f32.mrb[0].mxu0
    %v2603 = vadd.f32 0.0, %v2602
    %v2604 = vpop.f32.mrb[0].mxu0
    %2605 = vmatprep.mubr.f32.mxu0 0.0
    %2606 = vmatmul.mubr.f32.gmra.mrb[0].mxu0 %v2504
    %v2607 = vpop.f32.mrb[0].mxu0
    %v2608 = vadd.f32 0.0, %v2607
    %v2609 = vpop.f32.mrb[0].mxu0
    %2610 = vmatprep.mubr.f32.mxu0 0.0
    %2611 = vmatmul.mubr.f32.gmra.mrb[0].mxu0 %v2507
    %v2612 = vpop.f32.mrb[0].mxu0
    %v2613 = vadd.f32 0.0, %v2612
    %v2614 = vpop.f32.mrb[0].mxu0
    %2615 = vmatprep.mubr.f32.mxu0 0.0
    %2616 = vmatmul.mubr.f32.gmra.mrb[0].mxu0 %v2510
    %v2617 = vpop.f32.mrb[0].mxu0
    %v2618 = vpop.f32.mrb[0].mxu0
    %2619 = vdwg.mxu0
    %v2620 = vld [vmem:[%s12] sm:$0xff]
    %v2621 = vld [vmem:[%s12 + $0x8] sm:$0xff]
    %v2622 = vld [vmem:[%s13] sm:$0xff]
    %v2623 = vld [vmem:[%s13 + $0x8] sm:$0xff]
    %v2624 = vld [vmem:[%s13 + $0x10] sm:$0xff]
    %v2625 = vld [vmem:[%s13 + $0x18] sm:$0xff]
    %v2626 = vld [vmem:[%s13 + $0x20] sm:$0xff]
    %v2627 = vld [vmem:[%s13 + $0x28] sm:$0xff]
    %v2628 = vld [vmem:[%s13 + $0x30] sm:$0xff]
    %v2629 = vld [vmem:[%s13 + $0x38] sm:$0xff]
    %v2630 = vld [vmem:[%s14] sm:$0x3]
    %v2632 = vlaneseq
    %v2633 = vshrl.u32 %v2632, 7
    %v2634 = vsub.s32 0, %v2633
    %v2635 = vrot.slane %v2630, %v2634
    %v2636 = vlaneseq
    %v2637 = vshrl.u32 %v2636, 7
    %v2638 = vsub.s32 1, %v2637
    %v2639 = vrot.slane %v2630, %v2638
    %v2642 = vld [vmem:[%s15] sm:$0x3]
    %v2644 = vlaneseq
    %v2645 = vshrl.u32 %v2644, 7
    %v2646 = vsub.s32 0, %v2645
    %v2647 = vrot.slane %v2642, %v2646
    %v2648 = vlaneseq
    %v2649 = vshrl.u32 %v2648, 7
    %v2650 = vsub.s32 1, %v2649
    %v2651 = vrot.slane %v2642, %v2650
    %v2654 = vld [vmem:[%s16] sm:$0xff]
    %v2655 = vld [vmem:[%s16 + $0x8] sm:$0xff]
    %v2656 = vld [vmem:[%s16 + $0x10] sm:$0xff]
    %v2657 = vld [vmem:[%s16 + $0x18] sm:$0xff]
    %v2658 = vld [vmem:[%s16 + $0x20] sm:$0xff]
    %v2659 = vld [vmem:[%s16 + $0x28] sm:$0xff]
    %v2660 = vld [vmem:[%s16 + $0x30] sm:$0xff]
    %v2661 = vld [vmem:[%s16 + $0x38] sm:$0xff]
    %v2662 = vld [vmem:[%s17] sm:$0xff]
    %v2663 = vld [vmem:[%s17 + $0x8] sm:$0xff]
    %v2664 = vld [vmem:[%s17 + $0x10] sm:$0xff]
    %v2665 = vld [vmem:[%s17 + $0x18] sm:$0xff]
    %v2666 = vld [vmem:[%s17 + $0x20] sm:$0xff]
    %v2667 = vld [vmem:[%s17 + $0x28] sm:$0xff]
    %v2668 = vld [vmem:[%s17 + $0x30] sm:$0xff]
    %v2669 = vld [vmem:[%s17 + $0x38] sm:$0xff]
    %v2670 = vld [vmem:[%s18] sm:$0x3]
    %v2672 = vlaneseq
    %v2673 = vshrl.u32 %v2672, 7
    %v2674 = vsub.s32 0, %v2673
    %v2675 = vrot.slane %v2670, %v2674
    %v2676 = vlaneseq
    %v2677 = vshrl.u32 %v2676, 7
    %v2678 = vsub.s32 1, %v2677
    %v2679 = vrot.slane %v2670, %v2678
    %v2682 = vld [vmem:[%s19] sm:$0x3]
    %v2684 = vlaneseq
    %v2685 = vshrl.u32 %v2684, 7
    %v2686 = vsub.s32 0, %v2685
    %v2687 = vrot.slane %v2682, %v2686
    %v2688 = vlaneseq
    %v2689 = vshrl.u32 %v2688, 7
    %v2690 = vsub.s32 1, %v2689
    %v2691 = vrot.slane %v2682, %v2690
    %v2694 = vld [vmem:[%s20] sm:$0xf]
    %v2695 = vld [vmem:[%s20 + $0x4] sm:$0xf]
    %v2696 = vld [vmem:[%s20 + $0x8] sm:$0xf]
    %v2697 = vld [vmem:[%s20 + $0xc] sm:$0xf]
    %v2698 = vld [vmem:[%s20 + $0x10] sm:$0xf]
    %v2699 = vld [vmem:[%s20 + $0x14] sm:$0xf]
    %v2700 = vld [vmem:[%s20 + $0x18] sm:$0xf]
    %v2701 = vld [vmem:[%s20 + $0x1c] sm:$0xf]
    %v2702 = vld [vmem:[%s21] sm:$0x1]
    %v2704 = vlaneseq
    %v2705 = vshrl.u32 %v2704, 7
    %v2706 = vsub.s32 0, %v2705
    %v2707 = vrot.slane %v2702, %v2706
    %v2709 = vld [vmem:[%s22] sm:$0xff]
    %v2710 = vld [vmem:[%s22 + $0x8] sm:$0xff]
    %v2711 = vld [vmem:[%s22 + $0x10] sm:$0xff]
    %v2712 = vld [vmem:[%s22 + $0x18] sm:$0xff]
    %v2713 = vld [vmem:[%s22 + $0x20] sm:$0xff]
    %v2714 = vld [vmem:[%s22 + $0x28] sm:$0xff]
    %v2715 = vld [vmem:[%s22 + $0x30] sm:$0xff]
    %v2716 = vld [vmem:[%s22 + $0x38] sm:$0xff]
    %v2717 = vld [vmem:[%s22 + $0x40] sm:$0xff]
    %v2718 = vld [vmem:[%s22 + $0x48] sm:$0xff]
    %v2719 = vld [vmem:[%s22 + $0x50] sm:$0xff]
    %v2720 = vld [vmem:[%s22 + $0x58] sm:$0xff]
    %v2721 = vld [vmem:[%s22 + $0x60] sm:$0xff]
    %v2722 = vld [vmem:[%s22 + $0x68] sm:$0xff]
    %v2723 = vld [vmem:[%s22 + $0x70] sm:$0xff]
    %v2724 = vld [vmem:[%s22 + $0x78] sm:$0xff]
    %v2725 = vld [vmem:[%s23] sm:$0x3]
    %v2727 = vlaneseq
    %v2728 = vshrl.u32 %v2727, 7
    %v2729 = vsub.s32 0, %v2728
    %v2730 = vrot.slane %v2725, %v2729
    %v2731 = vlaneseq
    %v2732 = vshrl.u32 %v2731, 7
    %v2733 = vsub.s32 1, %v2732
    %v2734 = vrot.slane %v2725, %v2733
    %v2737 = vld [vmem:[%s24] sm:$0xf]
    %v2738 = vld [vmem:[%s24 + $0x4] sm:$0xf]
    %v2739 = vld [vmem:[%s24 + $0x8] sm:$0xf]
    %v2740 = vld [vmem:[%s24 + $0xc] sm:$0xf]
    %v2741 = vld [vmem:[%s24 + $0x10] sm:$0xf]
    %v2742 = vld [vmem:[%s24 + $0x14] sm:$0xf]
    %v2743 = vld [vmem:[%s24 + $0x18] sm:$0xf]
    %v2744 = vld [vmem:[%s24 + $0x1c] sm:$0xf]
    %v2745 = vld [vmem:[%s24 + $0x20] sm:$0xf]
    %v2746 = vld [vmem:[%s24 + $0x24] sm:$0xf]
    %v2747 = vld [vmem:[%s24 + $0x28] sm:$0xf]
    %v2748 = vld [vmem:[%s24 + $0x2c] sm:$0xf]
    %v2749 = vld [vmem:[%s24 + $0x30] sm:$0xf]
    %v2750 = vld [vmem:[%s24 + $0x34] sm:$0xf]
    %v2751 = vld [vmem:[%s24 + $0x38] sm:$0xf]
    %v2752 = vld [vmem:[%s24 + $0x3c] sm:$0xf]
    %v2753 = vld [vmem:[%s24 + $0x40] sm:$0xf]
    %v2754 = vld [vmem:[%s24 + $0x44] sm:$0xf]
    %v2755 = vld [vmem:[%s24 + $0x48] sm:$0xf]
    %v2756 = vld [vmem:[%s24 + $0x4c] sm:$0xf]
    %v2757 = vld [vmem:[%s24 + $0x50] sm:$0xf]
    %v2758 = vld [vmem:[%s24 + $0x54] sm:$0xf]
    %v2759 = vld [vmem:[%s24 + $0x58] sm:$0xf]
    %v2760 = vld [vmem:[%s24 + $0x5c] sm:$0xf]
    %v2761 = vld [vmem:[%s24 + $0x60] sm:$0xf]
    %v2762 = vld [vmem:[%s24 + $0x64] sm:$0xf]
    %v2763 = vld [vmem:[%s24 + $0x68] sm:$0xf]
    %v2764 = vld [vmem:[%s24 + $0x6c] sm:$0xf]
    %v2765 = vld [vmem:[%s24 + $0x70] sm:$0xf]
    %v2766 = vld [vmem:[%s24 + $0x74] sm:$0xf]
    %v2767 = vld [vmem:[%s24 + $0x78] sm:$0xf]
    %v2768 = vld [vmem:[%s24 + $0x7c] sm:$0xf]
    %v2769 = vld [vmem:[%s25] sm:$0x1]
    %v2771 = vlaneseq
    %v2772 = vshrl.u32 %v2771, 7
    %v2773 = vsub.s32 0, %v2772
    %v2774 = vrot.slane %v2769, %v2773
    %2776 = vst [vmem:[%s26] sm:$0xff] 0.0
    %2777 = vst.msk [vmem:[#allocation4] sm:$0xff] %vm142, %v2583
    %v2778 = vld [vmem:[#allocation4] sm:$0xff]
    %v2779 = vpack.c.bf16 %v2778, %v2778
    %v2782 = vunpack.c.l.b16 %v2620
    %v2783 = vunpack.c.h.b16 %v2620
    %v2784 = vunpack.c.l.b16 %v2621
    %v2785 = vunpack.c.h.b16 %v2621
    %v2786 = vpack.c.b16 %v2784, %v2782
    %v2787 = vpack.c.b16 %v2785, %v2783
    %v2791 = vsel %vm142, %v2779, 0
    %2793 = vmatprep.subr.bf16.mxu0 %v2787
    %2794 = vmatpush1.bf16.msra.mxu0 %v2786
    %2795 = vmatprep.subr.bf16.mxu0 0
    %2796 = vmatpush1.bf16.msra.mxu0 0
    %2797 = vmatprep.subr.bf16.mxu0 0
    %2798 = vmatpush1.bf16.msra.mxu0 0
    %2799 = vmatprep.subr.bf16.mxu0 0
    %2800 = vmatpush1.bf16.msra.mxu0 0
    %2801 = vmatprep.subr.bf16.mxu0 0
    %2802 = vmatpush1.bf16.msra.mxu0 0
    %2803 = vmatprep.subr.bf16.mxu0 0
    %2804 = vmatpush1.bf16.msra.mxu0 0
    %2805 = vmatprep.subr.bf16.mxu0 0
    %2806 = vmatpush1.bf16.msra.mxu0 0
    %2807 = vmatprep.subr.bf16.mxu0 0
    %2808 = vmatpush1.bf16.msra.mxu0 0
    %2809 = vmatprep.subr.bf16.mxu0 0
    %2810 = vmatpush1.bf16.msra.mxu0 0
    %2811 = vmatprep.subr.bf16.mxu0 0
    %2812 = vmatpush1.bf16.msra.mxu0 0
    %2813 = vmatprep.subr.bf16.mxu0 0
    %2814 = vmatpush1.bf16.msra.mxu0 0
    %2815 = vmatprep.subr.bf16.mxu0 0
    %2816 = vmatpush1.bf16.msra.mxu0 0
    %2817 = vmatprep.subr.bf16.mxu0 0
    %2818 = vmatpush1.bf16.msra.mxu0 0
    %2819 = vmatprep.subr.bf16.mxu0 0
    %2820 = vmatpush1.bf16.msra.mxu0 0
    %2821 = vmatprep.subr.bf16.mxu0 0
    %2822 = vmatpush1.bf16.msra.mxu0 0
    %2823 = vmatprep.subr.bf16.mxu0 0
    %2824 = vmatpush1.bf16.msra.mxu0 0
    %2825 = vmatprep.mubr.bf16.mxu0 0
    %2826 = vmatmul.mubr.bf16.gmra.mrb[0].mxu0 %v2791
    %v2827 = vpop.f32.mrb[0].mxu0
    %v2828 = vadd.f32 %v2635, %v2827
    %v2829 = vpop.f32.mrb[0].mxu0
    %v2830 = vadd.f32 %v2639, %v2829
    %v2831 = vpop.f32.mrb[0].mxu0
    %v2832 = vpop.f32.mrb[0].mxu0
    %2833 = vdwg.mxu0
    %v2834 = vpack.c.bf16 %v1259, %v1259
    %v2843 = vunpack.c.l.b16 %v2622
    %v2844 = vunpack.c.h.b16 %v2622
    %v2845 = vunpack.c.l.b16 %v2623
    %v2846 = vunpack.c.h.b16 %v2623
    %v2847 = vunpack.c.l.b16 %v2624
    %v2848 = vunpack.c.h.b16 %v2624
    %v2849 = vunpack.c.l.b16 %v2625
    %v2850 = vunpack.c.h.b16 %v2625
    %v2851 = vunpack.c.l.b16 %v2626
    %v2852 = vunpack.c.h.b16 %v2626
    %v2853 = vunpack.c.l.b16 %v2627
    %v2854 = vunpack.c.h.b16 %v2627
    %v2855 = vunpack.c.l.b16 %v2628
    %v2856 = vunpack.c.h.b16 %v2628
    %v2857 = vunpack.c.l.b16 %v2629
    %v2858 = vunpack.c.h.b16 %v2629
    %v2859 = vpack.c.b16 %v2845, %v2843
    %v2860 = vpack.c.b16 %v2846, %v2844
    %v2861 = vpack.c.b16 %v2849, %v2847
    %v2862 = vpack.c.b16 %v2850, %v2848
    %v2863 = vpack.c.b16 %v2853, %v2851
    %v2864 = vpack.c.b16 %v2854, %v2852
    %v2865 = vpack.c.b16 %v2857, %v2855
    %v2866 = vpack.c.b16 %v2858, %v2856
    %v2876 = vsel %vm279, %v2834, 0
    %2878 = vmatprep.subr.bf16.mxu0 %v2860
    %2879 = vmatpush1.bf16.msra.mxu0 %v2859
    %2880 = vmatprep.subr.bf16.mxu0 %v2862
    %2881 = vmatpush1.bf16.msra.mxu0 %v2861
    %2882 = vmatprep.subr.bf16.mxu0 %v2864
    %2883 = vmatpush1.bf16.msra.mxu0 %v2863
    %2884 = vmatprep.subr.bf16.mxu0 %v2866
    %2885 = vmatpush1.bf16.msra.mxu0 %v2865
    %2886 = vmatprep.subr.bf16.mxu0 0
    %2887 = vmatpush1.bf16.msra.mxu0 0
    %2888 = vmatprep.subr.bf16.mxu0 0
    %2889 = vmatpush1.bf16.msra.mxu0 0
    %2890 = vmatprep.subr.bf16.mxu0 0
    %2891 = vmatpush1.bf16.msra.mxu0 0
    %2892 = vmatprep.subr.bf16.mxu0 0
    %2893 = vmatpush1.bf16.msra.mxu0 0
    %2894 = vmatprep.subr.bf16.mxu0 0
    %2895 = vmatpush1.bf16.msra.mxu0 0
    %2896 = vmatprep.subr.bf16.mxu0 0
    %2897 = vmatpush1.bf16.msra.mxu0 0
    %2898 = vmatprep.subr.bf16.mxu0 0
    %2899 = vmatpush1.bf16.msra.mxu0 0
    %2900 = vmatprep.subr.bf16.mxu0 0
    %2901 = vmatpush1.bf16.msra.mxu0 0
    %2902 = vmatprep.subr.bf16.mxu0 0
    %2903 = vmatpush1.bf16.msra.mxu0 0
    %2904 = vmatprep.subr.bf16.mxu0 0
    %2905 = vmatpush1.bf16.msra.mxu0 0
    %2906 = vmatprep.subr.bf16.mxu0 0
    %2907 = vmatpush1.bf16.msra.mxu0 0
    %2908 = vmatprep.subr.bf16.mxu0 0
    %2909 = vmatpush1.bf16.msra.mxu0 0
    %2910 = vmatprep.mubr.bf16.mxu0 0
    %2911 = vmatmul.mubr.bf16.gmra.mrb[0].mxu0 %v2876
    %v2912 = vpop.f32.mrb[0].mxu0
    %v2913 = vadd.f32 %v2647, %v2912
    %v2914 = vpop.f32.mrb[0].mxu0
    %v2915 = vadd.f32 %v2651, %v2914
    %v2916 = vpop.f32.mrb[0].mxu0
    %v2917 = vpop.f32.mrb[0].mxu0
    %2918 = vdwg.mxu0
    %v2919 = vadd.f32 %v2828, %v2913
    %v2920 = vxor.u32 %v2919, 2147483648
    %v2921 = vmul.f32 %v2920, 1.442695
    %v2922 = vpow.pop %v2921
    %v2923 = vadd.f32 %v2922, 1.0
    %v2924 = vrcp.pop %v2923
    %v2925 = vmul.f32 1.0, %v2924
    %v2926 = vmul.f32 %v2925, %v2915
    %v2927 = vadd.f32 %v2830, %v2926
    %v2928 = vtanh.pop %v2927
    %v2929 = vsub.f32 1.0, %v2925
    %2931 = vrot.lane.b32.xlu0 %v2928, 64
    %v2932 = vpop.permute.xlu0 %2931
    %v2934 = vmul.f32 %v2929, %v2932
    %2936 = vrot.lane.b32.xlu0 %v1259, 64
    %v2937 = vpop.permute.xlu0 %2936
    %v2939 = vmul.f32 %v2925, %v2937
    %v2940 = vadd.f32 %v2934, %v2939
    %v2941 = vpack.c.bf16 %v2940, %v2940
    %2943 = vrot.lane.b32.xlu0 %v2941, 64
    %v2944 = vpop.permute.xlu0 %2943
    %v2953 = vunpack.c.l.b16 %v2654
    %v2954 = vunpack.c.h.b16 %v2654
    %v2955 = vunpack.c.l.b16 %v2655
    %v2956 = vunpack.c.h.b16 %v2655
    %v2957 = vunpack.c.l.b16 %v2656
    %v2958 = vunpack.c.h.b16 %v2656
    %v2959 = vunpack.c.l.b16 %v2657
    %v2960 = vunpack.c.h.b16 %v2657
    %v2961 = vunpack.c.l.b16 %v2658
    %v2962 = vunpack.c.h.b16 %v2658
    %v2963 = vunpack.c.l.b16 %v2659
    %v2964 = vunpack.c.h.b16 %v2659
    %v2965 = vunpack.c.l.b16 %v2660
    %v2966 = vunpack.c.h.b16 %v2660
    %v2967 = vunpack.c.l.b16 %v2661
    %v2968 = vunpack.c.h.b16 %v2661
    %v2969 = vpack.c.b16 %v2955, %v2953
    %v2970 = vpack.c.b16 %v2956, %v2954
    %v2971 = vpack.c.b16 %v2959, %v2957
    %v2972 = vpack.c.b16 %v2960, %v2958
    %v2973 = vpack.c.b16 %v2963, %v2961
    %v2974 = vpack.c.b16 %v2964, %v2962
    %v2975 = vpack.c.b16 %v2967, %v2965
    %v2976 = vpack.c.b16 %v2968, %v2966
    %v2986 = vsel %vm279, %v2944, 0
    %2988 = vmatprep.subr.bf16.mxu0 %v2970
    %2989 = vmatpush1.bf16.msra.mxu0 %v2969
    %2990 = vmatprep.subr.bf16.mxu0 %v2972
    %2991 = vmatpush1.bf16.msra.mxu0 %v2971
    %2992 = vmatprep.subr.bf16.mxu0 %v2974
    %2993 = vmatpush1.bf16.msra.mxu0 %v2973
    %2994 = vmatprep.subr.bf16.mxu0 %v2976
    %2995 = vmatpush1.bf16.msra.mxu0 %v2975
    %2996 = vmatprep.subr.bf16.mxu0 0
    %2997 = vmatpush1.bf16.msra.mxu0 0
    %2998 = vmatprep.subr.bf16.mxu0 0
    %2999 = vmatpush1.bf16.msra.mxu0 0
    %3000 = vmatprep.subr.bf16.mxu0 0
    %3001 = vmatpush1.bf16.msra.mxu0 0
    %3002 = vmatprep.subr.bf16.mxu0 0
    %3003 = vmatpush1.bf16.msra.mxu0 0
    %3004 = vmatprep.subr.bf16.mxu0 0
    %3005 = vmatpush1.bf16.msra.mxu0 0
    %3006 = vmatprep.subr.bf16.mxu0 0
    %3007 = vmatpush1.bf16.msra.mxu0 0
    %3008 = vmatprep.subr.bf16.mxu0 0
    %3009 = vmatpush1.bf16.msra.mxu0 0
    %3010 = vmatprep.subr.bf16.mxu0 0
    %3011 = vmatpush1.bf16.msra.mxu0 0
    %3012 = vmatprep.subr.bf16.mxu0 0
    %3013 = vmatpush1.bf16.msra.mxu0 0
    %3014 = vmatprep.subr.bf16.mxu0 0
    %3015 = vmatpush1.bf16.msra.mxu0 0
    %3016 = vmatprep.subr.bf16.mxu0 0
    %3017 = vmatpush1.bf16.msra.mxu0 0
    %3018 = vmatprep.subr.bf16.mxu0 0
    %3019 = vmatpush1.bf16.msra.mxu0 0
    %3020 = vmatprep.mubr.bf16.mxu0 0
    %3021 = vmatmul.mubr.bf16.gmra.mrb[0].mxu0 %v2986
    %v3022 = vpop.f32.mrb[0].mxu0
    %v3023 = vadd.f32 %v2675, %v3022
    %v3024 = vpop.f32.mrb[0].mxu0
    %v3025 = vadd.f32 %v2679, %v3024
    %v3026 = vpop.f32.mrb[0].mxu0
    %v3027 = vpop.f32.mrb[0].mxu0
    %3028 = vdwg.mxu0
    %v3029 = vpack.c.bf16 %v2476, %v2476
    %v3038 = vunpack.c.l.b16 %v2662
    %v3039 = vunpack.c.h.b16 %v2662
    %v3040 = vunpack.c.l.b16 %v2663
    %v3041 = vunpack.c.h.b16 %v2663
    %v3042 = vunpack.c.l.b16 %v2664
    %v3043 = vunpack.c.h.b16 %v2664
    %v3044 = vunpack.c.l.b16 %v2665
    %v3045 = vunpack.c.h.b16 %v2665
    %v3046 = vunpack.c.l.b16 %v2666
    %v3047 = vunpack.c.h.b16 %v2666
    %v3048 = vunpack.c.l.b16 %v2667
    %v3049 = vunpack.c.h.b16 %v2667
    %v3050 = vunpack.c.l.b16 %v2668
    %v3051 = vunpack.c.h.b16 %v2668
    %v3052 = vunpack.c.l.b16 %v2669
    %v3053 = vunpack.c.h.b16 %v2669
    %v3054 = vpack.c.b16 %v3040, %v3038
    %v3055 = vpack.c.b16 %v3041, %v3039
    %v3056 = vpack.c.b16 %v3044, %v3042
    %v3057 = vpack.c.b16 %v3045, %v3043
    %v3058 = vpack.c.b16 %v3048, %v3046
    %v3059 = vpack.c.b16 %v3049, %v3047
    %v3060 = vpack.c.b16 %v3052, %v3050
    %v3061 = vpack.c.b16 %v3053, %v3051
    %v3071 = vsel %vm279, %v3029, 0
    %3073 = vmatprep.subr.bf16.mxu0 %v3055
    %3074 = vmatpush1.bf16.msra.mxu0 %v3054
    %3075 = vmatprep.subr.bf16.mxu0 %v3057
    %3076 = vmatpush1.bf16.msra.mxu0 %v3056
    %3077 = vmatprep.subr.bf16.mxu0 %v3059
    %3078 = vmatpush1.bf16.msra.mxu0 %v3058
    %3079 = vmatprep.subr.bf16.mxu0 %v3061
    %3080 = vmatpush1.bf16.msra.mxu0 %v3060
    %3081 = vmatprep.subr.bf16.mxu0 0
    %3082 = vmatpush1.bf16.msra.mxu0 0
    %3083 = vmatprep.subr.bf16.mxu0 0
    %3084 = vmatpush1.bf16.msra.mxu0 0
    %3085 = vmatprep.subr.bf16.mxu0 0
    %3086 = vmatpush1.bf16.msra.mxu0 0
    %3087 = vmatprep.subr.bf16.mxu0 0
    %3088 = vmatpush1.bf16.msra.mxu0 0
    %3089 = vmatprep.subr.bf16.mxu0 0
    %3090 = vmatpush1.bf16.msra.mxu0 0
    %3091 = vmatprep.subr.bf16.mxu0 0
    %3092 = vmatpush1.bf16.msra.mxu0 0
    %3093 = vmatprep.subr.bf16.mxu0 0
    %3094 = vmatpush1.bf16.msra.mxu0 0
    %3095 = vmatprep.subr.bf16.mxu0 0
    %3096 = vmatpush1.bf16.msra.mxu0 0
    %3097 = vmatprep.subr.bf16.mxu0 0
    %3098 = vmatpush1.bf16.msra.mxu0 0
    %3099 = vmatprep.subr.bf16.mxu0 0
    %3100 = vmatpush1.bf16.msra.mxu0 0
    %3101 = vmatprep.subr.bf16.mxu0 0
    %3102 = vmatpush1.bf16.msra.mxu0 0
    %3103 = vmatprep.subr.bf16.mxu0 0
    %3104 = vmatpush1.bf16.msra.mxu0 0
    %3105 = vmatprep.mubr.bf16.mxu0 0
    %3106 = vmatmul.mubr.bf16.gmra.mrb[0].mxu0 %v3071
    %v3107 = vpop.f32.mrb[0].mxu0
    %v3108 = vadd.f32 %v2687, %v3107
    %v3109 = vpop.f32.mrb[0].mxu0
    %v3110 = vadd.f32 %v2691, %v3109
    %v3111 = vpop.f32.mrb[0].mxu0
    %v3112 = vpop.f32.mrb[0].mxu0
    %3113 = vdwg.mxu0
    %v3114 = vadd.f32 %v3023, %v3108
    %v3115 = vxor.u32 %v3114, 2147483648
    %v3116 = vmul.f32 %v3115, 1.442695
    %v3117 = vpow.pop %v3116
    %v3118 = vadd.f32 %v3117, 1.0
    %v3119 = vrcp.pop %v3118
    %v3120 = vmul.f32 1.0, %v3119
    %v3121 = vmul.f32 %v3120, %v3110
    %v3122 = vadd.f32 %v3025, %v3121
    %v3123 = vtanh.pop %v3122
    %v3124 = vsub.f32 1.0, %v3120
    %3126 = vrot.lane.b32.xlu0 %v3123, 64
    %v3127 = vpop.permute.xlu0 %3126
    %v3129 = vmul.f32 %v3124, %v3127
    %3131 = vrot.lane.b32.xlu0 %v2476, 64
    %v3132 = vpop.permute.xlu0 %3131
    %v3134 = vmul.f32 %v3120, %v3132
    %v3135 = vadd.f32 %v3129, %v3134
    %v3136 = vpack.c.bf16 %v3135, %v3135
    %3138 = vrot.lane.b32.xlu0 %v3136, 64
    %v3139 = vpop.permute.xlu0 %3138
    %v3148 = vunpack.c.l.b16 %v2694
    %v3149 = vunpack.c.l.b16 %v2695
    %v3150 = vunpack.c.l.b16 %v2696
    %v3151 = vunpack.c.l.b16 %v2697
    %v3152 = vunpack.c.l.b16 %v2698
    %v3153 = vunpack.c.l.b16 %v2699
    %v3154 = vunpack.c.l.b16 %v2700
    %v3155 = vunpack.c.l.b16 %v2701
    %v3156 = vpack.c.b16 %v3149, %v3148
    %v3157 = vpack.c.b16 %v3151, %v3150
    %v3158 = vpack.c.b16 %v3153, %v3152
    %v3159 = vpack.c.b16 %v3155, %v3154
    %v3165 = vsel %vm279, %v3139, 0
    %3167 = vmatprep.subr.bf16.mxu0 0
    %3168 = vmatpush1.bf16.msra.mxu0 %v3156
    %3169 = vmatprep.subr.bf16.mxu0 0
    %3170 = vmatpush1.bf16.msra.mxu0 %v3157
    %3171 = vmatprep.subr.bf16.mxu0 0
    %3172 = vmatpush1.bf16.msra.mxu0 %v3158
    %3173 = vmatprep.subr.bf16.mxu0 0
    %3174 = vmatpush1.bf16.msra.mxu0 %v3159
    %3175 = vmatprep.subr.bf16.mxu0 0
    %3176 = vmatpush1.bf16.msra.mxu0 0
    %3177 = vmatprep.subr.bf16.mxu0 0
    %3178 = vmatpush1.bf16.msra.mxu0 0
    %3179 = vmatprep.subr.bf16.mxu0 0
    %3180 = vmatpush1.bf16.msra.mxu0 0
    %3181 = vmatprep.subr.bf16.mxu0 0
    %3182 = vmatpush1.bf16.msra.mxu0 0
    %3183 = vmatprep.subr.bf16.mxu0 0
    %3184 = vmatpush1.bf16.msra.mxu0 0
    %3185 = vmatprep.subr.bf16.mxu0 0
    %3186 = vmatpush1.bf16.msra.mxu0 0
    %3187 = vmatprep.subr.bf16.mxu0 0
    %3188 = vmatpush1.bf16.msra.mxu0 0
    %3189 = vmatprep.subr.bf16.mxu0 0
    %3190 = vmatpush1.bf16.msra.mxu0 0
    %3191 = vmatprep.subr.bf16.mxu0 0
    %3192 = vmatpush1.bf16.msra.mxu0 0
    %3193 = vmatprep.subr.bf16.mxu0 0
    %3194 = vmatpush1.bf16.msra.mxu0 0
    %3195 = vmatprep.subr.bf16.mxu0 0
    %3196 = vmatpush1.bf16.msra.mxu0 0
    %3197 = vmatprep.subr.bf16.mxu0 0
    %3198 = vmatpush1.bf16.msra.mxu0 0
    %3199 = vmatprep.mubr.bf16.mxu0 0
    %3200 = vmatmul.mubr.bf16.gmra.mrb[0].mxu0 %v3165
    %v3201 = vpop.f32.mrb[0].mxu0
    %v3202 = vadd.f32 %v2707, %v3201
    %v3203 = vpop.f32.mrb[0].mxu0
    %v3204 = vpop.f32.mrb[0].mxu0
    %v3205 = vpop.f32.mrb[0].mxu0
    %3206 = vdwg.mxu0
    %v3207 = vpack.c.bf16 %v3202, %v3202
    %v3224 = vunpack.c.l.b16 %v2709
    %v3225 = vunpack.c.h.b16 %v2709
    %v3226 = vunpack.c.l.b16 %v2710
    %v3227 = vunpack.c.h.b16 %v2710
    %v3228 = vunpack.c.l.b16 %v2711
    %v3229 = vunpack.c.h.b16 %v2711
    %v3230 = vunpack.c.l.b16 %v2712
    %v3231 = vunpack.c.h.b16 %v2712
    %v3232 = vunpack.c.l.b16 %v2713
    %v3233 = vunpack.c.h.b16 %v2713
    %v3234 = vunpack.c.l.b16 %v2714
    %v3235 = vunpack.c.h.b16 %v2714
    %v3236 = vunpack.c.l.b16 %v2715
    %v3237 = vunpack.c.h.b16 %v2715
    %v3238 = vunpack.c.l.b16 %v2716
    %v3239 = vunpack.c.h.b16 %v2716
    %v3240 = vunpack.c.l.b16 %v2717
    %v3241 = vunpack.c.h.b16 %v2717
    %v3242 = vunpack.c.l.b16 %v2718
    %v3243 = vunpack.c.h.b16 %v2718
    %v3244 = vunpack.c.l.b16 %v2719
    %v3245 = vunpack.c.h.b16 %v2719
    %v3246 = vunpack.c.l.b16 %v2720
    %v3247 = vunpack.c.h.b16 %v2720
    %v3248 = vunpack.c.l.b16 %v2721
    %v3249 = vunpack.c.h.b16 %v2721
    %v3250 = vunpack.c.l.b16 %v2722
    %v3251 = vunpack.c.h.b16 %v2722
    %v3252 = vunpack.c.l.b16 %v2723
    %v3253 = vunpack.c.h.b16 %v2723
    %v3254 = vunpack.c.l.b16 %v2724
    %v3255 = vunpack.c.h.b16 %v2724
    %v3256 = vpack.c.b16 %v3226, %v3224
    %v3257 = vpack.c.b16 %v3227, %v3225
    %v3258 = vpack.c.b16 %v3230, %v3228
    %v3259 = vpack.c.b16 %v3231, %v3229
    %v3260 = vpack.c.b16 %v3234, %v3232
    %v3261 = vpack.c.b16 %v3235, %v3233
    %v3262 = vpack.c.b16 %v3238, %v3236
    %v3263 = vpack.c.b16 %v3239, %v3237
    %v3264 = vpack.c.b16 %v3242, %v3240
    %v3265 = vpack.c.b16 %v3243, %v3241
    %v3266 = vpack.c.b16 %v3246, %v3244
    %v3267 = vpack.c.b16 %v3247, %v3245
    %v3268 = vpack.c.b16 %v3250, %v3248
    %v3269 = vpack.c.b16 %v3251, %v3249
    %v3270 = vpack.c.b16 %v3254, %v3252
    %v3271 = vpack.c.b16 %v3255, %v3253
    %3288 = vmatprep.subr.bf16.mxu0 %v3257
    %3289 = vmatpush1.bf16.msra.mxu0 %v3256
    %3290 = vmatprep.subr.bf16.mxu0 %v3259
    %3291 = vmatpush1.bf16.msra.mxu0 %v3258
    %3292 = vmatprep.subr.bf16.mxu0 %v3261
    %3293 = vmatpush1.bf16.msra.mxu0 %v3260
    %3294 = vmatprep.subr.bf16.mxu0 %v3263
    %3295 = vmatpush1.bf16.msra.mxu0 %v3262
    %3296 = vmatprep.subr.bf16.mxu0 %v3265
    %3297 = vmatpush1.bf16.msra.mxu0 %v3264
    %3298 = vmatprep.subr.bf16.mxu0 %v3267
    %3299 = vmatpush1.bf16.msra.mxu0 %v3266
    %3300 = vmatprep.subr.bf16.mxu0 %v3269
    %3301 = vmatpush1.bf16.msra.mxu0 %v3268
    %3302 = vmatprep.subr.bf16.mxu0 %v3271
    %3303 = vmatpush1.bf16.msra.mxu0 %v3270
    %3304 = vmatprep.subr.bf16.mxu0 0
    %3305 = vmatpush1.bf16.msra.mxu0 0
    %3306 = vmatprep.subr.bf16.mxu0 0
    %3307 = vmatpush1.bf16.msra.mxu0 0
    %3308 = vmatprep.subr.bf16.mxu0 0
    %3309 = vmatpush1.bf16.msra.mxu0 0
    %3310 = vmatprep.subr.bf16.mxu0 0
    %3311 = vmatpush1.bf16.msra.mxu0 0
    %3312 = vmatprep.subr.bf16.mxu0 0
    %3313 = vmatpush1.bf16.msra.mxu0 0
    %3314 = vmatprep.subr.bf16.mxu0 0
    %3315 = vmatpush1.bf16.msra.mxu0 0
    %3316 = vmatprep.subr.bf16.mxu0 0
    %3317 = vmatpush1.bf16.msra.mxu0 0
    %3318 = vmatprep.subr.bf16.mxu0 0
    %3319 = vmatpush1.bf16.msra.mxu0 0
    %3320 = vmatprep.mubr.bf16.mxu0 0
    %3321 = vmatmul.mubr.bf16.gmra.mrb[0].mxu0 %v3207
    %v3322 = vpop.f32.mrb[0].mxu0
    %v3323 = vadd.f32 %v2730, %v3322
    %v3324 = vpop.f32.mrb[0].mxu0
    %v3325 = vadd.f32 %v2734, %v3324
    %v3326 = vpop.f32.mrb[0].mxu0
    %v3327 = vpop.f32.mrb[0].mxu0
    %3328 = vdwg.mxu0
    %v3329 = vpack.c.bf16 %v3323, %v3323
    %v3330 = vpack.c.bf16 %v3325, %v3325
    %v3363 = vunpack.c.l.b16 %v2737
    %v3364 = vunpack.c.l.b16 %v2738
    %v3365 = vunpack.c.l.b16 %v2739
    %v3366 = vunpack.c.l.b16 %v2740
    %v3367 = vunpack.c.l.b16 %v2741
    %v3368 = vunpack.c.l.b16 %v2742
    %v3369 = vunpack.c.l.b16 %v2743
    %v3370 = vunpack.c.l.b16 %v2744
    %v3371 = vunpack.c.l.b16 %v2745
    %v3372 = vunpack.c.l.b16 %v2746
    %v3373 = vunpack.c.l.b16 %v2747
    %v3374 = vunpack.c.l.b16 %v2748
    %v3375 = vunpack.c.l.b16 %v2749
    %v3376 = vunpack.c.l.b16 %v2750
    %v3377 = vunpack.c.l.b16 %v2751
    %v3378 = vunpack.c.l.b16 %v2752
    %v3379 = vunpack.c.l.b16 %v2753
    %v3380 = vunpack.c.l.b16 %v2754
    %v3381 = vunpack.c.l.b16 %v2755
    %v3382 = vunpack.c.l.b16 %v2756
    %v3383 = vunpack.c.l.b16 %v2757
    %v3384 = vunpack.c.l.b16 %v2758
    %v3385 = vunpack.c.l.b16 %v2759
    %v3386 = vunpack.c.l.b16 %v2760
    %v3387 = vunpack.c.l.b16 %v2761
    %v3388 = vunpack.c.l.b16 %v2762
    %v3389 = vunpack.c.l.b16 %v2763
    %v3390 = vunpack.c.l.b16 %v2764
    %v3391 = vunpack.c.l.b16 %v2765
    %v3392 = vunpack.c.l.b16 %v2766
    %v3393 = vunpack.c.l.b16 %v2767
    %v3394 = vunpack.c.l.b16 %v2768
    %v3395 = vpack.c.b16 %v3364, %v3363
    %v3396 = vpack.c.b16 %v3366, %v3365
    %v3397 = vpack.c.b16 %v3368, %v3367
    %v3398 = vpack.c.b16 %v3370, %v3369
    %v3399 = vpack.c.b16 %v3372, %v3371
    %v3400 = vpack.c.b16 %v3374, %v3373
    %v3401 = vpack.c.b16 %v3376, %v3375
    %v3402 = vpack.c.b16 %v3378, %v3377
    %v3403 = vpack.c.b16 %v3380, %v3379
    %v3404 = vpack.c.b16 %v3382, %v3381
    %v3405 = vpack.c.b16 %v3384, %v3383
    %v3406 = vpack.c.b16 %v3386, %v3385
    %v3407 = vpack.c.b16 %v3388, %v3387
    %v3408 = vpack.c.b16 %v3390, %v3389
    %v3409 = vpack.c.b16 %v3392, %v3391
    %v3410 = vpack.c.b16 %v3394, %v3393
    %3427 = vmatprep.subr.bf16.mxu0 0
    %3428 = vmatpush1.bf16.msra.mxu0 %v3395
    %3429 = vmatprep.subr.bf16.mxu0 0
    %3430 = vmatpush1.bf16.msra.mxu0 %v3396
    %3431 = vmatprep.subr.bf16.mxu0 0
    %3432 = vmatpush1.bf16.msra.mxu0 %v3397
    %3433 = vmatprep.subr.bf16.mxu0 0
    %3434 = vmatpush1.bf16.msra.mxu0 %v3398
    %3435 = vmatprep.subr.bf16.mxu0 0
    %3436 = vmatpush1.bf16.msra.mxu0 %v3399
    %3437 = vmatprep.subr.bf16.mxu0 0
    %3438 = vmatpush1.bf16.msra.mxu0 %v3400
    %3439 = vmatprep.subr.bf16.mxu0 0
    %3440 = vmatpush1.bf16.msra.mxu0 %v3401
    %3441 = vmatprep.subr.bf16.mxu0 0
    %3442 = vmatpush1.bf16.msra.mxu0 %v3402
    %3443 = vmatprep.subr.bf16.mxu0 0
    %3444 = vmatpush1.bf16.msra.mxu0 %v3403
    %3445 = vmatprep.subr.bf16.mxu0 0
    %3446 = vmatpush1.bf16.msra.mxu0 %v3404
    %3447 = vmatprep.subr.bf16.mxu0 0
    %3448 = vmatpush1.bf16.msra.mxu0 %v3405
    %3449 = vmatprep.subr.bf16.mxu0 0
    %3450 = vmatpush1.bf16.msra.mxu0 %v3406
    %3451 = vmatprep.subr.bf16.mxu0 0
    %3452 = vmatpush1.bf16.msra.mxu0 %v3407
    %3453 = vmatprep.subr.bf16.mxu0 0
    %3454 = vmatpush1.bf16.msra.mxu0 %v3408
    %3455 = vmatprep.subr.bf16.mxu0 0
    %3456 = vmatpush1.bf16.msra.mxu0 %v3409
    %3457 = vmatprep.subr.bf16.mxu0 0
    %3458 = vmatpush1.bf16.msra.mxu0 %v3410
    %3459 = vmatprep.mubr.bf16.mxu0 %v3330
    %3460 = vmatmul.mubr.bf16.gmra.mrb[0].mxu0 %v3329
    %v3461 = vpop.f32.mrb[0].mxu0
    %v3462 = vadd.f32 %v2774, %v3461
    %v3463 = vpop.f32.mrb[0].mxu0
    %v3464 = vpop.f32.mrb[0].mxu0
    %v3465 = vpop.f32.mrb[0].mxu0
    %3466 = vdwg.mxu0
    %s3467 = scalar_lea.vmem %s26, 8
    %3468 = vst [vmem:[%s3467] sm:$0xff] %v3462
    %3469 = vst.msk [vmem:[#allocation4] sm:$0xff] %vm142, %v2588
    %s3470 = sld [smem:[#allocation5 + $0x1]]
    %p3471 = scmp.eq.s32.totalorder %s3470, 0
    // Predicated region
    $region110: #{seq2seq_forward.1} parent=1 // pred_check
      %p3472 = pneg %p3471
    $region111: #{seq2seq_forward.1} parent=1 // pred_check_branch
      %3474 = sbr.rel (%p3472) target = $region113
    $region112: #{seq2seq_forward.1} parent=1 // pred_region
      %3475 = vmax.xlane.f32.xlu0 %v3462
      %v3476 = vpop.xlane.xlu0 %3475
      %v3477 = vlaneseq
      %v3478 = vand.u32 %v3477, 127
      %vm3479 = vcmp.ge.f32.partialorder %v3462, %v3476
      %v3480 = vsel %vm3479, %v3478, 128
      %v3481 = vand.u32 %v3480, 65535
      %v3482 = vshra.s32 %v3480, 16
      %v3483 = vcvt.s32.f32 %v3481
      %v3484 = vcvt.s32.f32 %v3482
      %3485 = vmin.xlane.f32.xlu0 %v3484
      %v3486 = vpop.xlane.xlu0 %3485
      %vm3487 = vcmp.eq.f32.partialorder %v3484, %v3486
      %v3488 = vsel %vm3487, %v3483, inf
      %3489 = vmin.xlane.f32.xlu0 %v3488
      %v3490 = vpop.xlane.xlu0 %3489
      %v3491 = vcvt.f32.s32 %v3490
      %v3492 = vcvt.f32.s32 %v3486
      %v3493 = vshll.u32 %v3492, 16
      %v3494 = vadd.s32 %v3493, %v3491
      %vm3495 = vcmp.eq.s32.totalorder %v3494, %v3478
      %v3496 = vsel %vm3495, 1, 0
      %v3497 = vcvt.s32.f32 %v3496
      %v3499 = vsel %vm2487, %v3497, 0
      %3501 = vmatprep.subr.mxu0 0.0
      %3502 = vmatpush1.msra.mxu0 %v2477
      %3503 = vmatprep.subr.mxu0 0.0
      %3504 = vmatpush1.msra.mxu0 %v2514
      %3505 = vmatprep.subr.mxu0 0.0
      %3506 = vmatpush1.msra.mxu0 0.0
      %3507 = vmatprep.subr.mxu0 0.0
      %3508 = vmatpush1.msra.mxu0 0.0
      %3509 = vmatprep.subr.mxu0 0.0
      %3510 = vmatpush1.msra.mxu0 0.0
      %3511 = vmatprep.subr.mxu0 0.0
      %3512 = vmatpush1.msra.mxu0 0.0
      %3513 = vmatprep.subr.mxu0 0.0
      %3514 = vmatpush1.msra.mxu0 0.0
      %3515 = vmatprep.subr.mxu0 0.0
      %3516 = vmatpush1.msra.mxu0 0.0
      %3517 = vmatprep.subr.mxu0 0.0
      %3518 = vmatpush1.msra.mxu0 0.0
      %3519 = vmatprep.subr.mxu0 0.0
      %3520 = vmatpush1.msra.mxu0 0.0
      %3521 = vmatprep.subr.mxu0 0.0
      %3522 = vmatpush1.msra.mxu0 0.0
      %3523 = vmatprep.subr.mxu0 0.0
      %3524 = vmatpush1.msra.mxu0 0.0
      %3525 = vmatprep.subr.mxu0 0.0
      %3526 = vmatpush1.msra.mxu0 0.0
      %3527 = vmatprep.subr.mxu0 0.0
      %3528 = vmatpush1.msra.mxu0 0.0
      %3529 = vmatprep.subr.mxu0 0.0
      %3530 = vmatpush1.msra.mxu0 0.0
      %3531 = vmatprep.subr.mxu0 0.0
      %3532 = vmatpush1.msra.mxu0 0.0
      %3533 = vmatprep.subr.mxu0 0.0
      %3534 = vmatpush1.msra.mxu0 0.0
      %3535 = vmatprep.subr.mxu0 0.0
      %3536 = vmatpush1.msra.mxu0 0.0
      %3537 = vmatprep.subr.mxu0 0.0
      %3538 = vmatpush1.msra.mxu0 0.0
      %3539 = vmatprep.subr.mxu0 0.0
      %3540 = vmatpush1.msra.mxu0 0.0
      %3541 = vmatprep.subr.mxu0 0.0
      %3542 = vmatpush1.msra.mxu0 0.0
      %3543 = vmatprep.subr.mxu0 0.0
      %3544 = vmatpush1.msra.mxu0 0.0
      %3545 = vmatprep.subr.mxu0 0.0
      %3546 = vmatpush1.msra.mxu0 0.0
      %3547 = vmatprep.subr.mxu0 0.0
      %3548 = vmatpush1.msra.mxu0 0.0
      %3549 = vmatprep.subr.mxu0 0.0
      %3550 = vmatpush1.msra.mxu0 0.0
      %3551 = vmatprep.subr.mxu0 0.0
      %3552 = vmatpush1.msra.mxu0 0.0
      %3553 = vmatprep.subr.mxu0 0.0
      %3554 = vmatpush1.msra.mxu0 0.0
      %3555 = vmatprep.subr.mxu0 0.0
      %3556 = vmatpush1.msra.mxu0 0.0
      %3557 = vmatprep.subr.mxu0 0.0
      %3558 = vmatpush1.msra.mxu0 0.0
      %3559 = vmatprep.subr.mxu0 0.0
      %3560 = vmatpush1.msra.mxu0 0.0
      %3561 = vmatprep.subr.mxu0 0.0
      %3562 = vmatpush1.msra.mxu0 0.0
      %3563 = vmatprep.subr.mxu0 0.0
      %3564 = vmatpush1.msra.mxu0 0.0
      %3565 = vmatprep.mubr.f32.mxu0 0.0
      %3566 = vmatmul.mubr.f32.gmra.mrb[0].mxu0 %v3499
      %v3567 = vpop.f32.mrb[0].mxu0
      %v3568 = vadd.f32 0.0, %v3567
      %v3569 = vpop.f32.mrb[0].mxu0
      %3570 = vdwg.mxu0
      %3571 = vst.msk [vmem:[#allocation4] sm:$0xff] %vm142, %v3568
    $region113: #{seq2seq_forward.1} parent=1 // pred_fallthru
      _
    %v3572 = vld [vmem:[#allocation4] sm:$0xff]
    %v3573 = vpack.c.bf16 %v3572, %v3572
    %v3575 = vsel %vm142, %v3573, 0
    %3577 = vmatprep.subr.bf16.mxu0 %v2787
    %3578 = vmatpush1.bf16.msra.mxu0 %v2786
    %3579 = vmatprep.subr.bf16.mxu0 0
    %3580 = vmatpush1.bf16.msra.mxu0 0
    %3581 = vmatprep.subr.bf16.mxu0 0
    %3582 = vmatpush1.bf16.msra.mxu0 0
    %3583 = vmatprep.subr.bf16.mxu0 0
    %3584 = vmatpush1.bf16.msra.mxu0 0
    %3585 = vmatprep.subr.bf16.mxu0 0
    %3586 = vmatpush1.bf16.msra.mxu0 0
    %3587 = vmatprep.subr.bf16.mxu0 0
    %3588 = vmatpush1.bf16.msra.mxu0 0
    %3589 = vmatprep.subr.bf16.mxu0 0
    %3590 = vmatpush1.bf16.msra.mxu0 0
    %3591 = vmatprep.subr.bf16.mxu0 0
    %3592 = vmatpush1.bf16.msra.mxu0 0
    %3593 = vmatprep.subr.bf16.mxu0 0
    %3594 = vmatpush1.bf16.msra.mxu0 0
    %3595 = vmatprep.subr.bf16.mxu0 0
    %3596 = vmatpush1.bf16.msra.mxu0 0
    %3597 = vmatprep.subr.bf16.mxu0 0
    %3598 = vmatpush1.bf16.msra.mxu0 0
    %3599 = vmatprep.subr.bf16.mxu0 0
    %3600 = vmatpush1.bf16.msra.mxu0 0
    %3601 = vmatprep.subr.bf16.mxu0 0
    %3602 = vmatpush1.bf16.msra.mxu0 0
    %3603 = vmatprep.subr.bf16.mxu0 0
    %3604 = vmatpush1.bf16.msra.mxu0 0
    %3605 = vmatprep.subr.bf16.mxu0 0
    %3606 = vmatpush1.bf16.msra.mxu0 0
    %3607 = vmatprep.subr.bf16.mxu0 0
    %3608 = vmatpush1.bf16.msra.mxu0 0
    %3609 = vmatprep.mubr.bf16.mxu0 0
    %3610 = vmatmul.mubr.bf16.gmra.mrb[0].mxu0 %v3575
    %v3611 = vpop.f32.mrb[0].mxu0
    %v3612 = vadd.f32 %v2635, %v3611
    %v3613 = vpop.f32.mrb[0].mxu0
    %v3614 = vadd.f32 %v2639, %v3613
    %v3615 = vpop.f32.mrb[0].mxu0
    %v3616 = vpop.f32.mrb[0].mxu0
    %3617 = vdwg.mxu0
    %3618 = vmatprep.subr.bf16.mxu0 %v2860
    %3619 = vmatpush1.bf16.msra.mxu0 %v2859
    %3620 = vmatprep.subr.bf16.mxu0 %v2862
    %3621 = vmatpush1.bf16.msra.mxu0 %v2861
    %3622 = vmatprep.subr.bf16.mxu0 %v2864
    %3623 = vmatpush1.bf16.msra.mxu0 %v2863
    %3624 = vmatprep.subr.bf16.mxu0 %v2866
    %3625 = vmatpush1.bf16.msra.mxu0 %v2865
    %3626 = vmatprep.subr.bf16.mxu0 0
    %3627 = vmatpush1.bf16.msra.mxu0 0
    %3628 = vmatprep.subr.bf16.mxu0 0
    %3629 = vmatpush1.bf16.msra.mxu0 0
    %3630 = vmatprep.subr.bf16.mxu0 0
    %3631 = vmatpush1.bf16.msra.mxu0 0
    %3632 = vmatprep.subr.bf16.mxu0 0
    %3633 = vmatpush1.bf16.msra.mxu0 0
    %3634 = vmatprep.subr.bf16.mxu0 0
    %3635 = vmatpush1.bf16.msra.mxu0 0
    %3636 = vmatprep.subr.bf16.mxu0 0
    %3637 = vmatpush1.bf16.msra.mxu0 0
    %3638 = vmatprep.subr.bf16.mxu0 0
    %3639 = vmatpush1.bf16.msra.mxu0 0
    %3640 = vmatprep.subr.bf16.mxu0 0
    %3641 = vmatpush1.bf16.msra.mxu0 0
    %3642 = vmatprep.subr.bf16.mxu0 0
    %3643 = vmatpush1.bf16.msra.mxu0 0
    %3644 = vmatprep.subr.bf16.mxu0 0
    %3645 = vmatpush1.bf16.msra.mxu0 0
    %3646 = vmatprep.subr.bf16.mxu0 0
    %3647 = vmatpush1.bf16.msra.mxu0 0
    %3648 = vmatprep.subr.bf16.mxu0 0
    %3649 = vmatpush1.bf16.msra.mxu0 0
    %3650 = vmatprep.mubr.bf16.mxu0 0
    %3651 = vmatmul.mubr.bf16.gmra.mrb[0].mxu0 %v2986
    %v3652 = vpop.f32.mrb[0].mxu0
    %v3653 = vadd.f32 %v2647, %v3652
    %v3654 = vpop.f32.mrb[0].mxu0
    %v3655 = vadd.f32 %v2651, %v3654
    %v3656 = vpop.f32.mrb[0].mxu0
    %v3657 = vpop.f32.mrb[0].mxu0
    %3658 = vdwg.mxu0
    %v3659 = vadd.f32 %v3612, %v3653
    %v3660 = vxor.u32 %v3659, 2147483648
    %v3661 = vmul.f32 %v3660, 1.442695
    %v3662 = vpow.pop %v3661
    %v3663 = vadd.f32 %v3662, 1.0
    %v3664 = vrcp.pop %v3663
    %v3665 = vmul.f32 1.0, %v3664
    %v3666 = vmul.f32 %v3665, %v3655
    %v3667 = vadd.f32 %v3614, %v3666
    %v3668 = vtanh.pop %v3667
    %v3669 = vsub.f32 1.0, %v3665
    %3671 = vrot.lane.b32.xlu0 %v3668, 64
    %v3672 = vpop.permute.xlu0 %3671
    %v3674 = vmul.f32 %v3669, %v3672
    %v3675 = vmul.f32 %v3665, %v2940
    %v3676 = vadd.f32 %v3674, %v3675
    %v3677 = vpack.c.bf16 %v3676, %v3676
    %3679 = vrot.lane.b32.xlu0 %v3677, 64
    %v3680 = vpop.permute.xlu0 %3679
    %v3682 = vsel %vm279, %v3680, 0
    %3684 = vmatprep.subr.bf16.mxu0 %v2970
    %3685 = vmatpush1.bf16.msra.mxu0 %v2969
    %3686 = vmatprep.subr.bf16.mxu0 %v2972
    %3687 = vmatpush1.bf16.msra.mxu0 %v2971
    %3688 = vmatprep.subr.bf16.mxu0 %v2974
    %3689 = vmatpush1.bf16.msra.mxu0 %v2973
    %3690 = vmatprep.subr.bf16.mxu0 %v2976
    %3691 = vmatpush1.bf16.msra.mxu0 %v2975
    %3692 = vmatprep.subr.bf16.mxu0 0
    %3693 = vmatpush1.bf16.msra.mxu0 0
    %3694 = vmatprep.subr.bf16.mxu0 0
    %3695 = vmatpush1.bf16.msra.mxu0 0
    %3696 = vmatprep.subr.bf16.mxu0 0
    %3697 = vmatpush1.bf16.msra.mxu0 0
    %3698 = vmatprep.subr.bf16.mxu0 0
    %3699 = vmatpush1.bf16.msra.mxu0 0
    %3700 = vmatprep.subr.bf16.mxu0 0
    %3701 = vmatpush1.bf16.msra.mxu0 0
    %3702 = vmatprep.subr.bf16.mxu0 0
    %3703 = vmatpush1.bf16.msra.mxu0 0
    %3704 = vmatprep.subr.bf16.mxu0 0
    %3705 = vmatpush1.bf16.msra.mxu0 0
    %3706 = vmatprep.subr.bf16.mxu0 0
    %3707 = vmatpush1.bf16.msra.mxu0 0
    %3708 = vmatprep.subr.bf16.mxu0 0
    %3709 = vmatpush1.bf16.msra.mxu0 0
    %3710 = vmatprep.subr.bf16.mxu0 0
    %3711 = vmatpush1.bf16.msra.mxu0 0
    %3712 = vmatprep.subr.bf16.mxu0 0
    %3713 = vmatpush1.bf16.msra.mxu0 0
    %3714 = vmatprep.subr.bf16.mxu0 0
    %3715 = vmatpush1.bf16.msra.mxu0 0
    %3716 = vmatprep.mubr.bf16.mxu0 0
    %3717 = vmatmul.mubr.bf16.gmra.mrb[0].mxu0 %v3682
    %v3718 = vpop.f32.mrb[0].mxu0
    %v3719 = vadd.f32 %v2675, %v3718
    %v3720 = vpop.f32.mrb[0].mxu0
    %v3721 = vadd.f32 %v2679, %v3720
    %v3722 = vpop.f32.mrb[0].mxu0
    %v3723 = vpop.f32.mrb[0].mxu0
    %3724 = vdwg.mxu0
    %3725 = vmatprep.subr.bf16.mxu0 %v3055
    %3726 = vmatpush1.bf16.msra.mxu0 %v3054
    %3727 = vmatprep.subr.bf16.mxu0 %v3057
    %3728 = vmatpush1.bf16.msra.mxu0 %v3056
    %3729 = vmatprep.subr.bf16.mxu0 %v3059
    %3730 = vmatpush1.bf16.msra.mxu0 %v3058
    %3731 = vmatprep.subr.bf16.mxu0 %v3061
    %3732 = vmatpush1.bf16.msra.mxu0 %v3060
    %3733 = vmatprep.subr.bf16.mxu0 0
    %3734 = vmatpush1.bf16.msra.mxu0 0
    %3735 = vmatprep.subr.bf16.mxu0 0
    %3736 = vmatpush1.bf16.msra.mxu0 0
    %3737 = vmatprep.subr.bf16.mxu0 0
    %3738 = vmatpush1.bf16.msra.mxu0 0
    %3739 = vmatprep.subr.bf16.mxu0 0
    %3740 = vmatpush1.bf16.msra.mxu0 0
    %3741 = vmatprep.subr.bf16.mxu0 0
    %3742 = vmatpush1.bf16.msra.mxu0 0
    %3743 = vmatprep.subr.bf16.mxu0 0
    %3744 = vmatpush1.bf16.msra.mxu0 0
    %3745 = vmatprep.subr.bf16.mxu0 0
    %3746 = vmatpush1.bf16.msra.mxu0 0
    %3747 = vmatprep.subr.bf16.mxu0 0
    %3748 = vmatpush1.bf16.msra.mxu0 0
    %3749 = vmatprep.subr.bf16.mxu0 0
    %3750 = vmatpush1.bf16.msra.mxu0 0
    %3751 = vmatprep.subr.bf16.mxu0 0
    %3752 = vmatpush1.bf16.msra.mxu0 0
    %3753 = vmatprep.subr.bf16.mxu0 0
    %3754 = vmatpush1.bf16.msra.mxu0 0
    %3755 = vmatprep.subr.bf16.mxu0 0
    %3756 = vmatpush1.bf16.msra.mxu0 0
    %3757 = vmatprep.mubr.bf16.mxu0 0
    %3758 = vmatmul.mubr.bf16.gmra.mrb[0].mxu0 %v3165
    %v3759 = vpop.f32.mrb[0].mxu0
    %v3760 = vadd.f32 %v2687, %v3759
    %v3761 = vpop.f32.mrb[0].mxu0
    %v3762 = vadd.f32 %v2691, %v3761
    %v3763 = vpop.f32.mrb[0].mxu0
    %v3764 = vpop.f32.mrb[0].mxu0
    %3765 = vdwg.mxu0
    %v3766 = vadd.f32 %v3719, %v3760
    %v3767 = vxor.u32 %v3766, 2147483648
    %v3768 = vmul.f32 %v3767, 1.442695
    %v3769 = vpow.pop %v3768
    %v3770 = vadd.f32 %v3769, 1.0
    %v3771 = vrcp.pop %v3770
    %v3772 = vmul.f32 1.0, %v3771
    %v3773 = vmul.f32 %v3772, %v3762
    %v3774 = vadd.f32 %v3721, %v3773
    %v3775 = vtanh.pop %v3774
    %v3776 = vsub.f32 1.0, %v3772
    %3778 = vrot.lane.b32.xlu0 %v3775, 64
    %v3779 = vpop.permute.xlu0 %3778
    %v3781 = vmul.f32 %v3776, %v3779
    %v3782 = vmul.f32 %v3772, %v3135
    %v3783 = vadd.f32 %v3781, %v3782
    %v3784 = vpack.c.bf16 %v3783, %v3783
    %3786 = vrot.lane.b32.xlu0 %v3784, 64
    %v3787 = vpop.permute.xlu0 %3786
    %v3789 = vsel %vm279, %v3787, 0
    %3791 = vmatprep.subr.bf16.mxu0 0
    %3792 = vmatpush1.bf16.msra.mxu0 %v3156
    %3793 = vmatprep.subr.bf16.mxu0 0
    %3794 = vmatpush1.bf16.msra.mxu0 %v3157
    %3795 = vmatprep.subr.bf16.mxu0 0
    %3796 = vmatpush1.bf16.msra.mxu0 %v3158
    %3797 = vmatprep.subr.bf16.mxu0 0
    %3798 = vmatpush1.bf16.msra.mxu0 %v3159
    %3799 = vmatprep.subr.bf16.mxu0 0
    %3800 = vmatpush1.bf16.msra.mxu0 0
    %3801 = vmatprep.subr.bf16.mxu0 0
    %3802 = vmatpush1.bf16.msra.mxu0 0
    %3803 = vmatprep.subr.bf16.mxu0 0
    %3804 = vmatpush1.bf16.msra.mxu0 0
    %3805 = vmatprep.subr.bf16.mxu0 0
    %3806 = vmatpush1.bf16.msra.mxu0 0
    %3807 = vmatprep.subr.bf16.mxu0 0
    %3808 = vmatpush1.bf16.msra.mxu0 0
    %3809 = vmatprep.subr.bf16.mxu0 0
    %3810 = vmatpush1.bf16.msra.mxu0 0
    %3811 = vmatprep.subr.bf16.mxu0 0
    %3812 = vmatpush1.bf16.msra.mxu0 0
    %3813 = vmatprep.subr.bf16.mxu0 0
    %3814 = vmatpush1.bf16.msra.mxu0 0
    %3815 = vmatprep.subr.bf16.mxu0 0
    %3816 = vmatpush1.bf16.msra.mxu0 0
    %3817 = vmatprep.subr.bf16.mxu0 0
    %3818 = vmatpush1.bf16.msra.mxu0 0
    %3819 = vmatprep.subr.bf16.mxu0 0
    %3820 = vmatpush1.bf16.msra.mxu0 0
    %3821 = vmatprep.subr.bf16.mxu0 0
    %3822 = vmatpush1.bf16.msra.mxu0 0
    %3823 = vmatprep.mubr.bf16.mxu0 0
    %3824 = vmatmul.mubr.bf16.gmra.mrb[0].mxu0 %v3789
    %v3825 = vpop.f32.mrb[0].mxu0
    %v3826 = vadd.f32 %v2707, %v3825
    %v3827 = vpop.f32.mrb[0].mxu0
    %v3828 = vpop.f32.mrb[0].mxu0
    %v3829 = vpop.f32.mrb[0].mxu0
    %3830 = vdwg.mxu0
    %v3831 = vpack.c.bf16 %v3826, %v3826
    %3832 = vmatprep.subr.bf16.mxu0 %v3257
    %3833 = vmatpush1.bf16.msra.mxu0 %v3256
    %3834 = vmatprep.subr.bf16.mxu0 %v3259
    %3835 = vmatpush1.bf16.msra.mxu0 %v3258
    %3836 = vmatprep.subr.bf16.mxu0 %v3261
    %3837 = vmatpush1.bf16.msra.mxu0 %v3260
    %3838 = vmatprep.subr.bf16.mxu0 %v3263
    %3839 = vmatpush1.bf16.msra.mxu0 %v3262
    %3840 = vmatprep.subr.bf16.mxu0 %v3265
    %3841 = vmatpush1.bf16.msra.mxu0 %v3264
    %3842 = vmatprep.subr.bf16.mxu0 %v3267
    %3843 = vmatpush1.bf16.msra.mxu0 %v3266
    %3844 = vmatprep.subr.bf16.mxu0 %v3269
    %3845 = vmatpush1.bf16.msra.mxu0 %v3268
    %3846 = vmatprep.subr.bf16.mxu0 %v3271
    %3847 = vmatpush1.bf16.msra.mxu0 %v3270
    %3848 = vmatprep.subr.bf16.mxu0 0
    %3849 = vmatpush1.bf16.msra.mxu0 0
    %3850 = vmatprep.subr.bf16.mxu0 0
    %3851 = vmatpush1.bf16.msra.mxu0 0
    %3852 = vmatprep.subr.bf16.mxu0 0
    %3853 = vmatpush1.bf16.msra.mxu0 0
    %3854 = vmatprep.subr.bf16.mxu0 0
    %3855 = vmatpush1.bf16.msra.mxu0 0
    %3856 = vmatprep.subr.bf16.mxu0 0
    %3857 = vmatpush1.bf16.msra.mxu0 0
    %3858 = vmatprep.subr.bf16.mxu0 0
    %3859 = vmatpush1.bf16.msra.mxu0 0
    %3860 = vmatprep.subr.bf16.mxu0 0
    %3861 = vmatpush1.bf16.msra.mxu0 0
    %3862 = vmatprep.subr.bf16.mxu0 0
    %3863 = vmatpush1.bf16.msra.mxu0 0
    %3864 = vmatprep.mubr.bf16.mxu0 0
    %3865 = vmatmul.mubr.bf16.gmra.mrb[0].mxu0 %v3831
    %v3866 = vpop.f32.mrb[0].mxu0
    %v3867 = vadd.f32 %v2730, %v3866
    %v3868 = vpop.f32.mrb[0].mxu0
    %v3869 = vadd.f32 %v2734, %v3868
    %v3870 = vpop.f32.mrb[0].mxu0
    %v3871 = vpop.f32.mrb[0].mxu0
    %3872 = vdwg.mxu0
    %v3873 = vpack.c.bf16 %v3867, %v3867
    %v3874 = vpack.c.bf16 %v3869, %v3869
    %3875 = vmatprep.subr.bf16.mxu0 0
    %3876 = vmatpush1.bf16.msra.mxu0 %v3395
    %3877 = vmatprep.subr.bf16.mxu0 0
    %3878 = vmatpush1.bf16.msra.mxu0 %v3396
    %3879 = vmatprep.subr.bf16.mxu0 0
    %3880 = vmatpush1.bf16.msra.mxu0 %v3397
    %3881 = vmatprep.subr.bf16.mxu0 0
    %3882 = vmatpush1.bf16.msra.mxu0 %v3398
    %3883 = vmatprep.subr.bf16.mxu0 0
    %3884 = vmatpush1.bf16.msra.mxu0 %v3399
    %3885 = vmatprep.subr.bf16.mxu0 0
    %3886 = vmatpush1.bf16.msra.mxu0 %v3400
    %3887 = vmatprep.subr.bf16.mxu0 0
    %3888 = vmatpush1.bf16.msra.mxu0 %v3401
    %3889 = vmatprep.subr.bf16.mxu0 0
    %3890 = vmatpush1.bf16.msra.mxu0 %v3402
    %3891 = vmatprep.subr.bf16.mxu0 0
    %3892 = vmatpush1.bf16.msra.mxu0 %v3403
    %3893 = vmatprep.subr.bf16.mxu0 0
    %3894 = vmatpush1.bf16.msra.mxu0 %v3404
    %3895 = vmatprep.subr.bf16.mxu0 0
    %3896 = vmatpush1.bf16.msra.mxu0 %v3405
    %3897 = vmatprep.subr.bf16.mxu0 0
    %3898 = vmatpush1.bf16.msra.mxu0 %v3406
    %3899 = vmatprep.subr.bf16.mxu0 0
    %3900 = vmatpush1.bf16.msra.mxu0 %v3407
    %3901 = vmatprep.subr.bf16.mxu0 0
    %3902 = vmatpush1.bf16.msra.mxu0 %v3408
    %3903 = vmatprep.subr.bf16.mxu0 0
    %3904 = vmatpush1.bf16.msra.mxu0 %v3409
    %3905 = vmatprep.subr.bf16.mxu0 0
    %3906 = vmatpush1.bf16.msra.mxu0 %v3410
    %3907 = vmatprep.mubr.bf16.mxu0 %v3874
    %3908 = vmatmul.mubr.bf16.gmra.mrb[0].mxu0 %v3873
    %v3909 = vpop.f32.mrb[0].mxu0
    %v3910 = vadd.f32 %v2774, %v3909
    %v3911 = vpop.f32.mrb[0].mxu0
    %v3912 = vpop.f32.mrb[0].mxu0
    %v3913 = vpop.f32.mrb[0].mxu0
    %3914 = vdwg.mxu0
    %s3915 = scalar_lea.vmem %s26, 16
    %3916 = vst [vmem:[%s3915] sm:$0xff] %v3910
    %3917 = vst.msk [vmem:[#allocation4] sm:$0xff] %vm142, %v2593
    %s3918 = sld [smem:[#allocation5 + $0x2]]
    %p3919 = scmp.eq.s32.totalorder %s3918, 0
    // Predicated region
    $region114: #{seq2seq_forward.1} parent=1 // pred_check
      %p3920 = pneg %p3919
    $region115: #{seq2seq_forward.1} parent=1 // pred_check_branch
      %3922 = sbr.rel (%p3920) target = $region117
    $region116: #{seq2seq_forward.1} parent=1 // pred_region
      %3923 = vmax.xlane.f32.xlu0 %v3910
      %v3924 = vpop.xlane.xlu0 %3923
      %v3925 = vlaneseq
      %v3926 = vand.u32 %v3925, 127
      %vm3927 = vcmp.ge.f32.partialorder %v3910, %v3924
      %v3928 = vsel %vm3927, %v3926, 128
      %v3929 = vand.u32 %v3928, 65535
      %v3930 = vshra.s32 %v3928, 16
      %v3931 = vcvt.s32.f32 %v3929
      %v3932 = vcvt.s32.f32 %v3930
      %3933 = vmin.xlane.f32.xlu0 %v3932
      %v3934 = vpop.xlane.xlu0 %3933
      %vm3935 = vcmp.eq.f32.partialorder %v3932, %v3934
      %v3936 = vsel %vm3935, %v3931, inf
      %3937 = vmin.xlane.f32.xlu0 %v3936
      %v3938 = vpop.xlane.xlu0 %3937
      %v3939 = vcvt.f32.s32 %v3938
      %v3940 = vcvt.f32.s32 %v3934
      %v3941 = vshll.u32 %v3940, 16
      %v3942 = vadd.s32 %v3941, %v3939
      %vm3943 = vcmp.eq.s32.totalorder %v3942, %v3926
      %v3944 = vsel %vm3943, 1, 0
      %v3945 = vcvt.s32.f32 %v3944
      %v3947 = vsel %vm2487, %v3945, 0
      %3949 = vmatprep.subr.mxu0 0.0
      %3950 = vmatpush1.msra.mxu0 %v2477
      %3951 = vmatprep.subr.mxu0 0.0
      %3952 = vmatpush1.msra.mxu0 %v2514
      %3953 = vmatprep.subr.mxu0 0.0
      %3954 = vmatpush1.msra.mxu0 0.0
      %3955 = vmatprep.subr.mxu0 0.0
      %3956 = vmatpush1.msra.mxu0 0.0
      %3957 = vmatprep.subr.mxu0 0.0
      %3958 = vmatpush1.msra.mxu0 0.0
      %3959 = vmatprep.subr.mxu0 0.0
      %3960 = vmatpush1.msra.mxu0 0.0
      %3961 = vmatprep.subr.mxu0 0.0
      %3962 = vmatpush1.msra.mxu0 0.0
      %3963 = vmatprep.subr.mxu0 0.0
      %3964 = vmatpush1.msra.mxu0 0.0
      %3965 = vmatprep.subr.mxu0 0.0
      %3966 = vmatpush1.msra.mxu0 0.0
      %3967 = vmatprep.subr.mxu0 0.0
      %3968 = vmatpush1.msra.mxu0 0.0
      %3969 = vmatprep.subr.mxu0 0.0
      %3970 = vmatpush1.msra.mxu0 0.0
      %3971 = vmatprep.subr.mxu0 0.0
      %3972 = vmatpush1.msra.mxu0 0.0
      %3973 = vmatprep.subr.mxu0 0.0
      %3974 = vmatpush1.msra.mxu0 0.0
      %3975 = vmatprep.subr.mxu0 0.0
      %3976 = vmatpush1.msra.mxu0 0.0
      %3977 = vmatprep.subr.mxu0 0.0
      %3978 = vmatpush1.msra.mxu0 0.0
      %3979 = vmatprep.subr.mxu0 0.0
      %3980 = vmatpush1.msra.mxu0 0.0
      %3981 = vmatprep.subr.mxu0 0.0
      %3982 = vmatpush1.msra.mxu0 0.0
      %3983 = vmatprep.subr.mxu0 0.0
      %3984 = vmatpush1.msra.mxu0 0.0
      %3985 = vmatprep.subr.mxu0 0.0
      %3986 = vmatpush1.msra.mxu0 0.0
      %3987 = vmatprep.subr.mxu0 0.0
      %3988 = vmatpush1.msra.mxu0 0.0
      %3989 = vmatprep.subr.mxu0 0.0
      %3990 = vmatpush1.msra.mxu0 0.0
      %3991 = vmatprep.subr.mxu0 0.0
      %3992 = vmatpush1.msra.mxu0 0.0
      %3993 = vmatprep.subr.mxu0 0.0
      %3994 = vmatpush1.msra.mxu0 0.0
      %3995 = vmatprep.subr.mxu0 0.0
      %3996 = vmatpush1.msra.mxu0 0.0
      %3997 = vmatprep.subr.mxu0 0.0
      %3998 = vmatpush1.msra.mxu0 0.0
      %3999 = vmatprep.subr.mxu0 0.0
      %4000 = vmatpush1.msra.mxu0 0.0
      %4001 = vmatprep.subr.mxu0 0.0
      %4002 = vmatpush1.msra.mxu0 0.0
      %4003 = vmatprep.subr.mxu0 0.0
      %4004 = vmatpush1.msra.mxu0 0.0
      %4005 = vmatprep.subr.mxu0 0.0
      %4006 = vmatpush1.msra.mxu0 0.0
      %4007 = vmatprep.subr.mxu0 0.0
      %4008 = vmatpush1.msra.mxu0 0.0
      %4009 = vmatprep.subr.mxu0 0.0
      %4010 = vmatpush1.msra.mxu0 0.0
      %4011 = vmatprep.subr.mxu0 0.0
      %4012 = vmatpush1.msra.mxu0 0.0
      %4013 = vmatprep.mubr.f32.mxu0 0.0
      %4014 = vmatmul.mubr.f32.gmra.mrb[0].mxu0 %v3947
      %v4015 = vpop.f32.mrb[0].mxu0
      %v4016 = vadd.f32 0.0, %v4015
      %v4017 = vpop.f32.mrb[0].mxu0
      %4018 = vdwg.mxu0
      %4019 = vst.msk [vmem:[#allocation4] sm:$0xff] %vm142, %v4016
    $region117: #{seq2seq_forward.1} parent=1 // pred_fallthru
      _
    %v4020 = vld [vmem:[#allocation4] sm:$0xff]
    %v4021 = vpack.c.bf16 %v4020, %v4020
    %v4023 = vsel %vm142, %v4021, 0
    %4025 = vmatprep.subr.bf16.mxu0 %v2787
    %4026 = vmatpush1.bf16.msra.mxu0 %v2786
    %4027 = vmatprep.subr.bf16.mxu0 0
    %4028 = vmatpush1.bf16.msra.mxu0 0
    %4029 = vmatprep.subr.bf16.mxu0 0
    %4030 = vmatpush1.bf16.msra.mxu0 0
    %4031 = vmatprep.subr.bf16.mxu0 0
    %4032 = vmatpush1.bf16.msra.mxu0 0
    %4033 = vmatprep.subr.bf16.mxu0 0
    %4034 = vmatpush1.bf16.msra.mxu0 0
    %4035 = vmatprep.subr.bf16.mxu0 0
    %4036 = vmatpush1.bf16.msra.mxu0 0
    %4037 = vmatprep.subr.bf16.mxu0 0
    %4038 = vmatpush1.bf16.msra.mxu0 0
    %4039 = vmatprep.subr.bf16.mxu0 0
    %4040 = vmatpush1.bf16.msra.mxu0 0
    %4041 = vmatprep.subr.bf16.mxu0 0
    %4042 = vmatpush1.bf16.msra.mxu0 0
    %4043 = vmatprep.subr.bf16.mxu0 0
    %4044 = vmatpush1.bf16.msra.mxu0 0
    %4045 = vmatprep.subr.bf16.mxu0 0
    %4046 = vmatpush1.bf16.msra.mxu0 0
    %4047 = vmatprep.subr.bf16.mxu0 0
    %4048 = vmatpush1.bf16.msra.mxu0 0
    %4049 = vmatprep.subr.bf16.mxu0 0
    %4050 = vmatpush1.bf16.msra.mxu0 0
    %4051 = vmatprep.subr.bf16.mxu0 0
    %4052 = vmatpush1.bf16.msra.mxu0 0
    %4053 = vmatprep.subr.bf16.mxu0 0
    %4054 = vmatpush1.bf16.msra.mxu0 0
    %4055 = vmatprep.subr.bf16.mxu0 0
    %4056 = vmatpush1.bf16.msra.mxu0 0
    %4057 = vmatprep.mubr.bf16.mxu0 0
    %4058 = vmatmul.mubr.bf16.gmra.mrb[0].mxu0 %v4023
    %v4059 = vpop.f32.mrb[0].mxu0
    %v4060 = vadd.f32 %v2635, %v4059
    %v4061 = vpop.f32.mrb[0].mxu0
    %v4062 = vadd.f32 %v2639, %v4061
    %v4063 = vpop.f32.mrb[0].mxu0
    %v4064 = vpop.f32.mrb[0].mxu0
    %4065 = vdwg.mxu0
    %4066 = vmatprep.subr.bf16.mxu0 %v2860
    %4067 = vmatpush1.bf16.msra.mxu0 %v2859
    %4068 = vmatprep.subr.bf16.mxu0 %v2862
    %4069 = vmatpush1.bf16.msra.mxu0 %v2861
    %4070 = vmatprep.subr.bf16.mxu0 %v2864
    %4071 = vmatpush1.bf16.msra.mxu0 %v2863
    %4072 = vmatprep.subr.bf16.mxu0 %v2866
    %4073 = vmatpush1.bf16.msra.mxu0 %v2865
    %4074 = vmatprep.subr.bf16.mxu0 0
    %4075 = vmatpush1.bf16.msra.mxu0 0
    %4076 = vmatprep.subr.bf16.mxu0 0
    %4077 = vmatpush1.bf16.msra.mxu0 0
    %4078 = vmatprep.subr.bf16.mxu0 0
    %4079 = vmatpush1.bf16.msra.mxu0 0
    %4080 = vmatprep.subr.bf16.mxu0 0
    %4081 = vmatpush1.bf16.msra.mxu0 0
    %4082 = vmatprep.subr.bf16.mxu0 0
    %4083 = vmatpush1.bf16.msra.mxu0 0
    %4084 = vmatprep.subr.bf16.mxu0 0
    %4085 = vmatpush1.bf16.msra.mxu0 0
    %4086 = vmatprep.subr.bf16.mxu0 0
    %4087 = vmatpush1.bf16.msra.mxu0 0
    %4088 = vmatprep.subr.bf16.mxu0 0
    %4089 = vmatpush1.bf16.msra.mxu0 0
    %4090 = vmatprep.subr.bf16.mxu0 0
    %4091 = vmatpush1.bf16.msra.mxu0 0
    %4092 = vmatprep.subr.bf16.mxu0 0
    %4093 = vmatpush1.bf16.msra.mxu0 0
    %4094 = vmatprep.subr.bf16.mxu0 0
    %4095 = vmatpush1.bf16.msra.mxu0 0
    %4096 = vmatprep.subr.bf16.mxu0 0
    %4097 = vmatpush1.bf16.msra.mxu0 0
    %4098 = vmatprep.mubr.bf16.mxu0 0
    %4099 = vmatmul.mubr.bf16.gmra.mrb[0].mxu0 %v3682
    %v4100 = vpop.f32.mrb[0].mxu0
    %v4101 = vadd.f32 %v2647, %v4100
    %v4102 = vpop.f32.mrb[0].mxu0
    %v4103 = vadd.f32 %v2651, %v4102
    %v4104 = vpop.f32.mrb[0].mxu0
    %v4105 = vpop.f32.mrb[0].mxu0
    %4106 = vdwg.mxu0
    %v4107 = vadd.f32 %v4060, %v4101
    %v4108 = vxor.u32 %v4107, 2147483648
    %v4109 = vmul.f32 %v4108, 1.442695
    %v4110 = vpow.pop %v4109
    %v4111 = vadd.f32 %v4110, 1.0
    %v4112 = vrcp.pop %v4111
    %v4113 = vmul.f32 1.0, %v4112
    %v4114 = vmul.f32 %v4113, %v4103
    %v4115 = vadd.f32 %v4062, %v4114
    %v4116 = vtanh.pop %v4115
    %v4117 = vsub.f32 1.0, %v4113
    %4119 = vrot.lane.b32.xlu0 %v4116, 64
    %v4120 = vpop.permute.xlu0 %4119
    %v4122 = vmul.f32 %v4117, %v4120
    %v4123 = vmul.f32 %v4113, %v3676
    %v4124 = vadd.f32 %v4122, %v4123
    %v4125 = vpack.c.bf16 %v4124, %v4124
    %4127 = vrot.lane.b32.xlu0 %v4125, 64
    %v4128 = vpop.permute.xlu0 %4127
    %v4130 = vsel %vm279, %v4128, 0
    %4132 = vmatprep.subr.bf16.mxu0 %v2970
    %4133 = vmatpush1.bf16.msra.mxu0 %v2969
    %4134 = vmatprep.subr.bf16.mxu0 %v2972
    %4135 = vmatpush1.bf16.msra.mxu0 %v2971
    %4136 = vmatprep.subr.bf16.mxu0 %v2974
    %4137 = vmatpush1.bf16.msra.mxu0 %v2973
    %4138 = vmatprep.subr.bf16.mxu0 %v2976
    %4139 = vmatpush1.bf16.msra.mxu0 %v2975
    %4140 = vmatprep.subr.bf16.mxu0 0
    %4141 = vmatpush1.bf16.msra.mxu0 0
    %4142 = vmatprep.subr.bf16.mxu0 0
    %4143 = vmatpush1.bf16.msra.mxu0 0
    %4144 = vmatprep.subr.bf16.mxu0 0
    %4145 = vmatpush1.bf16.msra.mxu0 0
    %4146 = vmatprep.subr.bf16.mxu0 0
    %4147 = vmatpush1.bf16.msra.mxu0 0
    %4148 = vmatprep.subr.bf16.mxu0 0
    %4149 = vmatpush1.bf16.msra.mxu0 0
    %4150 = vmatprep.subr.bf16.mxu0 0
    %4151 = vmatpush1.bf16.msra.mxu0 0
    %4152 = vmatprep.subr.bf16.mxu0 0
    %4153 = vmatpush1.bf16.msra.mxu0 0
    %4154 = vmatprep.subr.bf16.mxu0 0
    %4155 = vmatpush1.bf16.msra.mxu0 0
    %4156 = vmatprep.subr.bf16.mxu0 0
    %4157 = vmatpush1.bf16.msra.mxu0 0
    %4158 = vmatprep.subr.bf16.mxu0 0
    %4159 = vmatpush1.bf16.msra.mxu0 0
    %4160 = vmatprep.subr.bf16.mxu0 0
    %4161 = vmatpush1.bf16.msra.mxu0 0
    %4162 = vmatprep.subr.bf16.mxu0 0
    %4163 = vmatpush1.bf16.msra.mxu0 0
    %4164 = vmatprep.mubr.bf16.mxu0 0
    %4165 = vmatmul.mubr.bf16.gmra.mrb[0].mxu0 %v4130
    %v4166 = vpop.f32.mrb[0].mxu0
    %v4167 = vadd.f32 %v2675, %v4166
    %v4168 = vpop.f32.mrb[0].mxu0
    %v4169 = vadd.f32 %v2679, %v4168
    %v4170 = vpop.f32.mrb[0].mxu0
    %v4171 = vpop.f32.mrb[0].mxu0
    %4172 = vdwg.mxu0
    %4173 = vmatprep.subr.bf16.mxu0 %v3055
    %4174 = vmatpush1.bf16.msra.mxu0 %v3054
    %4175 = vmatprep.subr.bf16.mxu0 %v3057
    %4176 = vmatpush1.bf16.msra.mxu0 %v3056
    %4177 = vmatprep.subr.bf16.mxu0 %v3059
    %4178 = vmatpush1.bf16.msra.mxu0 %v3058
    %4179 = vmatprep.subr.bf16.mxu0 %v3061
    %4180 = vmatpush1.bf16.msra.mxu0 %v3060
    %4181 = vmatprep.subr.bf16.mxu0 0
    %4182 = vmatpush1.bf16.msra.mxu0 0
    %4183 = vmatprep.subr.bf16.mxu0 0
    %4184 = vmatpush1.bf16.msra.mxu0 0
    %4185 = vmatprep.subr.bf16.mxu0 0
    %4186 = vmatpush1.bf16.msra.mxu0 0
    %4187 = vmatprep.subr.bf16.mxu0 0
    %4188 = vmatpush1.bf16.msra.mxu0 0
    %4189 = vmatprep.subr.bf16.mxu0 0
    %4190 = vmatpush1.bf16.msra.mxu0 0
    %4191 = vmatprep.subr.bf16.mxu0 0
    %4192 = vmatpush1.bf16.msra.mxu0 0
    %4193 = vmatprep.subr.bf16.mxu0 0
    %4194 = vmatpush1.bf16.msra.mxu0 0
    %4195 = vmatprep.subr.bf16.mxu0 0
    %4196 = vmatpush1.bf16.msra.mxu0 0
    %4197 = vmatprep.subr.bf16.mxu0 0
    %4198 = vmatpush1.bf16.msra.mxu0 0
    %4199 = vmatprep.subr.bf16.mxu0 0
    %4200 = vmatpush1.bf16.msra.mxu0 0
    %4201 = vmatprep.subr.bf16.mxu0 0
    %4202 = vmatpush1.bf16.msra.mxu0 0
    %4203 = vmatprep.subr.bf16.mxu0 0
    %4204 = vmatpush1.bf16.msra.mxu0 0
    %4205 = vmatprep.mubr.bf16.mxu0 0
    %4206 = vmatmul.mubr.bf16.gmra.mrb[0].mxu0 %v3789
    %v4207 = vpop.f32.mrb[0].mxu0
    %v4208 = vadd.f32 %v2687, %v4207
    %v4209 = vpop.f32.mrb[0].mxu0
    %v4210 = vadd.f32 %v2691, %v4209
    %v4211 = vpop.f32.mrb[0].mxu0
    %v4212 = vpop.f32.mrb[0].mxu0
    %4213 = vdwg.mxu0
    %v4214 = vadd.f32 %v4167, %v4208
    %v4215 = vxor.u32 %v4214, 2147483648
    %v4216 = vmul.f32 %v4215, 1.442695
    %v4217 = vpow.pop %v4216
    %v4218 = vadd.f32 %v4217, 1.0
    %v4219 = vrcp.pop %v4218
    %v4220 = vmul.f32 1.0, %v4219
    %v4221 = vmul.f32 %v4220, %v4210
    %v4222 = vadd.f32 %v4169, %v4221
    %v4223 = vtanh.pop %v4222
    %v4224 = vsub.f32 1.0, %v4220
    %4226 = vrot.lane.b32.xlu0 %v4223, 64
    %v4227 = vpop.permute.xlu0 %4226
    %v4229 = vmul.f32 %v4224, %v4227
    %v4230 = vmul.f32 %v4220, %v3783
    %v4231 = vadd.f32 %v4229, %v4230
    %v4232 = vpack.c.bf16 %v4231, %v4231
    %4234 = vrot.lane.b32.xlu0 %v4232, 64
    %v4235 = vpop.permute.xlu0 %4234
    %v4237 = vsel %vm279, %v4235, 0
    %4239 = vmatprep.subr.bf16.mxu0 0
    %4240 = vmatpush1.bf16.msra.mxu0 %v3156
    %4241 = vmatprep.subr.bf16.mxu0 0
    %4242 = vmatpush1.bf16.msra.mxu0 %v3157
    %4243 = vmatprep.subr.bf16.mxu0 0
    %4244 = vmatpush1.bf16.msra.mxu0 %v3158
    %4245 = vmatprep.subr.bf16.mxu0 0
    %4246 = vmatpush1.bf16.msra.mxu0 %v3159
    %4247 = vmatprep.subr.bf16.mxu0 0
    %4248 = vmatpush1.bf16.msra.mxu0 0
    %4249 = vmatprep.subr.bf16.mxu0 0
    %4250 = vmatpush1.bf16.msra.mxu0 0
    %4251 = vmatprep.subr.bf16.mxu0 0
    %4252 = vmatpush1.bf16.msra.mxu0 0
    %4253 = vmatprep.subr.bf16.mxu0 0
    %4254 = vmatpush1.bf16.msra.mxu0 0
    %4255 = vmatprep.subr.bf16.mxu0 0
    %4256 = vmatpush1.bf16.msra.mxu0 0
    %4257 = vmatprep.subr.bf16.mxu0 0
    %4258 = vmatpush1.bf16.msra.mxu0 0
    %4259 = vmatprep.subr.bf16.mxu0 0
    %4260 = vmatpush1.bf16.msra.mxu0 0
    %4261 = vmatprep.subr.bf16.mxu0 0
    %4262 = vmatpush1.bf16.msra.mxu0 0
    %4263 = vmatprep.subr.bf16.mxu0 0
    %4264 = vmatpush1.bf16.msra.mxu0 0
    %4265 = vmatprep.subr.bf16.mxu0 0
    %4266 = vmatpush1.bf16.msra.mxu0 0
    %4267 = vmatprep.subr.bf16.mxu0 0
    %4268 = vmatpush1.bf16.msra.mxu0 0
    %4269 = vmatprep.subr.bf16.mxu0 0
    %4270 = vmatpush1.bf16.msra.mxu0 0
    %4271 = vmatprep.mubr.bf16.mxu0 0
    %4272 = vmatmul.mubr.bf16.gmra.mrb[0].mxu0 %v4237
    %v4273 = vpop.f32.mrb[0].mxu0
    %v4274 = vadd.f32 %v2707, %v4273
    %v4275 = vpop.f32.mrb[0].mxu0
    %v4276 = vpop.f32.mrb[0].mxu0
    %v4277 = vpop.f32.mrb[0].mxu0
    %4278 = vdwg.mxu0
    %v4279 = vpack.c.bf16 %v4274, %v4274
    %4280 = vmatprep.subr.bf16.mxu0 %v3257
    %4281 = vmatpush1.bf16.msra.mxu0 %v3256
    %4282 = vmatprep.subr.bf16.mxu0 %v3259
    %4283 = vmatpush1.bf16.msra.mxu0 %v3258
    %4284 = vmatprep.subr.bf16.mxu0 %v3261
    %4285 = vmatpush1.bf16.msra.mxu0 %v3260
    %4286 = vmatprep.subr.bf16.mxu0 %v3263
    %4287 = vmatpush1.bf16.msra.mxu0 %v3262
    %4288 = vmatprep.subr.bf16.mxu0 %v3265
    %4289 = vmatpush1.bf16.msra.mxu0 %v3264
    %4290 = vmatprep.subr.bf16.mxu0 %v3267
    %4291 = vmatpush1.bf16.msra.mxu0 %v3266
    %4292 = vmatprep.subr.bf16.mxu0 %v3269
    %4293 = vmatpush1.bf16.msra.mxu0 %v3268
    %4294 = vmatprep.subr.bf16.mxu0 %v3271
    %4295 = vmatpush1.bf16.msra.mxu0 %v3270
    %4296 = vmatprep.subr.bf16.mxu0 0
    %4297 = vmatpush1.bf16.msra.mxu0 0
    %4298 = vmatprep.subr.bf16.mxu0 0
    %4299 = vmatpush1.bf16.msra.mxu0 0
    %4300 = vmatprep.subr.bf16.mxu0 0
    %4301 = vmatpush1.bf16.msra.mxu0 0
    %4302 = vmatprep.subr.bf16.mxu0 0
    %4303 = vmatpush1.bf16.msra.mxu0 0
    %4304 = vmatprep.subr.bf16.mxu0 0
    %4305 = vmatpush1.bf16.msra.mxu0 0
    %4306 = vmatprep.subr.bf16.mxu0 0
    %4307 = vmatpush1.bf16.msra.mxu0 0
    %4308 = vmatprep.subr.bf16.mxu0 0
    %4309 = vmatpush1.bf16.msra.mxu0 0
    %4310 = vmatprep.subr.bf16.mxu0 0
    %4311 = vmatpush1.bf16.msra.mxu0 0
    %4312 = vmatprep.mubr.bf16.mxu0 0
    %4313 = vmatmul.mubr.bf16.gmra.mrb[0].mxu0 %v4279
    %v4314 = vpop.f32.mrb[0].mxu0
    %v4315 = vadd.f32 %v2730, %v4314
    %v4316 = vpop.f32.mrb[0].mxu0
    %v4317 = vadd.f32 %v2734, %v4316
    %v4318 = vpop.f32.mrb[0].mxu0
    %v4319 = vpop.f32.mrb[0].mxu0
    %4320 = vdwg.mxu0
    %v4321 = vpack.c.bf16 %v4315, %v4315
    %v4322 = vpack.c.bf16 %v4317, %v4317
    %4323 = vmatprep.subr.bf16.mxu0 0
    %4324 = vmatpush1.bf16.msra.mxu0 %v3395
    %4325 = vmatprep.subr.bf16.mxu0 0
    %4326 = vmatpush1.bf16.msra.mxu0 %v3396
    %4327 = vmatprep.subr.bf16.mxu0 0
    %4328 = vmatpush1.bf16.msra.mxu0 %v3397
    %4329 = vmatprep.subr.bf16.mxu0 0
    %4330 = vmatpush1.bf16.msra.mxu0 %v3398
    %4331 = vmatprep.subr.bf16.mxu0 0
    %4332 = vmatpush1.bf16.msra.mxu0 %v3399
    %4333 = vmatprep.subr.bf16.mxu0 0
    %4334 = vmatpush1.bf16.msra.mxu0 %v3400
    %4335 = vmatprep.subr.bf16.mxu0 0
    %4336 = vmatpush1.bf16.msra.mxu0 %v3401
    %4337 = vmatprep.subr.bf16.mxu0 0
    %4338 = vmatpush1.bf16.msra.mxu0 %v3402
    %4339 = vmatprep.subr.bf16.mxu0 0
    %4340 = vmatpush1.bf16.msra.mxu0 %v3403
    %4341 = vmatprep.subr.bf16.mxu0 0
    %4342 = vmatpush1.bf16.msra.mxu0 %v3404
    %4343 = vmatprep.subr.bf16.mxu0 0
    %4344 = vmatpush1.bf16.msra.mxu0 %v3405
    %4345 = vmatprep.subr.bf16.mxu0 0
    %4346 = vmatpush1.bf16.msra.mxu0 %v3406
    %4347 = vmatprep.subr.bf16.mxu0 0
    %4348 = vmatpush1.bf16.msra.mxu0 %v3407
    %4349 = vmatprep.subr.bf16.mxu0 0
    %4350 = vmatpush1.bf16.msra.mxu0 %v3408
    %4351 = vmatprep.subr.bf16.mxu0 0
    %4352 = vmatpush1.bf16.msra.mxu0 %v3409
    %4353 = vmatprep.subr.bf16.mxu0 0
    %4354 = vmatpush1.bf16.msra.mxu0 %v3410
    %4355 = vmatprep.mubr.bf16.mxu0 %v4322
    %4356 = vmatmul.mubr.bf16.gmra.mrb[0].mxu0 %v4321
    %v4357 = vpop.f32.mrb[0].mxu0
    %v4358 = vadd.f32 %v2774, %v4357
    %v4359 = vpop.f32.mrb[0].mxu0
    %v4360 = vpop.f32.mrb[0].mxu0
    %v4361 = vpop.f32.mrb[0].mxu0
    %4362 = vdwg.mxu0
    %s4363 = scalar_lea.vmem %s26, 24
    %4364 = vst [vmem:[%s4363] sm:$0xff] %v4358
    %4365 = vst.msk [vmem:[#allocation4] sm:$0xff] %vm142, %v2598
    %s4366 = sld [smem:[#allocation5 + $0x3]]
    %p4367 = scmp.eq.s32.totalorder %s4366, 0
    // Predicated region
    $region118: #{seq2seq_forward.1} parent=1 // pred_check
      %p4368 = pneg %p4367
    $region119: #{seq2seq_forward.1} parent=1 // pred_check_branch
      %4370 = sbr.rel (%p4368) target = $region121
    $region120: #{seq2seq_forward.1} parent=1 // pred_region
      %4371 = vmax.xlane.f32.xlu0 %v4358
      %v4372 = vpop.xlane.xlu0 %4371
      %v4373 = vlaneseq
      %v4374 = vand.u32 %v4373, 127
      %vm4375 = vcmp.ge.f32.partialorder %v4358, %v4372
      %v4376 = vsel %vm4375, %v4374, 128
      %v4377 = vand.u32 %v4376, 65535
      %v4378 = vshra.s32 %v4376, 16
      %v4379 = vcvt.s32.f32 %v4377
      %v4380 = vcvt.s32.f32 %v4378
      %4381 = vmin.xlane.f32.xlu0 %v4380
      %v4382 = vpop.xlane.xlu0 %4381
      %vm4383 = vcmp.eq.f32.partialorder %v4380, %v4382
      %v4384 = vsel %vm4383, %v4379, inf
      %4385 = vmin.xlane.f32.xlu0 %v4384
      %v4386 = vpop.xlane.xlu0 %4385
      %v4387 = vcvt.f32.s32 %v4386
      %v4388 = vcvt.f32.s32 %v4382
      %v4389 = vshll.u32 %v4388, 16
      %v4390 = vadd.s32 %v4389, %v4387
      %vm4391 = vcmp.eq.s32.totalorder %v4390, %v4374
      %v4392 = vsel %vm4391, 1, 0
      %v4393 = vcvt.s32.f32 %v4392
      %v4395 = vsel %vm2487, %v4393, 0
      %4397 = vmatprep.subr.mxu0 0.0
      %4398 = vmatpush1.msra.mxu0 %v2477
      %4399 = vmatprep.subr.mxu0 0.0
      %4400 = vmatpush1.msra.mxu0 %v2514
      %4401 = vmatprep.subr.mxu0 0.0
      %4402 = vmatpush1.msra.mxu0 0.0
      %4403 = vmatprep.subr.mxu0 0.0
      %4404 = vmatpush1.msra.mxu0 0.0
      %4405 = vmatprep.subr.mxu0 0.0
      %4406 = vmatpush1.msra.mxu0 0.0
      %4407 = vmatprep.subr.mxu0 0.0
      %4408 = vmatpush1.msra.mxu0 0.0
      %4409 = vmatprep.subr.mxu0 0.0
      %4410 = vmatpush1.msra.mxu0 0.0
      %4411 = vmatprep.subr.mxu0 0.0
      %4412 = vmatpush1.msra.mxu0 0.0
      %4413 = vmatprep.subr.mxu0 0.0
      %4414 = vmatpush1.msra.mxu0 0.0
      %4415 = vmatprep.subr.mxu0 0.0
      %4416 = vmatpush1.msra.mxu0 0.0
      %4417 = vmatprep.subr.mxu0 0.0
      %4418 = vmatpush1.msra.mxu0 0.0
      %4419 = vmatprep.subr.mxu0 0.0
      %4420 = vmatpush1.msra.mxu0 0.0
      %4421 = vmatprep.subr.mxu0 0.0
      %4422 = vmatpush1.msra.mxu0 0.0
      %4423 = vmatprep.subr.mxu0 0.0
      %4424 = vmatpush1.msra.mxu0 0.0
      %4425 = vmatprep.subr.mxu0 0.0
      %4426 = vmatpush1.msra.mxu0 0.0
      %4427 = vmatprep.subr.mxu0 0.0
      %4428 = vmatpush1.msra.mxu0 0.0
      %4429 = vmatprep.subr.mxu0 0.0
      %4430 = vmatpush1.msra.mxu0 0.0
      %4431 = vmatprep.subr.mxu0 0.0
      %4432 = vmatpush1.msra.mxu0 0.0
      %4433 = vmatprep.subr.mxu0 0.0
      %4434 = vmatpush1.msra.mxu0 0.0
      %4435 = vmatprep.subr.mxu0 0.0
      %4436 = vmatpush1.msra.mxu0 0.0
      %4437 = vmatprep.subr.mxu0 0.0
      %4438 = vmatpush1.msra.mxu0 0.0
      %4439 = vmatprep.subr.mxu0 0.0
      %4440 = vmatpush1.msra.mxu0 0.0
      %4441 = vmatprep.subr.mxu0 0.0
      %4442 = vmatpush1.msra.mxu0 0.0
      %4443 = vmatprep.subr.mxu0 0.0
      %4444 = vmatpush1.msra.mxu0 0.0
      %4445 = vmatprep.subr.mxu0 0.0
      %4446 = vmatpush1.msra.mxu0 0.0
      %4447 = vmatprep.subr.mxu0 0.0
      %4448 = vmatpush1.msra.mxu0 0.0
      %4449 = vmatprep.subr.mxu0 0.0
      %4450 = vmatpush1.msra.mxu0 0.0
      %4451 = vmatprep.subr.mxu0 0.0
      %4452 = vmatpush1.msra.mxu0 0.0
      %4453 = vmatprep.subr.mxu0 0.0
      %4454 = vmatpush1.msra.mxu0 0.0
      %4455 = vmatprep.subr.mxu0 0.0
      %4456 = vmatpush1.msra.mxu0 0.0
      %4457 = vmatprep.subr.mxu0 0.0
      %4458 = vmatpush1.msra.mxu0 0.0
      %4459 = vmatprep.subr.mxu0 0.0
      %4460 = vmatpush1.msra.mxu0 0.0
      %4461 = vmatprep.mubr.f32.mxu0 0.0
      %4462 = vmatmul.mubr.f32.gmra.mrb[0].mxu0 %v4395
      %v4463 = vpop.f32.mrb[0].mxu0
      %v4464 = vadd.f32 0.0, %v4463
      %v4465 = vpop.f32.mrb[0].mxu0
      %4466 = vdwg.mxu0
      %4467 = vst.msk [vmem:[#allocation4] sm:$0xff] %vm142, %v4464
    $region121: #{seq2seq_forward.1} parent=1 // pred_fallthru
      _
    %v4468 = vld [vmem:[#allocation4] sm:$0xff]
    %v4469 = vpack.c.bf16 %v4468, %v4468
    %v4471 = vsel %vm142, %v4469, 0
    %4473 = vmatprep.subr.bf16.mxu0 %v2787
    %4474 = vmatpush1.bf16.msra.mxu0 %v2786
    %4475 = vmatprep.subr.bf16.mxu0 0
    %4476 = vmatpush1.bf16.msra.mxu0 0
    %4477 = vmatprep.subr.bf16.mxu0 0
    %4478 = vmatpush1.bf16.msra.mxu0 0
    %4479 = vmatprep.subr.bf16.mxu0 0
    %4480 = vmatpush1.bf16.msra.mxu0 0
    %4481 = vmatprep.subr.bf16.mxu0 0
    %4482 = vmatpush1.bf16.msra.mxu0 0
    %4483 = vmatprep.subr.bf16.mxu0 0
    %4484 = vmatpush1.bf16.msra.mxu0 0
    %4485 = vmatprep.subr.bf16.mxu0 0
    %4486 = vmatpush1.bf16.msra.mxu0 0
    %4487 = vmatprep.subr.bf16.mxu0 0
    %4488 = vmatpush1.bf16.msra.mxu0 0
    %4489 = vmatprep.subr.bf16.mxu0 0
    %4490 = vmatpush1.bf16.msra.mxu0 0
    %4491 = vmatprep.subr.bf16.mxu0 0
    %4492 = vmatpush1.bf16.msra.mxu0 0
    %4493 = vmatprep.subr.bf16.mxu0 0
    %4494 = vmatpush1.bf16.msra.mxu0 0
    %4495 = vmatprep.subr.bf16.mxu0 0
    %4496 = vmatpush1.bf16.msra.mxu0 0
    %4497 = vmatprep.subr.bf16.mxu0 0
    %4498 = vmatpush1.bf16.msra.mxu0 0
    %4499 = vmatprep.subr.bf16.mxu0 0
    %4500 = vmatpush1.bf16.msra.mxu0 0
    %4501 = vmatprep.subr.bf16.mxu0 0
    %4502 = vmatpush1.bf16.msra.mxu0 0
    %4503 = vmatprep.subr.bf16.mxu0 0
    %4504 = vmatpush1.bf16.msra.mxu0 0
    %4505 = vmatprep.mubr.bf16.mxu0 0
    %4506 = vmatmul.mubr.bf16.gmra.mrb[0].mxu0 %v4471
    %v4507 = vpop.f32.mrb[0].mxu0
    %v4508 = vadd.f32 %v2635, %v4507
    %v4509 = vpop.f32.mrb[0].mxu0
    %v4510 = vadd.f32 %v2639, %v4509
    %v4511 = vpop.f32.mrb[0].mxu0
    %v4512 = vpop.f32.mrb[0].mxu0
    %4513 = vdwg.mxu0
    %4514 = vmatprep.subr.bf16.mxu0 %v2860
    %4515 = vmatpush1.bf16.msra.mxu0 %v2859
    %4516 = vmatprep.subr.bf16.mxu0 %v2862
    %4517 = vmatpush1.bf16.msra.mxu0 %v2861
    %4518 = vmatprep.subr.bf16.mxu0 %v2864
    %4519 = vmatpush1.bf16.msra.mxu0 %v2863
    %4520 = vmatprep.subr.bf16.mxu0 %v2866
    %4521 = vmatpush1.bf16.msra.mxu0 %v2865
    %4522 = vmatprep.subr.bf16.mxu0 0
    %4523 = vmatpush1.bf16.msra.mxu0 0
    %4524 = vmatprep.subr.bf16.mxu0 0
    %4525 = vmatpush1.bf16.msra.mxu0 0
    %4526 = vmatprep.subr.bf16.mxu0 0
    %4527 = vmatpush1.bf16.msra.mxu0 0
    %4528 = vmatprep.subr.bf16.mxu0 0
    %4529 = vmatpush1.bf16.msra.mxu0 0
    %4530 = vmatprep.subr.bf16.mxu0 0
    %4531 = vmatpush1.bf16.msra.mxu0 0
    %4532 = vmatprep.subr.bf16.mxu0 0
    %4533 = vmatpush1.bf16.msra.mxu0 0
    %4534 = vmatprep.subr.bf16.mxu0 0
    %4535 = vmatpush1.bf16.msra.mxu0 0
    %4536 = vmatprep.subr.bf16.mxu0 0
    %4537 = vmatpush1.bf16.msra.mxu0 0
    %4538 = vmatprep.subr.bf16.mxu0 0
    %4539 = vmatpush1.bf16.msra.mxu0 0
    %4540 = vmatprep.subr.bf16.mxu0 0
    %4541 = vmatpush1.bf16.msra.mxu0 0
    %4542 = vmatprep.subr.bf16.mxu0 0
    %4543 = vmatpush1.bf16.msra.mxu0 0
    %4544 = vmatprep.subr.bf16.mxu0 0
    %4545 = vmatpush1.bf16.msra.mxu0 0
    %4546 = vmatprep.mubr.bf16.mxu0 0
    %4547 = vmatmul.mubr.bf16.gmra.mrb[0].mxu0 %v4130
    %v4548 = vpop.f32.mrb[0].mxu0
    %v4549 = vadd.f32 %v2647, %v4548
    %v4550 = vpop.f32.mrb[0].mxu0
    %v4551 = vadd.f32 %v2651, %v4550
    %v4552 = vpop.f32.mrb[0].mxu0
    %v4553 = vpop.f32.mrb[0].mxu0
    %4554 = vdwg.mxu0
    %v4555 = vadd.f32 %v4508, %v4549
    %v4556 = vxor.u32 %v4555, 2147483648
    %v4557 = vmul.f32 %v4556, 1.442695
    %v4558 = vpow.pop %v4557
    %v4559 = vadd.f32 %v4558, 1.0
    %v4560 = vrcp.pop %v4559
    %v4561 = vmul.f32 1.0, %v4560
    %v4562 = vmul.f32 %v4561, %v4551
    %v4563 = vadd.f32 %v4510, %v4562
    %v4564 = vtanh.pop %v4563
    %v4565 = vsub.f32 1.0, %v4561
    %4567 = vrot.lane.b32.xlu0 %v4564, 64
    %v4568 = vpop.permute.xlu0 %4567
    %v4570 = vmul.f32 %v4565, %v4568
    %v4571 = vmul.f32 %v4561, %v4124
    %v4572 = vadd.f32 %v4570, %v4571
    %v4573 = vpack.c.bf16 %v4572, %v4572
    %4575 = vrot.lane.b32.xlu0 %v4573, 64
    %v4576 = vpop.permute.xlu0 %4575
    %v4578 = vsel %vm279, %v4576, 0
    %4580 = vmatprep.subr.bf16.mxu0 %v2970
    %4581 = vmatpush1.bf16.msra.mxu0 %v2969
    %4582 = vmatprep.subr.bf16.mxu0 %v2972
    %4583 = vmatpush1.bf16.msra.mxu0 %v2971
    %4584 = vmatprep.subr.bf16.mxu0 %v2974
    %4585 = vmatpush1.bf16.msra.mxu0 %v2973
    %4586 = vmatprep.subr.bf16.mxu0 %v2976
    %4587 = vmatpush1.bf16.msra.mxu0 %v2975
    %4588 = vmatprep.subr.bf16.mxu0 0
    %4589 = vmatpush1.bf16.msra.mxu0 0
    %4590 = vmatprep.subr.bf16.mxu0 0
    %4591 = vmatpush1.bf16.msra.mxu0 0
    %4592 = vmatprep.subr.bf16.mxu0 0
    %4593 = vmatpush1.bf16.msra.mxu0 0
    %4594 = vmatprep.subr.bf16.mxu0 0
    %4595 = vmatpush1.bf16.msra.mxu0 0
    %4596 = vmatprep.subr.bf16.mxu0 0
    %4597 = vmatpush1.bf16.msra.mxu0 0
    %4598 = vmatprep.subr.bf16.mxu0 0
    %4599 = vmatpush1.bf16.msra.mxu0 0
    %4600 = vmatprep.subr.bf16.mxu0 0
    %4601 = vmatpush1.bf16.msra.mxu0 0
    %4602 = vmatprep.subr.bf16.mxu0 0
    %4603 = vmatpush1.bf16.msra.mxu0 0
    %4604 = vmatprep.subr.bf16.mxu0 0
    %4605 = vmatpush1.bf16.msra.mxu0 0
    %4606 = vmatprep.subr.bf16.mxu0 0
    %4607 = vmatpush1.bf16.msra.mxu0 0
    %4608 = vmatprep.subr.bf16.mxu0 0
    %4609 = vmatpush1.bf16.msra.mxu0 0
    %4610 = vmatprep.subr.bf16.mxu0 0
    %4611 = vmatpush1.bf16.msra.mxu0 0
    %4612 = vmatprep.mubr.bf16.mxu0 0
    %4613 = vmatmul.mubr.bf16.gmra.mrb[0].mxu0 %v4578
    %v4614 = vpop.f32.mrb[0].mxu0
    %v4615 = vadd.f32 %v2675, %v4614
    %v4616 = vpop.f32.mrb[0].mxu0
    %v4617 = vadd.f32 %v2679, %v4616
    %v4618 = vpop.f32.mrb[0].mxu0
    %v4619 = vpop.f32.mrb[0].mxu0
    %4620 = vdwg.mxu0
    %4621 = vmatprep.subr.bf16.mxu0 %v3055
    %4622 = vmatpush1.bf16.msra.mxu0 %v3054
    %4623 = vmatprep.subr.bf16.mxu0 %v3057
    %4624 = vmatpush1.bf16.msra.mxu0 %v3056
    %4625 = vmatprep.subr.bf16.mxu0 %v3059
    %4626 = vmatpush1.bf16.msra.mxu0 %v3058
    %4627 = vmatprep.subr.bf16.mxu0 %v3061
    %4628 = vmatpush1.bf16.msra.mxu0 %v3060
    %4629 = vmatprep.subr.bf16.mxu0 0
    %4630 = vmatpush1.bf16.msra.mxu0 0
    %4631 = vmatprep.subr.bf16.mxu0 0
    %4632 = vmatpush1.bf16.msra.mxu0 0
    %4633 = vmatprep.subr.bf16.mxu0 0
    %4634 = vmatpush1.bf16.msra.mxu0 0
    %4635 = vmatprep.subr.bf16.mxu0 0
    %4636 = vmatpush1.bf16.msra.mxu0 0
    %4637 = vmatprep.subr.bf16.mxu0 0
    %4638 = vmatpush1.bf16.msra.mxu0 0
    %4639 = vmatprep.subr.bf16.mxu0 0
    %4640 = vmatpush1.bf16.msra.mxu0 0
    %4641 = vmatprep.subr.bf16.mxu0 0
    %4642 = vmatpush1.bf16.msra.mxu0 0
    %4643 = vmatprep.subr.bf16.mxu0 0
    %4644 = vmatpush1.bf16.msra.mxu0 0
    %4645 = vmatprep.subr.bf16.mxu0 0
    %4646 = vmatpush1.bf16.msra.mxu0 0
    %4647 = vmatprep.subr.bf16.mxu0 0
    %4648 = vmatpush1.bf16.msra.mxu0 0
    %4649 = vmatprep.subr.bf16.mxu0 0
    %4650 = vmatpush1.bf16.msra.mxu0 0
    %4651 = vmatprep.subr.bf16.mxu0 0
    %4652 = vmatpush1.bf16.msra.mxu0 0
    %4653 = vmatprep.mubr.bf16.mxu0 0
    %4654 = vmatmul.mubr.bf16.gmra.mrb[0].mxu0 %v4237
    %v4655 = vpop.f32.mrb[0].mxu0
    %v4656 = vadd.f32 %v2687, %v4655
    %v4657 = vpop.f32.mrb[0].mxu0
    %v4658 = vadd.f32 %v2691, %v4657
    %v4659 = vpop.f32.mrb[0].mxu0
    %v4660 = vpop.f32.mrb[0].mxu0
    %4661 = vdwg.mxu0
    %v4662 = vadd.f32 %v4615, %v4656
    %v4663 = vxor.u32 %v4662, 2147483648
    %v4664 = vmul.f32 %v4663, 1.442695
    %v4665 = vpow.pop %v4664
    %v4666 = vadd.f32 %v4665, 1.0
    %v4667 = vrcp.pop %v4666
    %v4668 = vmul.f32 1.0, %v4667
    %v4669 = vmul.f32 %v4668, %v4658
    %v4670 = vadd.f32 %v4617, %v4669
    %v4671 = vtanh.pop %v4670
    %v4672 = vsub.f32 1.0, %v4668
    %4674 = vrot.lane.b32.xlu0 %v4671, 64
    %v4675 = vpop.permute.xlu0 %4674
    %v4677 = vmul.f32 %v4672, %v4675
    %v4678 = vmul.f32 %v4668, %v4231
    %v4679 = vadd.f32 %v4677, %v4678
    %v4680 = vpack.c.bf16 %v4679, %v4679
    %4682 = vrot.lane.b32.xlu0 %v4680, 64
    %v4683 = vpop.permute.xlu0 %4682
    %v4685 = vsel %vm279, %v4683, 0
    %4687 = vmatprep.subr.bf16.mxu0 0
    %4688 = vmatpush1.bf16.msra.mxu0 %v3156
    %4689 = vmatprep.subr.bf16.mxu0 0
    %4690 = vmatpush1.bf16.msra.mxu0 %v3157
    %4691 = vmatprep.subr.bf16.mxu0 0
    %4692 = vmatpush1.bf16.msra.mxu0 %v3158
    %4693 = vmatprep.subr.bf16.mxu0 0
    %4694 = vmatpush1.bf16.msra.mxu0 %v3159
    %4695 = vmatprep.subr.bf16.mxu0 0
    %4696 = vmatpush1.bf16.msra.mxu0 0
    %4697 = vmatprep.subr.bf16.mxu0 0
    %4698 = vmatpush1.bf16.msra.mxu0 0
    %4699 = vmatprep.subr.bf16.mxu0 0
    %4700 = vmatpush1.bf16.msra.mxu0 0
    %4701 = vmatprep.subr.bf16.mxu0 0
    %4702 = vmatpush1.bf16.msra.mxu0 0
    %4703 = vmatprep.subr.bf16.mxu0 0
    %4704 = vmatpush1.bf16.msra.mxu0 0
    %4705 = vmatprep.subr.bf16.mxu0 0
    %4706 = vmatpush1.bf16.msra.mxu0 0
    %4707 = vmatprep.subr.bf16.mxu0 0
    %4708 = vmatpush1.bf16.msra.mxu0 0
    %4709 = vmatprep.subr.bf16.mxu0 0
    %4710 = vmatpush1.bf16.msra.mxu0 0
    %4711 = vmatprep.subr.bf16.mxu0 0
    %4712 = vmatpush1.bf16.msra.mxu0 0
    %4713 = vmatprep.subr.bf16.mxu0 0
    %4714 = vmatpush1.bf16.msra.mxu0 0
    %4715 = vmatprep.subr.bf16.mxu0 0
    %4716 = vmatpush1.bf16.msra.mxu0 0
    %4717 = vmatprep.subr.bf16.mxu0 0
    %4718 = vmatpush1.bf16.msra.mxu0 0
    %4719 = vmatprep.mubr.bf16.mxu0 0
    %4720 = vmatmul.mubr.bf16.gmra.mrb[0].mxu0 %v4685
    %v4721 = vpop.f32.mrb[0].mxu0
    %v4722 = vadd.f32 %v2707, %v4721
    %v4723 = vpop.f32.mrb[0].mxu0
    %v4724 = vpop.f32.mrb[0].mxu0
    %v4725 = vpop.f32.mrb[0].mxu0
    %4726 = vdwg.mxu0
    %v4727 = vpack.c.bf16 %v4722, %v4722
    %4728 = vmatprep.subr.bf16.mxu0 %v3257
    %4729 = vmatpush1.bf16.msra.mxu0 %v3256
    %4730 = vmatprep.subr.bf16.mxu0 %v3259
    %4731 = vmatpush1.bf16.msra.mxu0 %v3258
    %4732 = vmatprep.subr.bf16.mxu0 %v3261
    %4733 = vmatpush1.bf16.msra.mxu0 %v3260
    %4734 = vmatprep.subr.bf16.mxu0 %v3263
    %4735 = vmatpush1.bf16.msra.mxu0 %v3262
    %4736 = vmatprep.subr.bf16.mxu0 %v3265
    %4737 = vmatpush1.bf16.msra.mxu0 %v3264
    %4738 = vmatprep.subr.bf16.mxu0 %v3267
    %4739 = vmatpush1.bf16.msra.mxu0 %v3266
    %4740 = vmatprep.subr.bf16.mxu0 %v3269
    %4741 = vmatpush1.bf16.msra.mxu0 %v3268
    %4742 = vmatprep.subr.bf16.mxu0 %v3271
    %4743 = vmatpush1.bf16.msra.mxu0 %v3270
    %4744 = vmatprep.subr.bf16.mxu0 0
    %4745 = vmatpush1.bf16.msra.mxu0 0
    %4746 = vmatprep.subr.bf16.mxu0 0
    %4747 = vmatpush1.bf16.msra.mxu0 0
    %4748 = vmatprep.subr.bf16.mxu0 0
    %4749 = vmatpush1.bf16.msra.mxu0 0
    %4750 = vmatprep.subr.bf16.mxu0 0
    %4751 = vmatpush1.bf16.msra.mxu0 0
    %4752 = vmatprep.subr.bf16.mxu0 0
    %4753 = vmatpush1.bf16.msra.mxu0 0
    %4754 = vmatprep.subr.bf16.mxu0 0
    %4755 = vmatpush1.bf16.msra.mxu0 0
    %4756 = vmatprep.subr.bf16.mxu0 0
    %4757 = vmatpush1.bf16.msra.mxu0 0
    %4758 = vmatprep.subr.bf16.mxu0 0
    %4759 = vmatpush1.bf16.msra.mxu0 0
    %4760 = vmatprep.mubr.bf16.mxu0 0
    %4761 = vmatmul.mubr.bf16.gmra.mrb[0].mxu0 %v4727
    %v4762 = vpop.f32.mrb[0].mxu0
    %v4763 = vadd.f32 %v2730, %v4762
    %v4764 = vpop.f32.mrb[0].mxu0
    %v4765 = vadd.f32 %v2734, %v4764
    %v4766 = vpop.f32.mrb[0].mxu0
    %v4767 = vpop.f32.mrb[0].mxu0
    %4768 = vdwg.mxu0
    %v4769 = vpack.c.bf16 %v4763, %v4763
    %v4770 = vpack.c.bf16 %v4765, %v4765
    %4771 = vmatprep.subr.bf16.mxu0 0
    %4772 = vmatpush1.bf16.msra.mxu0 %v3395
    %4773 = vmatprep.subr.bf16.mxu0 0
    %4774 = vmatpush1.bf16.msra.mxu0 %v3396
    %4775 = vmatprep.subr.bf16.mxu0 0
    %4776 = vmatpush1.bf16.msra.mxu0 %v3397
    %4777 = vmatprep.subr.bf16.mxu0 0
    %4778 = vmatpush1.bf16.msra.mxu0 %v3398
    %4779 = vmatprep.subr.bf16.mxu0 0
    %4780 = vmatpush1.bf16.msra.mxu0 %v3399
    %4781 = vmatprep.subr.bf16.mxu0 0
    %4782 = vmatpush1.bf16.msra.mxu0 %v3400
    %4783 = vmatprep.subr.bf16.mxu0 0
    %4784 = vmatpush1.bf16.msra.mxu0 %v3401
    %4785 = vmatprep.subr.bf16.mxu0 0
    %4786 = vmatpush1.bf16.msra.mxu0 %v3402
    %4787 = vmatprep.subr.bf16.mxu0 0
    %4788 = vmatpush1.bf16.msra.mxu0 %v3403
    %4789 = vmatprep.subr.bf16.mxu0 0
    %4790 = vmatpush1.bf16.msra.mxu0 %v3404
    %4791 = vmatprep.subr.bf16.mxu0 0
    %4792 = vmatpush1.bf16.msra.mxu0 %v3405
    %4793 = vmatprep.subr.bf16.mxu0 0
    %4794 = vmatpush1.bf16.msra.mxu0 %v3406
    %4795 = vmatprep.subr.bf16.mxu0 0
    %4796 = vmatpush1.bf16.msra.mxu0 %v3407
    %4797 = vmatprep.subr.bf16.mxu0 0
    %4798 = vmatpush1.bf16.msra.mxu0 %v3408
    %4799 = vmatprep.subr.bf16.mxu0 0
    %4800 = vmatpush1.bf16.msra.mxu0 %v3409
    %4801 = vmatprep.subr.bf16.mxu0 0
    %4802 = vmatpush1.bf16.msra.mxu0 %v3410
    %4803 = vmatprep.mubr.bf16.mxu0 %v4770
    %4804 = vmatmul.mubr.bf16.gmra.mrb[0].mxu0 %v4769
    %v4805 = vpop.f32.mrb[0].mxu0
    %v4806 = vadd.f32 %v2774, %v4805
    %v4807 = vpop.f32.mrb[0].mxu0
    %v4808 = vpop.f32.mrb[0].mxu0
    %v4809 = vpop.f32.mrb[0].mxu0
    %4810 = vdwg.mxu0
    %s4811 = scalar_lea.vmem %s26, 32
    %4812 = vst [vmem:[%s4811] sm:$0xff] %v4806
    %4813 = vst.msk [vmem:[#allocation4] sm:$0xff] %vm142, %v2603
    %s4814 = sld [smem:[#allocation5 + $0x4]]
    %p4815 = scmp.eq.s32.totalorder %s4814, 0
    // Predicated region
    $region122: #{seq2seq_forward.1} parent=1 // pred_check
      %p4816 = pneg %p4815
    $region123: #{seq2seq_forward.1} parent=1 // pred_check_branch
      %4818 = sbr.rel (%p4816) target = $region125
    $region124: #{seq2seq_forward.1} parent=1 // pred_region
      %4819 = vmax.xlane.f32.xlu0 %v4806
      %v4820 = vpop.xlane.xlu0 %4819
      %v4821 = vlaneseq
      %v4822 = vand.u32 %v4821, 127
      %vm4823 = vcmp.ge.f32.partialorder %v4806, %v4820
      %v4824 = vsel %vm4823, %v4822, 128
      %v4825 = vand.u32 %v4824, 65535
      %v4826 = vshra.s32 %v4824, 16
      %v4827 = vcvt.s32.f32 %v4825
      %v4828 = vcvt.s32.f32 %v4826
      %4829 = vmin.xlane.f32.xlu0 %v4828
      %v4830 = vpop.xlane.xlu0 %4829
      %vm4831 = vcmp.eq.f32.partialorder %v4828, %v4830
      %v4832 = vsel %vm4831, %v4827, inf
      %4833 = vmin.xlane.f32.xlu0 %v4832
      %v4834 = vpop.xlane.xlu0 %4833
      %v4835 = vcvt.f32.s32 %v4834
      %v4836 = vcvt.f32.s32 %v4830
      %v4837 = vshll.u32 %v4836, 16
      %v4838 = vadd.s32 %v4837, %v4835
      %vm4839 = vcmp.eq.s32.totalorder %v4838, %v4822
      %v4840 = vsel %vm4839, 1, 0
      %v4841 = vcvt.s32.f32 %v4840
      %v4843 = vsel %vm2487, %v4841, 0
      %4845 = vmatprep.subr.mxu0 0.0
      %4846 = vmatpush1.msra.mxu0 %v2477
      %4847 = vmatprep.subr.mxu0 0.0
      %4848 = vmatpush1.msra.mxu0 %v2514
      %4849 = vmatprep.subr.mxu0 0.0
      %4850 = vmatpush1.msra.mxu0 0.0
      %4851 = vmatprep.subr.mxu0 0.0
      %4852 = vmatpush1.msra.mxu0 0.0
      %4853 = vmatprep.subr.mxu0 0.0
      %4854 = vmatpush1.msra.mxu0 0.0
      %4855 = vmatprep.subr.mxu0 0.0
      %4856 = vmatpush1.msra.mxu0 0.0
      %4857 = vmatprep.subr.mxu0 0.0
      %4858 = vmatpush1.msra.mxu0 0.0
      %4859 = vmatprep.subr.mxu0 0.0
      %4860 = vmatpush1.msra.mxu0 0.0
      %4861 = vmatprep.subr.mxu0 0.0
      %4862 = vmatpush1.msra.mxu0 0.0
      %4863 = vmatprep.subr.mxu0 0.0
      %4864 = vmatpush1.msra.mxu0 0.0
      %4865 = vmatprep.subr.mxu0 0.0
      %4866 = vmatpush1.msra.mxu0 0.0
      %4867 = vmatprep.subr.mxu0 0.0
      %4868 = vmatpush1.msra.mxu0 0.0
      %4869 = vmatprep.subr.mxu0 0.0
      %4870 = vmatpush1.msra.mxu0 0.0
      %4871 = vmatprep.subr.mxu0 0.0
      %4872 = vmatpush1.msra.mxu0 0.0
      %4873 = vmatprep.subr.mxu0 0.0
      %4874 = vmatpush1.msra.mxu0 0.0
      %4875 = vmatprep.subr.mxu0 0.0
      %4876 = vmatpush1.msra.mxu0 0.0
      %4877 = vmatprep.subr.mxu0 0.0
      %4878 = vmatpush1.msra.mxu0 0.0
      %4879 = vmatprep.subr.mxu0 0.0
      %4880 = vmatpush1.msra.mxu0 0.0
      %4881 = vmatprep.subr.mxu0 0.0
      %4882 = vmatpush1.msra.mxu0 0.0
      %4883 = vmatprep.subr.mxu0 0.0
      %4884 = vmatpush1.msra.mxu0 0.0
      %4885 = vmatprep.subr.mxu0 0.0
      %4886 = vmatpush1.msra.mxu0 0.0
      %4887 = vmatprep.subr.mxu0 0.0
      %4888 = vmatpush1.msra.mxu0 0.0
      %4889 = vmatprep.subr.mxu0 0.0
      %4890 = vmatpush1.msra.mxu0 0.0
      %4891 = vmatprep.subr.mxu0 0.0
      %4892 = vmatpush1.msra.mxu0 0.0
      %4893 = vmatprep.subr.mxu0 0.0
      %4894 = vmatpush1.msra.mxu0 0.0
      %4895 = vmatprep.subr.mxu0 0.0
      %4896 = vmatpush1.msra.mxu0 0.0
      %4897 = vmatprep.subr.mxu0 0.0
      %4898 = vmatpush1.msra.mxu0 0.0
      %4899 = vmatprep.subr.mxu0 0.0
      %4900 = vmatpush1.msra.mxu0 0.0
      %4901 = vmatprep.subr.mxu0 0.0
      %4902 = vmatpush1.msra.mxu0 0.0
      %4903 = vmatprep.subr.mxu0 0.0
      %4904 = vmatpush1.msra.mxu0 0.0
      %4905 = vmatprep.subr.mxu0 0.0
      %4906 = vmatpush1.msra.mxu0 0.0
      %4907 = vmatprep.subr.mxu0 0.0
      %4908 = vmatpush1.msra.mxu0 0.0
      %4909 = vmatprep.mubr.f32.mxu0 0.0
      %4910 = vmatmul.mubr.f32.gmra.mrb[0].mxu0 %v4843
      %v4911 = vpop.f32.mrb[0].mxu0
      %v4912 = vadd.f32 0.0, %v4911
      %v4913 = vpop.f32.mrb[0].mxu0
      %4914 = vdwg.mxu0
      %4915 = vst.msk [vmem:[#allocation4] sm:$0xff] %vm142, %v4912
    $region125: #{seq2seq_forward.1} parent=1 // pred_fallthru
      _
    %v4916 = vld [vmem:[#allocation4] sm:$0xff]
    %v4917 = vpack.c.bf16 %v4916, %v4916
    %v4919 = vsel %vm142, %v4917, 0
    %4921 = vmatprep.subr.bf16.mxu0 %v2787
    %4922 = vmatpush1.bf16.msra.mxu0 %v2786
    %4923 = vmatprep.subr.bf16.mxu0 0
    %4924 = vmatpush1.bf16.msra.mxu0 0
    %4925 = vmatprep.subr.bf16.mxu0 0
    %4926 = vmatpush1.bf16.msra.mxu0 0
    %4927 = vmatprep.subr.bf16.mxu0 0
    %4928 = vmatpush1.bf16.msra.mxu0 0
    %4929 = vmatprep.subr.bf16.mxu0 0
    %4930 = vmatpush1.bf16.msra.mxu0 0
    %4931 = vmatprep.subr.bf16.mxu0 0
    %4932 = vmatpush1.bf16.msra.mxu0 0
    %4933 = vmatprep.subr.bf16.mxu0 0
    %4934 = vmatpush1.bf16.msra.mxu0 0
    %4935 = vmatprep.subr.bf16.mxu0 0
    %4936 = vmatpush1.bf16.msra.mxu0 0
    %4937 = vmatprep.subr.bf16.mxu0 0
    %4938 = vmatpush1.bf16.msra.mxu0 0
    %4939 = vmatprep.subr.bf16.mxu0 0
    %4940 = vmatpush1.bf16.msra.mxu0 0
    %4941 = vmatprep.subr.bf16.mxu0 0
    %4942 = vmatpush1.bf16.msra.mxu0 0
    %4943 = vmatprep.subr.bf16.mxu0 0
    %4944 = vmatpush1.bf16.msra.mxu0 0
    %4945 = vmatprep.subr.bf16.mxu0 0
    %4946 = vmatpush1.bf16.msra.mxu0 0
    %4947 = vmatprep.subr.bf16.mxu0 0
    %4948 = vmatpush1.bf16.msra.mxu0 0
    %4949 = vmatprep.subr.bf16.mxu0 0
    %4950 = vmatpush1.bf16.msra.mxu0 0
    %4951 = vmatprep.subr.bf16.mxu0 0
    %4952 = vmatpush1.bf16.msra.mxu0 0
    %4953 = vmatprep.mubr.bf16.mxu0 0
    %4954 = vmatmul.mubr.bf16.gmra.mrb[0].mxu0 %v4919
    %v4955 = vpop.f32.mrb[0].mxu0
    %v4956 = vadd.f32 %v2635, %v4955
    %v4957 = vpop.f32.mrb[0].mxu0
    %v4958 = vadd.f32 %v2639, %v4957
    %v4959 = vpop.f32.mrb[0].mxu0
    %v4960 = vpop.f32.mrb[0].mxu0
    %4961 = vdwg.mxu0
    %4962 = vmatprep.subr.bf16.mxu0 %v2860
    %4963 = vmatpush1.bf16.msra.mxu0 %v2859
    %4964 = vmatprep.subr.bf16.mxu0 %v2862
    %4965 = vmatpush1.bf16.msra.mxu0 %v2861
    %4966 = vmatprep.subr.bf16.mxu0 %v2864
    %4967 = vmatpush1.bf16.msra.mxu0 %v2863
    %4968 = vmatprep.subr.bf16.mxu0 %v2866
    %4969 = vmatpush1.bf16.msra.mxu0 %v2865
    %4970 = vmatprep.subr.bf16.mxu0 0
    %4971 = vmatpush1.bf16.msra.mxu0 0
    %4972 = vmatprep.subr.bf16.mxu0 0
    %4973 = vmatpush1.bf16.msra.mxu0 0
    %4974 = vmatprep.subr.bf16.mxu0 0
    %4975 = vmatpush1.bf16.msra.mxu0 0
    %4976 = vmatprep.subr.bf16.mxu0 0
    %4977 = vmatpush1.bf16.msra.mxu0 0
    %4978 = vmatprep.subr.bf16.mxu0 0
    %4979 = vmatpush1.bf16.msra.mxu0 0
    %4980 = vmatprep.subr.bf16.mxu0 0
    %4981 = vmatpush1.bf16.msra.mxu0 0
    %4982 = vmatprep.subr.bf16.mxu0 0
    %4983 = vmatpush1.bf16.msra.mxu0 0
    %4984 = vmatprep.subr.bf16.mxu0 0
    %4985 = vmatpush1.bf16.msra.mxu0 0
    %4986 = vmatprep.subr.bf16.mxu0 0
    %4987 = vmatpush1.bf16.msra.mxu0 0
    %4988 = vmatprep.subr.bf16.mxu0 0
    %4989 = vmatpush1.bf16.msra.mxu0 0
    %4990 = vmatprep.subr.bf16.mxu0 0
    %4991 = vmatpush1.bf16.msra.mxu0 0
    %4992 = vmatprep.subr.bf16.mxu0 0
    %4993 = vmatpush1.bf16.msra.mxu0 0
    %4994 = vmatprep.mubr.bf16.mxu0 0
    %4995 = vmatmul.mubr.bf16.gmra.mrb[0].mxu0 %v4578
    %v4996 = vpop.f32.mrb[0].mxu0
    %v4997 = vadd.f32 %v2647, %v4996
    %v4998 = vpop.f32.mrb[0].mxu0
    %v4999 = vadd.f32 %v2651, %v4998
    %v5000 = vpop.f32.mrb[0].mxu0
    %v5001 = vpop.f32.mrb[0].mxu0
    %5002 = vdwg.mxu0
    %v5003 = vadd.f32 %v4956, %v4997
    %v5004 = vxor.u32 %v5003, 2147483648
    %v5005 = vmul.f32 %v5004, 1.442695
    %v5006 = vpow.pop %v5005
    %v5007 = vadd.f32 %v5006, 1.0
    %v5008 = vrcp.pop %v5007
    %v5009 = vmul.f32 1.0, %v5008
    %v5010 = vmul.f32 %v5009, %v4999
    %v5011 = vadd.f32 %v4958, %v5010
    %v5012 = vtanh.pop %v5011
    %v5013 = vsub.f32 1.0, %v5009
    %5015 = vrot.lane.b32.xlu0 %v5012, 64
    %v5016 = vpop.permute.xlu0 %5015
    %v5018 = vmul.f32 %v5013, %v5016
    %v5019 = vmul.f32 %v5009, %v4572
    %v5020 = vadd.f32 %v5018, %v5019
    %v5021 = vpack.c.bf16 %v5020, %v5020
    %5023 = vrot.lane.b32.xlu0 %v5021, 64
    %v5024 = vpop.permute.xlu0 %5023
    %v5026 = vsel %vm279, %v5024, 0
    %5028 = vmatprep.subr.bf16.mxu0 %v2970
    %5029 = vmatpush1.bf16.msra.mxu0 %v2969
    %5030 = vmatprep.subr.bf16.mxu0 %v2972
    %5031 = vmatpush1.bf16.msra.mxu0 %v2971
    %5032 = vmatprep.subr.bf16.mxu0 %v2974
    %5033 = vmatpush1.bf16.msra.mxu0 %v2973
    %5034 = vmatprep.subr.bf16.mxu0 %v2976
    %5035 = vmatpush1.bf16.msra.mxu0 %v2975
    %5036 = vmatprep.subr.bf16.mxu0 0
    %5037 = vmatpush1.bf16.msra.mxu0 0
    %5038 = vmatprep.subr.bf16.mxu0 0
    %5039 = vmatpush1.bf16.msra.mxu0 0
    %5040 = vmatprep.subr.bf16.mxu0 0
    %5041 = vmatpush1.bf16.msra.mxu0 0
    %5042 = vmatprep.subr.bf16.mxu0 0
    %5043 = vmatpush1.bf16.msra.mxu0 0
    %5044 = vmatprep.subr.bf16.mxu0 0
    %5045 = vmatpush1.bf16.msra.mxu0 0
    %5046 = vmatprep.subr.bf16.mxu0 0
    %5047 = vmatpush1.bf16.msra.mxu0 0
    %5048 = vmatprep.subr.bf16.mxu0 0
    %5049 = vmatpush1.bf16.msra.mxu0 0
    %5050 = vmatprep.subr.bf16.mxu0 0
    %5051 = vmatpush1.bf16.msra.mxu0 0
    %5052 = vmatprep.subr.bf16.mxu0 0
    %5053 = vmatpush1.bf16.msra.mxu0 0
    %5054 = vmatprep.subr.bf16.mxu0 0
    %5055 = vmatpush1.bf16.msra.mxu0 0
    %5056 = vmatprep.subr.bf16.mxu0 0
    %5057 = vmatpush1.bf16.msra.mxu0 0
    %5058 = vmatprep.subr.bf16.mxu0 0
    %5059 = vmatpush1.bf16.msra.mxu0 0
    %5060 = vmatprep.mubr.bf16.mxu0 0
    %5061 = vmatmul.mubr.bf16.gmra.mrb[0].mxu0 %v5026
    %v5062 = vpop.f32.mrb[0].mxu0
    %v5063 = vadd.f32 %v2675, %v5062
    %v5064 = vpop.f32.mrb[0].mxu0
    %v5065 = vadd.f32 %v2679, %v5064
    %v5066 = vpop.f32.mrb[0].mxu0
    %v5067 = vpop.f32.mrb[0].mxu0
    %5068 = vdwg.mxu0
    %5069 = vmatprep.subr.bf16.mxu0 %v3055
    %5070 = vmatpush1.bf16.msra.mxu0 %v3054
    %5071 = vmatprep.subr.bf16.mxu0 %v3057
    %5072 = vmatpush1.bf16.msra.mxu0 %v3056
    %5073 = vmatprep.subr.bf16.mxu0 %v3059
    %5074 = vmatpush1.bf16.msra.mxu0 %v3058
    %5075 = vmatprep.subr.bf16.mxu0 %v3061
    %5076 = vmatpush1.bf16.msra.mxu0 %v3060
    %5077 = vmatprep.subr.bf16.mxu0 0
    %5078 = vmatpush1.bf16.msra.mxu0 0
    %5079 = vmatprep.subr.bf16.mxu0 0
    %5080 = vmatpush1.bf16.msra.mxu0 0
    %5081 = vmatprep.subr.bf16.mxu0 0
    %5082 = vmatpush1.bf16.msra.mxu0 0
    %5083 = vmatprep.subr.bf16.mxu0 0
    %5084 = vmatpush1.bf16.msra.mxu0 0
    %5085 = vmatprep.subr.bf16.mxu0 0
    %5086 = vmatpush1.bf16.msra.mxu0 0
    %5087 = vmatprep.subr.bf16.mxu0 0
    %5088 = vmatpush1.bf16.msra.mxu0 0
    %5089 = vmatprep.subr.bf16.mxu0 0
    %5090 = vmatpush1.bf16.msra.mxu0 0
    %5091 = vmatprep.subr.bf16.mxu0 0
    %5092 = vmatpush1.bf16.msra.mxu0 0
    %5093 = vmatprep.subr.bf16.mxu0 0
    %5094 = vmatpush1.bf16.msra.mxu0 0
    %5095 = vmatprep.subr.bf16.mxu0 0
    %5096 = vmatpush1.bf16.msra.mxu0 0
    %5097 = vmatprep.subr.bf16.mxu0 0
    %5098 = vmatpush1.bf16.msra.mxu0 0
    %5099 = vmatprep.subr.bf16.mxu0 0
    %5100 = vmatpush1.bf16.msra.mxu0 0
    %5101 = vmatprep.mubr.bf16.mxu0 0
    %5102 = vmatmul.mubr.bf16.gmra.mrb[0].mxu0 %v4685
    %v5103 = vpop.f32.mrb[0].mxu0
    %v5104 = vadd.f32 %v2687, %v5103
    %v5105 = vpop.f32.mrb[0].mxu0
    %v5106 = vadd.f32 %v2691, %v5105
    %v5107 = vpop.f32.mrb[0].mxu0
    %v5108 = vpop.f32.mrb[0].mxu0
    %5109 = vdwg.mxu0
    %v5110 = vadd.f32 %v5063, %v5104
    %v5111 = vxor.u32 %v5110, 2147483648
    %v5112 = vmul.f32 %v5111, 1.442695
    %v5113 = vpow.pop %v5112
    %v5114 = vadd.f32 %v5113, 1.0
    %v5115 = vrcp.pop %v5114
    %v5116 = vmul.f32 1.0, %v5115
    %v5117 = vmul.f32 %v5116, %v5106
    %v5118 = vadd.f32 %v5065, %v5117
    %v5119 = vtanh.pop %v5118
    %v5120 = vsub.f32 1.0, %v5116
    %5122 = vrot.lane.b32.xlu0 %v5119, 64
    %v5123 = vpop.permute.xlu0 %5122
    %v5125 = vmul.f32 %v5120, %v5123
    %v5126 = vmul.f32 %v5116, %v4679
    %v5127 = vadd.f32 %v5125, %v5126
    %v5128 = vpack.c.bf16 %v5127, %v5127
    %5130 = vrot.lane.b32.xlu0 %v5128, 64
    %v5131 = vpop.permute.xlu0 %5130
    %v5133 = vsel %vm279, %v5131, 0
    %5135 = vmatprep.subr.bf16.mxu0 0
    %5136 = vmatpush1.bf16.msra.mxu0 %v3156
    %5137 = vmatprep.subr.bf16.mxu0 0
    %5138 = vmatpush1.bf16.msra.mxu0 %v3157
    %5139 = vmatprep.subr.bf16.mxu0 0
    %5140 = vmatpush1.bf16.msra.mxu0 %v3158
    %5141 = vmatprep.subr.bf16.mxu0 0
    %5142 = vmatpush1.bf16.msra.mxu0 %v3159
    %5143 = vmatprep.subr.bf16.mxu0 0
    %5144 = vmatpush1.bf16.msra.mxu0 0
    %5145 = vmatprep.subr.bf16.mxu0 0
    %5146 = vmatpush1.bf16.msra.mxu0 0
    %5147 = vmatprep.subr.bf16.mxu0 0
    %5148 = vmatpush1.bf16.msra.mxu0 0
    %5149 = vmatprep.subr.bf16.mxu0 0
    %5150 = vmatpush1.bf16.msra.mxu0 0
    %5151 = vmatprep.subr.bf16.mxu0 0
    %5152 = vmatpush1.bf16.msra.mxu0 0
    %5153 = vmatprep.subr.bf16.mxu0 0
    %5154 = vmatpush1.bf16.msra.mxu0 0
    %5155 = vmatprep.subr.bf16.mxu0 0
    %5156 = vmatpush1.bf16.msra.mxu0 0
    %5157 = vmatprep.subr.bf16.mxu0 0
    %5158 = vmatpush1.bf16.msra.mxu0 0
    %5159 = vmatprep.subr.bf16.mxu0 0
    %5160 = vmatpush1.bf16.msra.mxu0 0
    %5161 = vmatprep.subr.bf16.mxu0 0
    %5162 = vmatpush1.bf16.msra.mxu0 0
    %5163 = vmatprep.subr.bf16.mxu0 0
    %5164 = vmatpush1.bf16.msra.mxu0 0
    %5165 = vmatprep.subr.bf16.mxu0 0
    %5166 = vmatpush1.bf16.msra.mxu0 0
    %5167 = vmatprep.mubr.bf16.mxu0 0
    %5168 = vmatmul.mubr.bf16.gmra.mrb[0].mxu0 %v5133
    %v5169 = vpop.f32.mrb[0].mxu0
    %v5170 = vadd.f32 %v2707, %v5169
    %v5171 = vpop.f32.mrb[0].mxu0
    %v5172 = vpop.f32.mrb[0].mxu0
    %v5173 = vpop.f32.mrb[0].mxu0
    %5174 = vdwg.mxu0
    %v5175 = vpack.c.bf16 %v5170, %v5170
    %5176 = vmatprep.subr.bf16.mxu0 %v3257
    %5177 = vmatpush1.bf16.msra.mxu0 %v3256
    %5178 = vmatprep.subr.bf16.mxu0 %v3259
    %5179 = vmatpush1.bf16.msra.mxu0 %v3258
    %5180 = vmatprep.subr.bf16.mxu0 %v3261
    %5181 = vmatpush1.bf16.msra.mxu0 %v3260
    %5182 = vmatprep.subr.bf16.mxu0 %v3263
    %5183 = vmatpush1.bf16.msra.mxu0 %v3262
    %5184 = vmatprep.subr.bf16.mxu0 %v3265
    %5185 = vmatpush1.bf16.msra.mxu0 %v3264
    %5186 = vmatprep.subr.bf16.mxu0 %v3267
    %5187 = vmatpush1.bf16.msra.mxu0 %v3266
    %5188 = vmatprep.subr.bf16.mxu0 %v3269
    %5189 = vmatpush1.bf16.msra.mxu0 %v3268
    %5190 = vmatprep.subr.bf16.mxu0 %v3271
    %5191 = vmatpush1.bf16.msra.mxu0 %v3270
    %5192 = vmatprep.subr.bf16.mxu0 0
    %5193 = vmatpush1.bf16.msra.mxu0 0
    %5194 = vmatprep.subr.bf16.mxu0 0
    %5195 = vmatpush1.bf16.msra.mxu0 0
    %5196 = vmatprep.subr.bf16.mxu0 0
    %5197 = vmatpush1.bf16.msra.mxu0 0
    %5198 = vmatprep.subr.bf16.mxu0 0
    %5199 = vmatpush1.bf16.msra.mxu0 0
    %5200 = vmatprep.subr.bf16.mxu0 0
    %5201 = vmatpush1.bf16.msra.mxu0 0
    %5202 = vmatprep.subr.bf16.mxu0 0
    %5203 = vmatpush1.bf16.msra.mxu0 0
    %5204 = vmatprep.subr.bf16.mxu0 0
    %5205 = vmatpush1.bf16.msra.mxu0 0
    %5206 = vmatprep.subr.bf16.mxu0 0
    %5207 = vmatpush1.bf16.msra.mxu0 0
    %5208 = vmatprep.mubr.bf16.mxu0 0
    %5209 = vmatmul.mubr.bf16.gmra.mrb[0].mxu0 %v5175
    %v5210 = vpop.f32.mrb[0].mxu0
    %v5211 = vadd.f32 %v2730, %v5210
    %v5212 = vpop.f32.mrb[0].mxu0
    %v5213 = vadd.f32 %v2734, %v5212
    %v5214 = vpop.f32.mrb[0].mxu0
    %v5215 = vpop.f32.mrb[0].mxu0
    %5216 = vdwg.mxu0
    %v5217 = vpack.c.bf16 %v5211, %v5211
    %v5218 = vpack.c.bf16 %v5213, %v5213
    %5219 = vmatprep.subr.bf16.mxu0 0
    %5220 = vmatpush1.bf16.msra.mxu0 %v3395
    %5221 = vmatprep.subr.bf16.mxu0 0
    %5222 = vmatpush1.bf16.msra.mxu0 %v3396
    %5223 = vmatprep.subr.bf16.mxu0 0
    %5224 = vmatpush1.bf16.msra.mxu0 %v3397
    %5225 = vmatprep.subr.bf16.mxu0 0
    %5226 = vmatpush1.bf16.msra.mxu0 %v3398
    %5227 = vmatprep.subr.bf16.mxu0 0
    %5228 = vmatpush1.bf16.msra.mxu0 %v3399
    %5229 = vmatprep.subr.bf16.mxu0 0
    %5230 = vmatpush1.bf16.msra.mxu0 %v3400
    %5231 = vmatprep.subr.bf16.mxu0 0
    %5232 = vmatpush1.bf16.msra.mxu0 %v3401
    %5233 = vmatprep.subr.bf16.mxu0 0
    %5234 = vmatpush1.bf16.msra.mxu0 %v3402
    %5235 = vmatprep.subr.bf16.mxu0 0
    %5236 = vmatpush1.bf16.msra.mxu0 %v3403
    %5237 = vmatprep.subr.bf16.mxu0 0
    %5238 = vmatpush1.bf16.msra.mxu0 %v3404
    %5239 = vmatprep.subr.bf16.mxu0 0
    %5240 = vmatpush1.bf16.msra.mxu0 %v3405
    %5241 = vmatprep.subr.bf16.mxu0 0
    %5242 = vmatpush1.bf16.msra.mxu0 %v3406
    %5243 = vmatprep.subr.bf16.mxu0 0
    %5244 = vmatpush1.bf16.msra.mxu0 %v3407
    %5245 = vmatprep.subr.bf16.mxu0 0
    %5246 = vmatpush1.bf16.msra.mxu0 %v3408
    %5247 = vmatprep.subr.bf16.mxu0 0
    %5248 = vmatpush1.bf16.msra.mxu0 %v3409
    %5249 = vmatprep.subr.bf16.mxu0 0
    %5250 = vmatpush1.bf16.msra.mxu0 %v3410
    %5251 = vmatprep.mubr.bf16.mxu0 %v5218
    %5252 = vmatmul.mubr.bf16.gmra.mrb[0].mxu0 %v5217
    %v5253 = vpop.f32.mrb[0].mxu0
    %v5254 = vadd.f32 %v2774, %v5253
    %v5255 = vpop.f32.mrb[0].mxu0
    %v5256 = vpop.f32.mrb[0].mxu0
    %v5257 = vpop.f32.mrb[0].mxu0
    %5258 = vdwg.mxu0
    %s5259 = scalar_lea.vmem %s26, 40
    %5260 = vst [vmem:[%s5259] sm:$0xff] %v5254
    %5261 = vst.msk [vmem:[#allocation4] sm:$0xff] %vm142, %v2608
    %s5262 = sld [smem:[#allocation5 + $0x5]]
    %p5263 = scmp.eq.s32.totalorder %s5262, 0
    // Predicated region
    $region126: #{seq2seq_forward.1} parent=1 // pred_check
      %p5264 = pneg %p5263
    $region127: #{seq2seq_forward.1} parent=1 // pred_check_branch
      %5266 = sbr.rel (%p5264) target = $region129
    $region128: #{seq2seq_forward.1} parent=1 // pred_region
      %5267 = vmax.xlane.f32.xlu0 %v5254
      %v5268 = vpop.xlane.xlu0 %5267
      %v5269 = vlaneseq
      %v5270 = vand.u32 %v5269, 127
      %vm5271 = vcmp.ge.f32.partialorder %v5254, %v5268
      %v5272 = vsel %vm5271, %v5270, 128
      %v5273 = vand.u32 %v5272, 65535
      %v5274 = vshra.s32 %v5272, 16
      %v5275 = vcvt.s32.f32 %v5273
      %v5276 = vcvt.s32.f32 %v5274
      %5277 = vmin.xlane.f32.xlu0 %v5276
      %v5278 = vpop.xlane.xlu0 %5277
      %vm5279 = vcmp.eq.f32.partialorder %v5276, %v5278
      %v5280 = vsel %vm5279, %v5275, inf
      %5281 = vmin.xlane.f32.xlu0 %v5280
      %v5282 = vpop.xlane.xlu0 %5281
      %v5283 = vcvt.f32.s32 %v5282
      %v5284 = vcvt.f32.s32 %v5278
      %v5285 = vshll.u32 %v5284, 16
      %v5286 = vadd.s32 %v5285, %v5283
      %vm5287 = vcmp.eq.s32.totalorder %v5286, %v5270
      %v5288 = vsel %vm5287, 1, 0
      %v5289 = vcvt.s32.f32 %v5288
      %v5291 = vsel %vm2487, %v5289, 0
      %5293 = vmatprep.subr.mxu0 0.0
      %5294 = vmatpush1.msra.mxu0 %v2477
      %5295 = vmatprep.subr.mxu0 0.0
      %5296 = vmatpush1.msra.mxu0 %v2514
      %5297 = vmatprep.subr.mxu0 0.0
      %5298 = vmatpush1.msra.mxu0 0.0
      %5299 = vmatprep.subr.mxu0 0.0
      %5300 = vmatpush1.msra.mxu0 0.0
      %5301 = vmatprep.subr.mxu0 0.0
      %5302 = vmatpush1.msra.mxu0 0.0
      %5303 = vmatprep.subr.mxu0 0.0
      %5304 = vmatpush1.msra.mxu0 0.0
      %5305 = vmatprep.subr.mxu0 0.0
      %5306 = vmatpush1.msra.mxu0 0.0
      %5307 = vmatprep.subr.mxu0 0.0
      %5308 = vmatpush1.msra.mxu0 0.0
      %5309 = vmatprep.subr.mxu0 0.0
      %5310 = vmatpush1.msra.mxu0 0.0
      %5311 = vmatprep.subr.mxu0 0.0
      %5312 = vmatpush1.msra.mxu0 0.0
      %5313 = vmatprep.subr.mxu0 0.0
      %5314 = vmatpush1.msra.mxu0 0.0
      %5315 = vmatprep.subr.mxu0 0.0
      %5316 = vmatpush1.msra.mxu0 0.0
      %5317 = vmatprep.subr.mxu0 0.0
      %5318 = vmatpush1.msra.mxu0 0.0
      %5319 = vmatprep.subr.mxu0 0.0
      %5320 = vmatpush1.msra.mxu0 0.0
      %5321 = vmatprep.subr.mxu0 0.0
      %5322 = vmatpush1.msra.mxu0 0.0
      %5323 = vmatprep.subr.mxu0 0.0
      %5324 = vmatpush1.msra.mxu0 0.0
      %5325 = vmatprep.subr.mxu0 0.0
      %5326 = vmatpush1.msra.mxu0 0.0
      %5327 = vmatprep.subr.mxu0 0.0
      %5328 = vmatpush1.msra.mxu0 0.0
      %5329 = vmatprep.subr.mxu0 0.0
      %5330 = vmatpush1.msra.mxu0 0.0
      %5331 = vmatprep.subr.mxu0 0.0
      %5332 = vmatpush1.msra.mxu0 0.0
      %5333 = vmatprep.subr.mxu0 0.0
      %5334 = vmatpush1.msra.mxu0 0.0
      %5335 = vmatprep.subr.mxu0 0.0
      %5336 = vmatpush1.msra.mxu0 0.0
      %5337 = vmatprep.subr.mxu0 0.0
      %5338 = vmatpush1.msra.mxu0 0.0
      %5339 = vmatprep.subr.mxu0 0.0
      %5340 = vmatpush1.msra.mxu0 0.0
      %5341 = vmatprep.subr.mxu0 0.0
      %5342 = vmatpush1.msra.mxu0 0.0
      %5343 = vmatprep.subr.mxu0 0.0
      %5344 = vmatpush1.msra.mxu0 0.0
      %5345 = vmatprep.subr.mxu0 0.0
      %5346 = vmatpush1.msra.mxu0 0.0
      %5347 = vmatprep.subr.mxu0 0.0
      %5348 = vmatpush1.msra.mxu0 0.0
      %5349 = vmatprep.subr.mxu0 0.0
      %5350 = vmatpush1.msra.mxu0 0.0
      %5351 = vmatprep.subr.mxu0 0.0
      %5352 = vmatpush1.msra.mxu0 0.0
      %5353 = vmatprep.subr.mxu0 0.0
      %5354 = vmatpush1.msra.mxu0 0.0
      %5355 = vmatprep.subr.mxu0 0.0
      %5356 = vmatpush1.msra.mxu0 0.0
      %5357 = vmatprep.mubr.f32.mxu0 0.0
      %5358 = vmatmul.mubr.f32.gmra.mrb[0].mxu0 %v5291
      %v5359 = vpop.f32.mrb[0].mxu0
      %v5360 = vadd.f32 0.0, %v5359
      %v5361 = vpop.f32.mrb[0].mxu0
      %5362 = vdwg.mxu0
      %5363 = vst.msk [vmem:[#allocation4] sm:$0xff] %vm142, %v5360
    $region129: #{seq2seq_forward.1} parent=1 // pred_fallthru
      _
    %v5364 = vld [vmem:[#allocation4] sm:$0xff]
    %v5365 = vpack.c.bf16 %v5364, %v5364
    %v5367 = vsel %vm142, %v5365, 0
    %5369 = vmatprep.subr.bf16.mxu0 %v2787
    %5370 = vmatpush1.bf16.msra.mxu0 %v2786
    %5371 = vmatprep.subr.bf16.mxu0 0
    %5372 = vmatpush1.bf16.msra.mxu0 0
    %5373 = vmatprep.subr.bf16.mxu0 0
    %5374 = vmatpush1.bf16.msra.mxu0 0
    %5375 = vmatprep.subr.bf16.mxu0 0
    %5376 = vmatpush1.bf16.msra.mxu0 0
    %5377 = vmatprep.subr.bf16.mxu0 0
    %5378 = vmatpush1.bf16.msra.mxu0 0
    %5379 = vmatprep.subr.bf16.mxu0 0
    %5380 = vmatpush1.bf16.msra.mxu0 0
    %5381 = vmatprep.subr.bf16.mxu0 0
    %5382 = vmatpush1.bf16.msra.mxu0 0
    %5383 = vmatprep.subr.bf16.mxu0 0
    %5384 = vmatpush1.bf16.msra.mxu0 0
    %5385 = vmatprep.subr.bf16.mxu0 0
    %5386 = vmatpush1.bf16.msra.mxu0 0
    %5387 = vmatprep.subr.bf16.mxu0 0
    %5388 = vmatpush1.bf16.msra.mxu0 0
    %5389 = vmatprep.subr.bf16.mxu0 0
    %5390 = vmatpush1.bf16.msra.mxu0 0
    %5391 = vmatprep.subr.bf16.mxu0 0
    %5392 = vmatpush1.bf16.msra.mxu0 0
    %5393 = vmatprep.subr.bf16.mxu0 0
    %5394 = vmatpush1.bf16.msra.mxu0 0
    %5395 = vmatprep.subr.bf16.mxu0 0
    %5396 = vmatpush1.bf16.msra.mxu0 0
    %5397 = vmatprep.subr.bf16.mxu0 0
    %5398 = vmatpush1.bf16.msra.mxu0 0
    %5399 = vmatprep.subr.bf16.mxu0 0
    %5400 = vmatpush1.bf16.msra.mxu0 0
    %5401 = vmatprep.mubr.bf16.mxu0 0
    %5402 = vmatmul.mubr.bf16.gmra.mrb[0].mxu0 %v5367
    %v5403 = vpop.f32.mrb[0].mxu0
    %v5404 = vadd.f32 %v2635, %v5403
    %v5405 = vpop.f32.mrb[0].mxu0
    %v5406 = vadd.f32 %v2639, %v5405
    %v5407 = vpop.f32.mrb[0].mxu0
    %v5408 = vpop.f32.mrb[0].mxu0
    %5409 = vdwg.mxu0
    %5410 = vmatprep.subr.bf16.mxu0 %v2860
    %5411 = vmatpush1.bf16.msra.mxu0 %v2859
    %5412 = vmatprep.subr.bf16.mxu0 %v2862
    %5413 = vmatpush1.bf16.msra.mxu0 %v2861
    %5414 = vmatprep.subr.bf16.mxu0 %v2864
    %5415 = vmatpush1.bf16.msra.mxu0 %v2863
    %5416 = vmatprep.subr.bf16.mxu0 %v2866
    %5417 = vmatpush1.bf16.msra.mxu0 %v2865
    %5418 = vmatprep.subr.bf16.mxu0 0
    %5419 = vmatpush1.bf16.msra.mxu0 0
    %5420 = vmatprep.subr.bf16.mxu0 0
    %5421 = vmatpush1.bf16.msra.mxu0 0
    %5422 = vmatprep.subr.bf16.mxu0 0
    %5423 = vmatpush1.bf16.msra.mxu0 0
    %5424 = vmatprep.subr.bf16.mxu0 0
    %5425 = vmatpush1.bf16.msra.mxu0 0
    %5426 = vmatprep.subr.bf16.mxu0 0
    %5427 = vmatpush1.bf16.msra.mxu0 0
    %5428 = vmatprep.subr.bf16.mxu0 0
    %5429 = vmatpush1.bf16.msra.mxu0 0
    %5430 = vmatprep.subr.bf16.mxu0 0
    %5431 = vmatpush1.bf16.msra.mxu0 0
    %5432 = vmatprep.subr.bf16.mxu0 0
    %5433 = vmatpush1.bf16.msra.mxu0 0
    %5434 = vmatprep.subr.bf16.mxu0 0
    %5435 = vmatpush1.bf16.msra.mxu0 0
    %5436 = vmatprep.subr.bf16.mxu0 0
    %5437 = vmatpush1.bf16.msra.mxu0 0
    %5438 = vmatprep.subr.bf16.mxu0 0
    %5439 = vmatpush1.bf16.msra.mxu0 0
    %5440 = vmatprep.subr.bf16.mxu0 0
    %5441 = vmatpush1.bf16.msra.mxu0 0
    %5442 = vmatprep.mubr.bf16.mxu0 0
    %5443 = vmatmul.mubr.bf16.gmra.mrb[0].mxu0 %v5026
    %v5444 = vpop.f32.mrb[0].mxu0
    %v5445 = vadd.f32 %v2647, %v5444
    %v5446 = vpop.f32.mrb[0].mxu0
    %v5447 = vadd.f32 %v2651, %v5446
    %v5448 = vpop.f32.mrb[0].mxu0
    %v5449 = vpop.f32.mrb[0].mxu0
    %5450 = vdwg.mxu0
    %v5451 = vadd.f32 %v5404, %v5445
    %v5452 = vxor.u32 %v5451, 2147483648
    %v5453 = vmul.f32 %v5452, 1.442695
    %v5454 = vpow.pop %v5453
    %v5455 = vadd.f32 %v5454, 1.0
    %v5456 = vrcp.pop %v5455
    %v5457 = vmul.f32 1.0, %v5456
    %v5458 = vmul.f32 %v5457, %v5447
    %v5459 = vadd.f32 %v5406, %v5458
    %v5460 = vtanh.pop %v5459
    %v5461 = vsub.f32 1.0, %v5457
    %5463 = vrot.lane.b32.xlu0 %v5460, 64
    %v5464 = vpop.permute.xlu0 %5463
    %v5466 = vmul.f32 %v5461, %v5464
    %v5467 = vmul.f32 %v5457, %v5020
    %v5468 = vadd.f32 %v5466, %v5467
    %v5469 = vpack.c.bf16 %v5468, %v5468
    %5471 = vrot.lane.b32.xlu0 %v5469, 64
    %v5472 = vpop.permute.xlu0 %5471
    %v5474 = vsel %vm279, %v5472, 0
    %5476 = vmatprep.subr.bf16.mxu0 %v2970
    %5477 = vmatpush1.bf16.msra.mxu0 %v2969
    %5478 = vmatprep.subr.bf16.mxu0 %v2972
    %5479 = vmatpush1.bf16.msra.mxu0 %v2971
    %5480 = vmatprep.subr.bf16.mxu0 %v2974
    %5481 = vmatpush1.bf16.msra.mxu0 %v2973
    %5482 = vmatprep.subr.bf16.mxu0 %v2976
    %5483 = vmatpush1.bf16.msra.mxu0 %v2975
    %5484 = vmatprep.subr.bf16.mxu0 0
    %5485 = vmatpush1.bf16.msra.mxu0 0
    %5486 = vmatprep.subr.bf16.mxu0 0
    %5487 = vmatpush1.bf16.msra.mxu0 0
    %5488 = vmatprep.subr.bf16.mxu0 0
    %5489 = vmatpush1.bf16.msra.mxu0 0
    %5490 = vmatprep.subr.bf16.mxu0 0
    %5491 = vmatpush1.bf16.msra.mxu0 0
    %5492 = vmatprep.subr.bf16.mxu0 0
    %5493 = vmatpush1.bf16.msra.mxu0 0
    %5494 = vmatprep.subr.bf16.mxu0 0
    %5495 = vmatpush1.bf16.msra.mxu0 0
    %5496 = vmatprep.subr.bf16.mxu0 0
    %5497 = vmatpush1.bf16.msra.mxu0 0
    %5498 = vmatprep.subr.bf16.mxu0 0
    %5499 = vmatpush1.bf16.msra.mxu0 0
    %5500 = vmatprep.subr.bf16.mxu0 0
    %5501 = vmatpush1.bf16.msra.mxu0 0
    %5502 = vmatprep.subr.bf16.mxu0 0
    %5503 = vmatpush1.bf16.msra.mxu0 0
    %5504 = vmatprep.subr.bf16.mxu0 0
    %5505 = vmatpush1.bf16.msra.mxu0 0
    %5506 = vmatprep.subr.bf16.mxu0 0
    %5507 = vmatpush1.bf16.msra.mxu0 0
    %5508 = vmatprep.mubr.bf16.mxu0 0
    %5509 = vmatmul.mubr.bf16.gmra.mrb[0].mxu0 %v5474
    %v5510 = vpop.f32.mrb[0].mxu0
    %v5511 = vadd.f32 %v2675, %v5510
    %v5512 = vpop.f32.mrb[0].mxu0
    %v5513 = vadd.f32 %v2679, %v5512
    %v5514 = vpop.f32.mrb[0].mxu0
    %v5515 = vpop.f32.mrb[0].mxu0
    %5516 = vdwg.mxu0
    %5517 = vmatprep.subr.bf16.mxu0 %v3055
    %5518 = vmatpush1.bf16.msra.mxu0 %v3054
    %5519 = vmatprep.subr.bf16.mxu0 %v3057
    %5520 = vmatpush1.bf16.msra.mxu0 %v3056
    %5521 = vmatprep.subr.bf16.mxu0 %v3059
    %5522 = vmatpush1.bf16.msra.mxu0 %v3058
    %5523 = vmatprep.subr.bf16.mxu0 %v3061
    %5524 = vmatpush1.bf16.msra.mxu0 %v3060
    %5525 = vmatprep.subr.bf16.mxu0 0
    %5526 = vmatpush1.bf16.msra.mxu0 0
    %5527 = vmatprep.subr.bf16.mxu0 0
    %5528 = vmatpush1.bf16.msra.mxu0 0
    %5529 = vmatprep.subr.bf16.mxu0 0
    %5530 = vmatpush1.bf16.msra.mxu0 0
    %5531 = vmatprep.subr.bf16.mxu0 0
    %5532 = vmatpush1.bf16.msra.mxu0 0
    %5533 = vmatprep.subr.bf16.mxu0 0
    %5534 = vmatpush1.bf16.msra.mxu0 0
    %5535 = vmatprep.subr.bf16.mxu0 0
    %5536 = vmatpush1.bf16.msra.mxu0 0
    %5537 = vmatprep.subr.bf16.mxu0 0
    %5538 = vmatpush1.bf16.msra.mxu0 0
    %5539 = vmatprep.subr.bf16.mxu0 0
    %5540 = vmatpush1.bf16.msra.mxu0 0
    %5541 = vmatprep.subr.bf16.mxu0 0
    %5542 = vmatpush1.bf16.msra.mxu0 0
    %5543 = vmatprep.subr.bf16.mxu0 0
    %5544 = vmatpush1.bf16.msra.mxu0 0
    %5545 = vmatprep.subr.bf16.mxu0 0
    %5546 = vmatpush1.bf16.msra.mxu0 0
    %5547 = vmatprep.subr.bf16.mxu0 0
    %5548 = vmatpush1.bf16.msra.mxu0 0
    %5549 = vmatprep.mubr.bf16.mxu0 0
    %5550 = vmatmul.mubr.bf16.gmra.mrb[0].mxu0 %v5133
    %v5551 = vpop.f32.mrb[0].mxu0
    %v5552 = vadd.f32 %v2687, %v5551
    %v5553 = vpop.f32.mrb[0].mxu0
    %v5554 = vadd.f32 %v2691, %v5553
    %v5555 = vpop.f32.mrb[0].mxu0
    %v5556 = vpop.f32.mrb[0].mxu0
    %5557 = vdwg.mxu0
    %v5558 = vadd.f32 %v5511, %v5552
    %v5559 = vxor.u32 %v5558, 2147483648
    %v5560 = vmul.f32 %v5559, 1.442695
    %v5561 = vpow.pop %v5560
    %v5562 = vadd.f32 %v5561, 1.0
    %v5563 = vrcp.pop %v5562
    %v5564 = vmul.f32 1.0, %v5563
    %v5565 = vmul.f32 %v5564, %v5554
    %v5566 = vadd.f32 %v5513, %v5565
    %v5567 = vtanh.pop %v5566
    %v5568 = vsub.f32 1.0, %v5564
    %5570 = vrot.lane.b32.xlu0 %v5567, 64
    %v5571 = vpop.permute.xlu0 %5570
    %v5573 = vmul.f32 %v5568, %v5571
    %v5574 = vmul.f32 %v5564, %v5127
    %v5575 = vadd.f32 %v5573, %v5574
    %v5576 = vpack.c.bf16 %v5575, %v5575
    %5578 = vrot.lane.b32.xlu0 %v5576, 64
    %v5579 = vpop.permute.xlu0 %5578
    %v5581 = vsel %vm279, %v5579, 0
    %5583 = vmatprep.subr.bf16.mxu0 0
    %5584 = vmatpush1.bf16.msra.mxu0 %v3156
    %5585 = vmatprep.subr.bf16.mxu0 0
    %5586 = vmatpush1.bf16.msra.mxu0 %v3157
    %5587 = vmatprep.subr.bf16.mxu0 0
    %5588 = vmatpush1.bf16.msra.mxu0 %v3158
    %5589 = vmatprep.subr.bf16.mxu0 0
    %5590 = vmatpush1.bf16.msra.mxu0 %v3159
    %5591 = vmatprep.subr.bf16.mxu0 0
    %5592 = vmatpush1.bf16.msra.mxu0 0
    %5593 = vmatprep.subr.bf16.mxu0 0
    %5594 = vmatpush1.bf16.msra.mxu0 0
    %5595 = vmatprep.subr.bf16.mxu0 0
    %5596 = vmatpush1.bf16.msra.mxu0 0
    %5597 = vmatprep.subr.bf16.mxu0 0
    %5598 = vmatpush1.bf16.msra.mxu0 0
    %5599 = vmatprep.subr.bf16.mxu0 0
    %5600 = vmatpush1.bf16.msra.mxu0 0
    %5601 = vmatprep.subr.bf16.mxu0 0
    %5602 = vmatpush1.bf16.msra.mxu0 0
    %5603 = vmatprep.subr.bf16.mxu0 0
    %5604 = vmatpush1.bf16.msra.mxu0 0
    %5605 = vmatprep.subr.bf16.mxu0 0
    %5606 = vmatpush1.bf16.msra.mxu0 0
    %5607 = vmatprep.subr.bf16.mxu0 0
    %5608 = vmatpush1.bf16.msra.mxu0 0
    %5609 = vmatprep.subr.bf16.mxu0 0
    %5610 = vmatpush1.bf16.msra.mxu0 0
    %5611 = vmatprep.subr.bf16.mxu0 0
    %5612 = vmatpush1.bf16.msra.mxu0 0
    %5613 = vmatprep.subr.bf16.mxu0 0
    %5614 = vmatpush1.bf16.msra.mxu0 0
    %5615 = vmatprep.mubr.bf16.mxu0 0
    %5616 = vmatmul.mubr.bf16.gmra.mrb[0].mxu0 %v5581
    %v5617 = vpop.f32.mrb[0].mxu0
    %v5618 = vadd.f32 %v2707, %v5617
    %v5619 = vpop.f32.mrb[0].mxu0
    %v5620 = vpop.f32.mrb[0].mxu0
    %v5621 = vpop.f32.mrb[0].mxu0
    %5622 = vdwg.mxu0
    %v5623 = vpack.c.bf16 %v5618, %v5618
    %5624 = vmatprep.subr.bf16.mxu0 %v3257
    %5625 = vmatpush1.bf16.msra.mxu0 %v3256
    %5626 = vmatprep.subr.bf16.mxu0 %v3259
    %5627 = vmatpush1.bf16.msra.mxu0 %v3258
    %5628 = vmatprep.subr.bf16.mxu0 %v3261
    %5629 = vmatpush1.bf16.msra.mxu0 %v3260
    %5630 = vmatprep.subr.bf16.mxu0 %v3263
    %5631 = vmatpush1.bf16.msra.mxu0 %v3262
    %5632 = vmatprep.subr.bf16.mxu0 %v3265
    %5633 = vmatpush1.bf16.msra.mxu0 %v3264
    %5634 = vmatprep.subr.bf16.mxu0 %v3267
    %5635 = vmatpush1.bf16.msra.mxu0 %v3266
    %5636 = vmatprep.subr.bf16.mxu0 %v3269
    %5637 = vmatpush1.bf16.msra.mxu0 %v3268
    %5638 = vmatprep.subr.bf16.mxu0 %v3271
    %5639 = vmatpush1.bf16.msra.mxu0 %v3270
    %5640 = vmatprep.subr.bf16.mxu0 0
    %5641 = vmatpush1.bf16.msra.mxu0 0
    %5642 = vmatprep.subr.bf16.mxu0 0
    %5643 = vmatpush1.bf16.msra.mxu0 0
    %5644 = vmatprep.subr.bf16.mxu0 0
    %5645 = vmatpush1.bf16.msra.mxu0 0
    %5646 = vmatprep.subr.bf16.mxu0 0
    %5647 = vmatpush1.bf16.msra.mxu0 0
    %5648 = vmatprep.subr.bf16.mxu0 0
    %5649 = vmatpush1.bf16.msra.mxu0 0
    %5650 = vmatprep.subr.bf16.mxu0 0
    %5651 = vmatpush1.bf16.msra.mxu0 0
    %5652 = vmatprep.subr.bf16.mxu0 0
    %5653 = vmatpush1.bf16.msra.mxu0 0
    %5654 = vmatprep.subr.bf16.mxu0 0
    %5655 = vmatpush1.bf16.msra.mxu0 0
    %5656 = vmatprep.mubr.bf16.mxu0 0
    %5657 = vmatmul.mubr.bf16.gmra.mrb[0].mxu0 %v5623
    %v5658 = vpop.f32.mrb[0].mxu0
    %v5659 = vadd.f32 %v2730, %v5658
    %v5660 = vpop.f32.mrb[0].mxu0
    %v5661 = vadd.f32 %v2734, %v5660
    %v5662 = vpop.f32.mrb[0].mxu0
    %v5663 = vpop.f32.mrb[0].mxu0
    %5664 = vdwg.mxu0
    %v5665 = vpack.c.bf16 %v5659, %v5659
    %v5666 = vpack.c.bf16 %v5661, %v5661
    %5667 = vmatprep.subr.bf16.mxu0 0
    %5668 = vmatpush1.bf16.msra.mxu0 %v3395
    %5669 = vmatprep.subr.bf16.mxu0 0
    %5670 = vmatpush1.bf16.msra.mxu0 %v3396
    %5671 = vmatprep.subr.bf16.mxu0 0
    %5672 = vmatpush1.bf16.msra.mxu0 %v3397
    %5673 = vmatprep.subr.bf16.mxu0 0
    %5674 = vmatpush1.bf16.msra.mxu0 %v3398
    %5675 = vmatprep.subr.bf16.mxu0 0
    %5676 = vmatpush1.bf16.msra.mxu0 %v3399
    %5677 = vmatprep.subr.bf16.mxu0 0
    %5678 = vmatpush1.bf16.msra.mxu0 %v3400
    %5679 = vmatprep.subr.bf16.mxu0 0
    %5680 = vmatpush1.bf16.msra.mxu0 %v3401
    %5681 = vmatprep.subr.bf16.mxu0 0
    %5682 = vmatpush1.bf16.msra.mxu0 %v3402
    %5683 = vmatprep.subr.bf16.mxu0 0
    %5684 = vmatpush1.bf16.msra.mxu0 %v3403
    %5685 = vmatprep.subr.bf16.mxu0 0
    %5686 = vmatpush1.bf16.msra.mxu0 %v3404
    %5687 = vmatprep.subr.bf16.mxu0 0
    %5688 = vmatpush1.bf16.msra.mxu0 %v3405
    %5689 = vmatprep.subr.bf16.mxu0 0
    %5690 = vmatpush1.bf16.msra.mxu0 %v3406
    %5691 = vmatprep.subr.bf16.mxu0 0
    %5692 = vmatpush1.bf16.msra.mxu0 %v3407
    %5693 = vmatprep.subr.bf16.mxu0 0
    %5694 = vmatpush1.bf16.msra.mxu0 %v3408
    %5695 = vmatprep.subr.bf16.mxu0 0
    %5696 = vmatpush1.bf16.msra.mxu0 %v3409
    %5697 = vmatprep.subr.bf16.mxu0 0
    %5698 = vmatpush1.bf16.msra.mxu0 %v3410
    %5699 = vmatprep.mubr.bf16.mxu0 %v5666
    %5700 = vmatmul.mubr.bf16.gmra.mrb[0].mxu0 %v5665
    %v5701 = vpop.f32.mrb[0].mxu0
    %v5702 = vadd.f32 %v2774, %v5701
    %v5703 = vpop.f32.mrb[0].mxu0
    %v5704 = vpop.f32.mrb[0].mxu0
    %v5705 = vpop.f32.mrb[0].mxu0
    %5706 = vdwg.mxu0
    %s5707 = scalar_lea.vmem %s26, 48
    %5708 = vst [vmem:[%s5707] sm:$0xff] %v5702
    %5709 = vst.msk [vmem:[#allocation4] sm:$0xff] %vm142, %v2613
    %s5710 = sld [smem:[#allocation5 + $0x6]]
    %p5711 = scmp.eq.s32.totalorder %s5710, 0
    // Predicated region
    $region130: #{seq2seq_forward.1} parent=1 // pred_check
      %p5712 = pneg %p5711
    $region131: #{seq2seq_forward.1} parent=1 // pred_check_branch
      %5714 = sbr.rel (%p5712) target = $region133
    $region132: #{seq2seq_forward.1} parent=1 // pred_region
      %5715 = vmax.xlane.f32.xlu0 %v5702
      %v5716 = vpop.xlane.xlu0 %5715
      %v5717 = vlaneseq
      %v5718 = vand.u32 %v5717, 127
      %vm5719 = vcmp.ge.f32.partialorder %v5702, %v5716
      %v5720 = vsel %vm5719, %v5718, 128
      %v5721 = vand.u32 %v5720, 65535
      %v5722 = vshra.s32 %v5720, 16
      %v5723 = vcvt.s32.f32 %v5721
      %v5724 = vcvt.s32.f32 %v5722
      %5725 = vmin.xlane.f32.xlu0 %v5724
      %v5726 = vpop.xlane.xlu0 %5725
      %vm5727 = vcmp.eq.f32.partialorder %v5724, %v5726
      %v5728 = vsel %vm5727, %v5723, inf
      %5729 = vmin.xlane.f32.xlu0 %v5728
      %v5730 = vpop.xlane.xlu0 %5729
      %v5731 = vcvt.f32.s32 %v5730
      %v5732 = vcvt.f32.s32 %v5726
      %v5733 = vshll.u32 %v5732, 16
      %v5734 = vadd.s32 %v5733, %v5731
      %vm5735 = vcmp.eq.s32.totalorder %v5734, %v5718
      %v5736 = vsel %vm5735, 1, 0
      %v5737 = vcvt.s32.f32 %v5736
      %v5739 = vsel %vm2487, %v5737, 0
      %5741 = vmatprep.subr.mxu0 0.0
      %5742 = vmatpush1.msra.mxu0 %v2477
      %5743 = vmatprep.subr.mxu0 0.0
      %5744 = vmatpush1.msra.mxu0 %v2514
      %5745 = vmatprep.subr.mxu0 0.0
      %5746 = vmatpush1.msra.mxu0 0.0
      %5747 = vmatprep.subr.mxu0 0.0
      %5748 = vmatpush1.msra.mxu0 0.0
      %5749 = vmatprep.subr.mxu0 0.0
      %5750 = vmatpush1.msra.mxu0 0.0
      %5751 = vmatprep.subr.mxu0 0.0
      %5752 = vmatpush1.msra.mxu0 0.0
      %5753 = vmatprep.subr.mxu0 0.0
      %5754 = vmatpush1.msra.mxu0 0.0
      %5755 = vmatprep.subr.mxu0 0.0
      %5756 = vmatpush1.msra.mxu0 0.0
      %5757 = vmatprep.subr.mxu0 0.0
      %5758 = vmatpush1.msra.mxu0 0.0
      %5759 = vmatprep.subr.mxu0 0.0
      %5760 = vmatpush1.msra.mxu0 0.0
      %5761 = vmatprep.subr.mxu0 0.0
      %5762 = vmatpush1.msra.mxu0 0.0
      %5763 = vmatprep.subr.mxu0 0.0
      %5764 = vmatpush1.msra.mxu0 0.0
      %5765 = vmatprep.subr.mxu0 0.0
      %5766 = vmatpush1.msra.mxu0 0.0
      %5767 = vmatprep.subr.mxu0 0.0
      %5768 = vmatpush1.msra.mxu0 0.0
      %5769 = vmatprep.subr.mxu0 0.0
      %5770 = vmatpush1.msra.mxu0 0.0
      %5771 = vmatprep.subr.mxu0 0.0
      %5772 = vmatpush1.msra.mxu0 0.0
      %5773 = vmatprep.subr.mxu0 0.0
      %5774 = vmatpush1.msra.mxu0 0.0
      %5775 = vmatprep.subr.mxu0 0.0
      %5776 = vmatpush1.msra.mxu0 0.0
      %5777 = vmatprep.subr.mxu0 0.0
      %5778 = vmatpush1.msra.mxu0 0.0
      %5779 = vmatprep.subr.mxu0 0.0
      %5780 = vmatpush1.msra.mxu0 0.0
      %5781 = vmatprep.subr.mxu0 0.0
      %5782 = vmatpush1.msra.mxu0 0.0
      %5783 = vmatprep.subr.mxu0 0.0
      %5784 = vmatpush1.msra.mxu0 0.0
      %5785 = vmatprep.subr.mxu0 0.0
      %5786 = vmatpush1.msra.mxu0 0.0
      %5787 = vmatprep.subr.mxu0 0.0
      %5788 = vmatpush1.msra.mxu0 0.0
      %5789 = vmatprep.subr.mxu0 0.0
      %5790 = vmatpush1.msra.mxu0 0.0
      %5791 = vmatprep.subr.mxu0 0.0
      %5792 = vmatpush1.msra.mxu0 0.0
      %5793 = vmatprep.subr.mxu0 0.0
      %5794 = vmatpush1.msra.mxu0 0.0
      %5795 = vmatprep.subr.mxu0 0.0
      %5796 = vmatpush1.msra.mxu0 0.0
      %5797 = vmatprep.subr.mxu0 0.0
      %5798 = vmatpush1.msra.mxu0 0.0
      %5799 = vmatprep.subr.mxu0 0.0
      %5800 = vmatpush1.msra.mxu0 0.0
      %5801 = vmatprep.subr.mxu0 0.0
      %5802 = vmatpush1.msra.mxu0 0.0
      %5803 = vmatprep.subr.mxu0 0.0
      %5804 = vmatpush1.msra.mxu0 0.0
      %5805 = vmatprep.mubr.f32.mxu0 0.0
      %5806 = vmatmul.mubr.f32.gmra.mrb[0].mxu0 %v5739
      %v5807 = vpop.f32.mrb[0].mxu0
      %v5808 = vadd.f32 0.0, %v5807
      %v5809 = vpop.f32.mrb[0].mxu0
      %5810 = vdwg.mxu0
      %5811 = vst.msk [vmem:[#allocation4] sm:$0xff] %vm142, %v5808
    $region133: #{seq2seq_forward.1} parent=1 // pred_fallthru
      _
    %v5812 = vld [vmem:[#allocation4] sm:$0xff]
    %v5813 = vpack.c.bf16 %v5812, %v5812
    %v5815 = vsel %vm142, %v5813, 0
    %5817 = vmatprep.subr.bf16.mxu0 %v2787
    %5818 = vmatpush1.bf16.msra.mxu0 %v2786
    %5819 = vmatprep.subr.bf16.mxu0 0
    %5820 = vmatpush1.bf16.msra.mxu0 0
    %5821 = vmatprep.subr.bf16.mxu0 0
    %5822 = vmatpush1.bf16.msra.mxu0 0
    %5823 = vmatprep.subr.bf16.mxu0 0
    %5824 = vmatpush1.bf16.msra.mxu0 0
    %5825 = vmatprep.subr.bf16.mxu0 0
    %5826 = vmatpush1.bf16.msra.mxu0 0
    %5827 = vmatprep.subr.bf16.mxu0 0
    %5828 = vmatpush1.bf16.msra.mxu0 0
    %5829 = vmatprep.subr.bf16.mxu0 0
    %5830 = vmatpush1.bf16.msra.mxu0 0
    %5831 = vmatprep.subr.bf16.mxu0 0
    %5832 = vmatpush1.bf16.msra.mxu0 0
    %5833 = vmatprep.subr.bf16.mxu0 0
    %5834 = vmatpush1.bf16.msra.mxu0 0
    %5835 = vmatprep.subr.bf16.mxu0 0
    %5836 = vmatpush1.bf16.msra.mxu0 0
    %5837 = vmatprep.subr.bf16.mxu0 0
    %5838 = vmatpush1.bf16.msra.mxu0 0
    %5839 = vmatprep.subr.bf16.mxu0 0
    %5840 = vmatpush1.bf16.msra.mxu0 0
    %5841 = vmatprep.subr.bf16.mxu0 0
    %5842 = vmatpush1.bf16.msra.mxu0 0
    %5843 = vmatprep.subr.bf16.mxu0 0
    %5844 = vmatpush1.bf16.msra.mxu0 0
    %5845 = vmatprep.subr.bf16.mxu0 0
    %5846 = vmatpush1.bf16.msra.mxu0 0
    %5847 = vmatprep.subr.bf16.mxu0 0
    %5848 = vmatpush1.bf16.msra.mxu0 0
    %5849 = vmatprep.mubr.bf16.mxu0 0
    %5850 = vmatmul.mubr.bf16.gmra.mrb[0].mxu0 %v5815
    %v5851 = vpop.f32.mrb[0].mxu0
    %v5852 = vadd.f32 %v2635, %v5851
    %v5853 = vpop.f32.mrb[0].mxu0
    %v5854 = vadd.f32 %v2639, %v5853
    %v5855 = vpop.f32.mrb[0].mxu0
    %v5856 = vpop.f32.mrb[0].mxu0
    %5857 = vdwg.mxu0
    %5858 = vmatprep.subr.bf16.mxu0 %v2860
    %5859 = vmatpush1.bf16.msra.mxu0 %v2859
    %5860 = vmatprep.subr.bf16.mxu0 %v2862
    %5861 = vmatpush1.bf16.msra.mxu0 %v2861
    %5862 = vmatprep.subr.bf16.mxu0 %v2864
    %5863 = vmatpush1.bf16.msra.mxu0 %v2863
    %5864 = vmatprep.subr.bf16.mxu0 %v2866
    %5865 = vmatpush1.bf16.msra.mxu0 %v2865
    %5866 = vmatprep.subr.bf16.mxu0 0
    %5867 = vmatpush1.bf16.msra.mxu0 0
    %5868 = vmatprep.subr.bf16.mxu0 0
    %5869 = vmatpush1.bf16.msra.mxu0 0
    %5870 = vmatprep.subr.bf16.mxu0 0
    %5871 = vmatpush1.bf16.msra.mxu0 0
    %5872 = vmatprep.subr.bf16.mxu0 0
    %5873 = vmatpush1.bf16.msra.mxu0 0
    %5874 = vmatprep.subr.bf16.mxu0 0
    %5875 = vmatpush1.bf16.msra.mxu0 0
    %5876 = vmatprep.subr.bf16.mxu0 0
    %5877 = vmatpush1.bf16.msra.mxu0 0
    %5878 = vmatprep.subr.bf16.mxu0 0
    %5879 = vmatpush1.bf16.msra.mxu0 0
    %5880 = vmatprep.subr.bf16.mxu0 0
    %5881 = vmatpush1.bf16.msra.mxu0 0
    %5882 = vmatprep.subr.bf16.mxu0 0
    %5883 = vmatpush1.bf16.msra.mxu0 0
    %5884 = vmatprep.subr.bf16.mxu0 0
    %5885 = vmatpush1.bf16.msra.mxu0 0
    %5886 = vmatprep.subr.bf16.mxu0 0
    %5887 = vmatpush1.bf16.msra.mxu0 0
    %5888 = vmatprep.subr.bf16.mxu0 0
    %5889 = vmatpush1.bf16.msra.mxu0 0
    %5890 = vmatprep.mubr.bf16.mxu0 0
    %5891 = vmatmul.mubr.bf16.gmra.mrb[0].mxu0 %v5474
    %v5892 = vpop.f32.mrb[0].mxu0
    %v5893 = vadd.f32 %v2647, %v5892
    %v5894 = vpop.f32.mrb[0].mxu0
    %v5895 = vadd.f32 %v2651, %v5894
    %v5896 = vpop.f32.mrb[0].mxu0
    %v5897 = vpop.f32.mrb[0].mxu0
    %5898 = vdwg.mxu0
    %v5899 = vadd.f32 %v5852, %v5893
    %v5900 = vxor.u32 %v5899, 2147483648
    %v5901 = vmul.f32 %v5900, 1.442695
    %v5902 = vpow.pop %v5901
    %v5903 = vadd.f32 %v5902, 1.0
    %v5904 = vrcp.pop %v5903
    %v5905 = vmul.f32 1.0, %v5904
    %v5906 = vmul.f32 %v5905, %v5895
    %v5907 = vadd.f32 %v5854, %v5906
    %v5908 = vtanh.pop %v5907
    %v5909 = vsub.f32 1.0, %v5905
    %5911 = vrot.lane.b32.xlu0 %v5908, 64
    %v5912 = vpop.permute.xlu0 %5911
    %v5914 = vmul.f32 %v5909, %v5912
    %v5915 = vmul.f32 %v5905, %v5468
    %v5916 = vadd.f32 %v5914, %v5915
    %v5917 = vpack.c.bf16 %v5916, %v5916
    %5919 = vrot.lane.b32.xlu0 %v5917, 64
    %v5920 = vpop.permute.xlu0 %5919
    %v5922 = vsel %vm279, %v5920, 0
    %5924 = vmatprep.subr.bf16.mxu0 %v2970
    %5925 = vmatpush1.bf16.msra.mxu0 %v2969
    %5926 = vmatprep.subr.bf16.mxu0 %v2972
    %5927 = vmatpush1.bf16.msra.mxu0 %v2971
    %5928 = vmatprep.subr.bf16.mxu0 %v2974
    %5929 = vmatpush1.bf16.msra.mxu0 %v2973
    %5930 = vmatprep.subr.bf16.mxu0 %v2976
    %5931 = vmatpush1.bf16.msra.mxu0 %v2975
    %5932 = vmatprep.subr.bf16.mxu0 0
    %5933 = vmatpush1.bf16.msra.mxu0 0
    %5934 = vmatprep.subr.bf16.mxu0 0
    %5935 = vmatpush1.bf16.msra.mxu0 0
    %5936 = vmatprep.subr.bf16.mxu0 0
    %5937 = vmatpush1.bf16.msra.mxu0 0
    %5938 = vmatprep.subr.bf16.mxu0 0
    %5939 = vmatpush1.bf16.msra.mxu0 0
    %5940 = vmatprep.subr.bf16.mxu0 0
    %5941 = vmatpush1.bf16.msra.mxu0 0
    %5942 = vmatprep.subr.bf16.mxu0 0
    %5943 = vmatpush1.bf16.msra.mxu0 0
    %5944 = vmatprep.subr.bf16.mxu0 0
    %5945 = vmatpush1.bf16.msra.mxu0 0
    %5946 = vmatprep.subr.bf16.mxu0 0
    %5947 = vmatpush1.bf16.msra.mxu0 0
    %5948 = vmatprep.subr.bf16.mxu0 0
    %5949 = vmatpush1.bf16.msra.mxu0 0
    %5950 = vmatprep.subr.bf16.mxu0 0
    %5951 = vmatpush1.bf16.msra.mxu0 0
    %5952 = vmatprep.subr.bf16.mxu0 0
    %5953 = vmatpush1.bf16.msra.mxu0 0
    %5954 = vmatprep.subr.bf16.mxu0 0
    %5955 = vmatpush1.bf16.msra.mxu0 0
    %5956 = vmatprep.mubr.bf16.mxu0 0
    %5957 = vmatmul.mubr.bf16.gmra.mrb[0].mxu0 %v5922
    %v5958 = vpop.f32.mrb[0].mxu0
    %v5959 = vadd.f32 %v2675, %v5958
    %v5960 = vpop.f32.mrb[0].mxu0
    %v5961 = vadd.f32 %v2679, %v5960
    %v5962 = vpop.f32.mrb[0].mxu0
    %v5963 = vpop.f32.mrb[0].mxu0
    %5964 = vdwg.mxu0
    %5965 = vmatprep.subr.bf16.mxu0 %v3055
    %5966 = vmatpush1.bf16.msra.mxu0 %v3054
    %5967 = vmatprep.subr.bf16.mxu0 %v3057
    %5968 = vmatpush1.bf16.msra.mxu0 %v3056
    %5969 = vmatprep.subr.bf16.mxu0 %v3059
    %5970 = vmatpush1.bf16.msra.mxu0 %v3058
    %5971 = vmatprep.subr.bf16.mxu0 %v3061
    %5972 = vmatpush1.bf16.msra.mxu0 %v3060
    %5973 = vmatprep.subr.bf16.mxu0 0
    %5974 = vmatpush1.bf16.msra.mxu0 0
    %5975 = vmatprep.subr.bf16.mxu0 0
    %5976 = vmatpush1.bf16.msra.mxu0 0
    %5977 = vmatprep.subr.bf16.mxu0 0
    %5978 = vmatpush1.bf16.msra.mxu0 0
    %5979 = vmatprep.subr.bf16.mxu0 0
    %5980 = vmatpush1.bf16.msra.mxu0 0
    %5981 = vmatprep.subr.bf16.mxu0 0
    %5982 = vmatpush1.bf16.msra.mxu0 0
    %5983 = vmatprep.subr.bf16.mxu0 0
    %5984 = vmatpush1.bf16.msra.mxu0 0
    %5985 = vmatprep.subr.bf16.mxu0 0
    %5986 = vmatpush1.bf16.msra.mxu0 0
    %5987 = vmatprep.subr.bf16.mxu0 0
    %5988 = vmatpush1.bf16.msra.mxu0 0
    %5989 = vmatprep.subr.bf16.mxu0 0
    %5990 = vmatpush1.bf16.msra.mxu0 0
    %5991 = vmatprep.subr.bf16.mxu0 0
    %5992 = vmatpush1.bf16.msra.mxu0 0
    %5993 = vmatprep.subr.bf16.mxu0 0
    %5994 = vmatpush1.bf16.msra.mxu0 0
    %5995 = vmatprep.subr.bf16.mxu0 0
    %5996 = vmatpush1.bf16.msra.mxu0 0
    %5997 = vmatprep.mubr.bf16.mxu0 0
    %5998 = vmatmul.mubr.bf16.gmra.mrb[0].mxu0 %v5581
    %v5999 = vpop.f32.mrb[0].mxu0
    %v6000 = vadd.f32 %v2687, %v5999
    %v6001 = vpop.f32.mrb[0].mxu0
    %v6002 = vadd.f32 %v2691, %v6001
    %v6003 = vpop.f32.mrb[0].mxu0
    %v6004 = vpop.f32.mrb[0].mxu0
    %6005 = vdwg.mxu0
    %v6006 = vadd.f32 %v5959, %v6000
    %v6007 = vxor.u32 %v6006, 2147483648
    %v6008 = vmul.f32 %v6007, 1.442695
    %v6009 = vpow.pop %v6008
    %v6010 = vadd.f32 %v6009, 1.0
    %v6011 = vrcp.pop %v6010
    %v6012 = vmul.f32 1.0, %v6011
    %v6013 = vmul.f32 %v6012, %v6002
    %v6014 = vadd.f32 %v5961, %v6013
    %v6015 = vtanh.pop %v6014
    %v6016 = vsub.f32 1.0, %v6012
    %6018 = vrot.lane.b32.xlu0 %v6015, 64
    %v6019 = vpop.permute.xlu0 %6018
    %v6021 = vmul.f32 %v6016, %v6019
    %v6022 = vmul.f32 %v6012, %v5575
    %v6023 = vadd.f32 %v6021, %v6022
    %v6024 = vpack.c.bf16 %v6023, %v6023
    %6026 = vrot.lane.b32.xlu0 %v6024, 64
    %v6027 = vpop.permute.xlu0 %6026
    %v6029 = vsel %vm279, %v6027, 0
    %6031 = vmatprep.subr.bf16.mxu0 0
    %6032 = vmatpush1.bf16.msra.mxu0 %v3156
    %6033 = vmatprep.subr.bf16.mxu0 0
    %6034 = vmatpush1.bf16.msra.mxu0 %v3157
    %6035 = vmatprep.subr.bf16.mxu0 0
    %6036 = vmatpush1.bf16.msra.mxu0 %v3158
    %6037 = vmatprep.subr.bf16.mxu0 0
    %6038 = vmatpush1.bf16.msra.mxu0 %v3159
    %6039 = vmatprep.subr.bf16.mxu0 0
    %6040 = vmatpush1.bf16.msra.mxu0 0
    %6041 = vmatprep.subr.bf16.mxu0 0
    %6042 = vmatpush1.bf16.msra.mxu0 0
    %6043 = vmatprep.subr.bf16.mxu0 0
    %6044 = vmatpush1.bf16.msra.mxu0 0
    %6045 = vmatprep.subr.bf16.mxu0 0
    %6046 = vmatpush1.bf16.msra.mxu0 0
    %6047 = vmatprep.subr.bf16.mxu0 0
    %6048 = vmatpush1.bf16.msra.mxu0 0
    %6049 = vmatprep.subr.bf16.mxu0 0
    %6050 = vmatpush1.bf16.msra.mxu0 0
    %6051 = vmatprep.subr.bf16.mxu0 0
    %6052 = vmatpush1.bf16.msra.mxu0 0
    %6053 = vmatprep.subr.bf16.mxu0 0
    %6054 = vmatpush1.bf16.msra.mxu0 0
    %6055 = vmatprep.subr.bf16.mxu0 0
    %6056 = vmatpush1.bf16.msra.mxu0 0
    %6057 = vmatprep.subr.bf16.mxu0 0
    %6058 = vmatpush1.bf16.msra.mxu0 0
    %6059 = vmatprep.subr.bf16.mxu0 0
    %6060 = vmatpush1.bf16.msra.mxu0 0
    %6061 = vmatprep.subr.bf16.mxu0 0
    %6062 = vmatpush1.bf16.msra.mxu0 0
    %6063 = vmatprep.mubr.bf16.mxu0 0
    %6064 = vmatmul.mubr.bf16.gmra.mrb[0].mxu0 %v6029
    %v6065 = vpop.f32.mrb[0].mxu0
    %v6066 = vadd.f32 %v2707, %v6065
    %v6067 = vpop.f32.mrb[0].mxu0
    %v6068 = vpop.f32.mrb[0].mxu0
    %v6069 = vpop.f32.mrb[0].mxu0
    %6070 = vdwg.mxu0
    %v6071 = vpack.c.bf16 %v6066, %v6066
    %6072 = vmatprep.subr.bf16.mxu0 %v3257
    %6073 = vmatpush1.bf16.msra.mxu0 %v3256
    %6074 = vmatprep.subr.bf16.mxu0 %v3259
    %6075 = vmatpush1.bf16.msra.mxu0 %v3258
    %6076 = vmatprep.subr.bf16.mxu0 %v3261
    %6077 = vmatpush1.bf16.msra.mxu0 %v3260
    %6078 = vmatprep.subr.bf16.mxu0 %v3263
    %6079 = vmatpush1.bf16.msra.mxu0 %v3262
    %6080 = vmatprep.subr.bf16.mxu0 %v3265
    %6081 = vmatpush1.bf16.msra.mxu0 %v3264
    %6082 = vmatprep.subr.bf16.mxu0 %v3267
    %6083 = vmatpush1.bf16.msra.mxu0 %v3266
    %6084 = vmatprep.subr.bf16.mxu0 %v3269
    %6085 = vmatpush1.bf16.msra.mxu0 %v3268
    %6086 = vmatprep.subr.bf16.mxu0 %v3271
    %6087 = vmatpush1.bf16.msra.mxu0 %v3270
    %6088 = vmatprep.subr.bf16.mxu0 0
    %6089 = vmatpush1.bf16.msra.mxu0 0
    %6090 = vmatprep.subr.bf16.mxu0 0
    %6091 = vmatpush1.bf16.msra.mxu0 0
    %6092 = vmatprep.subr.bf16.mxu0 0
    %6093 = vmatpush1.bf16.msra.mxu0 0
    %6094 = vmatprep.subr.bf16.mxu0 0
    %6095 = vmatpush1.bf16.msra.mxu0 0
    %6096 = vmatprep.subr.bf16.mxu0 0
    %6097 = vmatpush1.bf16.msra.mxu0 0
    %6098 = vmatprep.subr.bf16.mxu0 0
    %6099 = vmatpush1.bf16.msra.mxu0 0
    %6100 = vmatprep.subr.bf16.mxu0 0
    %6101 = vmatpush1.bf16.msra.mxu0 0
    %6102 = vmatprep.subr.bf16.mxu0 0
    %6103 = vmatpush1.bf16.msra.mxu0 0
    %6104 = vmatprep.mubr.bf16.mxu0 0
    %6105 = vmatmul.mubr.bf16.gmra.mrb[0].mxu0 %v6071
    %v6106 = vpop.f32.mrb[0].mxu0
    %v6107 = vadd.f32 %v2730, %v6106
    %v6108 = vpop.f32.mrb[0].mxu0
    %v6109 = vadd.f32 %v2734, %v6108
    %v6110 = vpop.f32.mrb[0].mxu0
    %v6111 = vpop.f32.mrb[0].mxu0
    %6112 = vdwg.mxu0
    %v6113 = vpack.c.bf16 %v6107, %v6107
    %v6114 = vpack.c.bf16 %v6109, %v6109
    %6115 = vmatprep.subr.bf16.mxu0 0
    %6116 = vmatpush1.bf16.msra.mxu0 %v3395
    %6117 = vmatprep.subr.bf16.mxu0 0
    %6118 = vmatpush1.bf16.msra.mxu0 %v3396
    %6119 = vmatprep.subr.bf16.mxu0 0
    %6120 = vmatpush1.bf16.msra.mxu0 %v3397
    %6121 = vmatprep.subr.bf16.mxu0 0
    %6122 = vmatpush1.bf16.msra.mxu0 %v3398
    %6123 = vmatprep.subr.bf16.mxu0 0
    %6124 = vmatpush1.bf16.msra.mxu0 %v3399
    %6125 = vmatprep.subr.bf16.mxu0 0
    %6126 = vmatpush1.bf16.msra.mxu0 %v3400
    %6127 = vmatprep.subr.bf16.mxu0 0
    %6128 = vmatpush1.bf16.msra.mxu0 %v3401
    %6129 = vmatprep.subr.bf16.mxu0 0
    %6130 = vmatpush1.bf16.msra.mxu0 %v3402
    %6131 = vmatprep.subr.bf16.mxu0 0
    %6132 = vmatpush1.bf16.msra.mxu0 %v3403
    %6133 = vmatprep.subr.bf16.mxu0 0
    %6134 = vmatpush1.bf16.msra.mxu0 %v3404
    %6135 = vmatprep.subr.bf16.mxu0 0
    %6136 = vmatpush1.bf16.msra.mxu0 %v3405
    %6137 = vmatprep.subr.bf16.mxu0 0
    %6138 = vmatpush1.bf16.msra.mxu0 %v3406
    %6139 = vmatprep.subr.bf16.mxu0 0
    %6140 = vmatpush1.bf16.msra.mxu0 %v3407
    %6141 = vmatprep.subr.bf16.mxu0 0
    %6142 = vmatpush1.bf16.msra.mxu0 %v3408
    %6143 = vmatprep.subr.bf16.mxu0 0
    %6144 = vmatpush1.bf16.msra.mxu0 %v3409
    %6145 = vmatprep.subr.bf16.mxu0 0
    %6146 = vmatpush1.bf16.msra.mxu0 %v3410
    %6147 = vmatprep.mubr.bf16.mxu0 %v6114
    %6148 = vmatmul.mubr.bf16.gmra.mrb[0].mxu0 %v6113
    %v6149 = vpop.f32.mrb[0].mxu0
    %v6150 = vadd.f32 %v2774, %v6149
    %v6151 = vpop.f32.mrb[0].mxu0
    %v6152 = vpop.f32.mrb[0].mxu0
    %v6153 = vpop.f32.mrb[0].mxu0
    %6154 = vdwg.mxu0
    %s6155 = scalar_lea.vmem %s26, 56
    %6156 = vst [vmem:[%s6155] sm:$0xff] %v6150
    // Predicated region
    $region134: #{seq2seq_forward.1} parent=1 // pred_check
      _
    $region135: #{seq2seq_forward.1} parent=1 // pred_check_branch
      %6158 = sbr.rel (0) target = $region137
    $region136: #{seq2seq_forward.1} parent=1 // pred_region
      _
    $region137: #{seq2seq_forward.1} parent=1 // pred_fallthru
      _
    // Predicated region
    $region138: #{seq2seq_forward.1} parent=1 // pred_check
      _
    $region139: #{seq2seq_forward.1} parent=1 // pred_check_branch
      %6160 = sbr.rel (0) target = $region141
    $region140: #{seq2seq_forward.1} parent=1 // pred_region
      _
    $region141: #{seq2seq_forward.1} parent=1 // pred_fallthru
      _
    %6161 = vsyncpa [#allocation6], 1

</llo_original>
